<compile_context>
chip_gen: v5e
topology: v5e:2x2
jax: 0.10.0
libtpu: 0.0.40
codegen_flags: <defaults>
</compile_context>

<pallas_src>
import functools

import numpy as np
import jax
import jax.numpy as jnp
from jax import lax
from jax.experimental import pallas as pl
from jax.experimental.pallas import tpu as pltpu

EPS = 1e-5      # nn.BatchNorm2d default eps
C1P = 8         # conv1 channel count padded to one sublane tile


def _vmem():
    return pl.BlockSpec(memory_space=pltpu.MemorySpace.VMEM)


# ------------------------- fused Pallas kernel -------------------------

def lenet5_kernel(p1_ref, w1_ref, pk1_ref,
                  sw_ref, w2f_ref, pk2_ref,
                  selr_ref, maskm_ref, sumn_ref,
                  fc1w_ref, fc2w_ref, fc3w_ref, fcb_ref,
                  out_ref, g_ref, *,
                  kk, q1p, q1v, q2p, q2v, m1, m2, h1, h2, nc):
    f32 = jnp.float32
    m1p, m2p = 4 * q1p, 4 * q2p

    # ---- conv1 (single MXU matmul over padded im2col patches) + bias ----
    b1, g1, bt1 = pk1_ref[:, 0:1], pk1_ref[:, 1:2], pk1_ref[:, 2:3]
    y1 = jnp.dot(w1_ref[...], p1_ref[...], preferred_element_type=f32) + b1
    # zero the padded lanes (bias made them nonzero) so BN batch statistics stay exact
    lanes1 = lax.broadcasted_iota(jnp.int32, (1, m1p), 1)
    y1 = y1 * ((lanes1 % q1p) < q1v).astype(f32)

    inv1 = 1.0 / m1
    mu1 = jnp.sum(y1, axis=1, keepdims=True) * inv1
    ex1 = jnp.sum(y1 * y1, axis=1, keepdims=True) * inv1          # one-pass E[y^2]
    y1 = (y1 - mu1) * lax.rsqrt(ex1 - mu1 * mu1 + EPS) * g1 + bt1
    y1 = jnp.maximum(y1, 0.0)

    # ---- maxpool1: parity-grouped, 128-lane-aligned -> max over 4 contiguous blocks ----
    pooled1 = jnp.maximum(jnp.maximum(y1[:, 0:q1p], y1[:, q1p:2 * q1p]),
                          jnp.maximum(y1[:, 2 * q1p:3 * q1p], y1[:, 3 * q1p:4 * q1p]))  # (8, q1p)

    # ---- conv2: one wide gather matmul + aligned restack + one weight matmul ----
    pg = jnp.dot(pooled1, sw_ref[...], preferred_element_type=f32)           # (8, kk*m2p)
    for t in range(kk):                                                      # 25 full-tile copies
        g_ref[t * C1P:(t + 1) * C1P, :] = pg[:, t * m2p:(t + 1) * m2p]

    b2, g2, bt2 = pk2_ref[:, 0:1], pk2_ref[:, 1:2], pk2_ref[:, 2:3]
    y2 = jnp.dot(w2f_ref[...], g_ref[...], preferred_element_type=f32) + b2  # (16, m2p)
    lanes2 = lax.broadcasted_iota(jnp.int32, (1, m2p), 1)
    y2 = y2 * ((lanes2 % q2p) < q2v).astype(f32)

    inv2 = 1.0 / m2
    mu2 = jnp.sum(y2, axis=1, keepdims=True) * inv2
    ex2 = jnp.sum(y2 * y2, axis=1, keepdims=True) * inv2
    y2 = (y2 - mu2) * lax.rsqrt(ex2 - mu2 * mu2 + EPS) * g2 + bt2
    y2 = jnp.maximum(y2, 0.0)

    # ---- maxpool2: again max over 4 contiguous lane blocks ----
    pooled2 = jnp.maximum(jnp.maximum(y2[:, 0:q2p], y2[:, q2p:2 * q2p]),
                          jnp.maximum(y2[:, 2 * q2p:3 * q2p], y2[:, 3 * q2p:4 * q2p]))  # (16, q2p)

    # ---- flatten to PyTorch NCHW feature order via selection matmuls ----
    e = jnp.dot(selr_ref[...], pooled2, preferred_element_type=f32)                     # (F, q2p)
    xt = jnp.dot(e * maskm_ref[...], sumn_ref[...], preferred_element_type=f32)         # (F, N)

    # ---- fc1 -> ReLU -> fc2 -> ReLU -> fc3 (feature-major: no weight transposes) ----
    b1f, b2f, b3f = fcb_ref[0:h1, 0:1], fcb_ref[0:h2, 1:2], fcb_ref[0:nc, 2:3]
    a1 = jnp.maximum(jnp.dot(fc1w_ref[...], xt, preferred_element_type=f32) + b1f, 0.0)
    a2 = jnp.maximum(jnp.dot(fc2w_ref[...], a1, preferred_element_type=f32) + b2f, 0.0)
    out_ref[...] = jnp.dot(fc3w_ref[...], a2, preferred_element_type=f32) + b3f


# ------------------------- wrapper -------------------------

@jax.jit
def lenet5_forward(x, p):
    N, Cin, H, W = x.shape
    C1, _, KH, KW = p["conv1_w"].shape
    C2 = p["conv2_w"].shape[0]
    NC = p["fc3_w"].shape[0]
    H1, H2 = p["fc1_w"].shape[0], p["fc2_w"].shape[0]

    OH, OW = H - KH + 1, W - KW + 1            # 28, 28
    PH, PW = OH // 2, OW // 2                  # 14, 14
    OH2, OW2 = PH - KH + 1, PW - KW + 1        # 10, 10
    PH2, PW2 = OH2 // 2, OW2 // 2              # 5, 5
    S2 = PH2 * PW2                             # 25
    K1 = Cin * KH * KW                         # 75
    KK = KH * KW                               # 25
    Q1 = N * PH * PW                           # 392 valid pooled1 lanes
    Q1P = -(-Q1 // 128) * 128                  # 512 (lane aligned)
    M1P = 4 * Q1P                              # 2048
    Q2 = N * S2                                # 50 valid pooled2 lanes
    Q2P = -(-Q2 // 32) * 32                    # 64 (so 4*Q2P is a multiple of 128)
    M2P = 4 * Q2P                              # 256
    F = C2 * S2                                # 400

    # im2col for conv1, column order (dh, dw, n, ph, pw); each parity block zero-padded to Q1P.
    views = jnp.stack([x[:, :, i:i + OH, j:j + OW]
                       for i in range(KH) for j in range(KW)], axis=0)   # (KK,N,Cin,OH,OW)
    views = views.transpose(2, 0, 1, 3, 4)                               # (Cin,KK,N,OH,OW)
    views = views.reshape(Cin, KK, N, PH, 2, PW, 2)                      # oh=2*ph+dh, ow=2*pw+dw
    views = views.transpose(0, 1, 4, 6, 2, 3, 5)                         # (Cin,KK,dh,dw,N,PH,PW)
    patches1 = jnp.pad(views.reshape(K1, 4, Q1),
                       ((0, 0), (0, 0), (0, Q1P - Q1))).reshape(K1, M1P)

    # conv1 weights / BN constants padded to C1P channels (padded channels stay exactly zero).
    w1m = jnp.pad(p["conv1_w"].reshape(C1, K1), ((0, C1P - C1), (0, 0)))         # (8, 75)
    pk1 = jnp.stack([jnp.pad(p["conv1_b"], (0, C1P - C1)),
                     jnp.pad(p["bn1_g"], (0, C1P - C1), constant_values=1.0),
                     jnp.pad(p["bn1_b"], (0, C1P - C1))], axis=1)                # (8, 3)
    pk2 = jnp.stack([p["conv2_b"], p["bn2_g"], p["bn2_b"]], axis=1)              # (16, 3)

    # conv2 weights as one flat (C2, KK*C1P) matrix (zeros at the padded channel slots).
    w2f = p["conv2_w"].transpose(0, 2, 3, 1).reshape(C2, KK, C1)
    w2f = jnp.pad(w2f, ((0, 0), (0, 0), (0, C1P - C1))).reshape(C2, KK * C1P)    # (16, 200)

    # Precomputed conv2 im2col gather operator (pure numpy -> baked constant).
    # Column block t=(i,j) of width M2P selects, for every conv2 output position
    # (parity-grouped for pool2, zero for padded columns), the pooled1 lane of tap (i, j).
    col = np.arange(M2P)
    pb, r = col // Q2P, col % Q2P
    valid = r < Q2
    nn = np.where(valid, r // S2, 0)
    s = np.where(valid, r % S2, 0)
    ph2, pw2 = s // PW2, s % PW2
    dh, dw = pb // 2, pb % 2
    q_idx = np.arange(Q1P)[:, None]
    s_wide = np.concatenate(
        [((q_idx == (nn * (PH * PW) + (2 * ph2 + dh + i) * PW + (2 * pw2 + dw + j))[None, :])
          & valid[None, :]).astype(np.float32)
         for i in range(KH) for j in range(KW)], axis=1)                         # (512, 25*256)

    # flatten-to-NCHW selection operators
    f_i, k_i = np.arange(F), np.arange(Q2P)
    selr = (f_i[:, None] // S2 == np.arange(C2)[None, :]).astype(np.float32)     # (400, 16)
    maskm = ((k_i[None, :] < Q2)
             & (k_i[None, :] % S2 == f_i[:, None] % S2)).astype(np.float32)      # (400, 64)
    sumn = ((k_i[:, None] < Q2)
            & (k_i[:, None] // S2 == np.arange(N)[None, :])).astype(np.float32)  # (64, N)

    # packed FC biases (one operand instead of three)
    BR = max(H1, H2, NC)
    fcb = jnp.zeros((BR, 3), jnp.float32)
    fcb = fcb.at[:H1, 0].set(p["fc1_b"]).at[:H2, 1].set(p["fc2_b"]).at[:NC, 2].set(p["fc3_b"])

    flops = int(2 * C1P * K1 * M1P + 2 * C1P * Q1P * KK * M2P + 2 * C2 * KK * C1P * M2P
                + 2 * F * C2 * Q2P + 2 * F * Q2P * N
                + 2 * N * (H1 * F + H2 * H1 + NC * H2))
    in_bytes = int(4 * (patches1.size + w1m.size + pk1.size + s_wide.size + w2f.size + pk2.size
                        + selr.size + maskm.size + sumn.size
                        + p["fc1_w"].size + p["fc2_w"].size + p["fc3_w"].size + fcb.size))

    kernel = functools.partial(lenet5_kernel, kk=KK, q1p=Q1P, q1v=Q1, q2p=Q2P, q2v=Q2,
                               m1=N * OH * OW, m2=N * OH2 * OW2, h1=H1, h2=H2, nc=NC)
    out_t = pl.pallas_call(
        kernel,
        out_shape=jax.ShapeDtypeStruct((NC, N), jnp.float32),
        in_specs=[_vmem() for _ in range(13)],
        out_specs=_vmem(),
        scratch_shapes=[pltpu.VMEM((KK * C1P, M2P), jnp.float32)],
        compiler_params=pltpu.CompilerParams(vmem_limit_bytes=48 * 1024 * 1024),
        cost_estimate=pl.CostEstimate(flops=flops, transcendentals=C1P + C2,
                                      bytes_accessed=in_bytes + 4 * NC * N),
    )(patches1, w1m, pk1,
      s_wide, w2f, pk2,
      selr, maskm, sumn,
      p["fc1_w"], p["fc2_w"], p["fc3_w"], fcb)

    return out_t.T  # (N, num_classes)


# ------------------------- pure-JAX reference -------------------------

def ref_forward(x, p):
    def conv(x, w, b):
        y = lax.conv_general_dilated(x, w, (1, 1), "VALID",
                                     dimension_numbers=("NCHW", "OIHW", "NCHW"))
        return y + b.reshape(1, -1, 1, 1)

    def bn(x, g, bta):
        m = jnp.mean(x, axis=(0, 2, 3), keepdims=True)
        v = jnp.mean((x - m) ** 2, axis=(0, 2, 3), keepdims=True)
        return (x - m) * lax.rsqrt(v + EPS) * g.reshape(1, -1, 1, 1) + bta.reshape(1, -1, 1, 1)

    def pool(x):
        N, C, H, W = x.shape
        return x.reshape(N, C, H // 2, 2, W // 2, 2).max(axis=(3, 5))

    relu = lambda t: jnp.maximum(t, 0.0)
    x = pool(relu(bn(conv(x, p["conv1_w"], p["conv1_b"]), p["bn1_g"], p["bn1_b"])))
    x = pool(relu(bn(conv(x, p["conv2_w"], p["conv2_b"]), p["bn2_g"], p["bn2_b"])))
    x = x.reshape(x.shape[0], -1)
    x = relu(x @ p["fc1_w"].T + p["fc1_b"])
    x = relu(x @ p["fc2_w"].T + p["fc2_b"])
    return x @ p["fc3_w"].T + p["fc3_b"]


# ------------------------- parameter init -------------------------

def init_params(key, num_classes):
    ks = jax.random.split(key, 10)
    f32 = jnp.float32
    return {
        "conv1_w": 0.1 * jax.random.normal(ks[0], (6, 3, 5, 5), f32),
        "conv1_b": 0.1 * jax.random.normal(ks[1], (6,), f32),
        "bn1_g": jnp.ones((6,), f32),                 # BatchNorm2d default init
        "bn1_b": jnp.zeros((6,), f32),
        "conv2_w": 0.1 * jax.random.normal(ks[2], (16, 6, 5, 5), f32),
        "conv2_b": 0.1 * jax.random.normal(ks[3], (16,), f32),
        "bn2_g": jnp.ones((16,), f32),
        "bn2_b": jnp.zeros((16,), f32),
        "fc1_w": 0.1 * jax.random.normal(ks[4], (120, 16 * 5 * 5), f32),
        "fc1_b": 0.1 * jax.random.normal(ks[5], (120,), f32),
        "fc2_w": 0.1 * jax.random.normal(ks[6], (84, 120), f32),
        "fc2_b": 0.1 * jax.random.normal(ks[7], (84,), f32),
        "fc3_w": 0.1 * jax.random.normal(ks[8], (num_classes, 84), f32),
        "fc3_b": 0.1 * jax.random.normal(ks[9], (num_classes,), f32),
    }


if __name__ == "__main__":
    num_classes = 10
    key = jax.random.PRNGKey(0)
    k_x, k_p = jax.random.split(key)
    # LeNet-5 geometry requires 32x32 spatial input (fc1 expects 16*5*5 features).
    x = jax.random.normal(k_x, (2, 3, 32, 32), jnp.float32)
    params = init_params(k_p, num_classes)

    out = jax.block_until_ready(lenet5_forward(x, params))
    ref = jax.block_until_ready(ref_forward(x, params))

    assert out.shape == (2, num_classes), out.shape
    assert jnp.allclose(out, ref, atol=2e-3, rtol=2e-3), float(jnp.max(jnp.abs(out - ref)))
    print("KERNEL_OK")
</pallas_src>

<mosaic_0001>
module attributes {stable_mosaic.version = 11 : i64} {
  func.func @lenet5_kernel(%arg0: memref<75x2048xf32, #tpu.memory_space<vmem>>, %arg1: memref<8x75xf32, #tpu.memory_space<vmem>>, %arg2: memref<8x3xf32, #tpu.memory_space<vmem>>, %arg3: memref<512x6400xf32, #tpu.memory_space<vmem>>, %arg4: memref<16x200xf32, #tpu.memory_space<vmem>>, %arg5: memref<16x3xf32, #tpu.memory_space<vmem>>, %arg6: memref<400x16xf32, #tpu.memory_space<vmem>>, %arg7: memref<400x64xf32, #tpu.memory_space<vmem>>, %arg8: memref<64x2xf32, #tpu.memory_space<vmem>>, %arg9: memref<120x400xf32, #tpu.memory_space<vmem>>, %arg10: memref<84x120xf32, #tpu.memory_space<vmem>>, %arg11: memref<10x84xf32, #tpu.memory_space<vmem>>, %arg12: memref<120x3xf32, #tpu.memory_space<vmem>>, %arg13: memref<10x2xf32, #tpu.memory_space<vmem>>, %arg14: memref<200x256xf32, #tpu.memory_space<vmem>>) attributes {dimension_semantics = [], scalar_prefetch = 0 : i64, scratch_operands = 1 : i64, tpu.core_type = #tpu.core_type<tc>} {
    %c0 = arith.constant 0 : index
    %c0_0 = arith.constant 0 : index
    %0 = vector.load %arg2[%c0, %c0_0] : memref<8x3xf32, #tpu.memory_space<vmem>>, vector<8x1xf32>
    %c0_1 = arith.constant 0 : index
    %c1 = arith.constant 1 : index
    %1 = vector.load %arg2[%c0_1, %c1] : memref<8x3xf32, #tpu.memory_space<vmem>>, vector<8x1xf32>
    %c0_2 = arith.constant 0 : index
    %c2 = arith.constant 2 : index
    %2 = vector.load %arg2[%c0_2, %c2] : memref<8x3xf32, #tpu.memory_space<vmem>>, vector<8x1xf32>
    %c0_3 = arith.constant 0 : index
    %c0_4 = arith.constant 0 : index
    %3 = vector.load %arg1[%c0_3, %c0_4] : memref<8x75xf32, #tpu.memory_space<vmem>>, vector<8x75xf32>
    %c0_5 = arith.constant 0 : index
    %c0_6 = arith.constant 0 : index
    %4 = vector.load %arg0[%c0_5, %c0_6] : memref<75x2048xf32, #tpu.memory_space<vmem>>, vector<75x2048xf32>
    %cst = arith.constant dense<0.000000e+00> : vector<8x2048xf32>
    %5 = tpu.matmul %3, %4, %cst {dimension_numbers = #tpu.dot_dimension_numbers<[1], [0], [0], [1], [0, 0, 1, 1], [], []>} : vector<8x75xf32>, vector<75x2048xf32>, vector<8x2048xf32> -> vector<8x2048xf32>
    %6 = vector.broadcast %0 : vector<8x1xf32> to vector<8x2048xf32>
    %7 = arith.addf %5, %6 : vector<8x2048xf32>
    %8 = tpu.iota {dimensions = array<i32: 1>} : vector<1x2048xi32>
    %c512_i32 = arith.constant 512 : i32
    %c0_i32 = arith.constant 0 : i32
    %9 = arith.cmpi eq, %c512_i32, %c0_i32 : i32
    %c1_i32 = arith.constant 1 : i32
    %10 = arith.select %9, %c1_i32, %c512_i32 : i32
    %11 = vector.broadcast %10 : i32 to vector<1x2048xi32>
    %12 = arith.remsi %8, %11 : vector<1x2048xi32>
    %c0_i32_7 = arith.constant 0 : i32
    %13 = vector.broadcast %c0_i32_7 : i32 to vector<1x2048xi32>
    %14 = arith.cmpi ne, %12, %13 : vector<1x2048xi32>
    %c0_i32_8 = arith.constant 0 : i32
    %15 = vector.broadcast %c0_i32_8 : i32 to vector<1x2048xi32>
    %16 = arith.cmpi slt, %12, %15 : vector<1x2048xi32>
    %c0_i32_9 = arith.constant 0 : i32
    %17 = arith.cmpi slt, %10, %c0_i32_9 : i32
    %18 = vector.broadcast %17 : i1 to vector<1x2048xi1>
    %19 = vector.broadcast %18 : vector<1x2048xi1> to vector<1x2048xi1>
    %20 = arith.xori %16, %19 : vector<1x2048xi1>
    %21 = arith.andi %20, %14 : vector<1x2048xi1>
    %22 = vector.broadcast %10 : i32 to vector<1x2048xi32>
    %23 = arith.addi %12, %22 : vector<1x2048xi32>
    %24 = arith.select %21, %23, %12 : vector<1x2048xi1>, vector<1x2048xi32>
    %c392_i32 = arith.constant 392 : i32
    %25 = vector.broadcast %c392_i32 : i32 to vector<1x2048xi32>
    %26 = arith.cmpi slt, %24, %25 : vector<1x2048xi32>
    %27 = arith.extui %26 : vector<1x2048xi1> to vector<1x2048xi32>
    %28 = arith.sitofp %27 : vector<1x2048xi32> to vector<1x2048xf32>
    %29 = vector.broadcast %28 : vector<1x2048xf32> to vector<8x2048xf32>
    %30 = arith.mulf %7, %29 : vector<8x2048xf32>
    %cst_10 = arith.constant dense<0.000000e+00> : vector<8xf32>
    %31 = vector.multi_reduction <add>, %30, %cst_10 [1] : vector<8x2048xf32> to vector<8xf32>
    %32 = vector.shape_cast %31 : vector<8xf32> to vector<8x1xf32>
    %cst_11 = arith.constant 6.37755089E-4 : f32
    %33 = vector.broadcast %cst_11 : f32 to vector<8x1xf32>
    %34 = arith.mulf %32, %33 : vector<8x1xf32>
    %35 = arith.mulf %30, %30 : vector<8x2048xf32>
    %cst_12 = arith.constant dense<0.000000e+00> : vector<8xf32>
    %36 = vector.multi_reduction <add>, %35, %cst_12 [1] : vector<8x2048xf32> to vector<8xf32>
    %37 = vector.shape_cast %36 : vector<8xf32> to vector<8x1xf32>
    %cst_13 = arith.constant 6.37755089E-4 : f32
    %38 = vector.broadcast %cst_13 : f32 to vector<8x1xf32>
    %39 = arith.mulf %37, %38 : vector<8x1xf32>
    %40 = vector.broadcast %34 : vector<8x1xf32> to vector<8x2048xf32>
    %41 = arith.subf %30, %40 : vector<8x2048xf32>
    %42 = arith.mulf %34, %34 : vector<8x1xf32>
    %43 = arith.subf %39, %42 : vector<8x1xf32>
    %cst_14 = arith.constant 9.99999974E-6 : f32
    %44 = vector.broadcast %cst_14 : f32 to vector<8x1xf32>
    %45 = arith.addf %43, %44 : vector<8x1xf32>
    %46 = math.rsqrt %45 : vector<8x1xf32>
    %47 = vector.broadcast %46 : vector<8x1xf32> to vector<8x2048xf32>
    %48 = arith.mulf %41, %47 : vector<8x2048xf32>
    %49 = vector.broadcast %1 : vector<8x1xf32> to vector<8x2048xf32>
    %50 = arith.mulf %48, %49 : vector<8x2048xf32>
    %51 = vector.broadcast %2 : vector<8x1xf32> to vector<8x2048xf32>
    %52 = arith.addf %50, %51 : vector<8x2048xf32>
    %cst_15 = arith.constant 0.000000e+00 : f32
    %53 = vector.broadcast %cst_15 : f32 to vector<8x2048xf32>
    %54 = arith.maximumf %52, %53 : vector<8x2048xf32>
    %55 = vector.extract_strided_slice %54 {offsets = [0, 0], sizes = [8, 512], strides = [1, 1]} : vector<8x2048xf32> to vector<8x512xf32>
    %56 = vector.extract_strided_slice %54 {offsets = [0, 512], sizes = [8, 512], strides = [1, 1]} : vector<8x2048xf32> to vector<8x512xf32>
    %57 = arith.maximumf %55, %56 : vector<8x512xf32>
    %58 = vector.extract_strided_slice %54 {offsets = [0, 1024], sizes = [8, 512], strides = [1, 1]} : vector<8x2048xf32> to vector<8x512xf32>
    %59 = vector.extract_strided_slice %54 {offsets = [0, 1536], sizes = [8, 512], strides = [1, 1]} : vector<8x2048xf32> to vector<8x512xf32>
    %60 = arith.maximumf %58, %59 : vector<8x512xf32>
    %61 = arith.maximumf %57, %60 : vector<8x512xf32>
    %c0_16 = arith.constant 0 : index
    %c0_17 = arith.constant 0 : index
    %62 = vector.load %arg3[%c0_16, %c0_17] : memref<512x6400xf32, #tpu.memory_space<vmem>>, vector<512x6400xf32>
    %cst_18 = arith.constant dense<0.000000e+00> : vector<8x6400xf32>
    %63 = tpu.matmul %61, %62, %cst_18 {dimension_numbers = #tpu.dot_dimension_numbers<[1], [0], [0], [1], [0, 0, 1, 1], [], []>} : vector<8x512xf32>, vector<512x6400xf32>, vector<8x6400xf32> -> vector<8x6400xf32>
    %64 = vector.extract_strided_slice %63 {offsets = [0, 0], sizes = [8, 256], strides = [1, 1]} : vector<8x6400xf32> to vector<8x256xf32>
    %c0_19 = arith.constant 0 : index
    %c0_20 = arith.constant 0 : index
    %65 = vector.load %arg14[%c0_19, %c0_20] : memref<200x256xf32, #tpu.memory_space<vmem>>, vector<8x256xf32>
    tpu.vector_store %arg14[%c0_19, %c0_20], %64 {strides = array<i32>} : memref<200x256xf32, #tpu.memory_space<vmem>>, vector<8x256xf32>,
    %66 = vector.extract_strided_slice %63 {offsets = [0, 256], sizes = [8, 256], strides = [1, 1]} : vector<8x6400xf32> to vector<8x256xf32>
    %c8 = arith.constant 8 : index
    %c0_21 = arith.constant 0 : index
    %67 = vector.load %arg14[%c8, %c0_21] : memref<200x256xf32, #tpu.memory_space<vmem>>, vector<8x256xf32>
    tpu.vector_store %arg14[%c8, %c0_21], %66 {strides = array<i32>} : memref<200x256xf32, #tpu.memory_space<vmem>>, vector<8x256xf32>,
    %68 = vector.extract_strided_slice %63 {offsets = [0, 512], sizes = [8, 256], strides = [1, 1]} : vector<8x6400xf32> to vector<8x256xf32>
    %c16 = arith.constant 16 : index
    %c0_22 = arith.constant 0 : index
    %69 = vector.load %arg14[%c16, %c0_22] : memref<200x256xf32, #tpu.memory_space<vmem>>, vector<8x256xf32>
    tpu.vector_store %arg14[%c16, %c0_22], %68 {strides = array<i32>} : memref<200x256xf32, #tpu.memory_space<vmem>>, vector<8x256xf32>,
    %70 = vector.extract_strided_slice %63 {offsets = [0, 768], sizes = [8, 256], strides = [1, 1]} : vector<8x6400xf32> to vector<8x256xf32>
    %c24 = arith.constant 24 : index
    %c0_23 = arith.constant 0 : index
    %71 = vector.load %arg14[%c24, %c0_23] : memref<200x256xf32, #tpu.memory_space<vmem>>, vector<8x256xf32>
    tpu.vector_store %arg14[%c24, %c0_23], %70 {strides = array<i32>} : memref<200x256xf32, #tpu.memory_space<vmem>>, vector<8x256xf32>,
    %72 = vector.extract_strided_slice %63 {offsets = [0, 1024], sizes = [8, 256], strides = [1, 1]} : vector<8x6400xf32> to vector<8x256xf32>
    %c32 = arith.constant 32 : index
    %c0_24 = arith.constant 0 : index
    %73 = vector.load %arg14[%c32, %c0_24] : memref<200x256xf32, #tpu.memory_space<vmem>>, vector<8x256xf32>
    tpu.vector_store %arg14[%c32, %c0_24], %72 {strides = array<i32>} : memref<200x256xf32, #tpu.memory_space<vmem>>, vector<8x256xf32>,
    %74 = vector.extract_strided_slice %63 {offsets = [0, 1280], sizes = [8, 256], strides = [1, 1]} : vector<8x6400xf32> to vector<8x256xf32>
    %c40 = arith.constant 40 : index
    %c0_25 = arith.constant 0 : index
    %75 = vector.load %arg14[%c40, %c0_25] : memref<200x256xf32, #tpu.memory_space<vmem>>, vector<8x256xf32>
    tpu.vector_store %arg14[%c40, %c0_25], %74 {strides = array<i32>} : memref<200x256xf32, #tpu.memory_space<vmem>>, vector<8x256xf32>,
    %76 = vector.extract_strided_slice %63 {offsets = [0, 1536], sizes = [8, 256], strides = [1, 1]} : vector<8x6400xf32> to vector<8x256xf32>
    %c48 = arith.constant 48 : index
    %c0_26 = arith.constant 0 : index
    %77 = vector.load %arg14[%c48, %c0_26] : memref<200x256xf32, #tpu.memory_space<vmem>>, vector<8x256xf32>
    tpu.vector_store %arg14[%c48, %c0_26], %76 {strides = array<i32>} : memref<200x256xf32, #tpu.memory_space<vmem>>, vector<8x256xf32>,
    %78 = vector.extract_strided_slice %63 {offsets = [0, 1792], sizes = [8, 256], strides = [1, 1]} : vector<8x6400xf32> to vector<8x256xf32>
    %c56 = arith.constant 56 : index
    %c0_27 = arith.constant 0 : index
    %79 = vector.load %arg14[%c56, %c0_27] : memref<200x256xf32, #tpu.memory_space<vmem>>, vector<8x256xf32>
    tpu.vector_store %arg14[%c56, %c0_27], %78 {strides = array<i32>} : memref<200x256xf32, #tpu.memory_space<vmem>>, vector<8x256xf32>,
    %80 = vector.extract_strided_slice %63 {offsets = [0, 2048], sizes = [8, 256], strides = [1, 1]} : vector<8x6400xf32> to vector<8x256xf32>
    %c64 = arith.constant 64 : index
    %c0_28 = arith.constant 0 : index
    %81 = vector.load %arg14[%c64, %c0_28] : memref<200x256xf32, #tpu.memory_space<vmem>>, vector<8x256xf32>
    tpu.vector_store %arg14[%c64, %c0_28], %80 {strides = array<i32>} : memref<200x256xf32, #tpu.memory_space<vmem>>, vector<8x256xf32>,
    %82 = vector.extract_strided_slice %63 {offsets = [0, 2304], sizes = [8, 256], strides = [1, 1]} : vector<8x6400xf32> to vector<8x256xf32>
    %c72 = arith.constant 72 : index
    %c0_29 = arith.constant 0 : index
    %83 = vector.load %arg14[%c72, %c0_29] : memref<200x256xf32, #tpu.memory_space<vmem>>, vector<8x256xf32>
    tpu.vector_store %arg14[%c72, %c0_29], %82 {strides = array<i32>} : memref<200x256xf32, #tpu.memory_space<vmem>>, vector<8x256xf32>,
    %84 = vector.extract_strided_slice %63 {offsets = [0, 2560], sizes = [8, 256], strides = [1, 1]} : vector<8x6400xf32> to vector<8x256xf32>
    %c80 = arith.constant 80 : index
    %c0_30 = arith.constant 0 : index
    %85 = vector.load %arg14[%c80, %c0_30] : memref<200x256xf32, #tpu.memory_space<vmem>>, vector<8x256xf32>
    tpu.vector_store %arg14[%c80, %c0_30], %84 {strides = array<i32>} : memref<200x256xf32, #tpu.memory_space<vmem>>, vector<8x256xf32>,
    %86 = vector.extract_strided_slice %63 {offsets = [0, 2816], sizes = [8, 256], strides = [1, 1]} : vector<8x6400xf32> to vector<8x256xf32>
    %c88 = arith.constant 88 : index
    %c0_31 = arith.constant 0 : index
    %87 = vector.load %arg14[%c88, %c0_31] : memref<200x256xf32, #tpu.memory_space<vmem>>, vector<8x256xf32>
    tpu.vector_store %arg14[%c88, %c0_31], %86 {strides = array<i32>} : memref<200x256xf32, #tpu.memory_space<vmem>>, vector<8x256xf32>,
    %88 = vector.extract_strided_slice %63 {offsets = [0, 3072], sizes = [8, 256], strides = [1, 1]} : vector<8x6400xf32> to vector<8x256xf32>
    %c96 = arith.constant 96 : index
    %c0_32 = arith.constant 0 : index
    %89 = vector.load %arg14[%c96, %c0_32] : memref<200x256xf32, #tpu.memory_space<vmem>>, vector<8x256xf32>
    tpu.vector_store %arg14[%c96, %c0_32], %88 {strides = array<i32>} : memref<200x256xf32, #tpu.memory_space<vmem>>, vector<8x256xf32>,
    %90 = vector.extract_strided_slice %63 {offsets = [0, 3328], sizes = [8, 256], strides = [1, 1]} : vector<8x6400xf32> to vector<8x256xf32>
    %c104 = arith.constant 104 : index
    %c0_33 = arith.constant 0 : index
    %91 = vector.load %arg14[%c104, %c0_33] : memref<200x256xf32, #tpu.memory_space<vmem>>, vector<8x256xf32>
    tpu.vector_store %arg14[%c104, %c0_33], %90 {strides = array<i32>} : memref<200x256xf32, #tpu.memory_space<vmem>>, vector<8x256xf32>,
    %92 = vector.extract_strided_slice %63 {offsets = [0, 3584], sizes = [8, 256], strides = [1, 1]} : vector<8x6400xf32> to vector<8x256xf32>
    %c112 = arith.constant 112 : index
    %c0_34 = arith.constant 0 : index
    %93 = vector.load %arg14[%c112, %c0_34] : memref<200x256xf32, #tpu.memory_space<vmem>>, vector<8x256xf32>
    tpu.vector_store %arg14[%c112, %c0_34], %92 {strides = array<i32>} : memref<200x256xf32, #tpu.memory_space<vmem>>, vector<8x256xf32>,
    %94 = vector.extract_strided_slice %63 {offsets = [0, 3840], sizes = [8, 256], strides = [1, 1]} : vector<8x6400xf32> to vector<8x256xf32>
    %c120 = arith.constant 120 : index
    %c0_35 = arith.constant 0 : index
    %95 = vector.load %arg14[%c120, %c0_35] : memref<200x256xf32, #tpu.memory_space<vmem>>, vector<8x256xf32>
    tpu.vector_store %arg14[%c120, %c0_35], %94 {strides = array<i32>} : memref<200x256xf32, #tpu.memory_space<vmem>>, vector<8x256xf32>,
    %96 = vector.extract_strided_slice %63 {offsets = [0, 4096], sizes = [8, 256], strides = [1, 1]} : vector<8x6400xf32> to vector<8x256xf32>
    %c128 = arith.constant 128 : index
    %c0_36 = arith.constant 0 : index
    %97 = vector.load %arg14[%c128, %c0_36] : memref<200x256xf32, #tpu.memory_space<vmem>>, vector<8x256xf32>
    tpu.vector_store %arg14[%c128, %c0_36], %96 {strides = array<i32>} : memref<200x256xf32, #tpu.memory_space<vmem>>, vector<8x256xf32>,
    %98 = vector.extract_strided_slice %63 {offsets = [0, 4352], sizes = [8, 256], strides = [1, 1]} : vector<8x6400xf32> to vector<8x256xf32>
    %c136 = arith.constant 136 : index
    %c0_37 = arith.constant 0 : index
    %99 = vector.load %arg14[%c136, %c0_37] : memref<200x256xf32, #tpu.memory_space<vmem>>, vector<8x256xf32>
    tpu.vector_store %arg14[%c136, %c0_37], %98 {strides = array<i32>} : memref<200x256xf32, #tpu.memory_space<vmem>>, vector<8x256xf32>,
    %100 = vector.extract_strided_slice %63 {offsets = [0, 4608], sizes = [8, 256], strides = [1, 1]} : vector<8x6400xf32> to vector<8x256xf32>
    %c144 = arith.constant 144 : index
    %c0_38 = arith.constant 0 : index
    %101 = vector.load %arg14[%c144, %c0_38] : memref<200x256xf32, #tpu.memory_space<vmem>>, vector<8x256xf32>
    tpu.vector_store %arg14[%c144, %c0_38], %100 {strides = array<i32>} : memref<200x256xf32, #tpu.memory_space<vmem>>, vector<8x256xf32>,
    %102 = vector.extract_strided_slice %63 {offsets = [0, 4864], sizes = [8, 256], strides = [1, 1]} : vector<8x6400xf32> to vector<8x256xf32>
    %c152 = arith.constant 152 : index
    %c0_39 = arith.constant 0 : index
    %103 = vector.load %arg14[%c152, %c0_39] : memref<200x256xf32, #tpu.memory_space<vmem>>, vector<8x256xf32>
    tpu.vector_store %arg14[%c152, %c0_39], %102 {strides = array<i32>} : memref<200x256xf32, #tpu.memory_space<vmem>>, vector<8x256xf32>,
    %104 = vector.extract_strided_slice %63 {offsets = [0, 5120], sizes = [8, 256], strides = [1, 1]} : vector<8x6400xf32> to vector<8x256xf32>
    %c160 = arith.constant 160 : index
    %c0_40 = arith.constant 0 : index
    %105 = vector.load %arg14[%c160, %c0_40] : memref<200x256xf32, #tpu.memory_space<vmem>>, vector<8x256xf32>
    tpu.vector_store %arg14[%c160, %c0_40], %104 {strides = array<i32>} : memref<200x256xf32, #tpu.memory_space<vmem>>, vector<8x256xf32>,
    %106 = vector.extract_strided_slice %63 {offsets = [0, 5376], sizes = [8, 256], strides = [1, 1]} : vector<8x6400xf32> to vector<8x256xf32>
    %c168 = arith.constant 168 : index
    %c0_41 = arith.constant 0 : index
    %107 = vector.load %arg14[%c168, %c0_41] : memref<200x256xf32, #tpu.memory_space<vmem>>, vector<8x256xf32>
    tpu.vector_store %arg14[%c168, %c0_41], %106 {strides = array<i32>} : memref<200x256xf32, #tpu.memory_space<vmem>>, vector<8x256xf32>,
    %108 = vector.extract_strided_slice %63 {offsets = [0, 5632], sizes = [8, 256], strides = [1, 1]} : vector<8x6400xf32> to vector<8x256xf32>
    %c176 = arith.constant 176 : index
    %c0_42 = arith.constant 0 : index
    %109 = vector.load %arg14[%c176, %c0_42] : memref<200x256xf32, #tpu.memory_space<vmem>>, vector<8x256xf32>
    tpu.vector_store %arg14[%c176, %c0_42], %108 {strides = array<i32>} : memref<200x256xf32, #tpu.memory_space<vmem>>, vector<8x256xf32>,
    %110 = vector.extract_strided_slice %63 {offsets = [0, 5888], sizes = [8, 256], strides = [1, 1]} : vector<8x6400xf32> to vector<8x256xf32>
    %c184 = arith.constant 184 : index
    %c0_43 = arith.constant 0 : index
    %111 = vector.load %arg14[%c184, %c0_43] : memref<200x256xf32, #tpu.memory_space<vmem>>, vector<8x256xf32>
    tpu.vector_store %arg14[%c184, %c0_43], %110 {strides = array<i32>} : memref<200x256xf32, #tpu.memory_space<vmem>>, vector<8x256xf32>,
    %112 = vector.extract_strided_slice %63 {offsets = [0, 6144], sizes = [8, 256], strides = [1, 1]} : vector<8x6400xf32> to vector<8x256xf32>
    %c192 = arith.constant 192 : index
    %c0_44 = arith.constant 0 : index
    %113 = vector.load %arg14[%c192, %c0_44] : memref<200x256xf32, #tpu.memory_space<vmem>>, vector<8x256xf32>
    tpu.vector_store %arg14[%c192, %c0_44], %112 {strides = array<i32>} : memref<200x256xf32, #tpu.memory_space<vmem>>, vector<8x256xf32>,
    %c0_45 = arith.constant 0 : index
    %c0_46 = arith.constant 0 : index
    %114 = vector.load %arg5[%c0_45, %c0_46] : memref<16x3xf32, #tpu.memory_space<vmem>>, vector<16x1xf32>
    %c0_47 = arith.constant 0 : index
    %c1_48 = arith.constant 1 : index
    %115 = vector.load %arg5[%c0_47, %c1_48] : memref<16x3xf32, #tpu.memory_space<vmem>>, vector<16x1xf32>
    %c0_49 = arith.constant 0 : index
    %c2_50 = arith.constant 2 : index
    %116 = vector.load %arg5[%c0_49, %c2_50] : memref<16x3xf32, #tpu.memory_space<vmem>>, vector<16x1xf32>
    %c0_51 = arith.constant 0 : index
    %c0_52 = arith.constant 0 : index
    %117 = vector.load %arg4[%c0_51, %c0_52] : memref<16x200xf32, #tpu.memory_space<vmem>>, vector<16x200xf32>
    %c0_53 = arith.constant 0 : index
    %c0_54 = arith.constant 0 : index
    %118 = vector.load %arg14[%c0_53, %c0_54] : memref<200x256xf32, #tpu.memory_space<vmem>>, vector<200x256xf32>
    %cst_55 = arith.constant dense<0.000000e+00> : vector<16x256xf32>
    %119 = tpu.matmul %117, %118, %cst_55 {dimension_numbers = #tpu.dot_dimension_numbers<[1], [0], [0], [1], [0, 0, 1, 1], [], []>} : vector<16x200xf32>, vector<200x256xf32>, vector<16x256xf32> -> vector<16x256xf32>
    %120 = vector.broadcast %114 : vector<16x1xf32> to vector<16x256xf32>
    %121 = arith.addf %119, %120 : vector<16x256xf32>
    %122 = tpu.iota {dimensions = array<i32: 1>} : vector<1x256xi32>
    %c64_i32 = arith.constant 64 : i32
    %c0_i32_56 = arith.constant 0 : i32
    %123 = arith.cmpi eq, %c64_i32, %c0_i32_56 : i32
    %c1_i32_57 = arith.constant 1 : i32
    %124 = arith.select %123, %c1_i32_57, %c64_i32 : i32
    %125 = vector.broadcast %124 : i32 to vector<1x256xi32>
    %126 = arith.remsi %122, %125 : vector<1x256xi32>
    %c0_i32_58 = arith.constant 0 : i32
    %127 = vector.broadcast %c0_i32_58 : i32 to vector<1x256xi32>
    %128 = arith.cmpi ne, %126, %127 : vector<1x256xi32>
    %c0_i32_59 = arith.constant 0 : i32
    %129 = vector.broadcast %c0_i32_59 : i32 to vector<1x256xi32>
    %130 = arith.cmpi slt, %126, %129 : vector<1x256xi32>
    %c0_i32_60 = arith.constant 0 : i32
    %131 = arith.cmpi slt, %124, %c0_i32_60 : i32
    %132 = vector.broadcast %131 : i1 to vector<1x256xi1>
    %133 = vector.broadcast %132 : vector<1x256xi1> to vector<1x256xi1>
    %134 = arith.xori %130, %133 : vector<1x256xi1>
    %135 = arith.andi %134, %128 : vector<1x256xi1>
    %136 = vector.broadcast %124 : i32 to vector<1x256xi32>
    %137 = arith.addi %126, %136 : vector<1x256xi32>
    %138 = arith.select %135, %137, %126 : vector<1x256xi1>, vector<1x256xi32>
    %c50_i32 = arith.constant 50 : i32
    %139 = vector.broadcast %c50_i32 : i32 to vector<1x256xi32>
    %140 = arith.cmpi slt, %138, %139 : vector<1x256xi32>
    %141 = arith.extui %140 : vector<1x256xi1> to vector<1x256xi32>
    %142 = arith.sitofp %141 : vector<1x256xi32> to vector<1x256xf32>
    %143 = vector.broadcast %142 : vector<1x256xf32> to vector<16x256xf32>
    %144 = arith.mulf %121, %143 : vector<16x256xf32>
    %cst_61 = arith.constant dense<0.000000e+00> : vector<16xf32>
    %145 = vector.multi_reduction <add>, %144, %cst_61 [1] : vector<16x256xf32> to vector<16xf32>
    %146 = vector.shape_cast %145 : vector<16xf32> to vector<16x1xf32>
    %cst_62 = arith.constant 5.000000e-03 : f32
    %147 = vector.broadcast %cst_62 : f32 to vector<16x1xf32>
    %148 = arith.mulf %146, %147 : vector<16x1xf32>
    %149 = arith.mulf %144, %144 : vector<16x256xf32>
    %cst_63 = arith.constant dense<0.000000e+00> : vector<16xf32>
    %150 = vector.multi_reduction <add>, %149, %cst_63 [1] : vector<16x256xf32> to vector<16xf32>
    %151 = vector.shape_cast %150 : vector<16xf32> to vector<16x1xf32>
    %cst_64 = arith.constant 5.000000e-03 : f32
    %152 = vector.broadcast %cst_64 : f32 to vector<16x1xf32>
    %153 = arith.mulf %151, %152 : vector<16x1xf32>
    %154 = vector.broadcast %148 : vector<16x1xf32> to vector<16x256xf32>
    %155 = arith.subf %144, %154 : vector<16x256xf32>
    %156 = arith.mulf %148, %148 : vector<16x1xf32>
    %157 = arith.subf %153, %156 : vector<16x1xf32>
    %cst_65 = arith.constant 9.99999974E-6 : f32
    %158 = vector.broadcast %cst_65 : f32 to vector<16x1xf32>
    %159 = arith.addf %157, %158 : vector<16x1xf32>
    %160 = math.rsqrt %159 : vector<16x1xf32>
    %161 = vector.broadcast %160 : vector<16x1xf32> to vector<16x256xf32>
    %162 = arith.mulf %155, %161 : vector<16x256xf32>
    %163 = vector.broadcast %115 : vector<16x1xf32> to vector<16x256xf32>
    %164 = arith.mulf %162, %163 : vector<16x256xf32>
    %165 = vector.broadcast %116 : vector<16x1xf32> to vector<16x256xf32>
    %166 = arith.addf %164, %165 : vector<16x256xf32>
    %cst_66 = arith.constant 0.000000e+00 : f32
    %167 = vector.broadcast %cst_66 : f32 to vector<16x256xf32>
    %168 = arith.maximumf %166, %167 : vector<16x256xf32>
    %169 = vector.extract_strided_slice %168 {offsets = [0, 0], sizes = [16, 64], strides = [1, 1]} : vector<16x256xf32> to vector<16x64xf32>
    %170 = vector.extract_strided_slice %168 {offsets = [0, 64], sizes = [16, 64], strides = [1, 1]} : vector<16x256xf32> to vector<16x64xf32>
    %171 = arith.maximumf %169, %170 : vector<16x64xf32>
    %172 = vector.extract_strided_slice %168 {offsets = [0, 128], sizes = [16, 64], strides = [1, 1]} : vector<16x256xf32> to vector<16x64xf32>
    %173 = vector.extract_strided_slice %168 {offsets = [0, 192], sizes = [16, 64], strides = [1, 1]} : vector<16x256xf32> to vector<16x64xf32>
    %174 = arith.maximumf %172, %173 : vector<16x64xf32>
    %175 = arith.maximumf %171, %174 : vector<16x64xf32>
    %c0_67 = arith.constant 0 : index
    %c0_68 = arith.constant 0 : index
    %176 = vector.load %arg6[%c0_67, %c0_68] : memref<400x16xf32, #tpu.memory_space<vmem>>, vector<400x16xf32>
    %cst_69 = arith.constant dense<0.000000e+00> : vector<400x64xf32>
    %177 = tpu.matmul %176, %175, %cst_69 {dimension_numbers = #tpu.dot_dimension_numbers<[1], [0], [0], [1], [0, 0, 1, 1], [], []>} : vector<400x16xf32>, vector<16x64xf32>, vector<400x64xf32> -> vector<400x64xf32>
    %c0_70 = arith.constant 0 : index
    %c0_71 = arith.constant 0 : index
    %178 = vector.load %arg7[%c0_70, %c0_71] : memref<400x64xf32, #tpu.memory_space<vmem>>, vector<400x64xf32>
    %179 = arith.mulf %177, %178 : vector<400x64xf32>
    %c0_72 = arith.constant 0 : index
    %c0_73 = arith.constant 0 : index
    %180 = vector.load %arg8[%c0_72, %c0_73] : memref<64x2xf32, #tpu.memory_space<vmem>>, vector<64x2xf32>
    %cst_74 = arith.constant dense<0.000000e+00> : vector<400x2xf32>
    %181 = tpu.matmul %179, %180, %cst_74 {dimension_numbers = #tpu.dot_dimension_numbers<[1], [0], [0], [1], [0, 0, 1, 1], [], []>} : vector<400x64xf32>, vector<64x2xf32>, vector<400x2xf32> -> vector<400x2xf32>
    %c0_75 = arith.constant 0 : index
    %c0_76 = arith.constant 0 : index
    %182 = vector.load %arg12[%c0_75, %c0_76] : memref<120x3xf32, #tpu.memory_space<vmem>>, vector<120x1xf32>
    %c0_77 = arith.constant 0 : index
    %c1_78 = arith.constant 1 : index
    %183 = vector.load %arg12[%c0_77, %c1_78] : memref<120x3xf32, #tpu.memory_space<vmem>>, vector<84x1xf32>
    %c0_79 = arith.constant 0 : index
    %c2_80 = arith.constant 2 : index
    %184 = vector.load %arg12[%c0_79, %c2_80] : memref<120x3xf32, #tpu.memory_space<vmem>>, vector<10x1xf32>
    %c0_81 = arith.constant 0 : index
    %c0_82 = arith.constant 0 : index
    %185 = vector.load %arg9[%c0_81, %c0_82] : memref<120x400xf32, #tpu.memory_space<vmem>>, vector<120x400xf32>
    %cst_83 = arith.constant dense<0.000000e+00> : vector<120x2xf32>
    %186 = tpu.matmul %185, %181, %cst_83 {dimension_numbers = #tpu.dot_dimension_numbers<[1], [0], [0], [1], [0, 0, 1, 1], [], []>} : vector<120x400xf32>, vector<400x2xf32>, vector<120x2xf32> -> vector<120x2xf32>
    %187 = vector.broadcast %182 : vector<120x1xf32> to vector<120x2xf32>
    %188 = arith.addf %186, %187 : vector<120x2xf32>
    %cst_84 = arith.constant 0.000000e+00 : f32
    %189 = vector.broadcast %cst_84 : f32 to vector<120x2xf32>
    %190 = arith.maximumf %188, %189 : vector<120x2xf32>
    %c0_85 = arith.constant 0 : index
    %c0_86 = arith.constant 0 : index
    %191 = vector.load %arg10[%c0_85, %c0_86] : memref<84x120xf32, #tpu.memory_space<vmem>>, vector<84x120xf32>
    %cst_87 = arith.constant dense<0.000000e+00> : vector<84x2xf32>
    %192 = tpu.matmul %191, %190, %cst_87 {dimension_numbers = #tpu.dot_dimension_numbers<[1], [0], [0], [1], [0, 0, 1, 1], [], []>} : vector<84x120xf32>, vector<120x2xf32>, vector<84x2xf32> -> vector<84x2xf32>
    %193 = vector.broadcast %183 : vector<84x1xf32> to vector<84x2xf32>
    %194 = arith.addf %192, %193 : vector<84x2xf32>
    %cst_88 = arith.constant 0.000000e+00 : f32
    %195 = vector.broadcast %cst_88 : f32 to vector<84x2xf32>
    %196 = arith.maximumf %194, %195 : vector<84x2xf32>
    %c0_89 = arith.constant 0 : index
    %c0_90 = arith.constant 0 : index
    %197 = vector.load %arg11[%c0_89, %c0_90] : memref<10x84xf32, #tpu.memory_space<vmem>>, vector<10x84xf32>
    %cst_91 = arith.constant dense<0.000000e+00> : vector<10x2xf32>
    %198 = tpu.matmul %197, %196, %cst_91 {dimension_numbers = #tpu.dot_dimension_numbers<[1], [0], [0], [1], [0, 0, 1, 1], [], []>} : vector<10x84xf32>, vector<84x2xf32>, vector<10x2xf32> -> vector<10x2xf32>
    %199 = vector.broadcast %184 : vector<10x1xf32> to vector<10x2xf32>
    %200 = arith.addf %198, %199 : vector<10x2xf32>
    %c0_92 = arith.constant 0 : index
    %c0_93 = arith.constant 0 : index
    %201 = vector.load %arg13[%c0_92, %c0_93] : memref<10x2xf32, #tpu.memory_space<vmem>>, vector<10x2xf32>
    tpu.vector_store %arg13[%c0_92, %c0_93], %200 {strides = array<i32>} : memref<10x2xf32, #tpu.memory_space<vmem>>, vector<10x2xf32>,
    return
  }
}

</mosaic_0001>

<llo_original>
// kernel: lenet5_forward.1
$region0: #{lenet5_forward.1}
  #allocation0 [shape = 'u32[]', space=smem, size = 0x4, offset = 0x4, fixed_abs, tag = 'smem constant byte address 0x4 - core index']
  #allocation1 [shape = 'u32[72,128]{1,0:T(1,128)}', space=vmem, size = 0x9000, scoped, tag = 'internal scratch']
  #allocation2 [shape = 'f32[200,256]{1,0:T(8,128)}', space=vmem, size = 0x32000, scoped, tag = 'scratch operand']
  %s0 = inlined_call_operand.vmem [shape: f32[75,2048], index: 0, kind: input, shape index: {}]
  %s1 = inlined_call_operand.vmem [shape: f32[8,75], index: 1, kind: input, shape index: {}]
  %s2 = inlined_call_operand.vmem [shape: f32[8,3], index: 2, kind: input, shape index: {}]
  %s3 = inlined_call_operand.vmem [shape: f32[512,6400], index: 3, kind: input, shape index: {}]
  %s4 = inlined_call_operand.vmem [shape: f32[16,200], index: 4, kind: input, shape index: {}]
  %s5 = inlined_call_operand.vmem [shape: f32[16,3], index: 5, kind: input, shape index: {}]
  %s6 = inlined_call_operand.vmem [shape: f32[400,16], index: 6, kind: input, shape index: {}]
  %s7 = inlined_call_operand.vmem [shape: f32[400,64], index: 7, kind: input, shape index: {}]
  %s8 = inlined_call_operand.vmem [shape: f32[64,2], index: 8, kind: input, shape index: {}]
  %s9 = inlined_call_operand.vmem [shape: f32[120,400], index: 9, kind: input, shape index: {}]
  %s10 = inlined_call_operand.vmem [shape: f32[84,120], index: 10, kind: input, shape index: {}]
  %s11 = inlined_call_operand.vmem [shape: f32[10,84], index: 11, kind: input, shape index: {}]
  %s12 = inlined_call_operand.vmem [shape: f32[120,3], index: 12, kind: input, shape index: {}]
  %s13 = inlined_call_operand.vmem [shape: f32[10,2], index: 13, kind: output, shape index: {}]
  %s14 = sld [smem:[#allocation0]]
  $region62: #{lenet5_forward.1} parent=0
    _
  %s16 = ssub.s32 1, %s14
  %s17 = scalar_select 0, %s16, %s14
  // Predicated region
  $region2: #{lenet5_forward.1} parent=0 // pred_check
    _
  $region3: #{lenet5_forward.1} parent=0 // pred_check_branch
    %19 = sbr.rel (0) target = $region5
  $region4: #{lenet5_forward.1} parent=0 // pred_region
    _
  $region5: #{lenet5_forward.1} parent=0 // pred_fallthru
    _
  // Predicated region
  $region6: #{lenet5_forward.1} parent=0 // pred_check
    _
  $region7: #{lenet5_forward.1} parent=0 // pred_check_branch
    %21 = sbr.rel (0) target = $region9
  $region8: #{lenet5_forward.1} parent=0 // pred_region
    _
  $region9: #{lenet5_forward.1} parent=0 // pred_fallthru
    _
  // Predicated region
  $region10: #{lenet5_forward.1} parent=0 // pred_check
    _
  $region11: #{lenet5_forward.1} parent=0 // pred_check_branch
    %23 = sbr.rel (0) target = $region13
  $region12: #{lenet5_forward.1} parent=0 // pred_region
    _
  $region13: #{lenet5_forward.1} parent=0 // pred_fallthru
    _
  // Predicated region
  $region14: #{lenet5_forward.1} parent=0 // pred_check
    _
  $region15: #{lenet5_forward.1} parent=0 // pred_check_branch
    %25 = sbr.rel (0) target = $region17
  $region16: #{lenet5_forward.1} parent=0 // pred_region
    _
  $region17: #{lenet5_forward.1} parent=0 // pred_fallthru
    _
  // Predicated region
  $region18: #{lenet5_forward.1} parent=0 // pred_check
    _
  $region19: #{lenet5_forward.1} parent=0 // pred_check_branch
    %27 = sbr.rel (0) target = $region21
  $region20: #{lenet5_forward.1} parent=0 // pred_region
    _
  $region21: #{lenet5_forward.1} parent=0 // pred_fallthru
    _
  // Predicated region
  $region22: #{lenet5_forward.1} parent=0 // pred_check
    _
  $region23: #{lenet5_forward.1} parent=0 // pred_check_branch
    %29 = sbr.rel (0) target = $region25
  $region24: #{lenet5_forward.1} parent=0 // pred_region
    _
  $region25: #{lenet5_forward.1} parent=0 // pred_fallthru
    _
  // Predicated region
  $region26: #{lenet5_forward.1} parent=0 // pred_check
    _
  $region27: #{lenet5_forward.1} parent=0 // pred_check_branch
    %31 = sbr.rel (0) target = $region29
  $region28: #{lenet5_forward.1} parent=0 // pred_region
    _
  $region29: #{lenet5_forward.1} parent=0 // pred_fallthru
    _
  // Predicated region
  $region30: #{lenet5_forward.1} parent=0 // pred_check
    _
  $region31: #{lenet5_forward.1} parent=0 // pred_check_branch
    %33 = sbr.rel (0) target = $region33
  $region32: #{lenet5_forward.1} parent=0 // pred_region
    _
  $region33: #{lenet5_forward.1} parent=0 // pred_fallthru
    _
  // Predicated region
  $region34: #{lenet5_forward.1} parent=0 // pred_check
    _
  $region35: #{lenet5_forward.1} parent=0 // pred_check_branch
    %35 = sbr.rel (0) target = $region37
  $region36: #{lenet5_forward.1} parent=0 // pred_region
    _
  $region37: #{lenet5_forward.1} parent=0 // pred_fallthru
    _
  // Predicated region
  $region38: #{lenet5_forward.1} parent=0 // pred_check
    _
  $region39: #{lenet5_forward.1} parent=0 // pred_check_branch
    %37 = sbr.rel (0) target = $region41
  $region40: #{lenet5_forward.1} parent=0 // pred_region
    _
  $region41: #{lenet5_forward.1} parent=0 // pred_fallthru
    _
  // Predicated region
  $region42: #{lenet5_forward.1} parent=0 // pred_check
    _
  $region43: #{lenet5_forward.1} parent=0 // pred_check_branch
    %39 = sbr.rel (0) target = $region45
  $region44: #{lenet5_forward.1} parent=0 // pred_region
    _
  $region45: #{lenet5_forward.1} parent=0 // pred_fallthru
    _
  // Predicated region
  $region46: #{lenet5_forward.1} parent=0 // pred_check
    _
  $region47: #{lenet5_forward.1} parent=0 // pred_check_branch
    %41 = sbr.rel (0) target = $region49
  $region48: #{lenet5_forward.1} parent=0 // pred_region
    _
  $region49: #{lenet5_forward.1} parent=0 // pred_fallthru
    _
  // Predicated region
  $region50: #{lenet5_forward.1} parent=0 // pred_check
    _
  $region51: #{lenet5_forward.1} parent=0 // pred_check_branch
    %43 = sbr.rel (0) target = $region53
  $region52: #{lenet5_forward.1} parent=0 // pred_region
    _
  $region53: #{lenet5_forward.1} parent=0 // pred_fallthru
    _
  %v44 = vld [vmem:[%s2] sm:$0xff]
  %v45 = vld [vmem:[%s1] sm:$0xff]
  %v46 = vld [vmem:[%s0] sm:$0xff]
  %v47 = vld [vmem:[%s0 + $0x8] sm:$0xff]
  %v48 = vld [vmem:[%s0 + $0x10] sm:$0xff]
  %v49 = vld [vmem:[%s0 + $0x18] sm:$0xff]
  %v50 = vld [vmem:[%s0 + $0x20] sm:$0xff]
  %v51 = vld [vmem:[%s0 + $0x28] sm:$0xff]
  %v52 = vld [vmem:[%s0 + $0x30] sm:$0xff]
  %v53 = vld [vmem:[%s0 + $0x38] sm:$0xff]
  %v54 = vld [vmem:[%s0 + $0x40] sm:$0xff]
  %v55 = vld [vmem:[%s0 + $0x48] sm:$0xff]
  %v56 = vld [vmem:[%s0 + $0x50] sm:$0xff]
  %v57 = vld [vmem:[%s0 + $0x58] sm:$0xff]
  %v58 = vld [vmem:[%s0 + $0x60] sm:$0xff]
  %v59 = vld [vmem:[%s0 + $0x68] sm:$0xff]
  %v60 = vld [vmem:[%s0 + $0x70] sm:$0xff]
  %v61 = vld [vmem:[%s0 + $0x78] sm:$0xff]
  %v62 = vld [vmem:[%s0 + $0x80] sm:$0xff]
  %v63 = vld [vmem:[%s0 + $0x88] sm:$0xff]
  %v64 = vld [vmem:[%s0 + $0x90] sm:$0xff]
  %v65 = vld [vmem:[%s0 + $0x98] sm:$0xff]
  %v66 = vld [vmem:[%s0 + $0xa0] sm:$0xff]
  %v67 = vld [vmem:[%s0 + $0xa8] sm:$0xff]
  %v68 = vld [vmem:[%s0 + $0xb0] sm:$0xff]
  %v69 = vld [vmem:[%s0 + $0xb8] sm:$0xff]
  %v70 = vld [vmem:[%s0 + $0xc0] sm:$0xff]
  %v71 = vld [vmem:[%s0 + $0xc8] sm:$0xff]
  %v72 = vld [vmem:[%s0 + $0xd0] sm:$0xff]
  %v73 = vld [vmem:[%s0 + $0xd8] sm:$0xff]
  %v74 = vld [vmem:[%s0 + $0xe0] sm:$0xff]
  %v75 = vld [vmem:[%s0 + $0xe8] sm:$0xff]
  %v76 = vld [vmem:[%s0 + $0xf0] sm:$0xff]
  %v77 = vld [vmem:[%s0 + $0xf8] sm:$0xff]
  %v78 = vld [vmem:[%s0 + $0x100] sm:$0xff]
  %v79 = vld [vmem:[%s0 + $0x108] sm:$0xff]
  %v80 = vld [vmem:[%s0 + $0x110] sm:$0xff]
  %v81 = vld [vmem:[%s0 + $0x118] sm:$0xff]
  %v82 = vld [vmem:[%s0 + $0x120] sm:$0xff]
  %v83 = vld [vmem:[%s0 + $0x128] sm:$0xff]
  %v84 = vld [vmem:[%s0 + $0x130] sm:$0xff]
  %v85 = vld [vmem:[%s0 + $0x138] sm:$0xff]
  %v86 = vld [vmem:[%s0 + $0x140] sm:$0xff]
  %v87 = vld [vmem:[%s0 + $0x148] sm:$0xff]
  %v88 = vld [vmem:[%s0 + $0x150] sm:$0xff]
  %v89 = vld [vmem:[%s0 + $0x158] sm:$0xff]
  %v90 = vld [vmem:[%s0 + $0x160] sm:$0xff]
  %v91 = vld [vmem:[%s0 + $0x168] sm:$0xff]
  %v92 = vld [vmem:[%s0 + $0x170] sm:$0xff]
  %v93 = vld [vmem:[%s0 + $0x178] sm:$0xff]
  %v94 = vld [vmem:[%s0 + $0x180] sm:$0xff]
  %v95 = vld [vmem:[%s0 + $0x188] sm:$0xff]
  %v96 = vld [vmem:[%s0 + $0x190] sm:$0xff]
  %v97 = vld [vmem:[%s0 + $0x198] sm:$0xff]
  %v98 = vld [vmem:[%s0 + $0x1a0] sm:$0xff]
  %v99 = vld [vmem:[%s0 + $0x1a8] sm:$0xff]
  %v100 = vld [vmem:[%s0 + $0x1b0] sm:$0xff]
  %v101 = vld [vmem:[%s0 + $0x1b8] sm:$0xff]
  %v102 = vld [vmem:[%s0 + $0x1c0] sm:$0xff]
  %v103 = vld [vmem:[%s0 + $0x1c8] sm:$0xff]
  %v104 = vld [vmem:[%s0 + $0x1d0] sm:$0xff]
  %v105 = vld [vmem:[%s0 + $0x1d8] sm:$0xff]
  %v106 = vld [vmem:[%s0 + $0x1e0] sm:$0xff]
  %v107 = vld [vmem:[%s0 + $0x1e8] sm:$0xff]
  %v108 = vld [vmem:[%s0 + $0x1f0] sm:$0xff]
  %v109 = vld [vmem:[%s0 + $0x1f8] sm:$0xff]
  %v110 = vld [vmem:[%s0 + $0x200] sm:$0xff]
  %v111 = vld [vmem:[%s0 + $0x208] sm:$0xff]
  %v112 = vld [vmem:[%s0 + $0x210] sm:$0xff]
  %v113 = vld [vmem:[%s0 + $0x218] sm:$0xff]
  %v114 = vld [vmem:[%s0 + $0x220] sm:$0xff]
  %v115 = vld [vmem:[%s0 + $0x228] sm:$0xff]
  %v116 = vld [vmem:[%s0 + $0x230] sm:$0xff]
  %v117 = vld [vmem:[%s0 + $0x238] sm:$0xff]
  %v118 = vld [vmem:[%s0 + $0x240] sm:$0xff]
  %v119 = vld [vmem:[%s0 + $0x248] sm:$0xff]
  %v120 = vld [vmem:[%s0 + $0x250] sm:$0xff]
  %v121 = vld [vmem:[%s0 + $0x258] sm:$0xff]
  %v122 = vld [vmem:[%s0 + $0x260] sm:$0xff]
  %v123 = vld [vmem:[%s0 + $0x268] sm:$0xff]
  %v124 = vld [vmem:[%s0 + $0x270] sm:$0xff]
  %v125 = vld [vmem:[%s0 + $0x278] sm:$0xff]
  %v126 = vld [vmem:[%s0 + $0x280] sm:$0xff]
  %v127 = vld [vmem:[%s0 + $0x288] sm:$0xff]
  %v128 = vld [vmem:[%s0 + $0x290] sm:$0xff]
  %v129 = vld [vmem:[%s0 + $0x298] sm:$0xff]
  %v130 = vld [vmem:[%s0 + $0x2a0] sm:$0xff]
  %v131 = vld [vmem:[%s0 + $0x2a8] sm:$0xff]
  %v132 = vld [vmem:[%s0 + $0x2b0] sm:$0xff]
  %v133 = vld [vmem:[%s0 + $0x2b8] sm:$0xff]
  %v134 = vld [vmem:[%s0 + $0x2c0] sm:$0xff]
  %v135 = vld [vmem:[%s0 + $0x2c8] sm:$0xff]
  %v136 = vld [vmem:[%s0 + $0x2d0] sm:$0xff]
  %v137 = vld [vmem:[%s0 + $0x2d8] sm:$0xff]
  %v138 = vld [vmem:[%s0 + $0x2e0] sm:$0xff]
  %v139 = vld [vmem:[%s0 + $0x2e8] sm:$0xff]
  %v140 = vld [vmem:[%s0 + $0x2f0] sm:$0xff]
  %v141 = vld [vmem:[%s0 + $0x2f8] sm:$0xff]
  %v142 = vld [vmem:[%s0 + $0x300] sm:$0xff]
  %v143 = vld [vmem:[%s0 + $0x308] sm:$0xff]
  %v144 = vld [vmem:[%s0 + $0x310] sm:$0xff]
  %v145 = vld [vmem:[%s0 + $0x318] sm:$0xff]
  %v146 = vld [vmem:[%s0 + $0x320] sm:$0xff]
  %v147 = vld [vmem:[%s0 + $0x328] sm:$0xff]
  %v148 = vld [vmem:[%s0 + $0x330] sm:$0xff]
  %v149 = vld [vmem:[%s0 + $0x338] sm:$0xff]
  %v150 = vld [vmem:[%s0 + $0x340] sm:$0xff]
  %v151 = vld [vmem:[%s0 + $0x348] sm:$0xff]
  %v152 = vld [vmem:[%s0 + $0x350] sm:$0xff]
  %v153 = vld [vmem:[%s0 + $0x358] sm:$0xff]
  %v154 = vld [vmem:[%s0 + $0x360] sm:$0xff]
  %v155 = vld [vmem:[%s0 + $0x368] sm:$0xff]
  %v156 = vld [vmem:[%s0 + $0x370] sm:$0xff]
  %v157 = vld [vmem:[%s0 + $0x378] sm:$0xff]
  %v158 = vld [vmem:[%s0 + $0x380] sm:$0xff]
  %v159 = vld [vmem:[%s0 + $0x388] sm:$0xff]
  %v160 = vld [vmem:[%s0 + $0x390] sm:$0xff]
  %v161 = vld [vmem:[%s0 + $0x398] sm:$0xff]
  %v162 = vld [vmem:[%s0 + $0x3a0] sm:$0xff]
  %v163 = vld [vmem:[%s0 + $0x3a8] sm:$0xff]
  %v164 = vld [vmem:[%s0 + $0x3b0] sm:$0xff]
  %v165 = vld [vmem:[%s0 + $0x3b8] sm:$0xff]
  %v166 = vld [vmem:[%s0 + $0x3c0] sm:$0xff]
  %v167 = vld [vmem:[%s0 + $0x3c8] sm:$0xff]
  %v168 = vld [vmem:[%s0 + $0x3d0] sm:$0xff]
  %v169 = vld [vmem:[%s0 + $0x3d8] sm:$0xff]
  %v170 = vld [vmem:[%s0 + $0x3e0] sm:$0xff]
  %v171 = vld [vmem:[%s0 + $0x3e8] sm:$0xff]
  %v172 = vld [vmem:[%s0 + $0x3f0] sm:$0xff]
  %v173 = vld [vmem:[%s0 + $0x3f8] sm:$0xff]
  %v174 = vld [vmem:[%s0 + $0x400] sm:$0xff]
  %v175 = vld [vmem:[%s0 + $0x408] sm:$0xff]
  %v176 = vld [vmem:[%s0 + $0x410] sm:$0xff]
  %v177 = vld [vmem:[%s0 + $0x418] sm:$0xff]
  %v178 = vld [vmem:[%s0 + $0x420] sm:$0xff]
  %v179 = vld [vmem:[%s0 + $0x428] sm:$0xff]
  %v180 = vld [vmem:[%s0 + $0x430] sm:$0xff]
  %v181 = vld [vmem:[%s0 + $0x438] sm:$0xff]
  %v182 = vld [vmem:[%s0 + $0x440] sm:$0xff]
  %v183 = vld [vmem:[%s0 + $0x448] sm:$0xff]
  %v184 = vld [vmem:[%s0 + $0x450] sm:$0xff]
  %v185 = vld [vmem:[%s0 + $0x458] sm:$0xff]
  %v186 = vld [vmem:[%s0 + $0x460] sm:$0xff]
  %v187 = vld [vmem:[%s0 + $0x468] sm:$0xff]
  %v188 = vld [vmem:[%s0 + $0x470] sm:$0xff]
  %v189 = vld [vmem:[%s0 + $0x478] sm:$0xff]
  %v190 = vld [vmem:[%s0 + $0x480] sm:$0x7]
  %v191 = vld [vmem:[%s0 + $0x488] sm:$0x7]
  %v192 = vld [vmem:[%s0 + $0x490] sm:$0x7]
  %v193 = vld [vmem:[%s0 + $0x498] sm:$0x7]
  %v194 = vld [vmem:[%s0 + $0x4a0] sm:$0x7]
  %v195 = vld [vmem:[%s0 + $0x4a8] sm:$0x7]
  %v196 = vld [vmem:[%s0 + $0x4b0] sm:$0x7]
  %v197 = vld [vmem:[%s0 + $0x4b8] sm:$0x7]
  %v198 = vld [vmem:[%s0 + $0x4c0] sm:$0x7]
  %v199 = vld [vmem:[%s0 + $0x4c8] sm:$0x7]
  %v200 = vld [vmem:[%s0 + $0x4d0] sm:$0x7]
  %v201 = vld [vmem:[%s0 + $0x4d8] sm:$0x7]
  %v202 = vld [vmem:[%s0 + $0x4e0] sm:$0x7]
  %v203 = vld [vmem:[%s0 + $0x4e8] sm:$0x7]
  %v204 = vld [vmem:[%s0 + $0x4f0] sm:$0x7]
  %v205 = vld [vmem:[%s0 + $0x4f8] sm:$0x7]
  %207 = vset.pattern.permute.xlu0 0
  %208 = vperm.xlu0 %207, %v44
  %v209 = vpop.permute.xlu0 %208
  %vm211 = vcmask 613376
  %v213 = vsel %vm211, %v45, 0
  %vm215 = vcmask 1042432
  %v217 = vsel %vm215, %v190, 0
  %v220 = vsel %vm215, %v191, 0
  %v223 = vsel %vm215, %v192, 0
  %v226 = vsel %vm215, %v193, 0
  %v229 = vsel %vm215, %v194, 0
  %v232 = vsel %vm215, %v195, 0
  %v235 = vsel %vm215, %v196, 0
  %v238 = vsel %vm215, %v197, 0
  %v241 = vsel %vm215, %v198, 0
  %v244 = vsel %vm215, %v199, 0
  %v247 = vsel %vm215, %v200, 0
  %v250 = vsel %vm215, %v201, 0
  %v253 = vsel %vm215, %v202, 0
  %v256 = vsel %vm215, %v203, 0
  %v259 = vsel %vm215, %v204, 0
  %v262 = vsel %vm215, %v205, 0
  %264 = vmatpush.msra.mxu0 0.0
  %265 = vmatpush.msra.mxu0 0.0
  %266 = vmatpush.msra.mxu0 0.0
  %267 = vmatpush.msra.mxu0 0.0
  %268 = vmatpush.msra.mxu0 0.0
  %269 = vmatpush.msra.mxu0 0.0
  %270 = vmatpush.msra.mxu0 %v217
  %271 = vmatpush.msra.mxu0 %v174
  %272 = vmatpush.msra.mxu0 %v158
  %273 = vmatpush.msra.mxu0 %v142
  %274 = vmatpush.msra.mxu0 %v126
  %275 = vmatpush.msra.mxu0 %v110
  %276 = vmatpush.msra.mxu0 %v94
  %277 = vmatpush.msra.mxu0 %v78
  %278 = vmatpush.msra.mxu0 %v62
  %279 = vmatpush.msra.mxu0 %v46
  %280 = vmatmul.f32.gmra.mxu0 %v213
  %v281 = vpop.f32.mrf.mxu0
  %v282 = vadd.f32 %v209, %v281
  %283 = vdwg.mxu0
  %284 = vmatpush.msra.mxu0 0.0
  %285 = vmatpush.msra.mxu0 0.0
  %286 = vmatpush.msra.mxu0 0.0
  %287 = vmatpush.msra.mxu0 0.0
  %288 = vmatpush.msra.mxu0 0.0
  %289 = vmatpush.msra.mxu0 0.0
  %290 = vmatpush.msra.mxu0 %v220
  %291 = vmatpush.msra.mxu0 %v175
  %292 = vmatpush.msra.mxu0 %v159
  %293 = vmatpush.msra.mxu0 %v143
  %294 = vmatpush.msra.mxu0 %v127
  %295 = vmatpush.msra.mxu0 %v111
  %296 = vmatpush.msra.mxu0 %v95
  %297 = vmatpush.msra.mxu0 %v79
  %298 = vmatpush.msra.mxu0 %v63
  %299 = vmatpush.msra.mxu0 %v47
  %300 = vmatmul.f32.gmra.mxu0 %v213
  %v301 = vpop.f32.mrf.mxu0
  %v302 = vadd.f32 %v209, %v301
  %303 = vdwg.mxu0
  %304 = vmatpush.msra.mxu0 0.0
  %305 = vmatpush.msra.mxu0 0.0
  %306 = vmatpush.msra.mxu0 0.0
  %307 = vmatpush.msra.mxu0 0.0
  %308 = vmatpush.msra.mxu0 0.0
  %309 = vmatpush.msra.mxu0 0.0
  %310 = vmatpush.msra.mxu0 %v223
  %311 = vmatpush.msra.mxu0 %v176
  %312 = vmatpush.msra.mxu0 %v160
  %313 = vmatpush.msra.mxu0 %v144
  %314 = vmatpush.msra.mxu0 %v128
  %315 = vmatpush.msra.mxu0 %v112
  %316 = vmatpush.msra.mxu0 %v96
  %317 = vmatpush.msra.mxu0 %v80
  %318 = vmatpush.msra.mxu0 %v64
  %319 = vmatpush.msra.mxu0 %v48
  %320 = vmatmul.f32.gmra.mxu0 %v213
  %v321 = vpop.f32.mrf.mxu0
  %v322 = vadd.f32 %v209, %v321
  %323 = vdwg.mxu0
  %324 = vmatpush.msra.mxu0 0.0
  %325 = vmatpush.msra.mxu0 0.0
  %326 = vmatpush.msra.mxu0 0.0
  %327 = vmatpush.msra.mxu0 0.0
  %328 = vmatpush.msra.mxu0 0.0
  %329 = vmatpush.msra.mxu0 0.0
  %330 = vmatpush.msra.mxu0 %v226
  %331 = vmatpush.msra.mxu0 %v177
  %332 = vmatpush.msra.mxu0 %v161
  %333 = vmatpush.msra.mxu0 %v145
  %334 = vmatpush.msra.mxu0 %v129
  %335 = vmatpush.msra.mxu0 %v113
  %336 = vmatpush.msra.mxu0 %v97
  %337 = vmatpush.msra.mxu0 %v81
  %338 = vmatpush.msra.mxu0 %v65
  %339 = vmatpush.msra.mxu0 %v49
  %340 = vmatmul.f32.gmra.mxu0 %v213
  %v341 = vpop.f32.mrf.mxu0
  %v342 = vadd.f32 %v209, %v341
  %343 = vdwg.mxu0
  %344 = vmatpush.msra.mxu0 0.0
  %345 = vmatpush.msra.mxu0 0.0
  %346 = vmatpush.msra.mxu0 0.0
  %347 = vmatpush.msra.mxu0 0.0
  %348 = vmatpush.msra.mxu0 0.0
  %349 = vmatpush.msra.mxu0 0.0
  %350 = vmatpush.msra.mxu0 %v229
  %351 = vmatpush.msra.mxu0 %v178
  %352 = vmatpush.msra.mxu0 %v162
  %353 = vmatpush.msra.mxu0 %v146
  %354 = vmatpush.msra.mxu0 %v130
  %355 = vmatpush.msra.mxu0 %v114
  %356 = vmatpush.msra.mxu0 %v98
  %357 = vmatpush.msra.mxu0 %v82
  %358 = vmatpush.msra.mxu0 %v66
  %359 = vmatpush.msra.mxu0 %v50
  %360 = vmatmul.f32.gmra.mxu0 %v213
  %v361 = vpop.f32.mrf.mxu0
  %v362 = vadd.f32 %v209, %v361
  %363 = vdwg.mxu0
  %364 = vmatpush.msra.mxu0 0.0
  %365 = vmatpush.msra.mxu0 0.0
  %366 = vmatpush.msra.mxu0 0.0
  %367 = vmatpush.msra.mxu0 0.0
  %368 = vmatpush.msra.mxu0 0.0
  %369 = vmatpush.msra.mxu0 0.0
  %370 = vmatpush.msra.mxu0 %v232
  %371 = vmatpush.msra.mxu0 %v179
  %372 = vmatpush.msra.mxu0 %v163
  %373 = vmatpush.msra.mxu0 %v147
  %374 = vmatpush.msra.mxu0 %v131
  %375 = vmatpush.msra.mxu0 %v115
  %376 = vmatpush.msra.mxu0 %v99
  %377 = vmatpush.msra.mxu0 %v83
  %378 = vmatpush.msra.mxu0 %v67
  %379 = vmatpush.msra.mxu0 %v51
  %380 = vmatmul.f32.gmra.mxu0 %v213
  %v381 = vpop.f32.mrf.mxu0
  %v382 = vadd.f32 %v209, %v381
  %383 = vdwg.mxu0
  %384 = vmatpush.msra.mxu0 0.0
  %385 = vmatpush.msra.mxu0 0.0
  %386 = vmatpush.msra.mxu0 0.0
  %387 = vmatpush.msra.mxu0 0.0
  %388 = vmatpush.msra.mxu0 0.0
  %389 = vmatpush.msra.mxu0 0.0
  %390 = vmatpush.msra.mxu0 %v235
  %391 = vmatpush.msra.mxu0 %v180
  %392 = vmatpush.msra.mxu0 %v164
  %393 = vmatpush.msra.mxu0 %v148
  %394 = vmatpush.msra.mxu0 %v132
  %395 = vmatpush.msra.mxu0 %v116
  %396 = vmatpush.msra.mxu0 %v100
  %397 = vmatpush.msra.mxu0 %v84
  %398 = vmatpush.msra.mxu0 %v68
  %399 = vmatpush.msra.mxu0 %v52
  %400 = vmatmul.f32.gmra.mxu0 %v213
  %v401 = vpop.f32.mrf.mxu0
  %v402 = vadd.f32 %v209, %v401
  %403 = vdwg.mxu0
  %404 = vmatpush.msra.mxu0 0.0
  %405 = vmatpush.msra.mxu0 0.0
  %406 = vmatpush.msra.mxu0 0.0
  %407 = vmatpush.msra.mxu0 0.0
  %408 = vmatpush.msra.mxu0 0.0
  %409 = vmatpush.msra.mxu0 0.0
  %410 = vmatpush.msra.mxu0 %v238
  %411 = vmatpush.msra.mxu0 %v181
  %412 = vmatpush.msra.mxu0 %v165
  %413 = vmatpush.msra.mxu0 %v149
  %414 = vmatpush.msra.mxu0 %v133
  %415 = vmatpush.msra.mxu0 %v117
  %416 = vmatpush.msra.mxu0 %v101
  %417 = vmatpush.msra.mxu0 %v85
  %418 = vmatpush.msra.mxu0 %v69
  %419 = vmatpush.msra.mxu0 %v53
  %420 = vmatmul.f32.gmra.mxu0 %v213
  %v421 = vpop.f32.mrf.mxu0
  %v422 = vadd.f32 %v209, %v421
  %423 = vdwg.mxu0
  %424 = vmatpush.msra.mxu0 0.0
  %425 = vmatpush.msra.mxu0 0.0
  %426 = vmatpush.msra.mxu0 0.0
  %427 = vmatpush.msra.mxu0 0.0
  %428 = vmatpush.msra.mxu0 0.0
  %429 = vmatpush.msra.mxu0 0.0
  %430 = vmatpush.msra.mxu0 %v241
  %431 = vmatpush.msra.mxu0 %v182
  %432 = vmatpush.msra.mxu0 %v166
  %433 = vmatpush.msra.mxu0 %v150
  %434 = vmatpush.msra.mxu0 %v134
  %435 = vmatpush.msra.mxu0 %v118
  %436 = vmatpush.msra.mxu0 %v102
  %437 = vmatpush.msra.mxu0 %v86
  %438 = vmatpush.msra.mxu0 %v70
  %439 = vmatpush.msra.mxu0 %v54
  %440 = vmatmul.f32.gmra.mxu0 %v213
  %v441 = vpop.f32.mrf.mxu0
  %v442 = vadd.f32 %v209, %v441
  %443 = vdwg.mxu0
  %444 = vmatpush.msra.mxu0 0.0
  %445 = vmatpush.msra.mxu0 0.0
  %446 = vmatpush.msra.mxu0 0.0
  %447 = vmatpush.msra.mxu0 0.0
  %448 = vmatpush.msra.mxu0 0.0
  %449 = vmatpush.msra.mxu0 0.0
  %450 = vmatpush.msra.mxu0 %v244
  %451 = vmatpush.msra.mxu0 %v183
  %452 = vmatpush.msra.mxu0 %v167
  %453 = vmatpush.msra.mxu0 %v151
  %454 = vmatpush.msra.mxu0 %v135
  %455 = vmatpush.msra.mxu0 %v119
  %456 = vmatpush.msra.mxu0 %v103
  %457 = vmatpush.msra.mxu0 %v87
  %458 = vmatpush.msra.mxu0 %v71
  %459 = vmatpush.msra.mxu0 %v55
  %460 = vmatmul.f32.gmra.mxu0 %v213
  %v461 = vpop.f32.mrf.mxu0
  %v462 = vadd.f32 %v209, %v461
  %463 = vdwg.mxu0
  %464 = vmatpush.msra.mxu0 0.0
  %465 = vmatpush.msra.mxu0 0.0
  %466 = vmatpush.msra.mxu0 0.0
  %467 = vmatpush.msra.mxu0 0.0
  %468 = vmatpush.msra.mxu0 0.0
  %469 = vmatpush.msra.mxu0 0.0
  %470 = vmatpush.msra.mxu0 %v247
  %471 = vmatpush.msra.mxu0 %v184
  %472 = vmatpush.msra.mxu0 %v168
  %473 = vmatpush.msra.mxu0 %v152
  %474 = vmatpush.msra.mxu0 %v136
  %475 = vmatpush.msra.mxu0 %v120
  %476 = vmatpush.msra.mxu0 %v104
  %477 = vmatpush.msra.mxu0 %v88
  %478 = vmatpush.msra.mxu0 %v72
  %479 = vmatpush.msra.mxu0 %v56
  %480 = vmatmul.f32.gmra.mxu0 %v213
  %v481 = vpop.f32.mrf.mxu0
  %v482 = vadd.f32 %v209, %v481
  %483 = vdwg.mxu0
  %484 = vmatpush.msra.mxu0 0.0
  %485 = vmatpush.msra.mxu0 0.0
  %486 = vmatpush.msra.mxu0 0.0
  %487 = vmatpush.msra.mxu0 0.0
  %488 = vmatpush.msra.mxu0 0.0
  %489 = vmatpush.msra.mxu0 0.0
  %490 = vmatpush.msra.mxu0 %v250
  %491 = vmatpush.msra.mxu0 %v185
  %492 = vmatpush.msra.mxu0 %v169
  %493 = vmatpush.msra.mxu0 %v153
  %494 = vmatpush.msra.mxu0 %v137
  %495 = vmatpush.msra.mxu0 %v121
  %496 = vmatpush.msra.mxu0 %v105
  %497 = vmatpush.msra.mxu0 %v89
  %498 = vmatpush.msra.mxu0 %v73
  %499 = vmatpush.msra.mxu0 %v57
  %500 = vmatmul.f32.gmra.mxu0 %v213
  %v501 = vpop.f32.mrf.mxu0
  %v502 = vadd.f32 %v209, %v501
  %503 = vdwg.mxu0
  %504 = vmatpush.msra.mxu0 0.0
  %505 = vmatpush.msra.mxu0 0.0
  %506 = vmatpush.msra.mxu0 0.0
  %507 = vmatpush.msra.mxu0 0.0
  %508 = vmatpush.msra.mxu0 0.0
  %509 = vmatpush.msra.mxu0 0.0
  %510 = vmatpush.msra.mxu0 %v253
  %511 = vmatpush.msra.mxu0 %v186
  %512 = vmatpush.msra.mxu0 %v170
  %513 = vmatpush.msra.mxu0 %v154
  %514 = vmatpush.msra.mxu0 %v138
  %515 = vmatpush.msra.mxu0 %v122
  %516 = vmatpush.msra.mxu0 %v106
  %517 = vmatpush.msra.mxu0 %v90
  %518 = vmatpush.msra.mxu0 %v74
  %519 = vmatpush.msra.mxu0 %v58
  %520 = vmatmul.f32.gmra.mxu0 %v213
  %v521 = vpop.f32.mrf.mxu0
  %v522 = vadd.f32 %v209, %v521
  %523 = vdwg.mxu0
  %524 = vmatpush.msra.mxu0 0.0
  %525 = vmatpush.msra.mxu0 0.0
  %526 = vmatpush.msra.mxu0 0.0
  %527 = vmatpush.msra.mxu0 0.0
  %528 = vmatpush.msra.mxu0 0.0
  %529 = vmatpush.msra.mxu0 0.0
  %530 = vmatpush.msra.mxu0 %v256
  %531 = vmatpush.msra.mxu0 %v187
  %532 = vmatpush.msra.mxu0 %v171
  %533 = vmatpush.msra.mxu0 %v155
  %534 = vmatpush.msra.mxu0 %v139
  %535 = vmatpush.msra.mxu0 %v123
  %536 = vmatpush.msra.mxu0 %v107
  %537 = vmatpush.msra.mxu0 %v91
  %538 = vmatpush.msra.mxu0 %v75
  %539 = vmatpush.msra.mxu0 %v59
  %540 = vmatmul.f32.gmra.mxu0 %v213
  %v541 = vpop.f32.mrf.mxu0
  %v542 = vadd.f32 %v209, %v541
  %543 = vdwg.mxu0
  %544 = vmatpush.msra.mxu0 0.0
  %545 = vmatpush.msra.mxu0 0.0
  %546 = vmatpush.msra.mxu0 0.0
  %547 = vmatpush.msra.mxu0 0.0
  %548 = vmatpush.msra.mxu0 0.0
  %549 = vmatpush.msra.mxu0 0.0
  %550 = vmatpush.msra.mxu0 %v259
  %551 = vmatpush.msra.mxu0 %v188
  %552 = vmatpush.msra.mxu0 %v172
  %553 = vmatpush.msra.mxu0 %v156
  %554 = vmatpush.msra.mxu0 %v140
  %555 = vmatpush.msra.mxu0 %v124
  %556 = vmatpush.msra.mxu0 %v108
  %557 = vmatpush.msra.mxu0 %v92
  %558 = vmatpush.msra.mxu0 %v76
  %559 = vmatpush.msra.mxu0 %v60
  %560 = vmatmul.f32.gmra.mxu0 %v213
  %v561 = vpop.f32.mrf.mxu0
  %v562 = vadd.f32 %v209, %v561
  %563 = vdwg.mxu0
  %564 = vmatpush.msra.mxu0 0.0
  %565 = vmatpush.msra.mxu0 0.0
  %566 = vmatpush.msra.mxu0 0.0
  %567 = vmatpush.msra.mxu0 0.0
  %568 = vmatpush.msra.mxu0 0.0
  %569 = vmatpush.msra.mxu0 0.0
  %570 = vmatpush.msra.mxu0 %v262
  %571 = vmatpush.msra.mxu0 %v189
  %572 = vmatpush.msra.mxu0 %v173
  %573 = vmatpush.msra.mxu0 %v157
  %574 = vmatpush.msra.mxu0 %v141
  %575 = vmatpush.msra.mxu0 %v125
  %576 = vmatpush.msra.mxu0 %v109
  %577 = vmatpush.msra.mxu0 %v93
  %578 = vmatpush.msra.mxu0 %v77
  %579 = vmatpush.msra.mxu0 %v61
  %580 = vmatmul.f32.gmra.mxu0 %v213
  %v581 = vpop.f32.mrf.mxu0
  %v582 = vadd.f32 %v209, %v581
  %583 = vdwg.mxu0
  %v584 = vlaneseq
  %v585 = vand.u32 %v584, 127
  %v586 = vadd.s32 %v585, 128
  %v587 = vadd.s32 %v585, 256
  %v588 = vadd.s32 %v585, 384
  %v589 = vadd.s32 %v585, 512
  %v590 = vadd.s32 %v585, 640
  %v591 = vadd.s32 %v585, 768
  %v592 = vadd.s32 %v585, 896
  %v593 = vadd.s32 %v585, 1024
  %v594 = vadd.s32 %v585, 1152
  %v595 = vadd.s32 %v585, 1280
  %v596 = vadd.s32 %v585, 1408
  %v597 = vadd.s32 %v585, 1536
  %v598 = vadd.s32 %v585, 1664
  %v599 = vadd.s32 %v585, 1792
  %v600 = vadd.s32 %v585, 1920
  %vm601 = vcmp.lt.s32.totalorder %v585, 0
  %v602 = vsub.s32 0, %v585
  %v603 = vsel %vm601, %v602, %v585
  %v604 = vshrl.u32 %v603, 9
  %v605 = vand.u32 %v603, 511
  %v606 = vsub.s32 0, %v605
  %v607 = vsel %vm601, %v606, %v605
  %vm608 = vcmp.lt.s32.totalorder %v586, 0
  %v609 = vsub.s32 0, %v586
  %v610 = vsel %vm608, %v609, %v586
  %v611 = vshrl.u32 %v610, 9
  %v612 = vand.u32 %v610, 511
  %v613 = vsub.s32 0, %v612
  %v614 = vsel %vm608, %v613, %v612
  %vm615 = vcmp.lt.s32.totalorder %v587, 0
  %v616 = vsub.s32 0, %v587
  %v617 = vsel %vm615, %v616, %v587
  %v618 = vshrl.u32 %v617, 9
  %v619 = vand.u32 %v617, 511
  %v620 = vsub.s32 0, %v619
  %v621 = vsel %vm615, %v620, %v619
  %vm622 = vcmp.lt.s32.totalorder %v588, 0
  %v623 = vsub.s32 0, %v588
  %v624 = vsel %vm622, %v623, %v588
  %v625 = vshrl.u32 %v624, 9
  %v626 = vand.u32 %v624, 511
  %v627 = vsub.s32 0, %v626
  %v628 = vsel %vm622, %v627, %v626
  %vm629 = vcmp.lt.s32.totalorder %v589, 0
  %v630 = vsub.s32 0, %v589
  %v631 = vsel %vm629, %v630, %v589
  %v632 = vshrl.u32 %v631, 9
  %v633 = vand.u32 %v631, 511
  %v634 = vsub.s32 0, %v633
  %v635 = vsel %vm629, %v634, %v633
  %vm636 = vcmp.lt.s32.totalorder %v590, 0
  %v637 = vsub.s32 0, %v590
  %v638 = vsel %vm636, %v637, %v590
  %v639 = vshrl.u32 %v638, 9
  %v640 = vand.u32 %v638, 511
  %v641 = vsub.s32 0, %v640
  %v642 = vsel %vm636, %v641, %v640
  %vm643 = vcmp.lt.s32.totalorder %v591, 0
  %v644 = vsub.s32 0, %v591
  %v645 = vsel %vm643, %v644, %v591
  %v646 = vshrl.u32 %v645, 9
  %v647 = vand.u32 %v645, 511
  %v648 = vsub.s32 0, %v647
  %v649 = vsel %vm643, %v648, %v647
  %vm650 = vcmp.lt.s32.totalorder %v592, 0
  %v651 = vsub.s32 0, %v592
  %v652 = vsel %vm650, %v651, %v592
  %v653 = vshrl.u32 %v652, 9
  %v654 = vand.u32 %v652, 511
  %v655 = vsub.s32 0, %v654
  %v656 = vsel %vm650, %v655, %v654
  %vm657 = vcmp.lt.s32.totalorder %v593, 0
  %v658 = vsub.s32 0, %v593
  %v659 = vsel %vm657, %v658, %v593
  %v660 = vshrl.u32 %v659, 9
  %v661 = vand.u32 %v659, 511
  %v662 = vsub.s32 0, %v661
  %v663 = vsel %vm657, %v662, %v661
  %vm664 = vcmp.lt.s32.totalorder %v594, 0
  %v665 = vsub.s32 0, %v594
  %v666 = vsel %vm664, %v665, %v594
  %v667 = vshrl.u32 %v666, 9
  %v668 = vand.u32 %v666, 511
  %v669 = vsub.s32 0, %v668
  %v670 = vsel %vm664, %v669, %v668
  %vm671 = vcmp.lt.s32.totalorder %v595, 0
  %v672 = vsub.s32 0, %v595
  %v673 = vsel %vm671, %v672, %v595
  %v674 = vshrl.u32 %v673, 9
  %v675 = vand.u32 %v673, 511
  %v676 = vsub.s32 0, %v675
  %v677 = vsel %vm671, %v676, %v675
  %vm678 = vcmp.lt.s32.totalorder %v596, 0
  %v679 = vsub.s32 0, %v596
  %v680 = vsel %vm678, %v679, %v596
  %v681 = vshrl.u32 %v680, 9
  %v682 = vand.u32 %v680, 511
  %v683 = vsub.s32 0, %v682
  %v684 = vsel %vm678, %v683, %v682
  %vm685 = vcmp.lt.s32.totalorder %v597, 0
  %v686 = vsub.s32 0, %v597
  %v687 = vsel %vm685, %v686, %v597
  %v688 = vshrl.u32 %v687, 9
  %v689 = vand.u32 %v687, 511
  %v690 = vsub.s32 0, %v689
  %v691 = vsel %vm685, %v690, %v689
  %vm692 = vcmp.lt.s32.totalorder %v598, 0
  %v693 = vsub.s32 0, %v598
  %v694 = vsel %vm692, %v693, %v598
  %v695 = vshrl.u32 %v694, 9
  %v696 = vand.u32 %v694, 511
  %v697 = vsub.s32 0, %v696
  %v698 = vsel %vm692, %v697, %v696
  %vm699 = vcmp.lt.s32.totalorder %v599, 0
  %v700 = vsub.s32 0, %v599
  %v701 = vsel %vm699, %v700, %v599
  %v702 = vshrl.u32 %v701, 9
  %v703 = vand.u32 %v701, 511
  %v704 = vsub.s32 0, %v703
  %v705 = vsel %vm699, %v704, %v703
  %vm706 = vcmp.lt.s32.totalorder %v600, 0
  %v707 = vsub.s32 0, %v600
  %v708 = vsel %vm706, %v707, %v600
  %v709 = vshrl.u32 %v708, 9
  %v710 = vand.u32 %v708, 511
  %v711 = vsub.s32 0, %v710
  %v712 = vsel %vm706, %v711, %v710
  %vm713 = vcmp.ne.s32.totalorder %v607, 0
  %vm714 = vcmp.ne.s32.totalorder %v614, 0
  %vm715 = vcmp.ne.s32.totalorder %v621, 0
  %vm716 = vcmp.ne.s32.totalorder %v628, 0
  %vm717 = vcmp.ne.s32.totalorder %v635, 0
  %vm718 = vcmp.ne.s32.totalorder %v642, 0
  %vm719 = vcmp.ne.s32.totalorder %v649, 0
  %vm720 = vcmp.ne.s32.totalorder %v656, 0
  %vm721 = vcmp.ne.s32.totalorder %v663, 0
  %vm722 = vcmp.ne.s32.totalorder %v670, 0
  %vm723 = vcmp.ne.s32.totalorder %v677, 0
  %vm724 = vcmp.ne.s32.totalorder %v684, 0
  %vm725 = vcmp.ne.s32.totalorder %v691, 0
  %vm726 = vcmp.ne.s32.totalorder %v698, 0
  %vm727 = vcmp.ne.s32.totalorder %v705, 0
  %vm728 = vcmp.ne.s32.totalorder %v712, 0
  %vm729 = vcmp.lt.s32.totalorder %v607, 0
  %vm730 = vcmp.lt.s32.totalorder %v614, 0
  %vm731 = vcmp.lt.s32.totalorder %v621, 0
  %vm732 = vcmp.lt.s32.totalorder %v628, 0
  %vm733 = vcmp.lt.s32.totalorder %v635, 0
  %vm734 = vcmp.lt.s32.totalorder %v642, 0
  %vm735 = vcmp.lt.s32.totalorder %v649, 0
  %vm736 = vcmp.lt.s32.totalorder %v656, 0
  %vm737 = vcmp.lt.s32.totalorder %v663, 0
  %vm738 = vcmp.lt.s32.totalorder %v670, 0
  %vm739 = vcmp.lt.s32.totalorder %v677, 0
  %vm740 = vcmp.lt.s32.totalorder %v684, 0
  %vm741 = vcmp.lt.s32.totalorder %v691, 0
  %vm742 = vcmp.lt.s32.totalorder %v698, 0
  %vm743 = vcmp.lt.s32.totalorder %v705, 0
  %vm744 = vcmp.lt.s32.totalorder %v712, 0
  %vm745 = vmand %vm729, %vm713
  %vm746 = vmand %vm730, %vm714
  %vm747 = vmand %vm731, %vm715
  %vm748 = vmand %vm732, %vm716
  %vm749 = vmand %vm733, %vm717
  %vm750 = vmand %vm734, %vm718
  %vm751 = vmand %vm735, %vm719
  %vm752 = vmand %vm736, %vm720
  %vm753 = vmand %vm737, %vm721
  %vm754 = vmand %vm738, %vm722
  %vm755 = vmand %vm739, %vm723
  %vm756 = vmand %vm740, %vm724
  %vm757 = vmand %vm741, %vm725
  %vm758 = vmand %vm742, %vm726
  %vm759 = vmand %vm743, %vm727
  %vm760 = vmand %vm744, %vm728
  %v761 = vadd.s32 %v607, 512
  %v762 = vadd.s32 %v614, 512
  %v763 = vadd.s32 %v621, 512
  %v764 = vadd.s32 %v628, 512
  %v765 = vadd.s32 %v635, 512
  %v766 = vadd.s32 %v642, 512
  %v767 = vadd.s32 %v649, 512
  %v768 = vadd.s32 %v656, 512
  %v769 = vadd.s32 %v663, 512
  %v770 = vadd.s32 %v670, 512
  %v771 = vadd.s32 %v677, 512
  %v772 = vadd.s32 %v684, 512
  %v773 = vadd.s32 %v691, 512
  %v774 = vadd.s32 %v698, 512
  %v775 = vadd.s32 %v705, 512
  %v776 = vadd.s32 %v712, 512
  %v777 = vsel %vm745, %v761, %v607
  %v778 = vsel %vm746, %v762, %v614
  %v779 = vsel %vm747, %v763, %v621
  %v780 = vsel %vm748, %v764, %v628
  %v781 = vsel %vm749, %v765, %v635
  %v782 = vsel %vm750, %v766, %v642
  %v783 = vsel %vm751, %v767, %v649
  %v784 = vsel %vm752, %v768, %v656
  %v785 = vsel %vm753, %v769, %v663
  %v786 = vsel %vm754, %v770, %v670
  %v787 = vsel %vm755, %v771, %v677
  %v788 = vsel %vm756, %v772, %v684
  %v789 = vsel %vm757, %v773, %v691
  %v790 = vsel %vm758, %v774, %v698
  %v791 = vsel %vm759, %v775, %v705
  %v792 = vsel %vm760, %v776, %v712
  %vm793 = vcmp.lt.s32.totalorder %v777, 392
  %vm794 = vcmp.lt.s32.totalorder %v778, 392
  %vm795 = vcmp.lt.s32.totalorder %v779, 392
  %vm796 = vcmp.lt.s32.totalorder %v780, 392
  %vm797 = vcmp.lt.s32.totalorder %v781, 392
  %vm798 = vcmp.lt.s32.totalorder %v782, 392
  %vm799 = vcmp.lt.s32.totalorder %v783, 392
  %vm800 = vcmp.lt.s32.totalorder %v784, 392
  %vm801 = vcmp.lt.s32.totalorder %v785, 392
  %vm802 = vcmp.lt.s32.totalorder %v786, 392
  %vm803 = vcmp.lt.s32.totalorder %v787, 392
  %vm804 = vcmp.lt.s32.totalorder %v788, 392
  %vm805 = vcmp.lt.s32.totalorder %v789, 392
  %vm806 = vcmp.lt.s32.totalorder %v790, 392
  %vm807 = vcmp.lt.s32.totalorder %v791, 392
  %vm808 = vcmp.lt.s32.totalorder %v792, 392
  %v809 = vsel %vm793, 1, 0
  %v810 = vsel %vm794, 1, 0
  %v811 = vsel %vm795, 1, 0
  %v812 = vsel %vm796, 1, 0
  %v813 = vsel %vm797, 1, 0
  %v814 = vsel %vm798, 1, 0
  %v815 = vsel %vm799, 1, 0
  %v816 = vsel %vm800, 1, 0
  %v817 = vsel %vm801, 1, 0
  %v818 = vsel %vm802, 1, 0
  %v819 = vsel %vm803, 1, 0
  %v820 = vsel %vm804, 1, 0
  %v821 = vsel %vm805, 1, 0
  %v822 = vsel %vm806, 1, 0
  %v823 = vsel %vm807, 1, 0
  %v824 = vsel %vm808, 1, 0
  %v825 = vcvt.s32.f32 %v809
  %v826 = vcvt.s32.f32 %v810
  %v827 = vcvt.s32.f32 %v811
  %v828 = vcvt.s32.f32 %v812
  %v829 = vcvt.s32.f32 %v813
  %v830 = vcvt.s32.f32 %v814
  %v831 = vcvt.s32.f32 %v815
  %v832 = vcvt.s32.f32 %v816
  %v833 = vcvt.s32.f32 %v817
  %v834 = vcvt.s32.f32 %v818
  %v835 = vcvt.s32.f32 %v819
  %v836 = vcvt.s32.f32 %v820
  %v837 = vcvt.s32.f32 %v821
  %v838 = vcvt.s32.f32 %v822
  %v839 = vcvt.s32.f32 %v823
  %v840 = vcvt.s32.f32 %v824
  %v841 = vmul.f32 %v282, %v825
  %v842 = vmul.f32 %v302, %v826
  %v843 = vmul.f32 %v322, %v827
  %v844 = vmul.f32 %v342, %v828
  %v845 = vmul.f32 %v362, %v829
  %v846 = vmul.f32 %v382, %v830
  %v847 = vmul.f32 %v402, %v831
  %v848 = vmul.f32 %v422, %v832
  %v849 = vmul.f32 %v442, %v833
  %v850 = vmul.f32 %v462, %v834
  %v851 = vmul.f32 %v482, %v835
  %v852 = vmul.f32 %v502, %v836
  %v853 = vmul.f32 %v522, %v837
  %v854 = vmul.f32 %v542, %v838
  %v855 = vmul.f32 %v562, %v839
  %v856 = vmul.f32 %v582, %v840
  %v857 = vadd.f32 %v841, %v842
  %v858 = vadd.f32 %v857, %v843
  %v859 = vadd.f32 %v858, %v844
  %v860 = vadd.f32 %v859, %v845
  %v861 = vadd.f32 %v860, %v846
  %v862 = vadd.f32 %v861, %v847
  %v863 = vadd.f32 %v862, %v848
  %v864 = vadd.f32 %v863, %v849
  %v865 = vadd.f32 %v864, %v850
  %v866 = vadd.f32 %v865, %v851
  %v867 = vadd.f32 %v866, %v852
  %v868 = vadd.f32 %v867, %v853
  %v869 = vadd.f32 %v868, %v854
  %v870 = vadd.f32 %v869, %v855
  %v871 = vadd.f32 %v870, %v856
  %872 = vadd.xlane.f32.xlu0 %v871
  %v873 = vpop.xlane.xlu0 %872
  %v874 = vmul.f32 %v873, 0.0006377551
  %v875 = vmul.f32 %v841, %v841
  %v876 = vmul.f32 %v842, %v842
  %v877 = vmul.f32 %v843, %v843
  %v878 = vmul.f32 %v844, %v844
  %v879 = vmul.f32 %v845, %v845
  %v880 = vmul.f32 %v846, %v846
  %v881 = vmul.f32 %v847, %v847
  %v882 = vmul.f32 %v848, %v848
  %v883 = vmul.f32 %v849, %v849
  %v884 = vmul.f32 %v850, %v850
  %v885 = vmul.f32 %v851, %v851
  %v886 = vmul.f32 %v852, %v852
  %v887 = vmul.f32 %v853, %v853
  %v888 = vmul.f32 %v854, %v854
  %v889 = vmul.f32 %v855, %v855
  %v890 = vmul.f32 %v856, %v856
  %v891 = vadd.f32 %v875, %v876
  %v892 = vadd.f32 %v891, %v877
  %v893 = vadd.f32 %v892, %v878
  %v894 = vadd.f32 %v893, %v879
  %v895 = vadd.f32 %v894, %v880
  %v896 = vadd.f32 %v895, %v881
  %v897 = vadd.f32 %v896, %v882
  %v898 = vadd.f32 %v897, %v883
  %v899 = vadd.f32 %v898, %v884
  %v900 = vadd.f32 %v899, %v885
  %v901 = vadd.f32 %v900, %v886
  %v902 = vadd.f32 %v901, %v887
  %v903 = vadd.f32 %v902, %v888
  %v904 = vadd.f32 %v903, %v889
  %v905 = vadd.f32 %v904, %v890
  %906 = vadd.xlane.f32.xlu0 %v905
  %v907 = vpop.xlane.xlu0 %906
  %v908 = vmul.f32 %v907, 0.0006377551
  %v909 = vsub.f32 %v841, %v874
  %v910 = vsub.f32 %v842, %v874
  %v911 = vsub.f32 %v843, %v874
  %v912 = vsub.f32 %v844, %v874
  %v913 = vsub.f32 %v845, %v874
  %v914 = vsub.f32 %v846, %v874
  %v915 = vsub.f32 %v847, %v874
  %v916 = vsub.f32 %v848, %v874
  %v917 = vsub.f32 %v849, %v874
  %v918 = vsub.f32 %v850, %v874
  %v919 = vsub.f32 %v851, %v874
  %v920 = vsub.f32 %v852, %v874
  %v921 = vsub.f32 %v853, %v874
  %v922 = vsub.f32 %v854, %v874
  %v923 = vsub.f32 %v855, %v874
  %v924 = vsub.f32 %v856, %v874
  %v925 = vmul.f32 %v874, %v874
  %v926 = vsub.f32 %v908, %v925
  %v927 = vadd.f32 %v926, 1e-05
  %v928 = vrsqrt.pop %v927
  %v929 = vmul.f32 %v928, %v927
  %v930 = vmul.f32 %v929, %v928
  %v931 = vmul.f32 0.5, %v930
  %v932 = vsub.f32 1.5, %v931
  %v933 = vmul.f32 %v928, %v932
  %vm934 = vweird.f32 %v927
  %vm935 = vweird.f32 %v928
  %vm936 = vmor %vm934, %vm935
  %v937 = vsel %vm936, %v928, %v933
  %v938 = vmul.f32 %v909, %v937
  %v939 = vmul.f32 %v910, %v937
  %v940 = vmul.f32 %v911, %v937
  %v941 = vmul.f32 %v912, %v937
  %v942 = vmul.f32 %v913, %v937
  %v943 = vmul.f32 %v914, %v937
  %v944 = vmul.f32 %v915, %v937
  %v945 = vmul.f32 %v916, %v937
  %v946 = vmul.f32 %v917, %v937
  %v947 = vmul.f32 %v918, %v937
  %v948 = vmul.f32 %v919, %v937
  %v949 = vmul.f32 %v920, %v937
  %v950 = vmul.f32 %v921, %v937
  %v951 = vmul.f32 %v922, %v937
  %v952 = vmul.f32 %v923, %v937
  %v953 = vmul.f32 %v924, %v937
  %954 = vset.pattern.permute.xlu0 1
  %955 = vperm.xlu0 %954, %v44
  %v956 = vpop.permute.xlu0 %955
  %v958 = vmul.f32 %v938, %v956
  %v959 = vmul.f32 %v939, %v956
  %v960 = vmul.f32 %v940, %v956
  %v961 = vmul.f32 %v941, %v956
  %v962 = vmul.f32 %v942, %v956
  %v963 = vmul.f32 %v943, %v956
  %v964 = vmul.f32 %v944, %v956
  %v965 = vmul.f32 %v945, %v956
  %v966 = vmul.f32 %v946, %v956
  %v967 = vmul.f32 %v947, %v956
  %v968 = vmul.f32 %v948, %v956
  %v969 = vmul.f32 %v949, %v956
  %v970 = vmul.f32 %v950, %v956
  %v971 = vmul.f32 %v951, %v956
  %v972 = vmul.f32 %v952, %v956
  %v973 = vmul.f32 %v953, %v956
  %974 = vset.pattern.permute.xlu0 2
  %975 = vperm.xlu0 %974, %v44
  %v976 = vpop.permute.xlu0 %975
  %v978 = vadd.f32 %v958, %v976
  %v979 = vadd.f32 %v959, %v976
  %v980 = vadd.f32 %v960, %v976
  %v981 = vadd.f32 %v961, %v976
  %v982 = vadd.f32 %v962, %v976
  %v983 = vadd.f32 %v963, %v976
  %v984 = vadd.f32 %v964, %v976
  %v985 = vadd.f32 %v965, %v976
  %v986 = vadd.f32 %v966, %v976
  %v987 = vadd.f32 %v967, %v976
  %v988 = vadd.f32 %v968, %v976
  %v989 = vadd.f32 %v969, %v976
  %v990 = vadd.f32 %v970, %v976
  %v991 = vadd.f32 %v971, %v976
  %v992 = vadd.f32 %v972, %v976
  %v993 = vadd.f32 %v973, %v976
  %v994 = vmax.f32 %v978, 0.0
  %v995 = vmax.f32 %v979, 0.0
  %v996 = vmax.f32 %v980, 0.0
  %v997 = vmax.f32 %v981, 0.0
  %v998 = vmax.f32 %v982, 0.0
  %v999 = vmax.f32 %v983, 0.0
  %v1000 = vmax.f32 %v984, 0.0
  %v1001 = vmax.f32 %v985, 0.0
  %v1002 = vmax.f32 %v986, 0.0
  %v1003 = vmax.f32 %v987, 0.0
  %v1004 = vmax.f32 %v988, 0.0
  %v1005 = vmax.f32 %v989, 0.0
  %v1006 = vmax.f32 %v990, 0.0
  %v1007 = vmax.f32 %v991, 0.0
  %v1008 = vmax.f32 %v992, 0.0
  %v1009 = vmax.f32 %v993, 0.0
  %v1010 = vmax.f32 %v994, %v998
  %v1011 = vmax.f32 %v995, %v999
  %v1012 = vmax.f32 %v996, %v1000
  %v1013 = vmax.f32 %v997, %v1001
  %v1014 = vmax.f32 %v1002, %v1006
  %v1015 = vmax.f32 %v1003, %v1007
  %v1016 = vmax.f32 %v1004, %v1008
  %v1017 = vmax.f32 %v1005, %v1009
  %v1018 = vmax.f32 %v1010, %v1014
  %v1019 = vmax.f32 %v1011, %v1015
  %v1020 = vmax.f32 %v1012, %v1016
  %v1021 = vmax.f32 %v1013, %v1017
  %v1022 = vld [vmem:[%s3] sm:$0xff]
  %v1023 = vld [vmem:[%s3 + $0x8] sm:$0xff]
  %v1024 = vld [vmem:[%s3 + $0x10] sm:$0xff]
  %v1025 = vld [vmem:[%s3 + $0x18] sm:$0xff]
  %v1026 = vld [vmem:[%s3 + $0x20] sm:$0xff]
  %v1027 = vld [vmem:[%s3 + $0x28] sm:$0xff]
  %v1028 = vld [vmem:[%s3 + $0x30] sm:$0xff]
  %v1029 = vld [vmem:[%s3 + $0x38] sm:$0xff]
  %v1030 = vld [vmem:[%s3 + $0x40] sm:$0xff]
  %v1031 = vld [vmem:[%s3 + $0x48] sm:$0xff]
  %v1032 = vld [vmem:[%s3 + $0x50] sm:$0xff]
  %v1033 = vld [vmem:[%s3 + $0x58] sm:$0xff]
  %v1034 = vld [vmem:[%s3 + $0x60] sm:$0xff]
  %v1035 = vld [vmem:[%s3 + $0x68] sm:$0xff]
  %v1036 = vld [vmem:[%s3 + $0x70] sm:$0xff]
  %v1037 = vld [vmem:[%s3 + $0x78] sm:$0xff]
  %v1038 = vld [vmem:[%s3 + $0x80] sm:$0xff]
  %v1039 = vld [vmem:[%s3 + $0x88] sm:$0xff]
  %v1040 = vld [vmem:[%s3 + $0x90] sm:$0xff]
  %v1041 = vld [vmem:[%s3 + $0x98] sm:$0xff]
  %v1042 = vld [vmem:[%s3 + $0xa0] sm:$0xff]
  %v1043 = vld [vmem:[%s3 + $0xa8] sm:$0xff]
  %v1044 = vld [vmem:[%s3 + $0xb0] sm:$0xff]
  %v1045 = vld [vmem:[%s3 + $0xb8] sm:$0xff]
  %v1046 = vld [vmem:[%s3 + $0xc0] sm:$0xff]
  %v1047 = vld [vmem:[%s3 + $0xc8] sm:$0xff]
  %v1048 = vld [vmem:[%s3 + $0xd0] sm:$0xff]
  %v1049 = vld [vmem:[%s3 + $0xd8] sm:$0xff]
  %v1050 = vld [vmem:[%s3 + $0xe0] sm:$0xff]
  %v1051 = vld [vmem:[%s3 + $0xe8] sm:$0xff]
  %v1052 = vld [vmem:[%s3 + $0xf0] sm:$0xff]
  %v1053 = vld [vmem:[%s3 + $0xf8] sm:$0xff]
  %v1054 = vld [vmem:[%s3 + $0x100] sm:$0xff]
  %v1055 = vld [vmem:[%s3 + $0x108] sm:$0xff]
  %v1056 = vld [vmem:[%s3 + $0x110] sm:$0xff]
  %v1057 = vld [vmem:[%s3 + $0x118] sm:$0xff]
  %v1058 = vld [vmem:[%s3 + $0x120] sm:$0xff]
  %v1059 = vld [vmem:[%s3 + $0x128] sm:$0xff]
  %v1060 = vld [vmem:[%s3 + $0x130] sm:$0xff]
  %v1061 = vld [vmem:[%s3 + $0x138] sm:$0xff]
  %v1062 = vld [vmem:[%s3 + $0x140] sm:$0xff]
  %v1063 = vld [vmem:[%s3 + $0x148] sm:$0xff]
  %v1064 = vld [vmem:[%s3 + $0x150] sm:$0xff]
  %v1065 = vld [vmem:[%s3 + $0x158] sm:$0xff]
  %v1066 = vld [vmem:[%s3 + $0x160] sm:$0xff]
  %v1067 = vld [vmem:[%s3 + $0x168] sm:$0xff]
  %v1068 = vld [vmem:[%s3 + $0x170] sm:$0xff]
  %v1069 = vld [vmem:[%s3 + $0x178] sm:$0xff]
  %v1070 = vld [vmem:[%s3 + $0x180] sm:$0xff]
  %v1071 = vld [vmem:[%s3 + $0x188] sm:$0xff]
  %v1072 = vld [vmem:[%s3 + $0x190] sm:$0xff]
  %v1073 = vld [vmem:[%s3 + $0x198] sm:$0xff]
  %v1074 = vld [vmem:[%s3 + $0x1a0] sm:$0xff]
  %v1075 = vld [vmem:[%s3 + $0x1a8] sm:$0xff]
  %v1076 = vld [vmem:[%s3 + $0x1b0] sm:$0xff]
  %v1077 = vld [vmem:[%s3 + $0x1b8] sm:$0xff]
  %v1078 = vld [vmem:[%s3 + $0x1c0] sm:$0xff]
  %v1079 = vld [vmem:[%s3 + $0x1c8] sm:$0xff]
  %v1080 = vld [vmem:[%s3 + $0x1d0] sm:$0xff]
  %v1081 = vld [vmem:[%s3 + $0x1d8] sm:$0xff]
  %v1082 = vld [vmem:[%s3 + $0x1e0] sm:$0xff]
  %v1083 = vld [vmem:[%s3 + $0x1e8] sm:$0xff]
  %v1084 = vld [vmem:[%s3 + $0x1f0] sm:$0xff]
  %v1085 = vld [vmem:[%s3 + $0x1f8] sm:$0xff]
  %v1086 = vld [vmem:[%s3 + $0x200] sm:$0xff]
  %v1087 = vld [vmem:[%s3 + $0x208] sm:$0xff]
  %v1088 = vld [vmem:[%s3 + $0x210] sm:$0xff]
  %v1089 = vld [vmem:[%s3 + $0x218] sm:$0xff]
  %v1090 = vld [vmem:[%s3 + $0x220] sm:$0xff]
  %v1091 = vld [vmem:[%s3 + $0x228] sm:$0xff]
  %v1092 = vld [vmem:[%s3 + $0x230] sm:$0xff]
  %v1093 = vld [vmem:[%s3 + $0x238] sm:$0xff]
  %v1094 = vld [vmem:[%s3 + $0x240] sm:$0xff]
  %v1095 = vld [vmem:[%s3 + $0x248] sm:$0xff]
  %v1096 = vld [vmem:[%s3 + $0x250] sm:$0xff]
  %v1097 = vld [vmem:[%s3 + $0x258] sm:$0xff]
  %v1098 = vld [vmem:[%s3 + $0x260] sm:$0xff]
  %v1099 = vld [vmem:[%s3 + $0x268] sm:$0xff]
  %v1100 = vld [vmem:[%s3 + $0x270] sm:$0xff]
  %v1101 = vld [vmem:[%s3 + $0x278] sm:$0xff]
  %v1102 = vld [vmem:[%s3 + $0x280] sm:$0xff]
  %v1103 = vld [vmem:[%s3 + $0x288] sm:$0xff]
  %v1104 = vld [vmem:[%s3 + $0x290] sm:$0xff]
  %v1105 = vld [vmem:[%s3 + $0x298] sm:$0xff]
  %v1106 = vld [vmem:[%s3 + $0x2a0] sm:$0xff]
  %v1107 = vld [vmem:[%s3 + $0x2a8] sm:$0xff]
  %v1108 = vld [vmem:[%s3 + $0x2b0] sm:$0xff]
  %v1109 = vld [vmem:[%s3 + $0x2b8] sm:$0xff]
  %v1110 = vld [vmem:[%s3 + $0x2c0] sm:$0xff]
  %v1111 = vld [vmem:[%s3 + $0x2c8] sm:$0xff]
  %v1112 = vld [vmem:[%s3 + $0x2d0] sm:$0xff]
  %v1113 = vld [vmem:[%s3 + $0x2d8] sm:$0xff]
  %v1114 = vld [vmem:[%s3 + $0x2e0] sm:$0xff]
  %v1115 = vld [vmem:[%s3 + $0x2e8] sm:$0xff]
  %v1116 = vld [vmem:[%s3 + $0x2f0] sm:$0xff]
  %v1117 = vld [vmem:[%s3 + $0x2f8] sm:$0xff]
  %v1118 = vld [vmem:[%s3 + $0x300] sm:$0xff]
  %v1119 = vld [vmem:[%s3 + $0x308] sm:$0xff]
  %v1120 = vld [vmem:[%s3 + $0x310] sm:$0xff]
  %v1121 = vld [vmem:[%s3 + $0x318] sm:$0xff]
  %v1122 = vld [vmem:[%s3 + $0x320] sm:$0xff]
  %v1123 = vld [vmem:[%s3 + $0x328] sm:$0xff]
  %v1124 = vld [vmem:[%s3 + $0x330] sm:$0xff]
  %v1125 = vld [vmem:[%s3 + $0x338] sm:$0xff]
  %v1126 = vld [vmem:[%s3 + $0x340] sm:$0xff]
  %v1127 = vld [vmem:[%s3 + $0x348] sm:$0xff]
  %v1128 = vld [vmem:[%s3 + $0x350] sm:$0xff]
  %v1129 = vld [vmem:[%s3 + $0x358] sm:$0xff]
  %v1130 = vld [vmem:[%s3 + $0x360] sm:$0xff]
  %v1131 = vld [vmem:[%s3 + $0x368] sm:$0xff]
  %v1132 = vld [vmem:[%s3 + $0x370] sm:$0xff]
  %v1133 = vld [vmem:[%s3 + $0x378] sm:$0xff]
  %v1134 = vld [vmem:[%s3 + $0x380] sm:$0xff]
  %v1135 = vld [vmem:[%s3 + $0x388] sm:$0xff]
  %v1136 = vld [vmem:[%s3 + $0x390] sm:$0xff]
  %v1137 = vld [vmem:[%s3 + $0x398] sm:$0xff]
  %v1138 = vld [vmem:[%s3 + $0x3a0] sm:$0xff]
  %v1139 = vld [vmem:[%s3 + $0x3a8] sm:$0xff]
  %v1140 = vld [vmem:[%s3 + $0x3b0] sm:$0xff]
  %v1141 = vld [vmem:[%s3 + $0x3b8] sm:$0xff]
  %v1142 = vld [vmem:[%s3 + $0x3c0] sm:$0xff]
  %v1143 = vld [vmem:[%s3 + $0x3c8] sm:$0xff]
  %v1144 = vld [vmem:[%s3 + $0x3d0] sm:$0xff]
  %v1145 = vld [vmem:[%s3 + $0x3d8] sm:$0xff]
  %v1146 = vld [vmem:[%s3 + $0x3e0] sm:$0xff]
  %v1147 = vld [vmem:[%s3 + $0x3e8] sm:$0xff]
  %v1148 = vld [vmem:[%s3 + $0x3f0] sm:$0xff]
  %v1149 = vld [vmem:[%s3 + $0x3f8] sm:$0xff]
  %v1150 = vld [vmem:[%s3 + $0x400] sm:$0xff]
  %v1151 = vld [vmem:[%s3 + $0x408] sm:$0xff]
  %v1152 = vld [vmem:[%s3 + $0x410] sm:$0xff]
  %v1153 = vld [vmem:[%s3 + $0x418] sm:$0xff]
  %v1154 = vld [vmem:[%s3 + $0x420] sm:$0xff]
  %v1155 = vld [vmem:[%s3 + $0x428] sm:$0xff]
  %v1156 = vld [vmem:[%s3 + $0x430] sm:$0xff]
  %v1157 = vld [vmem:[%s3 + $0x438] sm:$0xff]
  %v1158 = vld [vmem:[%s3 + $0x440] sm:$0xff]
  %v1159 = vld [vmem:[%s3 + $0x448] sm:$0xff]
  %v1160 = vld [vmem:[%s3 + $0x450] sm:$0xff]
  %v1161 = vld [vmem:[%s3 + $0x458] sm:$0xff]
  %v1162 = vld [vmem:[%s3 + $0x460] sm:$0xff]
  %v1163 = vld [vmem:[%s3 + $0x468] sm:$0xff]
  %v1164 = vld [vmem:[%s3 + $0x470] sm:$0xff]
  %v1165 = vld [vmem:[%s3 + $0x478] sm:$0xff]
  %v1166 = vld [vmem:[%s3 + $0x480] sm:$0xff]
  %v1167 = vld [vmem:[%s3 + $0x488] sm:$0xff]
  %v1168 = vld [vmem:[%s3 + $0x490] sm:$0xff]
  %v1169 = vld [vmem:[%s3 + $0x498] sm:$0xff]
  %v1170 = vld [vmem:[%s3 + $0x4a0] sm:$0xff]
  %v1171 = vld [vmem:[%s3 + $0x4a8] sm:$0xff]
  %v1172 = vld [vmem:[%s3 + $0x4b0] sm:$0xff]
  %v1173 = vld [vmem:[%s3 + $0x4b8] sm:$0xff]
  %v1174 = vld [vmem:[%s3 + $0x4c0] sm:$0xff]
  %v1175 = vld [vmem:[%s3 + $0x4c8] sm:$0xff]
  %v1176 = vld [vmem:[%s3 + $0x4d0] sm:$0xff]
  %v1177 = vld [vmem:[%s3 + $0x4d8] sm:$0xff]
  %v1178 = vld [vmem:[%s3 + $0x4e0] sm:$0xff]
  %v1179 = vld [vmem:[%s3 + $0x4e8] sm:$0xff]
  %v1180 = vld [vmem:[%s3 + $0x4f0] sm:$0xff]
  %v1181 = vld [vmem:[%s3 + $0x4f8] sm:$0xff]
  %v1182 = vld [vmem:[%s3 + $0x500] sm:$0xff]
  %v1183 = vld [vmem:[%s3 + $0x508] sm:$0xff]
  %v1184 = vld [vmem:[%s3 + $0x510] sm:$0xff]
  %v1185 = vld [vmem:[%s3 + $0x518] sm:$0xff]
  %v1186 = vld [vmem:[%s3 + $0x520] sm:$0xff]
  %v1187 = vld [vmem:[%s3 + $0x528] sm:$0xff]
  %v1188 = vld [vmem:[%s3 + $0x530] sm:$0xff]
  %v1189 = vld [vmem:[%s3 + $0x538] sm:$0xff]
  %v1190 = vld [vmem:[%s3 + $0x540] sm:$0xff]
  %v1191 = vld [vmem:[%s3 + $0x548] sm:$0xff]
  %v1192 = vld [vmem:[%s3 + $0x550] sm:$0xff]
  %v1193 = vld [vmem:[%s3 + $0x558] sm:$0xff]
  %v1194 = vld [vmem:[%s3 + $0x560] sm:$0xff]
  %v1195 = vld [vmem:[%s3 + $0x568] sm:$0xff]
  %v1196 = vld [vmem:[%s3 + $0x570] sm:$0xff]
  %v1197 = vld [vmem:[%s3 + $0x578] sm:$0xff]
  %v1198 = vld [vmem:[%s3 + $0x580] sm:$0xff]
  %v1199 = vld [vmem:[%s3 + $0x588] sm:$0xff]
  %v1200 = vld [vmem:[%s3 + $0x590] sm:$0xff]
  %v1201 = vld [vmem:[%s3 + $0x598] sm:$0xff]
  %v1202 = vld [vmem:[%s3 + $0x5a0] sm:$0xff]
  %v1203 = vld [vmem:[%s3 + $0x5a8] sm:$0xff]
  %v1204 = vld [vmem:[%s3 + $0x5b0] sm:$0xff]
  %v1205 = vld [vmem:[%s3 + $0x5b8] sm:$0xff]
  %v1206 = vld [vmem:[%s3 + $0x5c0] sm:$0xff]
  %v1207 = vld [vmem:[%s3 + $0x5c8] sm:$0xff]
  %v1208 = vld [vmem:[%s3 + $0x5d0] sm:$0xff]
  %v1209 = vld [vmem:[%s3 + $0x5d8] sm:$0xff]
  %v1210 = vld [vmem:[%s3 + $0x5e0] sm:$0xff]
  %v1211 = vld [vmem:[%s3 + $0x5e8] sm:$0xff]
  %v1212 = vld [vmem:[%s3 + $0x5f0] sm:$0xff]
  %v1213 = vld [vmem:[%s3 + $0x5f8] sm:$0xff]
  %v1214 = vld [vmem:[%s3 + $0x600] sm:$0xff]
  %v1215 = vld [vmem:[%s3 + $0x608] sm:$0xff]
  %v1216 = vld [vmem:[%s3 + $0x610] sm:$0xff]
  %v1217 = vld [vmem:[%s3 + $0x618] sm:$0xff]
  %v1218 = vld [vmem:[%s3 + $0x620] sm:$0xff]
  %v1219 = vld [vmem:[%s3 + $0x628] sm:$0xff]
  %v1220 = vld [vmem:[%s3 + $0x630] sm:$0xff]
  %v1221 = vld [vmem:[%s3 + $0x638] sm:$0xff]
  %v1222 = vld [vmem:[%s3 + $0x640] sm:$0xff]
  %v1223 = vld [vmem:[%s3 + $0x648] sm:$0xff]
  %v1224 = vld [vmem:[%s3 + $0x650] sm:$0xff]
  %v1225 = vld [vmem:[%s3 + $0x658] sm:$0xff]
  %v1226 = vld [vmem:[%s3 + $0x660] sm:$0xff]
  %v1227 = vld [vmem:[%s3 + $0x668] sm:$0xff]
  %v1228 = vld [vmem:[%s3 + $0x670] sm:$0xff]
  %v1229 = vld [vmem:[%s3 + $0x678] sm:$0xff]
  %v1230 = vld [vmem:[%s3 + $0x680] sm:$0xff]
  %v1231 = vld [vmem:[%s3 + $0x688] sm:$0xff]
  %v1232 = vld [vmem:[%s3 + $0x690] sm:$0xff]
  %v1233 = vld [vmem:[%s3 + $0x698] sm:$0xff]
  %v1234 = vld [vmem:[%s3 + $0x6a0] sm:$0xff]
  %v1235 = vld [vmem:[%s3 + $0x6a8] sm:$0xff]
  %v1236 = vld [vmem:[%s3 + $0x6b0] sm:$0xff]
  %v1237 = vld [vmem:[%s3 + $0x6b8] sm:$0xff]
  %v1238 = vld [vmem:[%s3 + $0x6c0] sm:$0xff]
  %v1239 = vld [vmem:[%s3 + $0x6c8] sm:$0xff]
  %v1240 = vld [vmem:[%s3 + $0x6d0] sm:$0xff]
  %v1241 = vld [vmem:[%s3 + $0x6d8] sm:$0xff]
  %v1242 = vld [vmem:[%s3 + $0x6e0] sm:$0xff]
  %v1243 = vld [vmem:[%s3 + $0x6e8] sm:$0xff]
  %v1244 = vld [vmem:[%s3 + $0x6f0] sm:$0xff]
  %v1245 = vld [vmem:[%s3 + $0x6f8] sm:$0xff]
  %v1246 = vld [vmem:[%s3 + $0x700] sm:$0xff]
  %v1247 = vld [vmem:[%s3 + $0x708] sm:$0xff]
  %v1248 = vld [vmem:[%s3 + $0x710] sm:$0xff]
  %v1249 = vld [vmem:[%s3 + $0x718] sm:$0xff]
  %v1250 = vld [vmem:[%s3 + $0x720] sm:$0xff]
  %v1251 = vld [vmem:[%s3 + $0x728] sm:$0xff]
  %v1252 = vld [vmem:[%s3 + $0x730] sm:$0xff]
  %v1253 = vld [vmem:[%s3 + $0x738] sm:$0xff]
  %v1254 = vld [vmem:[%s3 + $0x740] sm:$0xff]
  %v1255 = vld [vmem:[%s3 + $0x748] sm:$0xff]
  %v1256 = vld [vmem:[%s3 + $0x750] sm:$0xff]
  %v1257 = vld [vmem:[%s3 + $0x758] sm:$0xff]
  %v1258 = vld [vmem:[%s3 + $0x760] sm:$0xff]
  %v1259 = vld [vmem:[%s3 + $0x768] sm:$0xff]
  %v1260 = vld [vmem:[%s3 + $0x770] sm:$0xff]
  %v1261 = vld [vmem:[%s3 + $0x778] sm:$0xff]
  %v1262 = vld [vmem:[%s3 + $0x780] sm:$0xff]
  %v1263 = vld [vmem:[%s3 + $0x788] sm:$0xff]
  %v1264 = vld [vmem:[%s3 + $0x790] sm:$0xff]
  %v1265 = vld [vmem:[%s3 + $0x798] sm:$0xff]
  %v1266 = vld [vmem:[%s3 + $0x7a0] sm:$0xff]
  %v1267 = vld [vmem:[%s3 + $0x7a8] sm:$0xff]
  %v1268 = vld [vmem:[%s3 + $0x7b0] sm:$0xff]
  %v1269 = vld [vmem:[%s3 + $0x7b8] sm:$0xff]
  %v1270 = vld [vmem:[%s3 + $0x7c0] sm:$0xff]
  %v1271 = vld [vmem:[%s3 + $0x7c8] sm:$0xff]
  %v1272 = vld [vmem:[%s3 + $0x7d0] sm:$0xff]
  %v1273 = vld [vmem:[%s3 + $0x7d8] sm:$0xff]
  %v1274 = vld [vmem:[%s3 + $0x7e0] sm:$0xff]
  %v1275 = vld [vmem:[%s3 + $0x7e8] sm:$0xff]
  %v1276 = vld [vmem:[%s3 + $0x7f0] sm:$0xff]
  %v1277 = vld [vmem:[%s3 + $0x7f8] sm:$0xff]
  %v1278 = vld [vmem:[%s3 + $0x800] sm:$0xff]
  %v1279 = vld [vmem:[%s3 + $0x808] sm:$0xff]
  %v1280 = vld [vmem:[%s3 + $0x810] sm:$0xff]
  %v1281 = vld [vmem:[%s3 + $0x818] sm:$0xff]
  %v1282 = vld [vmem:[%s3 + $0x820] sm:$0xff]
  %v1283 = vld [vmem:[%s3 + $0x828] sm:$0xff]
  %v1284 = vld [vmem:[%s3 + $0x830] sm:$0xff]
  %v1285 = vld [vmem:[%s3 + $0x838] sm:$0xff]
  %v1286 = vld [vmem:[%s3 + $0x840] sm:$0xff]
  %v1287 = vld [vmem:[%s3 + $0x848] sm:$0xff]
  %v1288 = vld [vmem:[%s3 + $0x850] sm:$0xff]
  %v1289 = vld [vmem:[%s3 + $0x858] sm:$0xff]
  %v1290 = vld [vmem:[%s3 + $0x860] sm:$0xff]
  %v1291 = vld [vmem:[%s3 + $0x868] sm:$0xff]
  %v1292 = vld [vmem:[%s3 + $0x870] sm:$0xff]
  %v1293 = vld [vmem:[%s3 + $0x878] sm:$0xff]
  %v1294 = vld [vmem:[%s3 + $0x880] sm:$0xff]
  %v1295 = vld [vmem:[%s3 + $0x888] sm:$0xff]
  %v1296 = vld [vmem:[%s3 + $0x890] sm:$0xff]
  %v1297 = vld [vmem:[%s3 + $0x898] sm:$0xff]
  %v1298 = vld [vmem:[%s3 + $0x8a0] sm:$0xff]
  %v1299 = vld [vmem:[%s3 + $0x8a8] sm:$0xff]
  %v1300 = vld [vmem:[%s3 + $0x8b0] sm:$0xff]
  %v1301 = vld [vmem:[%s3 + $0x8b8] sm:$0xff]
  %v1302 = vld [vmem:[%s3 + $0x8c0] sm:$0xff]
  %v1303 = vld [vmem:[%s3 + $0x8c8] sm:$0xff]
  %v1304 = vld [vmem:[%s3 + $0x8d0] sm:$0xff]
  %v1305 = vld [vmem:[%s3 + $0x8d8] sm:$0xff]
  %v1306 = vld [vmem:[%s3 + $0x8e0] sm:$0xff]
  %v1307 = vld [vmem:[%s3 + $0x8e8] sm:$0xff]
  %v1308 = vld [vmem:[%s3 + $0x8f0] sm:$0xff]
  %v1309 = vld [vmem:[%s3 + $0x8f8] sm:$0xff]
  %v1310 = vld [vmem:[%s3 + $0x900] sm:$0xff]
  %v1311 = vld [vmem:[%s3 + $0x908] sm:$0xff]
  %v1312 = vld [vmem:[%s3 + $0x910] sm:$0xff]
  %v1313 = vld [vmem:[%s3 + $0x918] sm:$0xff]
  %v1314 = vld [vmem:[%s3 + $0x920] sm:$0xff]
  %v1315 = vld [vmem:[%s3 + $0x928] sm:$0xff]
  %v1316 = vld [vmem:[%s3 + $0x930] sm:$0xff]
  %v1317 = vld [vmem:[%s3 + $0x938] sm:$0xff]
  %v1318 = vld [vmem:[%s3 + $0x940] sm:$0xff]
  %v1319 = vld [vmem:[%s3 + $0x948] sm:$0xff]
  %v1320 = vld [vmem:[%s3 + $0x950] sm:$0xff]
  %v1321 = vld [vmem:[%s3 + $0x958] sm:$0xff]
  %v1322 = vld [vmem:[%s3 + $0x960] sm:$0xff]
  %v1323 = vld [vmem:[%s3 + $0x968] sm:$0xff]
  %v1324 = vld [vmem:[%s3 + $0x970] sm:$0xff]
  %v1325 = vld [vmem:[%s3 + $0x978] sm:$0xff]
  %v1326 = vld [vmem:[%s3 + $0x980] sm:$0xff]
  %v1327 = vld [vmem:[%s3 + $0x988] sm:$0xff]
  %v1328 = vld [vmem:[%s3 + $0x990] sm:$0xff]
  %v1329 = vld [vmem:[%s3 + $0x998] sm:$0xff]
  %v1330 = vld [vmem:[%s3 + $0x9a0] sm:$0xff]
  %v1331 = vld [vmem:[%s3 + $0x9a8] sm:$0xff]
  %v1332 = vld [vmem:[%s3 + $0x9b0] sm:$0xff]
  %v1333 = vld [vmem:[%s3 + $0x9b8] sm:$0xff]
  %v1334 = vld [vmem:[%s3 + $0x9c0] sm:$0xff]
  %v1335 = vld [vmem:[%s3 + $0x9c8] sm:$0xff]
  %v1336 = vld [vmem:[%s3 + $0x9d0] sm:$0xff]
  %v1337 = vld [vmem:[%s3 + $0x9d8] sm:$0xff]
  %v1338 = vld [vmem:[%s3 + $0x9e0] sm:$0xff]
  %v1339 = vld [vmem:[%s3 + $0x9e8] sm:$0xff]
  %v1340 = vld [vmem:[%s3 + $0x9f0] sm:$0xff]
  %v1341 = vld [vmem:[%s3 + $0x9f8] sm:$0xff]
  %v1342 = vld [vmem:[%s3 + $0xa00] sm:$0xff]
  %v1343 = vld [vmem:[%s3 + $0xa08] sm:$0xff]
  %v1344 = vld [vmem:[%s3 + $0xa10] sm:$0xff]
  %v1345 = vld [vmem:[%s3 + $0xa18] sm:$0xff]
  %v1346 = vld [vmem:[%s3 + $0xa20] sm:$0xff]
  %v1347 = vld [vmem:[%s3 + $0xa28] sm:$0xff]
  %v1348 = vld [vmem:[%s3 + $0xa30] sm:$0xff]
  %v1349 = vld [vmem:[%s3 + $0xa38] sm:$0xff]
  %v1350 = vld [vmem:[%s3 + $0xa40] sm:$0xff]
  %v1351 = vld [vmem:[%s3 + $0xa48] sm:$0xff]
  %v1352 = vld [vmem:[%s3 + $0xa50] sm:$0xff]
  %v1353 = vld [vmem:[%s3 + $0xa58] sm:$0xff]
  %v1354 = vld [vmem:[%s3 + $0xa60] sm:$0xff]
  %v1355 = vld [vmem:[%s3 + $0xa68] sm:$0xff]
  %v1356 = vld [vmem:[%s3 + $0xa70] sm:$0xff]
  %v1357 = vld [vmem:[%s3 + $0xa78] sm:$0xff]
  %v1358 = vld [vmem:[%s3 + $0xa80] sm:$0xff]
  %v1359 = vld [vmem:[%s3 + $0xa88] sm:$0xff]
  %v1360 = vld [vmem:[%s3 + $0xa90] sm:$0xff]
  %v1361 = vld [vmem:[%s3 + $0xa98] sm:$0xff]
  %v1362 = vld [vmem:[%s3 + $0xaa0] sm:$0xff]
  %v1363 = vld [vmem:[%s3 + $0xaa8] sm:$0xff]
  %v1364 = vld [vmem:[%s3 + $0xab0] sm:$0xff]
  %v1365 = vld [vmem:[%s3 + $0xab8] sm:$0xff]
  %v1366 = vld [vmem:[%s3 + $0xac0] sm:$0xff]
  %v1367 = vld [vmem:[%s3 + $0xac8] sm:$0xff]
  %v1368 = vld [vmem:[%s3 + $0xad0] sm:$0xff]
  %v1369 = vld [vmem:[%s3 + $0xad8] sm:$0xff]
  %v1370 = vld [vmem:[%s3 + $0xae0] sm:$0xff]
  %v1371 = vld [vmem:[%s3 + $0xae8] sm:$0xff]
  %v1372 = vld [vmem:[%s3 + $0xaf0] sm:$0xff]
  %v1373 = vld [vmem:[%s3 + $0xaf8] sm:$0xff]
  %v1374 = vld [vmem:[%s3 + $0xb00] sm:$0xff]
  %v1375 = vld [vmem:[%s3 + $0xb08] sm:$0xff]
  %v1376 = vld [vmem:[%s3 + $0xb10] sm:$0xff]
  %v1377 = vld [vmem:[%s3 + $0xb18] sm:$0xff]
  %v1378 = vld [vmem:[%s3 + $0xb20] sm:$0xff]
  %v1379 = vld [vmem:[%s3 + $0xb28] sm:$0xff]
  %v1380 = vld [vmem:[%s3 + $0xb30] sm:$0xff]
  %v1381 = vld [vmem:[%s3 + $0xb38] sm:$0xff]
  %v1382 = vld [vmem:[%s3 + $0xb40] sm:$0xff]
  %v1383 = vld [vmem:[%s3 + $0xb48] sm:$0xff]
  %v1384 = vld [vmem:[%s3 + $0xb50] sm:$0xff]
  %v1385 = vld [vmem:[%s3 + $0xb58] sm:$0xff]
  %v1386 = vld [vmem:[%s3 + $0xb60] sm:$0xff]
  %v1387 = vld [vmem:[%s3 + $0xb68] sm:$0xff]
  %v1388 = vld [vmem:[%s3 + $0xb70] sm:$0xff]
  %v1389 = vld [vmem:[%s3 + $0xb78] sm:$0xff]
  %v1390 = vld [vmem:[%s3 + $0xb80] sm:$0xff]
  %v1391 = vld [vmem:[%s3 + $0xb88] sm:$0xff]
  %v1392 = vld [vmem:[%s3 + $0xb90] sm:$0xff]
  %v1393 = vld [vmem:[%s3 + $0xb98] sm:$0xff]
  %v1394 = vld [vmem:[%s3 + $0xba0] sm:$0xff]
  %v1395 = vld [vmem:[%s3 + $0xba8] sm:$0xff]
  %v1396 = vld [vmem:[%s3 + $0xbb0] sm:$0xff]
  %v1397 = vld [vmem:[%s3 + $0xbb8] sm:$0xff]
  %v1398 = vld [vmem:[%s3 + $0xbc0] sm:$0xff]
  %v1399 = vld [vmem:[%s3 + $0xbc8] sm:$0xff]
  %v1400 = vld [vmem:[%s3 + $0xbd0] sm:$0xff]
  %v1401 = vld [vmem:[%s3 + $0xbd8] sm:$0xff]
  %v1402 = vld [vmem:[%s3 + $0xbe0] sm:$0xff]
  %v1403 = vld [vmem:[%s3 + $0xbe8] sm:$0xff]
  %v1404 = vld [vmem:[%s3 + $0xbf0] sm:$0xff]
  %v1405 = vld [vmem:[%s3 + $0xbf8] sm:$0xff]
  %v1406 = vld [vmem:[%s3 + $0xc00] sm:$0xff]
  %v1407 = vld [vmem:[%s3 + $0xc08] sm:$0xff]
  %v1408 = vld [vmem:[%s3 + $0xc10] sm:$0xff]
  %v1409 = vld [vmem:[%s3 + $0xc18] sm:$0xff]
  %v1410 = vld [vmem:[%s3 + $0xc20] sm:$0xff]
  %v1411 = vld [vmem:[%s3 + $0xc28] sm:$0xff]
  %v1412 = vld [vmem:[%s3 + $0xc30] sm:$0xff]
  %v1413 = vld [vmem:[%s3 + $0xc38] sm:$0xff]
  %v1414 = vld [vmem:[%s3 + $0xc40] sm:$0xff]
  %v1415 = vld [vmem:[%s3 + $0xc48] sm:$0xff]
  %v1416 = vld [vmem:[%s3 + $0xc50] sm:$0xff]
  %v1417 = vld [vmem:[%s3 + $0xc58] sm:$0xff]
  %v1418 = vld [vmem:[%s3 + $0xc60] sm:$0xff]
  %v1419 = vld [vmem:[%s3 + $0xc68] sm:$0xff]
  %v1420 = vld [vmem:[%s3 + $0xc70] sm:$0xff]
  %v1421 = vld [vmem:[%s3 + $0xc78] sm:$0xff]
  %v1422 = vld [vmem:[%s3 + $0xc80] sm:$0xff]
  %v1423 = vld [vmem:[%s3 + $0xc88] sm:$0xff]
  %v1424 = vld [vmem:[%s3 + $0xc90] sm:$0xff]
  %v1425 = vld [vmem:[%s3 + $0xc98] sm:$0xff]
  %v1426 = vld [vmem:[%s3 + $0xca0] sm:$0xff]
  %v1427 = vld [vmem:[%s3 + $0xca8] sm:$0xff]
  %v1428 = vld [vmem:[%s3 + $0xcb0] sm:$0xff]
  %v1429 = vld [vmem:[%s3 + $0xcb8] sm:$0xff]
  %v1430 = vld [vmem:[%s3 + $0xcc0] sm:$0xff]
  %v1431 = vld [vmem:[%s3 + $0xcc8] sm:$0xff]
  %v1432 = vld [vmem:[%s3 + $0xcd0] sm:$0xff]
  %v1433 = vld [vmem:[%s3 + $0xcd8] sm:$0xff]
  %v1434 = vld [vmem:[%s3 + $0xce0] sm:$0xff]
  %v1435 = vld [vmem:[%s3 + $0xce8] sm:$0xff]
  %v1436 = vld [vmem:[%s3 + $0xcf0] sm:$0xff]
  %v1437 = vld [vmem:[%s3 + $0xcf8] sm:$0xff]
  %v1438 = vld [vmem:[%s3 + $0xd00] sm:$0xff]
  %v1439 = vld [vmem:[%s3 + $0xd08] sm:$0xff]
  %v1440 = vld [vmem:[%s3 + $0xd10] sm:$0xff]
  %v1441 = vld [vmem:[%s3 + $0xd18] sm:$0xff]
  %v1442 = vld [vmem:[%s3 + $0xd20] sm:$0xff]
  %v1443 = vld [vmem:[%s3 + $0xd28] sm:$0xff]
  %v1444 = vld [vmem:[%s3 + $0xd30] sm:$0xff]
  %v1445 = vld [vmem:[%s3 + $0xd38] sm:$0xff]
  %v1446 = vld [vmem:[%s3 + $0xd40] sm:$0xff]
  %v1447 = vld [vmem:[%s3 + $0xd48] sm:$0xff]
  %v1448 = vld [vmem:[%s3 + $0xd50] sm:$0xff]
  %v1449 = vld [vmem:[%s3 + $0xd58] sm:$0xff]
  %v1450 = vld [vmem:[%s3 + $0xd60] sm:$0xff]
  %v1451 = vld [vmem:[%s3 + $0xd68] sm:$0xff]
  %v1452 = vld [vmem:[%s3 + $0xd70] sm:$0xff]
  %v1453 = vld [vmem:[%s3 + $0xd78] sm:$0xff]
  %v1454 = vld [vmem:[%s3 + $0xd80] sm:$0xff]
  %v1455 = vld [vmem:[%s3 + $0xd88] sm:$0xff]
  %v1456 = vld [vmem:[%s3 + $0xd90] sm:$0xff]
  %v1457 = vld [vmem:[%s3 + $0xd98] sm:$0xff]
  %v1458 = vld [vmem:[%s3 + $0xda0] sm:$0xff]
  %v1459 = vld [vmem:[%s3 + $0xda8] sm:$0xff]
  %v1460 = vld [vmem:[%s3 + $0xdb0] sm:$0xff]
  %v1461 = vld [vmem:[%s3 + $0xdb8] sm:$0xff]
  %v1462 = vld [vmem:[%s3 + $0xdc0] sm:$0xff]
  %v1463 = vld [vmem:[%s3 + $0xdc8] sm:$0xff]
  %v1464 = vld [vmem:[%s3 + $0xdd0] sm:$0xff]
  %v1465 = vld [vmem:[%s3 + $0xdd8] sm:$0xff]
  %v1466 = vld [vmem:[%s3 + $0xde0] sm:$0xff]
  %v1467 = vld [vmem:[%s3 + $0xde8] sm:$0xff]
  %v1468 = vld [vmem:[%s3 + $0xdf0] sm:$0xff]
  %v1469 = vld [vmem:[%s3 + $0xdf8] sm:$0xff]
  %v1470 = vld [vmem:[%s3 + $0xe00] sm:$0xff]
  %v1471 = vld [vmem:[%s3 + $0xe08] sm:$0xff]
  %v1472 = vld [vmem:[%s3 + $0xe10] sm:$0xff]
  %v1473 = vld [vmem:[%s3 + $0xe18] sm:$0xff]
  %v1474 = vld [vmem:[%s3 + $0xe20] sm:$0xff]
  %v1475 = vld [vmem:[%s3 + $0xe28] sm:$0xff]
  %v1476 = vld [vmem:[%s3 + $0xe30] sm:$0xff]
  %v1477 = vld [vmem:[%s3 + $0xe38] sm:$0xff]
  %v1478 = vld [vmem:[%s3 + $0xe40] sm:$0xff]
  %v1479 = vld [vmem:[%s3 + $0xe48] sm:$0xff]
  %v1480 = vld [vmem:[%s3 + $0xe50] sm:$0xff]
  %v1481 = vld [vmem:[%s3 + $0xe58] sm:$0xff]
  %v1482 = vld [vmem:[%s3 + $0xe60] sm:$0xff]
  %v1483 = vld [vmem:[%s3 + $0xe68] sm:$0xff]
  %v1484 = vld [vmem:[%s3 + $0xe70] sm:$0xff]
  %v1485 = vld [vmem:[%s3 + $0xe78] sm:$0xff]
  %v1486 = vld [vmem:[%s3 + $0xe80] sm:$0xff]
  %v1487 = vld [vmem:[%s3 + $0xe88] sm:$0xff]
  %v1488 = vld [vmem:[%s3 + $0xe90] sm:$0xff]
  %v1489 = vld [vmem:[%s3 + $0xe98] sm:$0xff]
  %v1490 = vld [vmem:[%s3 + $0xea0] sm:$0xff]
  %v1491 = vld [vmem:[%s3 + $0xea8] sm:$0xff]
  %v1492 = vld [vmem:[%s3 + $0xeb0] sm:$0xff]
  %v1493 = vld [vmem:[%s3 + $0xeb8] sm:$0xff]
  %v1494 = vld [vmem:[%s3 + $0xec0] sm:$0xff]
  %v1495 = vld [vmem:[%s3 + $0xec8] sm:$0xff]
  %v1496 = vld [vmem:[%s3 + $0xed0] sm:$0xff]
  %v1497 = vld [vmem:[%s3 + $0xed8] sm:$0xff]
  %v1498 = vld [vmem:[%s3 + $0xee0] sm:$0xff]
  %v1499 = vld [vmem:[%s3 + $0xee8] sm:$0xff]
  %v1500 = vld [vmem:[%s3 + $0xef0] sm:$0xff]
  %v1501 = vld [vmem:[%s3 + $0xef8] sm:$0xff]
  %v1502 = vld [vmem:[%s3 + $0xf00] sm:$0xff]
  %v1503 = vld [vmem:[%s3 + $0xf08] sm:$0xff]
  %v1504 = vld [vmem:[%s3 + $0xf10] sm:$0xff]
  %v1505 = vld [vmem:[%s3 + $0xf18] sm:$0xff]
  %v1506 = vld [vmem:[%s3 + $0xf20] sm:$0xff]
  %v1507 = vld [vmem:[%s3 + $0xf28] sm:$0xff]
  %v1508 = vld [vmem:[%s3 + $0xf30] sm:$0xff]
  %v1509 = vld [vmem:[%s3 + $0xf38] sm:$0xff]
  %v1510 = vld [vmem:[%s3 + $0xf40] sm:$0xff]
  %v1511 = vld [vmem:[%s3 + $0xf48] sm:$0xff]
  %v1512 = vld [vmem:[%s3 + $0xf50] sm:$0xff]
  %v1513 = vld [vmem:[%s3 + $0xf58] sm:$0xff]
  %v1514 = vld [vmem:[%s3 + $0xf60] sm:$0xff]
  %v1515 = vld [vmem:[%s3 + $0xf68] sm:$0xff]
  %v1516 = vld [vmem:[%s3 + $0xf70] sm:$0xff]
  %v1517 = vld [vmem:[%s3 + $0xf78] sm:$0xff]
  %v1518 = vld [vmem:[%s3 + $0xf80] sm:$0xff]
  %v1519 = vld [vmem:[%s3 + $0xf88] sm:$0xff]
  %v1520 = vld [vmem:[%s3 + $0xf90] sm:$0xff]
  %v1521 = vld [vmem:[%s3 + $0xf98] sm:$0xff]
  %v1522 = vld [vmem:[%s3 + $0xfa0] sm:$0xff]
  %v1523 = vld [vmem:[%s3 + $0xfa8] sm:$0xff]
  %v1524 = vld [vmem:[%s3 + $0xfb0] sm:$0xff]
  %v1525 = vld [vmem:[%s3 + $0xfb8] sm:$0xff]
  %v1526 = vld [vmem:[%s3 + $0xfc0] sm:$0xff]
  %v1527 = vld [vmem:[%s3 + $0xfc8] sm:$0xff]
  %v1528 = vld [vmem:[%s3 + $0xfd0] sm:$0xff]
  %v1529 = vld [vmem:[%s3 + $0xfd8] sm:$0xff]
  %v1530 = vld [vmem:[%s3 + $0xfe0] sm:$0xff]
  %v1531 = vld [vmem:[%s3 + $0xfe8] sm:$0xff]
  %v1532 = vld [vmem:[%s3 + $0xff0] sm:$0xff]
  %v1533 = vld [vmem:[%s3 + $0xff8] sm:$0xff]
  %v1534 = vld [vmem:[%s3 + $0x1000] sm:$0xff]
  %v1535 = vld [vmem:[%s3 + $0x1008] sm:$0xff]
  %v1536 = vld [vmem:[%s3 + $0x1010] sm:$0xff]
  %v1537 = vld [vmem:[%s3 + $0x1018] sm:$0xff]
  %v1538 = vld [vmem:[%s3 + $0x1020] sm:$0xff]
  %v1539 = vld [vmem:[%s3 + $0x1028] sm:$0xff]
  %v1540 = vld [vmem:[%s3 + $0x1030] sm:$0xff]
  %v1541 = vld [vmem:[%s3 + $0x1038] sm:$0xff]
  %v1542 = vld [vmem:[%s3 + $0x1040] sm:$0xff]
  %v1543 = vld [vmem:[%s3 + $0x1048] sm:$0xff]
  %v1544 = vld [vmem:[%s3 + $0x1050] sm:$0xff]
  %v1545 = vld [vmem:[%s3 + $0x1058] sm:$0xff]
  %v1546 = vld [vmem:[%s3 + $0x1060] sm:$0xff]
  %v1547 = vld [vmem:[%s3 + $0x1068] sm:$0xff]
  %v1548 = vld [vmem:[%s3 + $0x1070] sm:$0xff]
  %v1549 = vld [vmem:[%s3 + $0x1078] sm:$0xff]
  %v1550 = vld [vmem:[%s3 + $0x1080] sm:$0xff]
  %v1551 = vld [vmem:[%s3 + $0x1088] sm:$0xff]
  %v1552 = vld [vmem:[%s3 + $0x1090] sm:$0xff]
  %v1553 = vld [vmem:[%s3 + $0x1098] sm:$0xff]
  %v1554 = vld [vmem:[%s3 + $0x10a0] sm:$0xff]
  %v1555 = vld [vmem:[%s3 + $0x10a8] sm:$0xff]
  %v1556 = vld [vmem:[%s3 + $0x10b0] sm:$0xff]
  %v1557 = vld [vmem:[%s3 + $0x10b8] sm:$0xff]
  %v1558 = vld [vmem:[%s3 + $0x10c0] sm:$0xff]
  %v1559 = vld [vmem:[%s3 + $0x10c8] sm:$0xff]
  %v1560 = vld [vmem:[%s3 + $0x10d0] sm:$0xff]
  %v1561 = vld [vmem:[%s3 + $0x10d8] sm:$0xff]
  %v1562 = vld [vmem:[%s3 + $0x10e0] sm:$0xff]
  %v1563 = vld [vmem:[%s3 + $0x10e8] sm:$0xff]
  %v1564 = vld [vmem:[%s3 + $0x10f0] sm:$0xff]
  %v1565 = vld [vmem:[%s3 + $0x10f8] sm:$0xff]
  %v1566 = vld [vmem:[%s3 + $0x1100] sm:$0xff]
  %v1567 = vld [vmem:[%s3 + $0x1108] sm:$0xff]
  %v1568 = vld [vmem:[%s3 + $0x1110] sm:$0xff]
  %v1569 = vld [vmem:[%s3 + $0x1118] sm:$0xff]
  %v1570 = vld [vmem:[%s3 + $0x1120] sm:$0xff]
  %v1571 = vld [vmem:[%s3 + $0x1128] sm:$0xff]
  %v1572 = vld [vmem:[%s3 + $0x1130] sm:$0xff]
  %v1573 = vld [vmem:[%s3 + $0x1138] sm:$0xff]
  %v1574 = vld [vmem:[%s3 + $0x1140] sm:$0xff]
  %v1575 = vld [vmem:[%s3 + $0x1148] sm:$0xff]
  %v1576 = vld [vmem:[%s3 + $0x1150] sm:$0xff]
  %v1577 = vld [vmem:[%s3 + $0x1158] sm:$0xff]
  %v1578 = vld [vmem:[%s3 + $0x1160] sm:$0xff]
  %v1579 = vld [vmem:[%s3 + $0x1168] sm:$0xff]
  %v1580 = vld [vmem:[%s3 + $0x1170] sm:$0xff]
  %v1581 = vld [vmem:[%s3 + $0x1178] sm:$0xff]
  %v1582 = vld [vmem:[%s3 + $0x1180] sm:$0xff]
  %v1583 = vld [vmem:[%s3 + $0x1188] sm:$0xff]
  %v1584 = vld [vmem:[%s3 + $0x1190] sm:$0xff]
  %v1585 = vld [vmem:[%s3 + $0x1198] sm:$0xff]
  %v1586 = vld [vmem:[%s3 + $0x11a0] sm:$0xff]
  %v1587 = vld [vmem:[%s3 + $0x11a8] sm:$0xff]
  %v1588 = vld [vmem:[%s3 + $0x11b0] sm:$0xff]
  %v1589 = vld [vmem:[%s3 + $0x11b8] sm:$0xff]
  %v1590 = vld [vmem:[%s3 + $0x11c0] sm:$0xff]
  %v1591 = vld [vmem:[%s3 + $0x11c8] sm:$0xff]
  %v1592 = vld [vmem:[%s3 + $0x11d0] sm:$0xff]
  %v1593 = vld [vmem:[%s3 + $0x11d8] sm:$0xff]
  %v1594 = vld [vmem:[%s3 + $0x11e0] sm:$0xff]
  %v1595 = vld [vmem:[%s3 + $0x11e8] sm:$0xff]
  %v1596 = vld [vmem:[%s3 + $0x11f0] sm:$0xff]
  %v1597 = vld [vmem:[%s3 + $0x11f8] sm:$0xff]
  %v1598 = vld [vmem:[%s3 + $0x1200] sm:$0xff]
  %v1599 = vld [vmem:[%s3 + $0x1208] sm:$0xff]
  %v1600 = vld [vmem:[%s3 + $0x1210] sm:$0xff]
  %v1601 = vld [vmem:[%s3 + $0x1218] sm:$0xff]
  %v1602 = vld [vmem:[%s3 + $0x1220] sm:$0xff]
  %v1603 = vld [vmem:[%s3 + $0x1228] sm:$0xff]
  %v1604 = vld [vmem:[%s3 + $0x1230] sm:$0xff]
  %v1605 = vld [vmem:[%s3 + $0x1238] sm:$0xff]
  %v1606 = vld [vmem:[%s3 + $0x1240] sm:$0xff]
  %v1607 = vld [vmem:[%s3 + $0x1248] sm:$0xff]
  %v1608 = vld [vmem:[%s3 + $0x1250] sm:$0xff]
  %v1609 = vld [vmem:[%s3 + $0x1258] sm:$0xff]
  %v1610 = vld [vmem:[%s3 + $0x1260] sm:$0xff]
  %v1611 = vld [vmem:[%s3 + $0x1268] sm:$0xff]
  %v1612 = vld [vmem:[%s3 + $0x1270] sm:$0xff]
  %v1613 = vld [vmem:[%s3 + $0x1278] sm:$0xff]
  %v1614 = vld [vmem:[%s3 + $0x1280] sm:$0xff]
  %v1615 = vld [vmem:[%s3 + $0x1288] sm:$0xff]
  %v1616 = vld [vmem:[%s3 + $0x1290] sm:$0xff]
  %v1617 = vld [vmem:[%s3 + $0x1298] sm:$0xff]
  %v1618 = vld [vmem:[%s3 + $0x12a0] sm:$0xff]
  %v1619 = vld [vmem:[%s3 + $0x12a8] sm:$0xff]
  %v1620 = vld [vmem:[%s3 + $0x12b0] sm:$0xff]
  %v1621 = vld [vmem:[%s3 + $0x12b8] sm:$0xff]
  %v1622 = vld [vmem:[%s3 + $0x12c0] sm:$0xff]
  %v1623 = vld [vmem:[%s3 + $0x12c8] sm:$0xff]
  %v1624 = vld [vmem:[%s3 + $0x12d0] sm:$0xff]
  %v1625 = vld [vmem:[%s3 + $0x12d8] sm:$0xff]
  %v1626 = vld [vmem:[%s3 + $0x12e0] sm:$0xff]
  %v1627 = vld [vmem:[%s3 + $0x12e8] sm:$0xff]
  %v1628 = vld [vmem:[%s3 + $0x12f0] sm:$0xff]
  %v1629 = vld [vmem:[%s3 + $0x12f8] sm:$0xff]
  %v1630 = vld [vmem:[%s3 + $0x1300] sm:$0xff]
  %v1631 = vld [vmem:[%s3 + $0x1308] sm:$0xff]
  %v1632 = vld [vmem:[%s3 + $0x1310] sm:$0xff]
  %v1633 = vld [vmem:[%s3 + $0x1318] sm:$0xff]
  %v1634 = vld [vmem:[%s3 + $0x1320] sm:$0xff]
  %v1635 = vld [vmem:[%s3 + $0x1328] sm:$0xff]
  %v1636 = vld [vmem:[%s3 + $0x1330] sm:$0xff]
  %v1637 = vld [vmem:[%s3 + $0x1338] sm:$0xff]
  %v1638 = vld [vmem:[%s3 + $0x1340] sm:$0xff]
  %v1639 = vld [vmem:[%s3 + $0x1348] sm:$0xff]
  %v1640 = vld [vmem:[%s3 + $0x1350] sm:$0xff]
  %v1641 = vld [vmem:[%s3 + $0x1358] sm:$0xff]
  %v1642 = vld [vmem:[%s3 + $0x1360] sm:$0xff]
  %v1643 = vld [vmem:[%s3 + $0x1368] sm:$0xff]
  %v1644 = vld [vmem:[%s3 + $0x1370] sm:$0xff]
  %v1645 = vld [vmem:[%s3 + $0x1378] sm:$0xff]
  %v1646 = vld [vmem:[%s3 + $0x1380] sm:$0xff]
  %v1647 = vld [vmem:[%s3 + $0x1388] sm:$0xff]
  %v1648 = vld [vmem:[%s3 + $0x1390] sm:$0xff]
  %v1649 = vld [vmem:[%s3 + $0x1398] sm:$0xff]
  %v1650 = vld [vmem:[%s3 + $0x13a0] sm:$0xff]
  %v1651 = vld [vmem:[%s3 + $0x13a8] sm:$0xff]
  %v1652 = vld [vmem:[%s3 + $0x13b0] sm:$0xff]
  %v1653 = vld [vmem:[%s3 + $0x13b8] sm:$0xff]
  %v1654 = vld [vmem:[%s3 + $0x13c0] sm:$0xff]
  %v1655 = vld [vmem:[%s3 + $0x13c8] sm:$0xff]
  %v1656 = vld [vmem:[%s3 + $0x13d0] sm:$0xff]
  %v1657 = vld [vmem:[%s3 + $0x13d8] sm:$0xff]
  %v1658 = vld [vmem:[%s3 + $0x13e0] sm:$0xff]
  %v1659 = vld [vmem:[%s3 + $0x13e8] sm:$0xff]
  %v1660 = vld [vmem:[%s3 + $0x13f0] sm:$0xff]
  %v1661 = vld [vmem:[%s3 + $0x13f8] sm:$0xff]
  %v1662 = vld [vmem:[%s3 + $0x1400] sm:$0xff]
  %v1663 = vld [vmem:[%s3 + $0x1408] sm:$0xff]
  %v1664 = vld [vmem:[%s3 + $0x1410] sm:$0xff]
  %v1665 = vld [vmem:[%s3 + $0x1418] sm:$0xff]
  %v1666 = vld [vmem:[%s3 + $0x1420] sm:$0xff]
  %v1667 = vld [vmem:[%s3 + $0x1428] sm:$0xff]
  %v1668 = vld [vmem:[%s3 + $0x1430] sm:$0xff]
  %v1669 = vld [vmem:[%s3 + $0x1438] sm:$0xff]
  %v1670 = vld [vmem:[%s3 + $0x1440] sm:$0xff]
  %v1671 = vld [vmem:[%s3 + $0x1448] sm:$0xff]
  %v1672 = vld [vmem:[%s3 + $0x1450] sm:$0xff]
  %v1673 = vld [vmem:[%s3 + $0x1458] sm:$0xff]
  %v1674 = vld [vmem:[%s3 + $0x1460] sm:$0xff]
  %v1675 = vld [vmem:[%s3 + $0x1468] sm:$0xff]
  %v1676 = vld [vmem:[%s3 + $0x1470] sm:$0xff]
  %v1677 = vld [vmem:[%s3 + $0x1478] sm:$0xff]
  %v1678 = vld [vmem:[%s3 + $0x1480] sm:$0xff]
  %v1679 = vld [vmem:[%s3 + $0x1488] sm:$0xff]
  %v1680 = vld [vmem:[%s3 + $0x1490] sm:$0xff]
  %v1681 = vld [vmem:[%s3 + $0x1498] sm:$0xff]
  %v1682 = vld [vmem:[%s3 + $0x14a0] sm:$0xff]
  %v1683 = vld [vmem:[%s3 + $0x14a8] sm:$0xff]
  %v1684 = vld [vmem:[%s3 + $0x14b0] sm:$0xff]
  %v1685 = vld [vmem:[%s3 + $0x14b8] sm:$0xff]
  %v1686 = vld [vmem:[%s3 + $0x14c0] sm:$0xff]
  %v1687 = vld [vmem:[%s3 + $0x14c8] sm:$0xff]
  %v1688 = vld [vmem:[%s3 + $0x14d0] sm:$0xff]
  %v1689 = vld [vmem:[%s3 + $0x14d8] sm:$0xff]
  %v1690 = vld [vmem:[%s3 + $0x14e0] sm:$0xff]
  %v1691 = vld [vmem:[%s3 + $0x14e8] sm:$0xff]
  %v1692 = vld [vmem:[%s3 + $0x14f0] sm:$0xff]
  %v1693 = vld [vmem:[%s3 + $0x14f8] sm:$0xff]
  %v1694 = vld [vmem:[%s3 + $0x1500] sm:$0xff]
  %v1695 = vld [vmem:[%s3 + $0x1508] sm:$0xff]
  %v1696 = vld [vmem:[%s3 + $0x1510] sm:$0xff]
  %v1697 = vld [vmem:[%s3 + $0x1518] sm:$0xff]
  %v1698 = vld [vmem:[%s3 + $0x1520] sm:$0xff]
  %v1699 = vld [vmem:[%s3 + $0x1528] sm:$0xff]
  %v1700 = vld [vmem:[%s3 + $0x1530] sm:$0xff]
  %v1701 = vld [vmem:[%s3 + $0x1538] sm:$0xff]
  %v1702 = vld [vmem:[%s3 + $0x1540] sm:$0xff]
  %v1703 = vld [vmem:[%s3 + $0x1548] sm:$0xff]
  %v1704 = vld [vmem:[%s3 + $0x1550] sm:$0xff]
  %v1705 = vld [vmem:[%s3 + $0x1558] sm:$0xff]
  %v1706 = vld [vmem:[%s3 + $0x1560] sm:$0xff]
  %v1707 = vld [vmem:[%s3 + $0x1568] sm:$0xff]
  %v1708 = vld [vmem:[%s3 + $0x1570] sm:$0xff]
  %v1709 = vld [vmem:[%s3 + $0x1578] sm:$0xff]
  %v1710 = vld [vmem:[%s3 + $0x1580] sm:$0xff]
  %v1711 = vld [vmem:[%s3 + $0x1588] sm:$0xff]
  %v1712 = vld [vmem:[%s3 + $0x1590] sm:$0xff]
  %v1713 = vld [vmem:[%s3 + $0x1598] sm:$0xff]
  %v1714 = vld [vmem:[%s3 + $0x15a0] sm:$0xff]
  %v1715 = vld [vmem:[%s3 + $0x15a8] sm:$0xff]
  %v1716 = vld [vmem:[%s3 + $0x15b0] sm:$0xff]
  %v1717 = vld [vmem:[%s3 + $0x15b8] sm:$0xff]
  %v1718 = vld [vmem:[%s3 + $0x15c0] sm:$0xff]
  %v1719 = vld [vmem:[%s3 + $0x15c8] sm:$0xff]
  %v1720 = vld [vmem:[%s3 + $0x15d0] sm:$0xff]
  %v1721 = vld [vmem:[%s3 + $0x15d8] sm:$0xff]
  %v1722 = vld [vmem:[%s3 + $0x15e0] sm:$0xff]
  %v1723 = vld [vmem:[%s3 + $0x15e8] sm:$0xff]
  %v1724 = vld [vmem:[%s3 + $0x15f0] sm:$0xff]
  %v1725 = vld [vmem:[%s3 + $0x15f8] sm:$0xff]
  %v1726 = vld [vmem:[%s3 + $0x1600] sm:$0xff]
  %v1727 = vld [vmem:[%s3 + $0x1608] sm:$0xff]
  %v1728 = vld [vmem:[%s3 + $0x1610] sm:$0xff]
  %v1729 = vld [vmem:[%s3 + $0x1618] sm:$0xff]
  %v1730 = vld [vmem:[%s3 + $0x1620] sm:$0xff]
  %v1731 = vld [vmem:[%s3 + $0x1628] sm:$0xff]
  %v1732 = vld [vmem:[%s3 + $0x1630] sm:$0xff]
  %v1733 = vld [vmem:[%s3 + $0x1638] sm:$0xff]
  %v1734 = vld [vmem:[%s3 + $0x1640] sm:$0xff]
  %v1735 = vld [vmem:[%s3 + $0x1648] sm:$0xff]
  %v1736 = vld [vmem:[%s3 + $0x1650] sm:$0xff]
  %v1737 = vld [vmem:[%s3 + $0x1658] sm:$0xff]
  %v1738 = vld [vmem:[%s3 + $0x1660] sm:$0xff]
  %v1739 = vld [vmem:[%s3 + $0x1668] sm:$0xff]
  %v1740 = vld [vmem:[%s3 + $0x1670] sm:$0xff]
  %v1741 = vld [vmem:[%s3 + $0x1678] sm:$0xff]
  %v1742 = vld [vmem:[%s3 + $0x1680] sm:$0xff]
  %v1743 = vld [vmem:[%s3 + $0x1688] sm:$0xff]
  %v1744 = vld [vmem:[%s3 + $0x1690] sm:$0xff]
  %v1745 = vld [vmem:[%s3 + $0x1698] sm:$0xff]
  %v1746 = vld [vmem:[%s3 + $0x16a0] sm:$0xff]
  %v1747 = vld [vmem:[%s3 + $0x16a8] sm:$0xff]
  %v1748 = vld [vmem:[%s3 + $0x16b0] sm:$0xff]
  %v1749 = vld [vmem:[%s3 + $0x16b8] sm:$0xff]
  %v1750 = vld [vmem:[%s3 + $0x16c0] sm:$0xff]
  %v1751 = vld [vmem:[%s3 + $0x16c8] sm:$0xff]
  %v1752 = vld [vmem:[%s3 + $0x16d0] sm:$0xff]
  %v1753 = vld [vmem:[%s3 + $0x16d8] sm:$0xff]
  %v1754 = vld [vmem:[%s3 + $0x16e0] sm:$0xff]
  %v1755 = vld [vmem:[%s3 + $0x16e8] sm:$0xff]
  %v1756 = vld [vmem:[%s3 + $0x16f0] sm:$0xff]
  %v1757 = vld [vmem:[%s3 + $0x16f8] sm:$0xff]
  %v1758 = vld [vmem:[%s3 + $0x1700] sm:$0xff]
  %v1759 = vld [vmem:[%s3 + $0x1708] sm:$0xff]
  %v1760 = vld [vmem:[%s3 + $0x1710] sm:$0xff]
  %v1761 = vld [vmem:[%s3 + $0x1718] sm:$0xff]
  %v1762 = vld [vmem:[%s3 + $0x1720] sm:$0xff]
  %v1763 = vld [vmem:[%s3 + $0x1728] sm:$0xff]
  %v1764 = vld [vmem:[%s3 + $0x1730] sm:$0xff]
  %v1765 = vld [vmem:[%s3 + $0x1738] sm:$0xff]
  %v1766 = vld [vmem:[%s3 + $0x1740] sm:$0xff]
  %v1767 = vld [vmem:[%s3 + $0x1748] sm:$0xff]
  %v1768 = vld [vmem:[%s3 + $0x1750] sm:$0xff]
  %v1769 = vld [vmem:[%s3 + $0x1758] sm:$0xff]
  %v1770 = vld [vmem:[%s3 + $0x1760] sm:$0xff]
  %v1771 = vld [vmem:[%s3 + $0x1768] sm:$0xff]
  %v1772 = vld [vmem:[%s3 + $0x1770] sm:$0xff]
  %v1773 = vld [vmem:[%s3 + $0x1778] sm:$0xff]
  %v1774 = vld [vmem:[%s3 + $0x1780] sm:$0xff]
  %v1775 = vld [vmem:[%s3 + $0x1788] sm:$0xff]
  %v1776 = vld [vmem:[%s3 + $0x1790] sm:$0xff]
  %v1777 = vld [vmem:[%s3 + $0x1798] sm:$0xff]
  %v1778 = vld [vmem:[%s3 + $0x17a0] sm:$0xff]
  %v1779 = vld [vmem:[%s3 + $0x17a8] sm:$0xff]
  %v1780 = vld [vmem:[%s3 + $0x17b0] sm:$0xff]
  %v1781 = vld [vmem:[%s3 + $0x17b8] sm:$0xff]
  %v1782 = vld [vmem:[%s3 + $0x17c0] sm:$0xff]
  %v1783 = vld [vmem:[%s3 + $0x17c8] sm:$0xff]
  %v1784 = vld [vmem:[%s3 + $0x17d0] sm:$0xff]
  %v1785 = vld [vmem:[%s3 + $0x17d8] sm:$0xff]
  %v1786 = vld [vmem:[%s3 + $0x17e0] sm:$0xff]
  %v1787 = vld [vmem:[%s3 + $0x17e8] sm:$0xff]
  %v1788 = vld [vmem:[%s3 + $0x17f0] sm:$0xff]
  %v1789 = vld [vmem:[%s3 + $0x17f8] sm:$0xff]
  %v1790 = vld [vmem:[%s3 + $0x1800] sm:$0xff]
  %v1791 = vld [vmem:[%s3 + $0x1808] sm:$0xff]
  %v1792 = vld [vmem:[%s3 + $0x1810] sm:$0xff]
  %v1793 = vld [vmem:[%s3 + $0x1818] sm:$0xff]
  %v1794 = vld [vmem:[%s3 + $0x1820] sm:$0xff]
  %v1795 = vld [vmem:[%s3 + $0x1828] sm:$0xff]
  %v1796 = vld [vmem:[%s3 + $0x1830] sm:$0xff]
  %v1797 = vld [vmem:[%s3 + $0x1838] sm:$0xff]
  %v1798 = vld [vmem:[%s3 + $0x1840] sm:$0xff]
  %v1799 = vld [vmem:[%s3 + $0x1848] sm:$0xff]
  %v1800 = vld [vmem:[%s3 + $0x1850] sm:$0xff]
  %v1801 = vld [vmem:[%s3 + $0x1858] sm:$0xff]
  %v1802 = vld [vmem:[%s3 + $0x1860] sm:$0xff]
  %v1803 = vld [vmem:[%s3 + $0x1868] sm:$0xff]
  %v1804 = vld [vmem:[%s3 + $0x1870] sm:$0xff]
  %v1805 = vld [vmem:[%s3 + $0x1878] sm:$0xff]
  %v1806 = vld [vmem:[%s3 + $0x1880] sm:$0xff]
  %v1807 = vld [vmem:[%s3 + $0x1888] sm:$0xff]
  %v1808 = vld [vmem:[%s3 + $0x1890] sm:$0xff]
  %v1809 = vld [vmem:[%s3 + $0x1898] sm:$0xff]
  %v1810 = vld [vmem:[%s3 + $0x18a0] sm:$0xff]
  %v1811 = vld [vmem:[%s3 + $0x18a8] sm:$0xff]
  %v1812 = vld [vmem:[%s3 + $0x18b0] sm:$0xff]
  %v1813 = vld [vmem:[%s3 + $0x18b8] sm:$0xff]
  %v1814 = vld [vmem:[%s3 + $0x18c0] sm:$0xff]
  %v1815 = vld [vmem:[%s3 + $0x18c8] sm:$0xff]
  %v1816 = vld [vmem:[%s3 + $0x18d0] sm:$0xff]
  %v1817 = vld [vmem:[%s3 + $0x18d8] sm:$0xff]
  %v1818 = vld [vmem:[%s3 + $0x18e0] sm:$0xff]
  %v1819 = vld [vmem:[%s3 + $0x18e8] sm:$0xff]
  %v1820 = vld [vmem:[%s3 + $0x18f0] sm:$0xff]
  %v1821 = vld [vmem:[%s3 + $0x18f8] sm:$0xff]
  %v1822 = vld [vmem:[%s3 + $0x1900] sm:$0xff]
  %v1823 = vld [vmem:[%s3 + $0x1908] sm:$0xff]
  %v1824 = vld [vmem:[%s3 + $0x1910] sm:$0xff]
  %v1825 = vld [vmem:[%s3 + $0x1918] sm:$0xff]
  %v1826 = vld [vmem:[%s3 + $0x1920] sm:$0xff]
  %v1827 = vld [vmem:[%s3 + $0x1928] sm:$0xff]
  %v1828 = vld [vmem:[%s3 + $0x1930] sm:$0xff]
  %v1829 = vld [vmem:[%s3 + $0x1938] sm:$0xff]
  %v1830 = vld [vmem:[%s3 + $0x1940] sm:$0xff]
  %v1831 = vld [vmem:[%s3 + $0x1948] sm:$0xff]
  %v1832 = vld [vmem:[%s3 + $0x1950] sm:$0xff]
  %v1833 = vld [vmem:[%s3 + $0x1958] sm:$0xff]
  %v1834 = vld [vmem:[%s3 + $0x1960] sm:$0xff]
  %v1835 = vld [vmem:[%s3 + $0x1968] sm:$0xff]
  %v1836 = vld [vmem:[%s3 + $0x1970] sm:$0xff]
  %v1837 = vld [vmem:[%s3 + $0x1978] sm:$0xff]
  %v1838 = vld [vmem:[%s3 + $0x1980] sm:$0xff]
  %v1839 = vld [vmem:[%s3 + $0x1988] sm:$0xff]
  %v1840 = vld [vmem:[%s3 + $0x1990] sm:$0xff]
  %v1841 = vld [vmem:[%s3 + $0x1998] sm:$0xff]
  %v1842 = vld [vmem:[%s3 + $0x19a0] sm:$0xff]
  %v1843 = vld [vmem:[%s3 + $0x19a8] sm:$0xff]
  %v1844 = vld [vmem:[%s3 + $0x19b0] sm:$0xff]
  %v1845 = vld [vmem:[%s3 + $0x19b8] sm:$0xff]
  %v1846 = vld [vmem:[%s3 + $0x19c0] sm:$0xff]
  %v1847 = vld [vmem:[%s3 + $0x19c8] sm:$0xff]
  %v1848 = vld [vmem:[%s3 + $0x19d0] sm:$0xff]
  %v1849 = vld [vmem:[%s3 + $0x19d8] sm:$0xff]
  %v1850 = vld [vmem:[%s3 + $0x19e0] sm:$0xff]
  %v1851 = vld [vmem:[%s3 + $0x19e8] sm:$0xff]
  %v1852 = vld [vmem:[%s3 + $0x19f0] sm:$0xff]
  %v1853 = vld [vmem:[%s3 + $0x19f8] sm:$0xff]
  %v1854 = vld [vmem:[%s3 + $0x1a00] sm:$0xff]
  %v1855 = vld [vmem:[%s3 + $0x1a08] sm:$0xff]
  %v1856 = vld [vmem:[%s3 + $0x1a10] sm:$0xff]
  %v1857 = vld [vmem:[%s3 + $0x1a18] sm:$0xff]
  %v1858 = vld [vmem:[%s3 + $0x1a20] sm:$0xff]
  %v1859 = vld [vmem:[%s3 + $0x1a28] sm:$0xff]
  %v1860 = vld [vmem:[%s3 + $0x1a30] sm:$0xff]
  %v1861 = vld [vmem:[%s3 + $0x1a38] sm:$0xff]
  %v1862 = vld [vmem:[%s3 + $0x1a40] sm:$0xff]
  %v1863 = vld [vmem:[%s3 + $0x1a48] sm:$0xff]
  %v1864 = vld [vmem:[%s3 + $0x1a50] sm:$0xff]
  %v1865 = vld [vmem:[%s3 + $0x1a58] sm:$0xff]
  %v1866 = vld [vmem:[%s3 + $0x1a60] sm:$0xff]
  %v1867 = vld [vmem:[%s3 + $0x1a68] sm:$0xff]
  %v1868 = vld [vmem:[%s3 + $0x1a70] sm:$0xff]
  %v1869 = vld [vmem:[%s3 + $0x1a78] sm:$0xff]
  %v1870 = vld [vmem:[%s3 + $0x1a80] sm:$0xff]
  %v1871 = vld [vmem:[%s3 + $0x1a88] sm:$0xff]
  %v1872 = vld [vmem:[%s3 + $0x1a90] sm:$0xff]
  %v1873 = vld [vmem:[%s3 + $0x1a98] sm:$0xff]
  %v1874 = vld [vmem:[%s3 + $0x1aa0] sm:$0xff]
  %v1875 = vld [vmem:[%s3 + $0x1aa8] sm:$0xff]
  %v1876 = vld [vmem:[%s3 + $0x1ab0] sm:$0xff]
  %v1877 = vld [vmem:[%s3 + $0x1ab8] sm:$0xff]
  %v1878 = vld [vmem:[%s3 + $0x1ac0] sm:$0xff]
  %v1879 = vld [vmem:[%s3 + $0x1ac8] sm:$0xff]
  %v1880 = vld [vmem:[%s3 + $0x1ad0] sm:$0xff]
  %v1881 = vld [vmem:[%s3 + $0x1ad8] sm:$0xff]
  %v1882 = vld [vmem:[%s3 + $0x1ae0] sm:$0xff]
  %v1883 = vld [vmem:[%s3 + $0x1ae8] sm:$0xff]
  %v1884 = vld [vmem:[%s3 + $0x1af0] sm:$0xff]
  %v1885 = vld [vmem:[%s3 + $0x1af8] sm:$0xff]
  %v1886 = vld [vmem:[%s3 + $0x1b00] sm:$0xff]
  %v1887 = vld [vmem:[%s3 + $0x1b08] sm:$0xff]
  %v1888 = vld [vmem:[%s3 + $0x1b10] sm:$0xff]
  %v1889 = vld [vmem:[%s3 + $0x1b18] sm:$0xff]
  %v1890 = vld [vmem:[%s3 + $0x1b20] sm:$0xff]
  %v1891 = vld [vmem:[%s3 + $0x1b28] sm:$0xff]
  %v1892 = vld [vmem:[%s3 + $0x1b30] sm:$0xff]
  %v1893 = vld [vmem:[%s3 + $0x1b38] sm:$0xff]
  %v1894 = vld [vmem:[%s3 + $0x1b40] sm:$0xff]
  %v1895 = vld [vmem:[%s3 + $0x1b48] sm:$0xff]
  %v1896 = vld [vmem:[%s3 + $0x1b50] sm:$0xff]
  %v1897 = vld [vmem:[%s3 + $0x1b58] sm:$0xff]
  %v1898 = vld [vmem:[%s3 + $0x1b60] sm:$0xff]
  %v1899 = vld [vmem:[%s3 + $0x1b68] sm:$0xff]
  %v1900 = vld [vmem:[%s3 + $0x1b70] sm:$0xff]
  %v1901 = vld [vmem:[%s3 + $0x1b78] sm:$0xff]
  %v1902 = vld [vmem:[%s3 + $0x1b80] sm:$0xff]
  %v1903 = vld [vmem:[%s3 + $0x1b88] sm:$0xff]
  %v1904 = vld [vmem:[%s3 + $0x1b90] sm:$0xff]
  %v1905 = vld [vmem:[%s3 + $0x1b98] sm:$0xff]
  %v1906 = vld [vmem:[%s3 + $0x1ba0] sm:$0xff]
  %v1907 = vld [vmem:[%s3 + $0x1ba8] sm:$0xff]
  %v1908 = vld [vmem:[%s3 + $0x1bb0] sm:$0xff]
  %v1909 = vld [vmem:[%s3 + $0x1bb8] sm:$0xff]
  %v1910 = vld [vmem:[%s3 + $0x1bc0] sm:$0xff]
  %v1911 = vld [vmem:[%s3 + $0x1bc8] sm:$0xff]
  %v1912 = vld [vmem:[%s3 + $0x1bd0] sm:$0xff]
  %v1913 = vld [vmem:[%s3 + $0x1bd8] sm:$0xff]
  %v1914 = vld [vmem:[%s3 + $0x1be0] sm:$0xff]
  %v1915 = vld [vmem:[%s3 + $0x1be8] sm:$0xff]
  %v1916 = vld [vmem:[%s3 + $0x1bf0] sm:$0xff]
  %v1917 = vld [vmem:[%s3 + $0x1bf8] sm:$0xff]
  %v1918 = vld [vmem:[%s3 + $0x1c00] sm:$0xff]
  %v1919 = vld [vmem:[%s3 + $0x1c08] sm:$0xff]
  %v1920 = vld [vmem:[%s3 + $0x1c10] sm:$0xff]
  %v1921 = vld [vmem:[%s3 + $0x1c18] sm:$0xff]
  %v1922 = vld [vmem:[%s3 + $0x1c20] sm:$0xff]
  %v1923 = vld [vmem:[%s3 + $0x1c28] sm:$0xff]
  %v1924 = vld [vmem:[%s3 + $0x1c30] sm:$0xff]
  %v1925 = vld [vmem:[%s3 + $0x1c38] sm:$0xff]
  %v1926 = vld [vmem:[%s3 + $0x1c40] sm:$0xff]
  %v1927 = vld [vmem:[%s3 + $0x1c48] sm:$0xff]
  %v1928 = vld [vmem:[%s3 + $0x1c50] sm:$0xff]
  %v1929 = vld [vmem:[%s3 + $0x1c58] sm:$0xff]
  %v1930 = vld [vmem:[%s3 + $0x1c60] sm:$0xff]
  %v1931 = vld [vmem:[%s3 + $0x1c68] sm:$0xff]
  %v1932 = vld [vmem:[%s3 + $0x1c70] sm:$0xff]
  %v1933 = vld [vmem:[%s3 + $0x1c78] sm:$0xff]
  %v1934 = vld [vmem:[%s3 + $0x1c80] sm:$0xff]
  %v1935 = vld [vmem:[%s3 + $0x1c88] sm:$0xff]
  %v1936 = vld [vmem:[%s3 + $0x1c90] sm:$0xff]
  %v1937 = vld [vmem:[%s3 + $0x1c98] sm:$0xff]
  %v1938 = vld [vmem:[%s3 + $0x1ca0] sm:$0xff]
  %v1939 = vld [vmem:[%s3 + $0x1ca8] sm:$0xff]
  %v1940 = vld [vmem:[%s3 + $0x1cb0] sm:$0xff]
  %v1941 = vld [vmem:[%s3 + $0x1cb8] sm:$0xff]
  %v1942 = vld [vmem:[%s3 + $0x1cc0] sm:$0xff]
  %v1943 = vld [vmem:[%s3 + $0x1cc8] sm:$0xff]
  %v1944 = vld [vmem:[%s3 + $0x1cd0] sm:$0xff]
  %v1945 = vld [vmem:[%s3 + $0x1cd8] sm:$0xff]
  %v1946 = vld [vmem:[%s3 + $0x1ce0] sm:$0xff]
  %v1947 = vld [vmem:[%s3 + $0x1ce8] sm:$0xff]
  %v1948 = vld [vmem:[%s3 + $0x1cf0] sm:$0xff]
  %v1949 = vld [vmem:[%s3 + $0x1cf8] sm:$0xff]
  %v1950 = vld [vmem:[%s3 + $0x1d00] sm:$0xff]
  %v1951 = vld [vmem:[%s3 + $0x1d08] sm:$0xff]
  %v1952 = vld [vmem:[%s3 + $0x1d10] sm:$0xff]
  %v1953 = vld [vmem:[%s3 + $0x1d18] sm:$0xff]
  %v1954 = vld [vmem:[%s3 + $0x1d20] sm:$0xff]
  %v1955 = vld [vmem:[%s3 + $0x1d28] sm:$0xff]
  %v1956 = vld [vmem:[%s3 + $0x1d30] sm:$0xff]
  %v1957 = vld [vmem:[%s3 + $0x1d38] sm:$0xff]
  %v1958 = vld [vmem:[%s3 + $0x1d40] sm:$0xff]
  %v1959 = vld [vmem:[%s3 + $0x1d48] sm:$0xff]
  %v1960 = vld [vmem:[%s3 + $0x1d50] sm:$0xff]
  %v1961 = vld [vmem:[%s3 + $0x1d58] sm:$0xff]
  %v1962 = vld [vmem:[%s3 + $0x1d60] sm:$0xff]
  %v1963 = vld [vmem:[%s3 + $0x1d68] sm:$0xff]
  %v1964 = vld [vmem:[%s3 + $0x1d70] sm:$0xff]
  %v1965 = vld [vmem:[%s3 + $0x1d78] sm:$0xff]
  %v1966 = vld [vmem:[%s3 + $0x1d80] sm:$0xff]
  %v1967 = vld [vmem:[%s3 + $0x1d88] sm:$0xff]
  %v1968 = vld [vmem:[%s3 + $0x1d90] sm:$0xff]
  %v1969 = vld [vmem:[%s3 + $0x1d98] sm:$0xff]
  %v1970 = vld [vmem:[%s3 + $0x1da0] sm:$0xff]
  %v1971 = vld [vmem:[%s3 + $0x1da8] sm:$0xff]
  %v1972 = vld [vmem:[%s3 + $0x1db0] sm:$0xff]
  %v1973 = vld [vmem:[%s3 + $0x1db8] sm:$0xff]
  %v1974 = vld [vmem:[%s3 + $0x1dc0] sm:$0xff]
  %v1975 = vld [vmem:[%s3 + $0x1dc8] sm:$0xff]
  %v1976 = vld [vmem:[%s3 + $0x1dd0] sm:$0xff]
  %v1977 = vld [vmem:[%s3 + $0x1dd8] sm:$0xff]
  %v1978 = vld [vmem:[%s3 + $0x1de0] sm:$0xff]
  %v1979 = vld [vmem:[%s3 + $0x1de8] sm:$0xff]
  %v1980 = vld [vmem:[%s3 + $0x1df0] sm:$0xff]
  %v1981 = vld [vmem:[%s3 + $0x1df8] sm:$0xff]
  %v1982 = vld [vmem:[%s3 + $0x1e00] sm:$0xff]
  %v1983 = vld [vmem:[%s3 + $0x1e08] sm:$0xff]
  %v1984 = vld [vmem:[%s3 + $0x1e10] sm:$0xff]
  %v1985 = vld [vmem:[%s3 + $0x1e18] sm:$0xff]
  %v1986 = vld [vmem:[%s3 + $0x1e20] sm:$0xff]
  %v1987 = vld [vmem:[%s3 + $0x1e28] sm:$0xff]
  %v1988 = vld [vmem:[%s3 + $0x1e30] sm:$0xff]
  %v1989 = vld [vmem:[%s3 + $0x1e38] sm:$0xff]
  %v1990 = vld [vmem:[%s3 + $0x1e40] sm:$0xff]
  %v1991 = vld [vmem:[%s3 + $0x1e48] sm:$0xff]
  %v1992 = vld [vmem:[%s3 + $0x1e50] sm:$0xff]
  %v1993 = vld [vmem:[%s3 + $0x1e58] sm:$0xff]
  %v1994 = vld [vmem:[%s3 + $0x1e60] sm:$0xff]
  %v1995 = vld [vmem:[%s3 + $0x1e68] sm:$0xff]
  %v1996 = vld [vmem:[%s3 + $0x1e70] sm:$0xff]
  %v1997 = vld [vmem:[%s3 + $0x1e78] sm:$0xff]
  %v1998 = vld [vmem:[%s3 + $0x1e80] sm:$0xff]
  %v1999 = vld [vmem:[%s3 + $0x1e88] sm:$0xff]
  %v2000 = vld [vmem:[%s3 + $0x1e90] sm:$0xff]
  %v2001 = vld [vmem:[%s3 + $0x1e98] sm:$0xff]
  %v2002 = vld [vmem:[%s3 + $0x1ea0] sm:$0xff]
  %v2003 = vld [vmem:[%s3 + $0x1ea8] sm:$0xff]
  %v2004 = vld [vmem:[%s3 + $0x1eb0] sm:$0xff]
  %v2005 = vld [vmem:[%s3 + $0x1eb8] sm:$0xff]
  %v2006 = vld [vmem:[%s3 + $0x1ec0] sm:$0xff]
  %v2007 = vld [vmem:[%s3 + $0x1ec8] sm:$0xff]
  %v2008 = vld [vmem:[%s3 + $0x1ed0] sm:$0xff]
  %v2009 = vld [vmem:[%s3 + $0x1ed8] sm:$0xff]
  %v2010 = vld [vmem:[%s3 + $0x1ee0] sm:$0xff]
  %v2011 = vld [vmem:[%s3 + $0x1ee8] sm:$0xff]
  %v2012 = vld [vmem:[%s3 + $0x1ef0] sm:$0xff]
  %v2013 = vld [vmem:[%s3 + $0x1ef8] sm:$0xff]
  %v2014 = vld [vmem:[%s3 + $0x1f00] sm:$0xff]
  %v2015 = vld [vmem:[%s3 + $0x1f08] sm:$0xff]
  %v2016 = vld [vmem:[%s3 + $0x1f10] sm:$0xff]
  %v2017 = vld [vmem:[%s3 + $0x1f18] sm:$0xff]
  %v2018 = vld [vmem:[%s3 + $0x1f20] sm:$0xff]
  %v2019 = vld [vmem:[%s3 + $0x1f28] sm:$0xff]
  %v2020 = vld [vmem:[%s3 + $0x1f30] sm:$0xff]
  %v2021 = vld [vmem:[%s3 + $0x1f38] sm:$0xff]
  %v2022 = vld [vmem:[%s3 + $0x1f40] sm:$0xff]
  %v2023 = vld [vmem:[%s3 + $0x1f48] sm:$0xff]
  %v2024 = vld [vmem:[%s3 + $0x1f50] sm:$0xff]
  %v2025 = vld [vmem:[%s3 + $0x1f58] sm:$0xff]
  %v2026 = vld [vmem:[%s3 + $0x1f60] sm:$0xff]
  %v2027 = vld [vmem:[%s3 + $0x1f68] sm:$0xff]
  %v2028 = vld [vmem:[%s3 + $0x1f70] sm:$0xff]
  %v2029 = vld [vmem:[%s3 + $0x1f78] sm:$0xff]
  %v2030 = vld [vmem:[%s3 + $0x1f80] sm:$0xff]
  %v2031 = vld [vmem:[%s3 + $0x1f88] sm:$0xff]
  %v2032 = vld [vmem:[%s3 + $0x1f90] sm:$0xff]
  %v2033 = vld [vmem:[%s3 + $0x1f98] sm:$0xff]
  %v2034 = vld [vmem:[%s3 + $0x1fa0] sm:$0xff]
  %v2035 = vld [vmem:[%s3 + $0x1fa8] sm:$0xff]
  %v2036 = vld [vmem:[%s3 + $0x1fb0] sm:$0xff]
  %v2037 = vld [vmem:[%s3 + $0x1fb8] sm:$0xff]
  %v2038 = vld [vmem:[%s3 + $0x1fc0] sm:$0xff]
  %v2039 = vld [vmem:[%s3 + $0x1fc8] sm:$0xff]
  %v2040 = vld [vmem:[%s3 + $0x1fd0] sm:$0xff]
  %v2041 = vld [vmem:[%s3 + $0x1fd8] sm:$0xff]
  %v2042 = vld [vmem:[%s3 + $0x1fe0] sm:$0xff]
  %v2043 = vld [vmem:[%s3 + $0x1fe8] sm:$0xff]
  %v2044 = vld [vmem:[%s3 + $0x1ff0] sm:$0xff]
  %v2045 = vld [vmem:[%s3 + $0x1ff8] sm:$0xff]
  %v2046 = vld [vmem:[%s3 + $0x2000] sm:$0xff]
  %v2047 = vld [vmem:[%s3 + $0x2008] sm:$0xff]
  %v2048 = vld [vmem:[%s3 + $0x2010] sm:$0xff]
  %v2049 = vld [vmem:[%s3 + $0x2018] sm:$0xff]
  %v2050 = vld [vmem:[%s3 + $0x2020] sm:$0xff]
  %v2051 = vld [vmem:[%s3 + $0x2028] sm:$0xff]
  %v2052 = vld [vmem:[%s3 + $0x2030] sm:$0xff]
  %v2053 = vld [vmem:[%s3 + $0x2038] sm:$0xff]
  %v2054 = vld [vmem:[%s3 + $0x2040] sm:$0xff]
  %v2055 = vld [vmem:[%s3 + $0x2048] sm:$0xff]
  %v2056 = vld [vmem:[%s3 + $0x2050] sm:$0xff]
  %v2057 = vld [vmem:[%s3 + $0x2058] sm:$0xff]
  %v2058 = vld [vmem:[%s3 + $0x2060] sm:$0xff]
  %v2059 = vld [vmem:[%s3 + $0x2068] sm:$0xff]
  %v2060 = vld [vmem:[%s3 + $0x2070] sm:$0xff]
  %v2061 = vld [vmem:[%s3 + $0x2078] sm:$0xff]
  %v2062 = vld [vmem:[%s3 + $0x2080] sm:$0xff]
  %v2063 = vld [vmem:[%s3 + $0x2088] sm:$0xff]
  %v2064 = vld [vmem:[%s3 + $0x2090] sm:$0xff]
  %v2065 = vld [vmem:[%s3 + $0x2098] sm:$0xff]
  %v2066 = vld [vmem:[%s3 + $0x20a0] sm:$0xff]
  %v2067 = vld [vmem:[%s3 + $0x20a8] sm:$0xff]
  %v2068 = vld [vmem:[%s3 + $0x20b0] sm:$0xff]
  %v2069 = vld [vmem:[%s3 + $0x20b8] sm:$0xff]
  %v2070 = vld [vmem:[%s3 + $0x20c0] sm:$0xff]
  %v2071 = vld [vmem:[%s3 + $0x20c8] sm:$0xff]
  %v2072 = vld [vmem:[%s3 + $0x20d0] sm:$0xff]
  %v2073 = vld [vmem:[%s3 + $0x20d8] sm:$0xff]
  %v2074 = vld [vmem:[%s3 + $0x20e0] sm:$0xff]
  %v2075 = vld [vmem:[%s3 + $0x20e8] sm:$0xff]
  %v2076 = vld [vmem:[%s3 + $0x20f0] sm:$0xff]
  %v2077 = vld [vmem:[%s3 + $0x20f8] sm:$0xff]
  %v2078 = vld [vmem:[%s3 + $0x2100] sm:$0xff]
  %v2079 = vld [vmem:[%s3 + $0x2108] sm:$0xff]
  %v2080 = vld [vmem:[%s3 + $0x2110] sm:$0xff]
  %v2081 = vld [vmem:[%s3 + $0x2118] sm:$0xff]
  %v2082 = vld [vmem:[%s3 + $0x2120] sm:$0xff]
  %v2083 = vld [vmem:[%s3 + $0x2128] sm:$0xff]
  %v2084 = vld [vmem:[%s3 + $0x2130] sm:$0xff]
  %v2085 = vld [vmem:[%s3 + $0x2138] sm:$0xff]
  %v2086 = vld [vmem:[%s3 + $0x2140] sm:$0xff]
  %v2087 = vld [vmem:[%s3 + $0x2148] sm:$0xff]
  %v2088 = vld [vmem:[%s3 + $0x2150] sm:$0xff]
  %v2089 = vld [vmem:[%s3 + $0x2158] sm:$0xff]
  %v2090 = vld [vmem:[%s3 + $0x2160] sm:$0xff]
  %v2091 = vld [vmem:[%s3 + $0x2168] sm:$0xff]
  %v2092 = vld [vmem:[%s3 + $0x2170] sm:$0xff]
  %v2093 = vld [vmem:[%s3 + $0x2178] sm:$0xff]
  %v2094 = vld [vmem:[%s3 + $0x2180] sm:$0xff]
  %v2095 = vld [vmem:[%s3 + $0x2188] sm:$0xff]
  %v2096 = vld [vmem:[%s3 + $0x2190] sm:$0xff]
  %v2097 = vld [vmem:[%s3 + $0x2198] sm:$0xff]
  %v2098 = vld [vmem:[%s3 + $0x21a0] sm:$0xff]
  %v2099 = vld [vmem:[%s3 + $0x21a8] sm:$0xff]
  %v2100 = vld [vmem:[%s3 + $0x21b0] sm:$0xff]
  %v2101 = vld [vmem:[%s3 + $0x21b8] sm:$0xff]
  %v2102 = vld [vmem:[%s3 + $0x21c0] sm:$0xff]
  %v2103 = vld [vmem:[%s3 + $0x21c8] sm:$0xff]
  %v2104 = vld [vmem:[%s3 + $0x21d0] sm:$0xff]
  %v2105 = vld [vmem:[%s3 + $0x21d8] sm:$0xff]
  %v2106 = vld [vmem:[%s3 + $0x21e0] sm:$0xff]
  %v2107 = vld [vmem:[%s3 + $0x21e8] sm:$0xff]
  %v2108 = vld [vmem:[%s3 + $0x21f0] sm:$0xff]
  %v2109 = vld [vmem:[%s3 + $0x21f8] sm:$0xff]
  %v2110 = vld [vmem:[%s3 + $0x2200] sm:$0xff]
  %v2111 = vld [vmem:[%s3 + $0x2208] sm:$0xff]
  %v2112 = vld [vmem:[%s3 + $0x2210] sm:$0xff]
  %v2113 = vld [vmem:[%s3 + $0x2218] sm:$0xff]
  %v2114 = vld [vmem:[%s3 + $0x2220] sm:$0xff]
  %v2115 = vld [vmem:[%s3 + $0x2228] sm:$0xff]
  %v2116 = vld [vmem:[%s3 + $0x2230] sm:$0xff]
  %v2117 = vld [vmem:[%s3 + $0x2238] sm:$0xff]
  %v2118 = vld [vmem:[%s3 + $0x2240] sm:$0xff]
  %v2119 = vld [vmem:[%s3 + $0x2248] sm:$0xff]
  %v2120 = vld [vmem:[%s3 + $0x2250] sm:$0xff]
  %v2121 = vld [vmem:[%s3 + $0x2258] sm:$0xff]
  %v2122 = vld [vmem:[%s3 + $0x2260] sm:$0xff]
  %v2123 = vld [vmem:[%s3 + $0x2268] sm:$0xff]
  %v2124 = vld [vmem:[%s3 + $0x2270] sm:$0xff]
  %v2125 = vld [vmem:[%s3 + $0x2278] sm:$0xff]
  %v2126 = vld [vmem:[%s3 + $0x2280] sm:$0xff]
  %v2127 = vld [vmem:[%s3 + $0x2288] sm:$0xff]
  %v2128 = vld [vmem:[%s3 + $0x2290] sm:$0xff]
  %v2129 = vld [vmem:[%s3 + $0x2298] sm:$0xff]
  %v2130 = vld [vmem:[%s3 + $0x22a0] sm:$0xff]
  %v2131 = vld [vmem:[%s3 + $0x22a8] sm:$0xff]
  %v2132 = vld [vmem:[%s3 + $0x22b0] sm:$0xff]
  %v2133 = vld [vmem:[%s3 + $0x22b8] sm:$0xff]
  %v2134 = vld [vmem:[%s3 + $0x22c0] sm:$0xff]
  %v2135 = vld [vmem:[%s3 + $0x22c8] sm:$0xff]
  %v2136 = vld [vmem:[%s3 + $0x22d0] sm:$0xff]
  %v2137 = vld [vmem:[%s3 + $0x22d8] sm:$0xff]
  %v2138 = vld [vmem:[%s3 + $0x22e0] sm:$0xff]
  %v2139 = vld [vmem:[%s3 + $0x22e8] sm:$0xff]
  %v2140 = vld [vmem:[%s3 + $0x22f0] sm:$0xff]
  %v2141 = vld [vmem:[%s3 + $0x22f8] sm:$0xff]
  %v2142 = vld [vmem:[%s3 + $0x2300] sm:$0xff]
  %v2143 = vld [vmem:[%s3 + $0x2308] sm:$0xff]
  %v2144 = vld [vmem:[%s3 + $0x2310] sm:$0xff]
  %v2145 = vld [vmem:[%s3 + $0x2318] sm:$0xff]
  %v2146 = vld [vmem:[%s3 + $0x2320] sm:$0xff]
  %v2147 = vld [vmem:[%s3 + $0x2328] sm:$0xff]
  %v2148 = vld [vmem:[%s3 + $0x2330] sm:$0xff]
  %v2149 = vld [vmem:[%s3 + $0x2338] sm:$0xff]
  %v2150 = vld [vmem:[%s3 + $0x2340] sm:$0xff]
  %v2151 = vld [vmem:[%s3 + $0x2348] sm:$0xff]
  %v2152 = vld [vmem:[%s3 + $0x2350] sm:$0xff]
  %v2153 = vld [vmem:[%s3 + $0x2358] sm:$0xff]
  %v2154 = vld [vmem:[%s3 + $0x2360] sm:$0xff]
  %v2155 = vld [vmem:[%s3 + $0x2368] sm:$0xff]
  %v2156 = vld [vmem:[%s3 + $0x2370] sm:$0xff]
  %v2157 = vld [vmem:[%s3 + $0x2378] sm:$0xff]
  %v2158 = vld [vmem:[%s3 + $0x2380] sm:$0xff]
  %v2159 = vld [vmem:[%s3 + $0x2388] sm:$0xff]
  %v2160 = vld [vmem:[%s3 + $0x2390] sm:$0xff]
  %v2161 = vld [vmem:[%s3 + $0x2398] sm:$0xff]
  %v2162 = vld [vmem:[%s3 + $0x23a0] sm:$0xff]
  %v2163 = vld [vmem:[%s3 + $0x23a8] sm:$0xff]
  %v2164 = vld [vmem:[%s3 + $0x23b0] sm:$0xff]
  %v2165 = vld [vmem:[%s3 + $0x23b8] sm:$0xff]
  %v2166 = vld [vmem:[%s3 + $0x23c0] sm:$0xff]
  %v2167 = vld [vmem:[%s3 + $0x23c8] sm:$0xff]
  %v2168 = vld [vmem:[%s3 + $0x23d0] sm:$0xff]
  %v2169 = vld [vmem:[%s3 + $0x23d8] sm:$0xff]
  %v2170 = vld [vmem:[%s3 + $0x23e0] sm:$0xff]
  %v2171 = vld [vmem:[%s3 + $0x23e8] sm:$0xff]
  %v2172 = vld [vmem:[%s3 + $0x23f0] sm:$0xff]
  %v2173 = vld [vmem:[%s3 + $0x23f8] sm:$0xff]
  %v2174 = vld [vmem:[%s3 + $0x2400] sm:$0xff]
  %v2175 = vld [vmem:[%s3 + $0x2408] sm:$0xff]
  %v2176 = vld [vmem:[%s3 + $0x2410] sm:$0xff]
  %v2177 = vld [vmem:[%s3 + $0x2418] sm:$0xff]
  %v2178 = vld [vmem:[%s3 + $0x2420] sm:$0xff]
  %v2179 = vld [vmem:[%s3 + $0x2428] sm:$0xff]
  %v2180 = vld [vmem:[%s3 + $0x2430] sm:$0xff]
  %v2181 = vld [vmem:[%s3 + $0x2438] sm:$0xff]
  %v2182 = vld [vmem:[%s3 + $0x2440] sm:$0xff]
  %v2183 = vld [vmem:[%s3 + $0x2448] sm:$0xff]
  %v2184 = vld [vmem:[%s3 + $0x2450] sm:$0xff]
  %v2185 = vld [vmem:[%s3 + $0x2458] sm:$0xff]
  %v2186 = vld [vmem:[%s3 + $0x2460] sm:$0xff]
  %v2187 = vld [vmem:[%s3 + $0x2468] sm:$0xff]
  %v2188 = vld [vmem:[%s3 + $0x2470] sm:$0xff]
  %v2189 = vld [vmem:[%s3 + $0x2478] sm:$0xff]
  %v2190 = vld [vmem:[%s3 + $0x2480] sm:$0xff]
  %v2191 = vld [vmem:[%s3 + $0x2488] sm:$0xff]
  %v2192 = vld [vmem:[%s3 + $0x2490] sm:$0xff]
  %v2193 = vld [vmem:[%s3 + $0x2498] sm:$0xff]
  %v2194 = vld [vmem:[%s3 + $0x24a0] sm:$0xff]
  %v2195 = vld [vmem:[%s3 + $0x24a8] sm:$0xff]
  %v2196 = vld [vmem:[%s3 + $0x24b0] sm:$0xff]
  %v2197 = vld [vmem:[%s3 + $0x24b8] sm:$0xff]
  %v2198 = vld [vmem:[%s3 + $0x24c0] sm:$0xff]
  %v2199 = vld [vmem:[%s3 + $0x24c8] sm:$0xff]
  %v2200 = vld [vmem:[%s3 + $0x24d0] sm:$0xff]
  %v2201 = vld [vmem:[%s3 + $0x24d8] sm:$0xff]
  %v2202 = vld [vmem:[%s3 + $0x24e0] sm:$0xff]
  %v2203 = vld [vmem:[%s3 + $0x24e8] sm:$0xff]
  %v2204 = vld [vmem:[%s3 + $0x24f0] sm:$0xff]
  %v2205 = vld [vmem:[%s3 + $0x24f8] sm:$0xff]
  %v2206 = vld [vmem:[%s3 + $0x2500] sm:$0xff]
  %v2207 = vld [vmem:[%s3 + $0x2508] sm:$0xff]
  %v2208 = vld [vmem:[%s3 + $0x2510] sm:$0xff]
  %v2209 = vld [vmem:[%s3 + $0x2518] sm:$0xff]
  %v2210 = vld [vmem:[%s3 + $0x2520] sm:$0xff]
  %v2211 = vld [vmem:[%s3 + $0x2528] sm:$0xff]
  %v2212 = vld [vmem:[%s3 + $0x2530] sm:$0xff]
  %v2213 = vld [vmem:[%s3 + $0x2538] sm:$0xff]
  %v2214 = vld [vmem:[%s3 + $0x2540] sm:$0xff]
  %v2215 = vld [vmem:[%s3 + $0x2548] sm:$0xff]
  %v2216 = vld [vmem:[%s3 + $0x2550] sm:$0xff]
  %v2217 = vld [vmem:[%s3 + $0x2558] sm:$0xff]
  %v2218 = vld [vmem:[%s3 + $0x2560] sm:$0xff]
  %v2219 = vld [vmem:[%s3 + $0x2568] sm:$0xff]
  %v2220 = vld [vmem:[%s3 + $0x2570] sm:$0xff]
  %v2221 = vld [vmem:[%s3 + $0x2578] sm:$0xff]
  %v2222 = vld [vmem:[%s3 + $0x2580] sm:$0xff]
  %v2223 = vld [vmem:[%s3 + $0x2588] sm:$0xff]
  %v2224 = vld [vmem:[%s3 + $0x2590] sm:$0xff]
  %v2225 = vld [vmem:[%s3 + $0x2598] sm:$0xff]
  %v2226 = vld [vmem:[%s3 + $0x25a0] sm:$0xff]
  %v2227 = vld [vmem:[%s3 + $0x25a8] sm:$0xff]
  %v2228 = vld [vmem:[%s3 + $0x25b0] sm:$0xff]
  %v2229 = vld [vmem:[%s3 + $0x25b8] sm:$0xff]
  %v2230 = vld [vmem:[%s3 + $0x25c0] sm:$0xff]
  %v2231 = vld [vmem:[%s3 + $0x25c8] sm:$0xff]
  %v2232 = vld [vmem:[%s3 + $0x25d0] sm:$0xff]
  %v2233 = vld [vmem:[%s3 + $0x25d8] sm:$0xff]
  %v2234 = vld [vmem:[%s3 + $0x25e0] sm:$0xff]
  %v2235 = vld [vmem:[%s3 + $0x25e8] sm:$0xff]
  %v2236 = vld [vmem:[%s3 + $0x25f0] sm:$0xff]
  %v2237 = vld [vmem:[%s3 + $0x25f8] sm:$0xff]
  %v2238 = vld [vmem:[%s3 + $0x2600] sm:$0xff]
  %v2239 = vld [vmem:[%s3 + $0x2608] sm:$0xff]
  %v2240 = vld [vmem:[%s3 + $0x2610] sm:$0xff]
  %v2241 = vld [vmem:[%s3 + $0x2618] sm:$0xff]
  %v2242 = vld [vmem:[%s3 + $0x2620] sm:$0xff]
  %v2243 = vld [vmem:[%s3 + $0x2628] sm:$0xff]
  %v2244 = vld [vmem:[%s3 + $0x2630] sm:$0xff]
  %v2245 = vld [vmem:[%s3 + $0x2638] sm:$0xff]
  %v2246 = vld [vmem:[%s3 + $0x2640] sm:$0xff]
  %v2247 = vld [vmem:[%s3 + $0x2648] sm:$0xff]
  %v2248 = vld [vmem:[%s3 + $0x2650] sm:$0xff]
  %v2249 = vld [vmem:[%s3 + $0x2658] sm:$0xff]
  %v2250 = vld [vmem:[%s3 + $0x2660] sm:$0xff]
  %v2251 = vld [vmem:[%s3 + $0x2668] sm:$0xff]
  %v2252 = vld [vmem:[%s3 + $0x2670] sm:$0xff]
  %v2253 = vld [vmem:[%s3 + $0x2678] sm:$0xff]
  %v2254 = vld [vmem:[%s3 + $0x2680] sm:$0xff]
  %v2255 = vld [vmem:[%s3 + $0x2688] sm:$0xff]
  %v2256 = vld [vmem:[%s3 + $0x2690] sm:$0xff]
  %v2257 = vld [vmem:[%s3 + $0x2698] sm:$0xff]
  %v2258 = vld [vmem:[%s3 + $0x26a0] sm:$0xff]
  %v2259 = vld [vmem:[%s3 + $0x26a8] sm:$0xff]
  %v2260 = vld [vmem:[%s3 + $0x26b0] sm:$0xff]
  %v2261 = vld [vmem:[%s3 + $0x26b8] sm:$0xff]
  %v2262 = vld [vmem:[%s3 + $0x26c0] sm:$0xff]
  %v2263 = vld [vmem:[%s3 + $0x26c8] sm:$0xff]
  %v2264 = vld [vmem:[%s3 + $0x26d0] sm:$0xff]
  %v2265 = vld [vmem:[%s3 + $0x26d8] sm:$0xff]
  %v2266 = vld [vmem:[%s3 + $0x26e0] sm:$0xff]
  %v2267 = vld [vmem:[%s3 + $0x26e8] sm:$0xff]
  %v2268 = vld [vmem:[%s3 + $0x26f0] sm:$0xff]
  %v2269 = vld [vmem:[%s3 + $0x26f8] sm:$0xff]
  %v2270 = vld [vmem:[%s3 + $0x2700] sm:$0xff]
  %v2271 = vld [vmem:[%s3 + $0x2708] sm:$0xff]
  %v2272 = vld [vmem:[%s3 + $0x2710] sm:$0xff]
  %v2273 = vld [vmem:[%s3 + $0x2718] sm:$0xff]
  %v2274 = vld [vmem:[%s3 + $0x2720] sm:$0xff]
  %v2275 = vld [vmem:[%s3 + $0x2728] sm:$0xff]
  %v2276 = vld [vmem:[%s3 + $0x2730] sm:$0xff]
  %v2277 = vld [vmem:[%s3 + $0x2738] sm:$0xff]
  %v2278 = vld [vmem:[%s3 + $0x2740] sm:$0xff]
  %v2279 = vld [vmem:[%s3 + $0x2748] sm:$0xff]
  %v2280 = vld [vmem:[%s3 + $0x2750] sm:$0xff]
  %v2281 = vld [vmem:[%s3 + $0x2758] sm:$0xff]
  %v2282 = vld [vmem:[%s3 + $0x2760] sm:$0xff]
  %v2283 = vld [vmem:[%s3 + $0x2768] sm:$0xff]
  %v2284 = vld [vmem:[%s3 + $0x2770] sm:$0xff]
  %v2285 = vld [vmem:[%s3 + $0x2778] sm:$0xff]
  %v2286 = vld [vmem:[%s3 + $0x2780] sm:$0xff]
  %v2287 = vld [vmem:[%s3 + $0x2788] sm:$0xff]
  %v2288 = vld [vmem:[%s3 + $0x2790] sm:$0xff]
  %v2289 = vld [vmem:[%s3 + $0x2798] sm:$0xff]
  %v2290 = vld [vmem:[%s3 + $0x27a0] sm:$0xff]
  %v2291 = vld [vmem:[%s3 + $0x27a8] sm:$0xff]
  %v2292 = vld [vmem:[%s3 + $0x27b0] sm:$0xff]
  %v2293 = vld [vmem:[%s3 + $0x27b8] sm:$0xff]
  %v2294 = vld [vmem:[%s3 + $0x27c0] sm:$0xff]
  %v2295 = vld [vmem:[%s3 + $0x27c8] sm:$0xff]
  %v2296 = vld [vmem:[%s3 + $0x27d0] sm:$0xff]
  %v2297 = vld [vmem:[%s3 + $0x27d8] sm:$0xff]
  %v2298 = vld [vmem:[%s3 + $0x27e0] sm:$0xff]
  %v2299 = vld [vmem:[%s3 + $0x27e8] sm:$0xff]
  %v2300 = vld [vmem:[%s3 + $0x27f0] sm:$0xff]
  %v2301 = vld [vmem:[%s3 + $0x27f8] sm:$0xff]
  %v2302 = vld [vmem:[%s3 + $0x2800] sm:$0xff]
  %v2303 = vld [vmem:[%s3 + $0x2808] sm:$0xff]
  %v2304 = vld [vmem:[%s3 + $0x2810] sm:$0xff]
  %v2305 = vld [vmem:[%s3 + $0x2818] sm:$0xff]
  %v2306 = vld [vmem:[%s3 + $0x2820] sm:$0xff]
  %v2307 = vld [vmem:[%s3 + $0x2828] sm:$0xff]
  %v2308 = vld [vmem:[%s3 + $0x2830] sm:$0xff]
  %v2309 = vld [vmem:[%s3 + $0x2838] sm:$0xff]
  %v2310 = vld [vmem:[%s3 + $0x2840] sm:$0xff]
  %v2311 = vld [vmem:[%s3 + $0x2848] sm:$0xff]
  %v2312 = vld [vmem:[%s3 + $0x2850] sm:$0xff]
  %v2313 = vld [vmem:[%s3 + $0x2858] sm:$0xff]
  %v2314 = vld [vmem:[%s3 + $0x2860] sm:$0xff]
  %v2315 = vld [vmem:[%s3 + $0x2868] sm:$0xff]
  %v2316 = vld [vmem:[%s3 + $0x2870] sm:$0xff]
  %v2317 = vld [vmem:[%s3 + $0x2878] sm:$0xff]
  %v2318 = vld [vmem:[%s3 + $0x2880] sm:$0xff]
  %v2319 = vld [vmem:[%s3 + $0x2888] sm:$0xff]
  %v2320 = vld [vmem:[%s3 + $0x2890] sm:$0xff]
  %v2321 = vld [vmem:[%s3 + $0x2898] sm:$0xff]
  %v2322 = vld [vmem:[%s3 + $0x28a0] sm:$0xff]
  %v2323 = vld [vmem:[%s3 + $0x28a8] sm:$0xff]
  %v2324 = vld [vmem:[%s3 + $0x28b0] sm:$0xff]
  %v2325 = vld [vmem:[%s3 + $0x28b8] sm:$0xff]
  %v2326 = vld [vmem:[%s3 + $0x28c0] sm:$0xff]
  %v2327 = vld [vmem:[%s3 + $0x28c8] sm:$0xff]
  %v2328 = vld [vmem:[%s3 + $0x28d0] sm:$0xff]
  %v2329 = vld [vmem:[%s3 + $0x28d8] sm:$0xff]
  %v2330 = vld [vmem:[%s3 + $0x28e0] sm:$0xff]
  %v2331 = vld [vmem:[%s3 + $0x28e8] sm:$0xff]
  %v2332 = vld [vmem:[%s3 + $0x28f0] sm:$0xff]
  %v2333 = vld [vmem:[%s3 + $0x28f8] sm:$0xff]
  %v2334 = vld [vmem:[%s3 + $0x2900] sm:$0xff]
  %v2335 = vld [vmem:[%s3 + $0x2908] sm:$0xff]
  %v2336 = vld [vmem:[%s3 + $0x2910] sm:$0xff]
  %v2337 = vld [vmem:[%s3 + $0x2918] sm:$0xff]
  %v2338 = vld [vmem:[%s3 + $0x2920] sm:$0xff]
  %v2339 = vld [vmem:[%s3 + $0x2928] sm:$0xff]
  %v2340 = vld [vmem:[%s3 + $0x2930] sm:$0xff]
  %v2341 = vld [vmem:[%s3 + $0x2938] sm:$0xff]
  %v2342 = vld [vmem:[%s3 + $0x2940] sm:$0xff]
  %v2343 = vld [vmem:[%s3 + $0x2948] sm:$0xff]
  %v2344 = vld [vmem:[%s3 + $0x2950] sm:$0xff]
  %v2345 = vld [vmem:[%s3 + $0x2958] sm:$0xff]
  %v2346 = vld [vmem:[%s3 + $0x2960] sm:$0xff]
  %v2347 = vld [vmem:[%s3 + $0x2968] sm:$0xff]
  %v2348 = vld [vmem:[%s3 + $0x2970] sm:$0xff]
  %v2349 = vld [vmem:[%s3 + $0x2978] sm:$0xff]
  %v2350 = vld [vmem:[%s3 + $0x2980] sm:$0xff]
  %v2351 = vld [vmem:[%s3 + $0x2988] sm:$0xff]
  %v2352 = vld [vmem:[%s3 + $0x2990] sm:$0xff]
  %v2353 = vld [vmem:[%s3 + $0x2998] sm:$0xff]
  %v2354 = vld [vmem:[%s3 + $0x29a0] sm:$0xff]
  %v2355 = vld [vmem:[%s3 + $0x29a8] sm:$0xff]
  %v2356 = vld [vmem:[%s3 + $0x29b0] sm:$0xff]
  %v2357 = vld [vmem:[%s3 + $0x29b8] sm:$0xff]
  %v2358 = vld [vmem:[%s3 + $0x29c0] sm:$0xff]
  %v2359 = vld [vmem:[%s3 + $0x29c8] sm:$0xff]
  %v2360 = vld [vmem:[%s3 + $0x29d0] sm:$0xff]
  %v2361 = vld [vmem:[%s3 + $0x29d8] sm:$0xff]
  %v2362 = vld [vmem:[%s3 + $0x29e0] sm:$0xff]
  %v2363 = vld [vmem:[%s3 + $0x29e8] sm:$0xff]
  %v2364 = vld [vmem:[%s3 + $0x29f0] sm:$0xff]
  %v2365 = vld [vmem:[%s3 + $0x29f8] sm:$0xff]
  %v2366 = vld [vmem:[%s3 + $0x2a00] sm:$0xff]
  %v2367 = vld [vmem:[%s3 + $0x2a08] sm:$0xff]
  %v2368 = vld [vmem:[%s3 + $0x2a10] sm:$0xff]
  %v2369 = vld [vmem:[%s3 + $0x2a18] sm:$0xff]
  %v2370 = vld [vmem:[%s3 + $0x2a20] sm:$0xff]
  %v2371 = vld [vmem:[%s3 + $0x2a28] sm:$0xff]
  %v2372 = vld [vmem:[%s3 + $0x2a30] sm:$0xff]
  %v2373 = vld [vmem:[%s3 + $0x2a38] sm:$0xff]
  %v2374 = vld [vmem:[%s3 + $0x2a40] sm:$0xff]
  %v2375 = vld [vmem:[%s3 + $0x2a48] sm:$0xff]
  %v2376 = vld [vmem:[%s3 + $0x2a50] sm:$0xff]
  %v2377 = vld [vmem:[%s3 + $0x2a58] sm:$0xff]
  %v2378 = vld [vmem:[%s3 + $0x2a60] sm:$0xff]
  %v2379 = vld [vmem:[%s3 + $0x2a68] sm:$0xff]
  %v2380 = vld [vmem:[%s3 + $0x2a70] sm:$0xff]
  %v2381 = vld [vmem:[%s3 + $0x2a78] sm:$0xff]
  %v2382 = vld [vmem:[%s3 + $0x2a80] sm:$0xff]
  %v2383 = vld [vmem:[%s3 + $0x2a88] sm:$0xff]
  %v2384 = vld [vmem:[%s3 + $0x2a90] sm:$0xff]
  %v2385 = vld [vmem:[%s3 + $0x2a98] sm:$0xff]
  %v2386 = vld [vmem:[%s3 + $0x2aa0] sm:$0xff]
  %v2387 = vld [vmem:[%s3 + $0x2aa8] sm:$0xff]
  %v2388 = vld [vmem:[%s3 + $0x2ab0] sm:$0xff]
  %v2389 = vld [vmem:[%s3 + $0x2ab8] sm:$0xff]
  %v2390 = vld [vmem:[%s3 + $0x2ac0] sm:$0xff]
  %v2391 = vld [vmem:[%s3 + $0x2ac8] sm:$0xff]
  %v2392 = vld [vmem:[%s3 + $0x2ad0] sm:$0xff]
  %v2393 = vld [vmem:[%s3 + $0x2ad8] sm:$0xff]
  %v2394 = vld [vmem:[%s3 + $0x2ae0] sm:$0xff]
  %v2395 = vld [vmem:[%s3 + $0x2ae8] sm:$0xff]
  %v2396 = vld [vmem:[%s3 + $0x2af0] sm:$0xff]
  %v2397 = vld [vmem:[%s3 + $0x2af8] sm:$0xff]
  %v2398 = vld [vmem:[%s3 + $0x2b00] sm:$0xff]
  %v2399 = vld [vmem:[%s3 + $0x2b08] sm:$0xff]
  %v2400 = vld [vmem:[%s3 + $0x2b10] sm:$0xff]
  %v2401 = vld [vmem:[%s3 + $0x2b18] sm:$0xff]
  %v2402 = vld [vmem:[%s3 + $0x2b20] sm:$0xff]
  %v2403 = vld [vmem:[%s3 + $0x2b28] sm:$0xff]
  %v2404 = vld [vmem:[%s3 + $0x2b30] sm:$0xff]
  %v2405 = vld [vmem:[%s3 + $0x2b38] sm:$0xff]
  %v2406 = vld [vmem:[%s3 + $0x2b40] sm:$0xff]
  %v2407 = vld [vmem:[%s3 + $0x2b48] sm:$0xff]
  %v2408 = vld [vmem:[%s3 + $0x2b50] sm:$0xff]
  %v2409 = vld [vmem:[%s3 + $0x2b58] sm:$0xff]
  %v2410 = vld [vmem:[%s3 + $0x2b60] sm:$0xff]
  %v2411 = vld [vmem:[%s3 + $0x2b68] sm:$0xff]
  %v2412 = vld [vmem:[%s3 + $0x2b70] sm:$0xff]
  %v2413 = vld [vmem:[%s3 + $0x2b78] sm:$0xff]
  %v2414 = vld [vmem:[%s3 + $0x2b80] sm:$0xff]
  %v2415 = vld [vmem:[%s3 + $0x2b88] sm:$0xff]
  %v2416 = vld [vmem:[%s3 + $0x2b90] sm:$0xff]
  %v2417 = vld [vmem:[%s3 + $0x2b98] sm:$0xff]
  %v2418 = vld [vmem:[%s3 + $0x2ba0] sm:$0xff]
  %v2419 = vld [vmem:[%s3 + $0x2ba8] sm:$0xff]
  %v2420 = vld [vmem:[%s3 + $0x2bb0] sm:$0xff]
  %v2421 = vld [vmem:[%s3 + $0x2bb8] sm:$0xff]
  %v2422 = vld [vmem:[%s3 + $0x2bc0] sm:$0xff]
  %v2423 = vld [vmem:[%s3 + $0x2bc8] sm:$0xff]
  %v2424 = vld [vmem:[%s3 + $0x2bd0] sm:$0xff]
  %v2425 = vld [vmem:[%s3 + $0x2bd8] sm:$0xff]
  %v2426 = vld [vmem:[%s3 + $0x2be0] sm:$0xff]
  %v2427 = vld [vmem:[%s3 + $0x2be8] sm:$0xff]
  %v2428 = vld [vmem:[%s3 + $0x2bf0] sm:$0xff]
  %v2429 = vld [vmem:[%s3 + $0x2bf8] sm:$0xff]
  %v2430 = vld [vmem:[%s3 + $0x2c00] sm:$0xff]
  %v2431 = vld [vmem:[%s3 + $0x2c08] sm:$0xff]
  %v2432 = vld [vmem:[%s3 + $0x2c10] sm:$0xff]
  %v2433 = vld [vmem:[%s3 + $0x2c18] sm:$0xff]
  %v2434 = vld [vmem:[%s3 + $0x2c20] sm:$0xff]
  %v2435 = vld [vmem:[%s3 + $0x2c28] sm:$0xff]
  %v2436 = vld [vmem:[%s3 + $0x2c30] sm:$0xff]
  %v2437 = vld [vmem:[%s3 + $0x2c38] sm:$0xff]
  %v2438 = vld [vmem:[%s3 + $0x2c40] sm:$0xff]
  %v2439 = vld [vmem:[%s3 + $0x2c48] sm:$0xff]
  %v2440 = vld [vmem:[%s3 + $0x2c50] sm:$0xff]
  %v2441 = vld [vmem:[%s3 + $0x2c58] sm:$0xff]
  %v2442 = vld [vmem:[%s3 + $0x2c60] sm:$0xff]
  %v2443 = vld [vmem:[%s3 + $0x2c68] sm:$0xff]
  %v2444 = vld [vmem:[%s3 + $0x2c70] sm:$0xff]
  %v2445 = vld [vmem:[%s3 + $0x2c78] sm:$0xff]
  %v2446 = vld [vmem:[%s3 + $0x2c80] sm:$0xff]
  %v2447 = vld [vmem:[%s3 + $0x2c88] sm:$0xff]
  %v2448 = vld [vmem:[%s3 + $0x2c90] sm:$0xff]
  %v2449 = vld [vmem:[%s3 + $0x2c98] sm:$0xff]
  %v2450 = vld [vmem:[%s3 + $0x2ca0] sm:$0xff]
  %v2451 = vld [vmem:[%s3 + $0x2ca8] sm:$0xff]
  %v2452 = vld [vmem:[%s3 + $0x2cb0] sm:$0xff]
  %v2453 = vld [vmem:[%s3 + $0x2cb8] sm:$0xff]
  %v2454 = vld [vmem:[%s3 + $0x2cc0] sm:$0xff]
  %v2455 = vld [vmem:[%s3 + $0x2cc8] sm:$0xff]
  %v2456 = vld [vmem:[%s3 + $0x2cd0] sm:$0xff]
  %v2457 = vld [vmem:[%s3 + $0x2cd8] sm:$0xff]
  %v2458 = vld [vmem:[%s3 + $0x2ce0] sm:$0xff]
  %v2459 = vld [vmem:[%s3 + $0x2ce8] sm:$0xff]
  %v2460 = vld [vmem:[%s3 + $0x2cf0] sm:$0xff]
  %v2461 = vld [vmem:[%s3 + $0x2cf8] sm:$0xff]
  %v2462 = vld [vmem:[%s3 + $0x2d00] sm:$0xff]
  %v2463 = vld [vmem:[%s3 + $0x2d08] sm:$0xff]
  %v2464 = vld [vmem:[%s3 + $0x2d10] sm:$0xff]
  %v2465 = vld [vmem:[%s3 + $0x2d18] sm:$0xff]
  %v2466 = vld [vmem:[%s3 + $0x2d20] sm:$0xff]
  %v2467 = vld [vmem:[%s3 + $0x2d28] sm:$0xff]
  %v2468 = vld [vmem:[%s3 + $0x2d30] sm:$0xff]
  %v2469 = vld [vmem:[%s3 + $0x2d38] sm:$0xff]
  %v2470 = vld [vmem:[%s3 + $0x2d40] sm:$0xff]
  %v2471 = vld [vmem:[%s3 + $0x2d48] sm:$0xff]
  %v2472 = vld [vmem:[%s3 + $0x2d50] sm:$0xff]
  %v2473 = vld [vmem:[%s3 + $0x2d58] sm:$0xff]
  %v2474 = vld [vmem:[%s3 + $0x2d60] sm:$0xff]
  %v2475 = vld [vmem:[%s3 + $0x2d68] sm:$0xff]
  %v2476 = vld [vmem:[%s3 + $0x2d70] sm:$0xff]
  %v2477 = vld [vmem:[%s3 + $0x2d78] sm:$0xff]
  %v2478 = vld [vmem:[%s3 + $0x2d80] sm:$0xff]
  %v2479 = vld [vmem:[%s3 + $0x2d88] sm:$0xff]
  %v2480 = vld [vmem:[%s3 + $0x2d90] sm:$0xff]
  %v2481 = vld [vmem:[%s3 + $0x2d98] sm:$0xff]
  %v2482 = vld [vmem:[%s3 + $0x2da0] sm:$0xff]
  %v2483 = vld [vmem:[%s3 + $0x2da8] sm:$0xff]
  %v2484 = vld [vmem:[%s3 + $0x2db0] sm:$0xff]
  %v2485 = vld [vmem:[%s3 + $0x2db8] sm:$0xff]
  %v2486 = vld [vmem:[%s3 + $0x2dc0] sm:$0xff]
  %v2487 = vld [vmem:[%s3 + $0x2dc8] sm:$0xff]
  %v2488 = vld [vmem:[%s3 + $0x2dd0] sm:$0xff]
  %v2489 = vld [vmem:[%s3 + $0x2dd8] sm:$0xff]
  %v2490 = vld [vmem:[%s3 + $0x2de0] sm:$0xff]
  %v2491 = vld [vmem:[%s3 + $0x2de8] sm:$0xff]
  %v2492 = vld [vmem:[%s3 + $0x2df0] sm:$0xff]
  %v2493 = vld [vmem:[%s3 + $0x2df8] sm:$0xff]
  %v2494 = vld [vmem:[%s3 + $0x2e00] sm:$0xff]
  %v2495 = vld [vmem:[%s3 + $0x2e08] sm:$0xff]
  %v2496 = vld [vmem:[%s3 + $0x2e10] sm:$0xff]
  %v2497 = vld [vmem:[%s3 + $0x2e18] sm:$0xff]
  %v2498 = vld [vmem:[%s3 + $0x2e20] sm:$0xff]
  %v2499 = vld [vmem:[%s3 + $0x2e28] sm:$0xff]
  %v2500 = vld [vmem:[%s3 + $0x2e30] sm:$0xff]
  %v2501 = vld [vmem:[%s3 + $0x2e38] sm:$0xff]
  %v2502 = vld [vmem:[%s3 + $0x2e40] sm:$0xff]
  %v2503 = vld [vmem:[%s3 + $0x2e48] sm:$0xff]
  %v2504 = vld [vmem:[%s3 + $0x2e50] sm:$0xff]
  %v2505 = vld [vmem:[%s3 + $0x2e58] sm:$0xff]
  %v2506 = vld [vmem:[%s3 + $0x2e60] sm:$0xff]
  %v2507 = vld [vmem:[%s3 + $0x2e68] sm:$0xff]
  %v2508 = vld [vmem:[%s3 + $0x2e70] sm:$0xff]
  %v2509 = vld [vmem:[%s3 + $0x2e78] sm:$0xff]
  %v2510 = vld [vmem:[%s3 + $0x2e80] sm:$0xff]
  %v2511 = vld [vmem:[%s3 + $0x2e88] sm:$0xff]
  %v2512 = vld [vmem:[%s3 + $0x2e90] sm:$0xff]
  %v2513 = vld [vmem:[%s3 + $0x2e98] sm:$0xff]
  %v2514 = vld [vmem:[%s3 + $0x2ea0] sm:$0xff]
  %v2515 = vld [vmem:[%s3 + $0x2ea8] sm:$0xff]
  %v2516 = vld [vmem:[%s3 + $0x2eb0] sm:$0xff]
  %v2517 = vld [vmem:[%s3 + $0x2eb8] sm:$0xff]
  %v2518 = vld [vmem:[%s3 + $0x2ec0] sm:$0xff]
  %v2519 = vld [vmem:[%s3 + $0x2ec8] sm:$0xff]
  %v2520 = vld [vmem:[%s3 + $0x2ed0] sm:$0xff]
  %v2521 = vld [vmem:[%s3 + $0x2ed8] sm:$0xff]
  %v2522 = vld [vmem:[%s3 + $0x2ee0] sm:$0xff]
  %v2523 = vld [vmem:[%s3 + $0x2ee8] sm:$0xff]
  %v2524 = vld [vmem:[%s3 + $0x2ef0] sm:$0xff]
  %v2525 = vld [vmem:[%s3 + $0x2ef8] sm:$0xff]
  %v2526 = vld [vmem:[%s3 + $0x2f00] sm:$0xff]
  %v2527 = vld [vmem:[%s3 + $0x2f08] sm:$0xff]
  %v2528 = vld [vmem:[%s3 + $0x2f10] sm:$0xff]
  %v2529 = vld [vmem:[%s3 + $0x2f18] sm:$0xff]
  %v2530 = vld [vmem:[%s3 + $0x2f20] sm:$0xff]
  %v2531 = vld [vmem:[%s3 + $0x2f28] sm:$0xff]
  %v2532 = vld [vmem:[%s3 + $0x2f30] sm:$0xff]
  %v2533 = vld [vmem:[%s3 + $0x2f38] sm:$0xff]
  %v2534 = vld [vmem:[%s3 + $0x2f40] sm:$0xff]
  %v2535 = vld [vmem:[%s3 + $0x2f48] sm:$0xff]
  %v2536 = vld [vmem:[%s3 + $0x2f50] sm:$0xff]
  %v2537 = vld [vmem:[%s3 + $0x2f58] sm:$0xff]
  %v2538 = vld [vmem:[%s3 + $0x2f60] sm:$0xff]
  %v2539 = vld [vmem:[%s3 + $0x2f68] sm:$0xff]
  %v2540 = vld [vmem:[%s3 + $0x2f70] sm:$0xff]
  %v2541 = vld [vmem:[%s3 + $0x2f78] sm:$0xff]
  %v2542 = vld [vmem:[%s3 + $0x2f80] sm:$0xff]
  %v2543 = vld [vmem:[%s3 + $0x2f88] sm:$0xff]
  %v2544 = vld [vmem:[%s3 + $0x2f90] sm:$0xff]
  %v2545 = vld [vmem:[%s3 + $0x2f98] sm:$0xff]
  %v2546 = vld [vmem:[%s3 + $0x2fa0] sm:$0xff]
  %v2547 = vld [vmem:[%s3 + $0x2fa8] sm:$0xff]
  %v2548 = vld [vmem:[%s3 + $0x2fb0] sm:$0xff]
  %v2549 = vld [vmem:[%s3 + $0x2fb8] sm:$0xff]
  %v2550 = vld [vmem:[%s3 + $0x2fc0] sm:$0xff]
  %v2551 = vld [vmem:[%s3 + $0x2fc8] sm:$0xff]
  %v2552 = vld [vmem:[%s3 + $0x2fd0] sm:$0xff]
  %v2553 = vld [vmem:[%s3 + $0x2fd8] sm:$0xff]
  %v2554 = vld [vmem:[%s3 + $0x2fe0] sm:$0xff]
  %v2555 = vld [vmem:[%s3 + $0x2fe8] sm:$0xff]
  %v2556 = vld [vmem:[%s3 + $0x2ff0] sm:$0xff]
  %v2557 = vld [vmem:[%s3 + $0x2ff8] sm:$0xff]
  %v2558 = vld [vmem:[%s3 + $0x3000] sm:$0xff]
  %v2559 = vld [vmem:[%s3 + $0x3008] sm:$0xff]
  %v2560 = vld [vmem:[%s3 + $0x3010] sm:$0xff]
  %v2561 = vld [vmem:[%s3 + $0x3018] sm:$0xff]
  %v2562 = vld [vmem:[%s3 + $0x3020] sm:$0xff]
  %v2563 = vld [vmem:[%s3 + $0x3028] sm:$0xff]
  %v2564 = vld [vmem:[%s3 + $0x3030] sm:$0xff]
  %v2565 = vld [vmem:[%s3 + $0x3038] sm:$0xff]
  %v2566 = vld [vmem:[%s3 + $0x3040] sm:$0xff]
  %v2567 = vld [vmem:[%s3 + $0x3048] sm:$0xff]
  %v2568 = vld [vmem:[%s3 + $0x3050] sm:$0xff]
  %v2569 = vld [vmem:[%s3 + $0x3058] sm:$0xff]
  %v2570 = vld [vmem:[%s3 + $0x3060] sm:$0xff]
  %v2571 = vld [vmem:[%s3 + $0x3068] sm:$0xff]
  %v2572 = vld [vmem:[%s3 + $0x3070] sm:$0xff]
  %v2573 = vld [vmem:[%s3 + $0x3078] sm:$0xff]
  %v2574 = vld [vmem:[%s3 + $0x3080] sm:$0xff]
  %v2575 = vld [vmem:[%s3 + $0x3088] sm:$0xff]
  %v2576 = vld [vmem:[%s3 + $0x3090] sm:$0xff]
  %v2577 = vld [vmem:[%s3 + $0x3098] sm:$0xff]
  %v2578 = vld [vmem:[%s3 + $0x30a0] sm:$0xff]
  %v2579 = vld [vmem:[%s3 + $0x30a8] sm:$0xff]
  %v2580 = vld [vmem:[%s3 + $0x30b0] sm:$0xff]
  %v2581 = vld [vmem:[%s3 + $0x30b8] sm:$0xff]
  %v2582 = vld [vmem:[%s3 + $0x30c0] sm:$0xff]
  %v2583 = vld [vmem:[%s3 + $0x30c8] sm:$0xff]
  %v2584 = vld [vmem:[%s3 + $0x30d0] sm:$0xff]
  %v2585 = vld [vmem:[%s3 + $0x30d8] sm:$0xff]
  %v2586 = vld [vmem:[%s3 + $0x30e0] sm:$0xff]
  %v2587 = vld [vmem:[%s3 + $0x30e8] sm:$0xff]
  %v2588 = vld [vmem:[%s3 + $0x30f0] sm:$0xff]
  %v2589 = vld [vmem:[%s3 + $0x30f8] sm:$0xff]
  %v2590 = vld [vmem:[%s3 + $0x3100] sm:$0xff]
  %v2591 = vld [vmem:[%s3 + $0x3108] sm:$0xff]
  %v2592 = vld [vmem:[%s3 + $0x3110] sm:$0xff]
  %v2593 = vld [vmem:[%s3 + $0x3118] sm:$0xff]
  %v2594 = vld [vmem:[%s3 + $0x3120] sm:$0xff]
  %v2595 = vld [vmem:[%s3 + $0x3128] sm:$0xff]
  %v2596 = vld [vmem:[%s3 + $0x3130] sm:$0xff]
  %v2597 = vld [vmem:[%s3 + $0x3138] sm:$0xff]
  %v2598 = vld [vmem:[%s3 + $0x3140] sm:$0xff]
  %v2599 = vld [vmem:[%s3 + $0x3148] sm:$0xff]
  %v2600 = vld [vmem:[%s3 + $0x3150] sm:$0xff]
  %v2601 = vld [vmem:[%s3 + $0x3158] sm:$0xff]
  %v2602 = vld [vmem:[%s3 + $0x3160] sm:$0xff]
  %v2603 = vld [vmem:[%s3 + $0x3168] sm:$0xff]
  %v2604 = vld [vmem:[%s3 + $0x3170] sm:$0xff]
  %v2605 = vld [vmem:[%s3 + $0x3178] sm:$0xff]
  %v2606 = vld [vmem:[%s3 + $0x3180] sm:$0xff]
  %v2607 = vld [vmem:[%s3 + $0x3188] sm:$0xff]
  %v2608 = vld [vmem:[%s3 + $0x3190] sm:$0xff]
  %v2609 = vld [vmem:[%s3 + $0x3198] sm:$0xff]
  %v2610 = vld [vmem:[%s3 + $0x31a0] sm:$0xff]
  %v2611 = vld [vmem:[%s3 + $0x31a8] sm:$0xff]
  %v2612 = vld [vmem:[%s3 + $0x31b0] sm:$0xff]
  %v2613 = vld [vmem:[%s3 + $0x31b8] sm:$0xff]
  %v2614 = vld [vmem:[%s3 + $0x31c0] sm:$0xff]
  %v2615 = vld [vmem:[%s3 + $0x31c8] sm:$0xff]
  %v2616 = vld [vmem:[%s3 + $0x31d0] sm:$0xff]
  %v2617 = vld [vmem:[%s3 + $0x31d8] sm:$0xff]
  %v2618 = vld [vmem:[%s3 + $0x31e0] sm:$0xff]
  %v2619 = vld [vmem:[%s3 + $0x31e8] sm:$0xff]
  %v2620 = vld [vmem:[%s3 + $0x31f0] sm:$0xff]
  %v2621 = vld [vmem:[%s3 + $0x31f8] sm:$0xff]
  %v2622 = vld [vmem:[%s3 + $0x3200] sm:$0xff]
  %v2623 = vld [vmem:[%s3 + $0x3208] sm:$0xff]
  %v2624 = vld [vmem:[%s3 + $0x3210] sm:$0xff]
  %v2625 = vld [vmem:[%s3 + $0x3218] sm:$0xff]
  %v2626 = vld [vmem:[%s3 + $0x3220] sm:$0xff]
  %v2627 = vld [vmem:[%s3 + $0x3228] sm:$0xff]
  %v2628 = vld [vmem:[%s3 + $0x3230] sm:$0xff]
  %v2629 = vld [vmem:[%s3 + $0x3238] sm:$0xff]
  %v2630 = vld [vmem:[%s3 + $0x3240] sm:$0xff]
  %v2631 = vld [vmem:[%s3 + $0x3248] sm:$0xff]
  %v2632 = vld [vmem:[%s3 + $0x3250] sm:$0xff]
  %v2633 = vld [vmem:[%s3 + $0x3258] sm:$0xff]
  %v2634 = vld [vmem:[%s3 + $0x3260] sm:$0xff]
  %v2635 = vld [vmem:[%s3 + $0x3268] sm:$0xff]
  %v2636 = vld [vmem:[%s3 + $0x3270] sm:$0xff]
  %v2637 = vld [vmem:[%s3 + $0x3278] sm:$0xff]
  %v2638 = vld [vmem:[%s3 + $0x3280] sm:$0xff]
  %v2639 = vld [vmem:[%s3 + $0x3288] sm:$0xff]
  %v2640 = vld [vmem:[%s3 + $0x3290] sm:$0xff]
  %v2641 = vld [vmem:[%s3 + $0x3298] sm:$0xff]
  %v2642 = vld [vmem:[%s3 + $0x32a0] sm:$0xff]
  %v2643 = vld [vmem:[%s3 + $0x32a8] sm:$0xff]
  %v2644 = vld [vmem:[%s3 + $0x32b0] sm:$0xff]
  %v2645 = vld [vmem:[%s3 + $0x32b8] sm:$0xff]
  %v2646 = vld [vmem:[%s3 + $0x32c0] sm:$0xff]
  %v2647 = vld [vmem:[%s3 + $0x32c8] sm:$0xff]
  %v2648 = vld [vmem:[%s3 + $0x32d0] sm:$0xff]
  %v2649 = vld [vmem:[%s3 + $0x32d8] sm:$0xff]
  %v2650 = vld [vmem:[%s3 + $0x32e0] sm:$0xff]
  %v2651 = vld [vmem:[%s3 + $0x32e8] sm:$0xff]
  %v2652 = vld [vmem:[%s3 + $0x32f0] sm:$0xff]
  %v2653 = vld [vmem:[%s3 + $0x32f8] sm:$0xff]
  %v2654 = vld [vmem:[%s3 + $0x3300] sm:$0xff]
  %v2655 = vld [vmem:[%s3 + $0x3308] sm:$0xff]
  %v2656 = vld [vmem:[%s3 + $0x3310] sm:$0xff]
  %v2657 = vld [vmem:[%s3 + $0x3318] sm:$0xff]
  %v2658 = vld [vmem:[%s3 + $0x3320] sm:$0xff]
  %v2659 = vld [vmem:[%s3 + $0x3328] sm:$0xff]
  %v2660 = vld [vmem:[%s3 + $0x3330] sm:$0xff]
  %v2661 = vld [vmem:[%s3 + $0x3338] sm:$0xff]
  %v2662 = vld [vmem:[%s3 + $0x3340] sm:$0xff]
  %v2663 = vld [vmem:[%s3 + $0x3348] sm:$0xff]
  %v2664 = vld [vmem:[%s3 + $0x3350] sm:$0xff]
  %v2665 = vld [vmem:[%s3 + $0x3358] sm:$0xff]
  %v2666 = vld [vmem:[%s3 + $0x3360] sm:$0xff]
  %v2667 = vld [vmem:[%s3 + $0x3368] sm:$0xff]
  %v2668 = vld [vmem:[%s3 + $0x3370] sm:$0xff]
  %v2669 = vld [vmem:[%s3 + $0x3378] sm:$0xff]
  %v2670 = vld [vmem:[%s3 + $0x3380] sm:$0xff]
  %v2671 = vld [vmem:[%s3 + $0x3388] sm:$0xff]
  %v2672 = vld [vmem:[%s3 + $0x3390] sm:$0xff]
  %v2673 = vld [vmem:[%s3 + $0x3398] sm:$0xff]
  %v2674 = vld [vmem:[%s3 + $0x33a0] sm:$0xff]
  %v2675 = vld [vmem:[%s3 + $0x33a8] sm:$0xff]
  %v2676 = vld [vmem:[%s3 + $0x33b0] sm:$0xff]
  %v2677 = vld [vmem:[%s3 + $0x33b8] sm:$0xff]
  %v2678 = vld [vmem:[%s3 + $0x33c0] sm:$0xff]
  %v2679 = vld [vmem:[%s3 + $0x33c8] sm:$0xff]
  %v2680 = vld [vmem:[%s3 + $0x33d0] sm:$0xff]
  %v2681 = vld [vmem:[%s3 + $0x33d8] sm:$0xff]
  %v2682 = vld [vmem:[%s3 + $0x33e0] sm:$0xff]
  %v2683 = vld [vmem:[%s3 + $0x33e8] sm:$0xff]
  %v2684 = vld [vmem:[%s3 + $0x33f0] sm:$0xff]
  %v2685 = vld [vmem:[%s3 + $0x33f8] sm:$0xff]
  %v2686 = vld [vmem:[%s3 + $0x3400] sm:$0xff]
  %v2687 = vld [vmem:[%s3 + $0x3408] sm:$0xff]
  %v2688 = vld [vmem:[%s3 + $0x3410] sm:$0xff]
  %v2689 = vld [vmem:[%s3 + $0x3418] sm:$0xff]
  %v2690 = vld [vmem:[%s3 + $0x3420] sm:$0xff]
  %v2691 = vld [vmem:[%s3 + $0x3428] sm:$0xff]
  %v2692 = vld [vmem:[%s3 + $0x3430] sm:$0xff]
  %v2693 = vld [vmem:[%s3 + $0x3438] sm:$0xff]
  %v2694 = vld [vmem:[%s3 + $0x3440] sm:$0xff]
  %v2695 = vld [vmem:[%s3 + $0x3448] sm:$0xff]
  %v2696 = vld [vmem:[%s3 + $0x3450] sm:$0xff]
  %v2697 = vld [vmem:[%s3 + $0x3458] sm:$0xff]
  %v2698 = vld [vmem:[%s3 + $0x3460] sm:$0xff]
  %v2699 = vld [vmem:[%s3 + $0x3468] sm:$0xff]
  %v2700 = vld [vmem:[%s3 + $0x3470] sm:$0xff]
  %v2701 = vld [vmem:[%s3 + $0x3478] sm:$0xff]
  %v2702 = vld [vmem:[%s3 + $0x3480] sm:$0xff]
  %v2703 = vld [vmem:[%s3 + $0x3488] sm:$0xff]
  %v2704 = vld [vmem:[%s3 + $0x3490] sm:$0xff]
  %v2705 = vld [vmem:[%s3 + $0x3498] sm:$0xff]
  %v2706 = vld [vmem:[%s3 + $0x34a0] sm:$0xff]
  %v2707 = vld [vmem:[%s3 + $0x34a8] sm:$0xff]
  %v2708 = vld [vmem:[%s3 + $0x34b0] sm:$0xff]
  %v2709 = vld [vmem:[%s3 + $0x34b8] sm:$0xff]
  %v2710 = vld [vmem:[%s3 + $0x34c0] sm:$0xff]
  %v2711 = vld [vmem:[%s3 + $0x34c8] sm:$0xff]
  %v2712 = vld [vmem:[%s3 + $0x34d0] sm:$0xff]
  %v2713 = vld [vmem:[%s3 + $0x34d8] sm:$0xff]
  %v2714 = vld [vmem:[%s3 + $0x34e0] sm:$0xff]
  %v2715 = vld [vmem:[%s3 + $0x34e8] sm:$0xff]
  %v2716 = vld [vmem:[%s3 + $0x34f0] sm:$0xff]
  %v2717 = vld [vmem:[%s3 + $0x34f8] sm:$0xff]
  %v2718 = vld [vmem:[%s3 + $0x3500] sm:$0xff]
  %v2719 = vld [vmem:[%s3 + $0x3508] sm:$0xff]
  %v2720 = vld [vmem:[%s3 + $0x3510] sm:$0xff]
  %v2721 = vld [vmem:[%s3 + $0x3518] sm:$0xff]
  %v2722 = vld [vmem:[%s3 + $0x3520] sm:$0xff]
  %v2723 = vld [vmem:[%s3 + $0x3528] sm:$0xff]
  %v2724 = vld [vmem:[%s3 + $0x3530] sm:$0xff]
  %v2725 = vld [vmem:[%s3 + $0x3538] sm:$0xff]
  %v2726 = vld [vmem:[%s3 + $0x3540] sm:$0xff]
  %v2727 = vld [vmem:[%s3 + $0x3548] sm:$0xff]
  %v2728 = vld [vmem:[%s3 + $0x3550] sm:$0xff]
  %v2729 = vld [vmem:[%s3 + $0x3558] sm:$0xff]
  %v2730 = vld [vmem:[%s3 + $0x3560] sm:$0xff]
  %v2731 = vld [vmem:[%s3 + $0x3568] sm:$0xff]
  %v2732 = vld [vmem:[%s3 + $0x3570] sm:$0xff]
  %v2733 = vld [vmem:[%s3 + $0x3578] sm:$0xff]
  %v2734 = vld [vmem:[%s3 + $0x3580] sm:$0xff]
  %v2735 = vld [vmem:[%s3 + $0x3588] sm:$0xff]
  %v2736 = vld [vmem:[%s3 + $0x3590] sm:$0xff]
  %v2737 = vld [vmem:[%s3 + $0x3598] sm:$0xff]
  %v2738 = vld [vmem:[%s3 + $0x35a0] sm:$0xff]
  %v2739 = vld [vmem:[%s3 + $0x35a8] sm:$0xff]
  %v2740 = vld [vmem:[%s3 + $0x35b0] sm:$0xff]
  %v2741 = vld [vmem:[%s3 + $0x35b8] sm:$0xff]
  %v2742 = vld [vmem:[%s3 + $0x35c0] sm:$0xff]
  %v2743 = vld [vmem:[%s3 + $0x35c8] sm:$0xff]
  %v2744 = vld [vmem:[%s3 + $0x35d0] sm:$0xff]
  %v2745 = vld [vmem:[%s3 + $0x35d8] sm:$0xff]
  %v2746 = vld [vmem:[%s3 + $0x35e0] sm:$0xff]
  %v2747 = vld [vmem:[%s3 + $0x35e8] sm:$0xff]
  %v2748 = vld [vmem:[%s3 + $0x35f0] sm:$0xff]
  %v2749 = vld [vmem:[%s3 + $0x35f8] sm:$0xff]
  %v2750 = vld [vmem:[%s3 + $0x3600] sm:$0xff]
  %v2751 = vld [vmem:[%s3 + $0x3608] sm:$0xff]
  %v2752 = vld [vmem:[%s3 + $0x3610] sm:$0xff]
  %v2753 = vld [vmem:[%s3 + $0x3618] sm:$0xff]
  %v2754 = vld [vmem:[%s3 + $0x3620] sm:$0xff]
  %v2755 = vld [vmem:[%s3 + $0x3628] sm:$0xff]
  %v2756 = vld [vmem:[%s3 + $0x3630] sm:$0xff]
  %v2757 = vld [vmem:[%s3 + $0x3638] sm:$0xff]
  %v2758 = vld [vmem:[%s3 + $0x3640] sm:$0xff]
  %v2759 = vld [vmem:[%s3 + $0x3648] sm:$0xff]
  %v2760 = vld [vmem:[%s3 + $0x3650] sm:$0xff]
  %v2761 = vld [vmem:[%s3 + $0x3658] sm:$0xff]
  %v2762 = vld [vmem:[%s3 + $0x3660] sm:$0xff]
  %v2763 = vld [vmem:[%s3 + $0x3668] sm:$0xff]
  %v2764 = vld [vmem:[%s3 + $0x3670] sm:$0xff]
  %v2765 = vld [vmem:[%s3 + $0x3678] sm:$0xff]
  %v2766 = vld [vmem:[%s3 + $0x3680] sm:$0xff]
  %v2767 = vld [vmem:[%s3 + $0x3688] sm:$0xff]
  %v2768 = vld [vmem:[%s3 + $0x3690] sm:$0xff]
  %v2769 = vld [vmem:[%s3 + $0x3698] sm:$0xff]
  %v2770 = vld [vmem:[%s3 + $0x36a0] sm:$0xff]
  %v2771 = vld [vmem:[%s3 + $0x36a8] sm:$0xff]
  %v2772 = vld [vmem:[%s3 + $0x36b0] sm:$0xff]
  %v2773 = vld [vmem:[%s3 + $0x36b8] sm:$0xff]
  %v2774 = vld [vmem:[%s3 + $0x36c0] sm:$0xff]
  %v2775 = vld [vmem:[%s3 + $0x36c8] sm:$0xff]
  %v2776 = vld [vmem:[%s3 + $0x36d0] sm:$0xff]
  %v2777 = vld [vmem:[%s3 + $0x36d8] sm:$0xff]
  %v2778 = vld [vmem:[%s3 + $0x36e0] sm:$0xff]
  %v2779 = vld [vmem:[%s3 + $0x36e8] sm:$0xff]
  %v2780 = vld [vmem:[%s3 + $0x36f0] sm:$0xff]
  %v2781 = vld [vmem:[%s3 + $0x36f8] sm:$0xff]
  %v2782 = vld [vmem:[%s3 + $0x3700] sm:$0xff]
  %v2783 = vld [vmem:[%s3 + $0x3708] sm:$0xff]
  %v2784 = vld [vmem:[%s3 + $0x3710] sm:$0xff]
  %v2785 = vld [vmem:[%s3 + $0x3718] sm:$0xff]
  %v2786 = vld [vmem:[%s3 + $0x3720] sm:$0xff]
  %v2787 = vld [vmem:[%s3 + $0x3728] sm:$0xff]
  %v2788 = vld [vmem:[%s3 + $0x3730] sm:$0xff]
  %v2789 = vld [vmem:[%s3 + $0x3738] sm:$0xff]
  %v2790 = vld [vmem:[%s3 + $0x3740] sm:$0xff]
  %v2791 = vld [vmem:[%s3 + $0x3748] sm:$0xff]
  %v2792 = vld [vmem:[%s3 + $0x3750] sm:$0xff]
  %v2793 = vld [vmem:[%s3 + $0x3758] sm:$0xff]
  %v2794 = vld [vmem:[%s3 + $0x3760] sm:$0xff]
  %v2795 = vld [vmem:[%s3 + $0x3768] sm:$0xff]
  %v2796 = vld [vmem:[%s3 + $0x3770] sm:$0xff]
  %v2797 = vld [vmem:[%s3 + $0x3778] sm:$0xff]
  %v2798 = vld [vmem:[%s3 + $0x3780] sm:$0xff]
  %v2799 = vld [vmem:[%s3 + $0x3788] sm:$0xff]
  %v2800 = vld [vmem:[%s3 + $0x3790] sm:$0xff]
  %v2801 = vld [vmem:[%s3 + $0x3798] sm:$0xff]
  %v2802 = vld [vmem:[%s3 + $0x37a0] sm:$0xff]
  %v2803 = vld [vmem:[%s3 + $0x37a8] sm:$0xff]
  %v2804 = vld [vmem:[%s3 + $0x37b0] sm:$0xff]
  %v2805 = vld [vmem:[%s3 + $0x37b8] sm:$0xff]
  %v2806 = vld [vmem:[%s3 + $0x37c0] sm:$0xff]
  %v2807 = vld [vmem:[%s3 + $0x37c8] sm:$0xff]
  %v2808 = vld [vmem:[%s3 + $0x37d0] sm:$0xff]
  %v2809 = vld [vmem:[%s3 + $0x37d8] sm:$0xff]
  %v2810 = vld [vmem:[%s3 + $0x37e0] sm:$0xff]
  %v2811 = vld [vmem:[%s3 + $0x37e8] sm:$0xff]
  %v2812 = vld [vmem:[%s3 + $0x37f0] sm:$0xff]
  %v2813 = vld [vmem:[%s3 + $0x37f8] sm:$0xff]
  %v2814 = vld [vmem:[%s3 + $0x3800] sm:$0xff]
  %v2815 = vld [vmem:[%s3 + $0x3808] sm:$0xff]
  %v2816 = vld [vmem:[%s3 + $0x3810] sm:$0xff]
  %v2817 = vld [vmem:[%s3 + $0x3818] sm:$0xff]
  %v2818 = vld [vmem:[%s3 + $0x3820] sm:$0xff]
  %v2819 = vld [vmem:[%s3 + $0x3828] sm:$0xff]
  %v2820 = vld [vmem:[%s3 + $0x3830] sm:$0xff]
  %v2821 = vld [vmem:[%s3 + $0x3838] sm:$0xff]
  %v2822 = vld [vmem:[%s3 + $0x3840] sm:$0xff]
  %v2823 = vld [vmem:[%s3 + $0x3848] sm:$0xff]
  %v2824 = vld [vmem:[%s3 + $0x3850] sm:$0xff]
  %v2825 = vld [vmem:[%s3 + $0x3858] sm:$0xff]
  %v2826 = vld [vmem:[%s3 + $0x3860] sm:$0xff]
  %v2827 = vld [vmem:[%s3 + $0x3868] sm:$0xff]
  %v2828 = vld [vmem:[%s3 + $0x3870] sm:$0xff]
  %v2829 = vld [vmem:[%s3 + $0x3878] sm:$0xff]
  %v2830 = vld [vmem:[%s3 + $0x3880] sm:$0xff]
  %v2831 = vld [vmem:[%s3 + $0x3888] sm:$0xff]
  %v2832 = vld [vmem:[%s3 + $0x3890] sm:$0xff]
  %v2833 = vld [vmem:[%s3 + $0x3898] sm:$0xff]
  %v2834 = vld [vmem:[%s3 + $0x38a0] sm:$0xff]
  %v2835 = vld [vmem:[%s3 + $0x38a8] sm:$0xff]
  %v2836 = vld [vmem:[%s3 + $0x38b0] sm:$0xff]
  %v2837 = vld [vmem:[%s3 + $0x38b8] sm:$0xff]
  %v2838 = vld [vmem:[%s3 + $0x38c0] sm:$0xff]
  %v2839 = vld [vmem:[%s3 + $0x38c8] sm:$0xff]
  %v2840 = vld [vmem:[%s3 + $0x38d0] sm:$0xff]
  %v2841 = vld [vmem:[%s3 + $0x38d8] sm:$0xff]
  %v2842 = vld [vmem:[%s3 + $0x38e0] sm:$0xff]
  %v2843 = vld [vmem:[%s3 + $0x38e8] sm:$0xff]
  %v2844 = vld [vmem:[%s3 + $0x38f0] sm:$0xff]
  %v2845 = vld [vmem:[%s3 + $0x38f8] sm:$0xff]
  %v2846 = vld [vmem:[%s3 + $0x3900] sm:$0xff]
  %v2847 = vld [vmem:[%s3 + $0x3908] sm:$0xff]
  %v2848 = vld [vmem:[%s3 + $0x3910] sm:$0xff]
  %v2849 = vld [vmem:[%s3 + $0x3918] sm:$0xff]
  %v2850 = vld [vmem:[%s3 + $0x3920] sm:$0xff]
  %v2851 = vld [vmem:[%s3 + $0x3928] sm:$0xff]
  %v2852 = vld [vmem:[%s3 + $0x3930] sm:$0xff]
  %v2853 = vld [vmem:[%s3 + $0x3938] sm:$0xff]
  %v2854 = vld [vmem:[%s3 + $0x3940] sm:$0xff]
  %v2855 = vld [vmem:[%s3 + $0x3948] sm:$0xff]
  %v2856 = vld [vmem:[%s3 + $0x3950] sm:$0xff]
  %v2857 = vld [vmem:[%s3 + $0x3958] sm:$0xff]
  %v2858 = vld [vmem:[%s3 + $0x3960] sm:$0xff]
  %v2859 = vld [vmem:[%s3 + $0x3968] sm:$0xff]
  %v2860 = vld [vmem:[%s3 + $0x3970] sm:$0xff]
  %v2861 = vld [vmem:[%s3 + $0x3978] sm:$0xff]
  %v2862 = vld [vmem:[%s3 + $0x3980] sm:$0xff]
  %v2863 = vld [vmem:[%s3 + $0x3988] sm:$0xff]
  %v2864 = vld [vmem:[%s3 + $0x3990] sm:$0xff]
  %v2865 = vld [vmem:[%s3 + $0x3998] sm:$0xff]
  %v2866 = vld [vmem:[%s3 + $0x39a0] sm:$0xff]
  %v2867 = vld [vmem:[%s3 + $0x39a8] sm:$0xff]
  %v2868 = vld [vmem:[%s3 + $0x39b0] sm:$0xff]
  %v2869 = vld [vmem:[%s3 + $0x39b8] sm:$0xff]
  %v2870 = vld [vmem:[%s3 + $0x39c0] sm:$0xff]
  %v2871 = vld [vmem:[%s3 + $0x39c8] sm:$0xff]
  %v2872 = vld [vmem:[%s3 + $0x39d0] sm:$0xff]
  %v2873 = vld [vmem:[%s3 + $0x39d8] sm:$0xff]
  %v2874 = vld [vmem:[%s3 + $0x39e0] sm:$0xff]
  %v2875 = vld [vmem:[%s3 + $0x39e8] sm:$0xff]
  %v2876 = vld [vmem:[%s3 + $0x39f0] sm:$0xff]
  %v2877 = vld [vmem:[%s3 + $0x39f8] sm:$0xff]
  %v2878 = vld [vmem:[%s3 + $0x3a00] sm:$0xff]
  %v2879 = vld [vmem:[%s3 + $0x3a08] sm:$0xff]
  %v2880 = vld [vmem:[%s3 + $0x3a10] sm:$0xff]
  %v2881 = vld [vmem:[%s3 + $0x3a18] sm:$0xff]
  %v2882 = vld [vmem:[%s3 + $0x3a20] sm:$0xff]
  %v2883 = vld [vmem:[%s3 + $0x3a28] sm:$0xff]
  %v2884 = vld [vmem:[%s3 + $0x3a30] sm:$0xff]
  %v2885 = vld [vmem:[%s3 + $0x3a38] sm:$0xff]
  %v2886 = vld [vmem:[%s3 + $0x3a40] sm:$0xff]
  %v2887 = vld [vmem:[%s3 + $0x3a48] sm:$0xff]
  %v2888 = vld [vmem:[%s3 + $0x3a50] sm:$0xff]
  %v2889 = vld [vmem:[%s3 + $0x3a58] sm:$0xff]
  %v2890 = vld [vmem:[%s3 + $0x3a60] sm:$0xff]
  %v2891 = vld [vmem:[%s3 + $0x3a68] sm:$0xff]
  %v2892 = vld [vmem:[%s3 + $0x3a70] sm:$0xff]
  %v2893 = vld [vmem:[%s3 + $0x3a78] sm:$0xff]
  %v2894 = vld [vmem:[%s3 + $0x3a80] sm:$0xff]
  %v2895 = vld [vmem:[%s3 + $0x3a88] sm:$0xff]
  %v2896 = vld [vmem:[%s3 + $0x3a90] sm:$0xff]
  %v2897 = vld [vmem:[%s3 + $0x3a98] sm:$0xff]
  %v2898 = vld [vmem:[%s3 + $0x3aa0] sm:$0xff]
  %v2899 = vld [vmem:[%s3 + $0x3aa8] sm:$0xff]
  %v2900 = vld [vmem:[%s3 + $0x3ab0] sm:$0xff]
  %v2901 = vld [vmem:[%s3 + $0x3ab8] sm:$0xff]
  %v2902 = vld [vmem:[%s3 + $0x3ac0] sm:$0xff]
  %v2903 = vld [vmem:[%s3 + $0x3ac8] sm:$0xff]
  %v2904 = vld [vmem:[%s3 + $0x3ad0] sm:$0xff]
  %v2905 = vld [vmem:[%s3 + $0x3ad8] sm:$0xff]
  %v2906 = vld [vmem:[%s3 + $0x3ae0] sm:$0xff]
  %v2907 = vld [vmem:[%s3 + $0x3ae8] sm:$0xff]
  %v2908 = vld [vmem:[%s3 + $0x3af0] sm:$0xff]
  %v2909 = vld [vmem:[%s3 + $0x3af8] sm:$0xff]
  %v2910 = vld [vmem:[%s3 + $0x3b00] sm:$0xff]
  %v2911 = vld [vmem:[%s3 + $0x3b08] sm:$0xff]
  %v2912 = vld [vmem:[%s3 + $0x3b10] sm:$0xff]
  %v2913 = vld [vmem:[%s3 + $0x3b18] sm:$0xff]
  %v2914 = vld [vmem:[%s3 + $0x3b20] sm:$0xff]
  %v2915 = vld [vmem:[%s3 + $0x3b28] sm:$0xff]
  %v2916 = vld [vmem:[%s3 + $0x3b30] sm:$0xff]
  %v2917 = vld [vmem:[%s3 + $0x3b38] sm:$0xff]
  %v2918 = vld [vmem:[%s3 + $0x3b40] sm:$0xff]
  %v2919 = vld [vmem:[%s3 + $0x3b48] sm:$0xff]
  %v2920 = vld [vmem:[%s3 + $0x3b50] sm:$0xff]
  %v2921 = vld [vmem:[%s3 + $0x3b58] sm:$0xff]
  %v2922 = vld [vmem:[%s3 + $0x3b60] sm:$0xff]
  %v2923 = vld [vmem:[%s3 + $0x3b68] sm:$0xff]
  %v2924 = vld [vmem:[%s3 + $0x3b70] sm:$0xff]
  %v2925 = vld [vmem:[%s3 + $0x3b78] sm:$0xff]
  %v2926 = vld [vmem:[%s3 + $0x3b80] sm:$0xff]
  %v2927 = vld [vmem:[%s3 + $0x3b88] sm:$0xff]
  %v2928 = vld [vmem:[%s3 + $0x3b90] sm:$0xff]
  %v2929 = vld [vmem:[%s3 + $0x3b98] sm:$0xff]
  %v2930 = vld [vmem:[%s3 + $0x3ba0] sm:$0xff]
  %v2931 = vld [vmem:[%s3 + $0x3ba8] sm:$0xff]
  %v2932 = vld [vmem:[%s3 + $0x3bb0] sm:$0xff]
  %v2933 = vld [vmem:[%s3 + $0x3bb8] sm:$0xff]
  %v2934 = vld [vmem:[%s3 + $0x3bc0] sm:$0xff]
  %v2935 = vld [vmem:[%s3 + $0x3bc8] sm:$0xff]
  %v2936 = vld [vmem:[%s3 + $0x3bd0] sm:$0xff]
  %v2937 = vld [vmem:[%s3 + $0x3bd8] sm:$0xff]
  %v2938 = vld [vmem:[%s3 + $0x3be0] sm:$0xff]
  %v2939 = vld [vmem:[%s3 + $0x3be8] sm:$0xff]
  %v2940 = vld [vmem:[%s3 + $0x3bf0] sm:$0xff]
  %v2941 = vld [vmem:[%s3 + $0x3bf8] sm:$0xff]
  %v2942 = vld [vmem:[%s3 + $0x3c00] sm:$0xff]
  %v2943 = vld [vmem:[%s3 + $0x3c08] sm:$0xff]
  %v2944 = vld [vmem:[%s3 + $0x3c10] sm:$0xff]
  %v2945 = vld [vmem:[%s3 + $0x3c18] sm:$0xff]
  %v2946 = vld [vmem:[%s3 + $0x3c20] sm:$0xff]
  %v2947 = vld [vmem:[%s3 + $0x3c28] sm:$0xff]
  %v2948 = vld [vmem:[%s3 + $0x3c30] sm:$0xff]
  %v2949 = vld [vmem:[%s3 + $0x3c38] sm:$0xff]
  %v2950 = vld [vmem:[%s3 + $0x3c40] sm:$0xff]
  %v2951 = vld [vmem:[%s3 + $0x3c48] sm:$0xff]
  %v2952 = vld [vmem:[%s3 + $0x3c50] sm:$0xff]
  %v2953 = vld [vmem:[%s3 + $0x3c58] sm:$0xff]
  %v2954 = vld [vmem:[%s3 + $0x3c60] sm:$0xff]
  %v2955 = vld [vmem:[%s3 + $0x3c68] sm:$0xff]
  %v2956 = vld [vmem:[%s3 + $0x3c70] sm:$0xff]
  %v2957 = vld [vmem:[%s3 + $0x3c78] sm:$0xff]
  %v2958 = vld [vmem:[%s3 + $0x3c80] sm:$0xff]
  %v2959 = vld [vmem:[%s3 + $0x3c88] sm:$0xff]
  %v2960 = vld [vmem:[%s3 + $0x3c90] sm:$0xff]
  %v2961 = vld [vmem:[%s3 + $0x3c98] sm:$0xff]
  %v2962 = vld [vmem:[%s3 + $0x3ca0] sm:$0xff]
  %v2963 = vld [vmem:[%s3 + $0x3ca8] sm:$0xff]
  %v2964 = vld [vmem:[%s3 + $0x3cb0] sm:$0xff]
  %v2965 = vld [vmem:[%s3 + $0x3cb8] sm:$0xff]
  %v2966 = vld [vmem:[%s3 + $0x3cc0] sm:$0xff]
  %v2967 = vld [vmem:[%s3 + $0x3cc8] sm:$0xff]
  %v2968 = vld [vmem:[%s3 + $0x3cd0] sm:$0xff]
  %v2969 = vld [vmem:[%s3 + $0x3cd8] sm:$0xff]
  %v2970 = vld [vmem:[%s3 + $0x3ce0] sm:$0xff]
  %v2971 = vld [vmem:[%s3 + $0x3ce8] sm:$0xff]
  %v2972 = vld [vmem:[%s3 + $0x3cf0] sm:$0xff]
  %v2973 = vld [vmem:[%s3 + $0x3cf8] sm:$0xff]
  %v2974 = vld [vmem:[%s3 + $0x3d00] sm:$0xff]
  %v2975 = vld [vmem:[%s3 + $0x3d08] sm:$0xff]
  %v2976 = vld [vmem:[%s3 + $0x3d10] sm:$0xff]
  %v2977 = vld [vmem:[%s3 + $0x3d18] sm:$0xff]
  %v2978 = vld [vmem:[%s3 + $0x3d20] sm:$0xff]
  %v2979 = vld [vmem:[%s3 + $0x3d28] sm:$0xff]
  %v2980 = vld [vmem:[%s3 + $0x3d30] sm:$0xff]
  %v2981 = vld [vmem:[%s3 + $0x3d38] sm:$0xff]
  %v2982 = vld [vmem:[%s3 + $0x3d40] sm:$0xff]
  %v2983 = vld [vmem:[%s3 + $0x3d48] sm:$0xff]
  %v2984 = vld [vmem:[%s3 + $0x3d50] sm:$0xff]
  %v2985 = vld [vmem:[%s3 + $0x3d58] sm:$0xff]
  %v2986 = vld [vmem:[%s3 + $0x3d60] sm:$0xff]
  %v2987 = vld [vmem:[%s3 + $0x3d68] sm:$0xff]
  %v2988 = vld [vmem:[%s3 + $0x3d70] sm:$0xff]
  %v2989 = vld [vmem:[%s3 + $0x3d78] sm:$0xff]
  %v2990 = vld [vmem:[%s3 + $0x3d80] sm:$0xff]
  %v2991 = vld [vmem:[%s3 + $0x3d88] sm:$0xff]
  %v2992 = vld [vmem:[%s3 + $0x3d90] sm:$0xff]
  %v2993 = vld [vmem:[%s3 + $0x3d98] sm:$0xff]
  %v2994 = vld [vmem:[%s3 + $0x3da0] sm:$0xff]
  %v2995 = vld [vmem:[%s3 + $0x3da8] sm:$0xff]
  %v2996 = vld [vmem:[%s3 + $0x3db0] sm:$0xff]
  %v2997 = vld [vmem:[%s3 + $0x3db8] sm:$0xff]
  %v2998 = vld [vmem:[%s3 + $0x3dc0] sm:$0xff]
  %v2999 = vld [vmem:[%s3 + $0x3dc8] sm:$0xff]
  %v3000 = vld [vmem:[%s3 + $0x3dd0] sm:$0xff]
  %v3001 = vld [vmem:[%s3 + $0x3dd8] sm:$0xff]
  %v3002 = vld [vmem:[%s3 + $0x3de0] sm:$0xff]
  %v3003 = vld [vmem:[%s3 + $0x3de8] sm:$0xff]
  %v3004 = vld [vmem:[%s3 + $0x3df0] sm:$0xff]
  %v3005 = vld [vmem:[%s3 + $0x3df8] sm:$0xff]
  %v3006 = vld [vmem:[%s3 + $0x3e00] sm:$0xff]
  %v3007 = vld [vmem:[%s3 + $0x3e08] sm:$0xff]
  %v3008 = vld [vmem:[%s3 + $0x3e10] sm:$0xff]
  %v3009 = vld [vmem:[%s3 + $0x3e18] sm:$0xff]
  %v3010 = vld [vmem:[%s3 + $0x3e20] sm:$0xff]
  %v3011 = vld [vmem:[%s3 + $0x3e28] sm:$0xff]
  %v3012 = vld [vmem:[%s3 + $0x3e30] sm:$0xff]
  %v3013 = vld [vmem:[%s3 + $0x3e38] sm:$0xff]
  %v3014 = vld [vmem:[%s3 + $0x3e40] sm:$0xff]
  %v3015 = vld [vmem:[%s3 + $0x3e48] sm:$0xff]
  %v3016 = vld [vmem:[%s3 + $0x3e50] sm:$0xff]
  %v3017 = vld [vmem:[%s3 + $0x3e58] sm:$0xff]
  %v3018 = vld [vmem:[%s3 + $0x3e60] sm:$0xff]
  %v3019 = vld [vmem:[%s3 + $0x3e68] sm:$0xff]
  %v3020 = vld [vmem:[%s3 + $0x3e70] sm:$0xff]
  %v3021 = vld [vmem:[%s3 + $0x3e78] sm:$0xff]
  %v3022 = vld [vmem:[%s3 + $0x3e80] sm:$0xff]
  %v3023 = vld [vmem:[%s3 + $0x3e88] sm:$0xff]
  %v3024 = vld [vmem:[%s3 + $0x3e90] sm:$0xff]
  %v3025 = vld [vmem:[%s3 + $0x3e98] sm:$0xff]
  %v3026 = vld [vmem:[%s3 + $0x3ea0] sm:$0xff]
  %v3027 = vld [vmem:[%s3 + $0x3ea8] sm:$0xff]
  %v3028 = vld [vmem:[%s3 + $0x3eb0] sm:$0xff]
  %v3029 = vld [vmem:[%s3 + $0x3eb8] sm:$0xff]
  %v3030 = vld [vmem:[%s3 + $0x3ec0] sm:$0xff]
  %v3031 = vld [vmem:[%s3 + $0x3ec8] sm:$0xff]
  %v3032 = vld [vmem:[%s3 + $0x3ed0] sm:$0xff]
  %v3033 = vld [vmem:[%s3 + $0x3ed8] sm:$0xff]
  %v3034 = vld [vmem:[%s3 + $0x3ee0] sm:$0xff]
  %v3035 = vld [vmem:[%s3 + $0x3ee8] sm:$0xff]
  %v3036 = vld [vmem:[%s3 + $0x3ef0] sm:$0xff]
  %v3037 = vld [vmem:[%s3 + $0x3ef8] sm:$0xff]
  %v3038 = vld [vmem:[%s3 + $0x3f00] sm:$0xff]
  %v3039 = vld [vmem:[%s3 + $0x3f08] sm:$0xff]
  %v3040 = vld [vmem:[%s3 + $0x3f10] sm:$0xff]
  %v3041 = vld [vmem:[%s3 + $0x3f18] sm:$0xff]
  %v3042 = vld [vmem:[%s3 + $0x3f20] sm:$0xff]
  %v3043 = vld [vmem:[%s3 + $0x3f28] sm:$0xff]
  %v3044 = vld [vmem:[%s3 + $0x3f30] sm:$0xff]
  %v3045 = vld [vmem:[%s3 + $0x3f38] sm:$0xff]
  %v3046 = vld [vmem:[%s3 + $0x3f40] sm:$0xff]
  %v3047 = vld [vmem:[%s3 + $0x3f48] sm:$0xff]
  %v3048 = vld [vmem:[%s3 + $0x3f50] sm:$0xff]
  %v3049 = vld [vmem:[%s3 + $0x3f58] sm:$0xff]
  %v3050 = vld [vmem:[%s3 + $0x3f60] sm:$0xff]
  %v3051 = vld [vmem:[%s3 + $0x3f68] sm:$0xff]
  %v3052 = vld [vmem:[%s3 + $0x3f70] sm:$0xff]
  %v3053 = vld [vmem:[%s3 + $0x3f78] sm:$0xff]
  %v3054 = vld [vmem:[%s3 + $0x3f80] sm:$0xff]
  %v3055 = vld [vmem:[%s3 + $0x3f88] sm:$0xff]
  %v3056 = vld [vmem:[%s3 + $0x3f90] sm:$0xff]
  %v3057 = vld [vmem:[%s3 + $0x3f98] sm:$0xff]
  %v3058 = vld [vmem:[%s3 + $0x3fa0] sm:$0xff]
  %v3059 = vld [vmem:[%s3 + $0x3fa8] sm:$0xff]
  %v3060 = vld [vmem:[%s3 + $0x3fb0] sm:$0xff]
  %v3061 = vld [vmem:[%s3 + $0x3fb8] sm:$0xff]
  %v3062 = vld [vmem:[%s3 + $0x3fc0] sm:$0xff]
  %v3063 = vld [vmem:[%s3 + $0x3fc8] sm:$0xff]
  %v3064 = vld [vmem:[%s3 + $0x3fd0] sm:$0xff]
  %v3065 = vld [vmem:[%s3 + $0x3fd8] sm:$0xff]
  %v3066 = vld [vmem:[%s3 + $0x3fe0] sm:$0xff]
  %v3067 = vld [vmem:[%s3 + $0x3fe8] sm:$0xff]
  %v3068 = vld [vmem:[%s3 + $0x3ff0] sm:$0xff]
  %v3069 = vld [vmem:[%s3 + $0x3ff8] sm:$0xff]
  %v3070 = vld [vmem:[%s3 + $0x4000] sm:$0xff]
  %v3071 = vld [vmem:[%s3 + $0x4008] sm:$0xff]
  %v3072 = vld [vmem:[%s3 + $0x4010] sm:$0xff]
  %v3073 = vld [vmem:[%s3 + $0x4018] sm:$0xff]
  %v3074 = vld [vmem:[%s3 + $0x4020] sm:$0xff]
  %v3075 = vld [vmem:[%s3 + $0x4028] sm:$0xff]
  %v3076 = vld [vmem:[%s3 + $0x4030] sm:$0xff]
  %v3077 = vld [vmem:[%s3 + $0x4038] sm:$0xff]
  %v3078 = vld [vmem:[%s3 + $0x4040] sm:$0xff]
  %v3079 = vld [vmem:[%s3 + $0x4048] sm:$0xff]
  %v3080 = vld [vmem:[%s3 + $0x4050] sm:$0xff]
  %v3081 = vld [vmem:[%s3 + $0x4058] sm:$0xff]
  %v3082 = vld [vmem:[%s3 + $0x4060] sm:$0xff]
  %v3083 = vld [vmem:[%s3 + $0x4068] sm:$0xff]
  %v3084 = vld [vmem:[%s3 + $0x4070] sm:$0xff]
  %v3085 = vld [vmem:[%s3 + $0x4078] sm:$0xff]
  %v3086 = vld [vmem:[%s3 + $0x4080] sm:$0xff]
  %v3087 = vld [vmem:[%s3 + $0x4088] sm:$0xff]
  %v3088 = vld [vmem:[%s3 + $0x4090] sm:$0xff]
  %v3089 = vld [vmem:[%s3 + $0x4098] sm:$0xff]
  %v3090 = vld [vmem:[%s3 + $0x40a0] sm:$0xff]
  %v3091 = vld [vmem:[%s3 + $0x40a8] sm:$0xff]
  %v3092 = vld [vmem:[%s3 + $0x40b0] sm:$0xff]
  %v3093 = vld [vmem:[%s3 + $0x40b8] sm:$0xff]
  %v3094 = vld [vmem:[%s3 + $0x40c0] sm:$0xff]
  %v3095 = vld [vmem:[%s3 + $0x40c8] sm:$0xff]
  %v3096 = vld [vmem:[%s3 + $0x40d0] sm:$0xff]
  %v3097 = vld [vmem:[%s3 + $0x40d8] sm:$0xff]
  %v3098 = vld [vmem:[%s3 + $0x40e0] sm:$0xff]
  %v3099 = vld [vmem:[%s3 + $0x40e8] sm:$0xff]
  %v3100 = vld [vmem:[%s3 + $0x40f0] sm:$0xff]
  %v3101 = vld [vmem:[%s3 + $0x40f8] sm:$0xff]
  %v3102 = vld [vmem:[%s3 + $0x4100] sm:$0xff]
  %v3103 = vld [vmem:[%s3 + $0x4108] sm:$0xff]
  %v3104 = vld [vmem:[%s3 + $0x4110] sm:$0xff]
  %v3105 = vld [vmem:[%s3 + $0x4118] sm:$0xff]
  %v3106 = vld [vmem:[%s3 + $0x4120] sm:$0xff]
  %v3107 = vld [vmem:[%s3 + $0x4128] sm:$0xff]
  %v3108 = vld [vmem:[%s3 + $0x4130] sm:$0xff]
  %v3109 = vld [vmem:[%s3 + $0x4138] sm:$0xff]
  %v3110 = vld [vmem:[%s3 + $0x4140] sm:$0xff]
  %v3111 = vld [vmem:[%s3 + $0x4148] sm:$0xff]
  %v3112 = vld [vmem:[%s3 + $0x4150] sm:$0xff]
  %v3113 = vld [vmem:[%s3 + $0x4158] sm:$0xff]
  %v3114 = vld [vmem:[%s3 + $0x4160] sm:$0xff]
  %v3115 = vld [vmem:[%s3 + $0x4168] sm:$0xff]
  %v3116 = vld [vmem:[%s3 + $0x4170] sm:$0xff]
  %v3117 = vld [vmem:[%s3 + $0x4178] sm:$0xff]
  %v3118 = vld [vmem:[%s3 + $0x4180] sm:$0xff]
  %v3119 = vld [vmem:[%s3 + $0x4188] sm:$0xff]
  %v3120 = vld [vmem:[%s3 + $0x4190] sm:$0xff]
  %v3121 = vld [vmem:[%s3 + $0x4198] sm:$0xff]
  %v3122 = vld [vmem:[%s3 + $0x41a0] sm:$0xff]
  %v3123 = vld [vmem:[%s3 + $0x41a8] sm:$0xff]
  %v3124 = vld [vmem:[%s3 + $0x41b0] sm:$0xff]
  %v3125 = vld [vmem:[%s3 + $0x41b8] sm:$0xff]
  %v3126 = vld [vmem:[%s3 + $0x41c0] sm:$0xff]
  %v3127 = vld [vmem:[%s3 + $0x41c8] sm:$0xff]
  %v3128 = vld [vmem:[%s3 + $0x41d0] sm:$0xff]
  %v3129 = vld [vmem:[%s3 + $0x41d8] sm:$0xff]
  %v3130 = vld [vmem:[%s3 + $0x41e0] sm:$0xff]
  %v3131 = vld [vmem:[%s3 + $0x41e8] sm:$0xff]
  %v3132 = vld [vmem:[%s3 + $0x41f0] sm:$0xff]
  %v3133 = vld [vmem:[%s3 + $0x41f8] sm:$0xff]
  %v3134 = vld [vmem:[%s3 + $0x4200] sm:$0xff]
  %v3135 = vld [vmem:[%s3 + $0x4208] sm:$0xff]
  %v3136 = vld [vmem:[%s3 + $0x4210] sm:$0xff]
  %v3137 = vld [vmem:[%s3 + $0x4218] sm:$0xff]
  %v3138 = vld [vmem:[%s3 + $0x4220] sm:$0xff]
  %v3139 = vld [vmem:[%s3 + $0x4228] sm:$0xff]
  %v3140 = vld [vmem:[%s3 + $0x4230] sm:$0xff]
  %v3141 = vld [vmem:[%s3 + $0x4238] sm:$0xff]
  %v3142 = vld [vmem:[%s3 + $0x4240] sm:$0xff]
  %v3143 = vld [vmem:[%s3 + $0x4248] sm:$0xff]
  %v3144 = vld [vmem:[%s3 + $0x4250] sm:$0xff]
  %v3145 = vld [vmem:[%s3 + $0x4258] sm:$0xff]
  %v3146 = vld [vmem:[%s3 + $0x4260] sm:$0xff]
  %v3147 = vld [vmem:[%s3 + $0x4268] sm:$0xff]
  %v3148 = vld [vmem:[%s3 + $0x4270] sm:$0xff]
  %v3149 = vld [vmem:[%s3 + $0x4278] sm:$0xff]
  %v3150 = vld [vmem:[%s3 + $0x4280] sm:$0xff]
  %v3151 = vld [vmem:[%s3 + $0x4288] sm:$0xff]
  %v3152 = vld [vmem:[%s3 + $0x4290] sm:$0xff]
  %v3153 = vld [vmem:[%s3 + $0x4298] sm:$0xff]
  %v3154 = vld [vmem:[%s3 + $0x42a0] sm:$0xff]
  %v3155 = vld [vmem:[%s3 + $0x42a8] sm:$0xff]
  %v3156 = vld [vmem:[%s3 + $0x42b0] sm:$0xff]
  %v3157 = vld [vmem:[%s3 + $0x42b8] sm:$0xff]
  %v3158 = vld [vmem:[%s3 + $0x42c0] sm:$0xff]
  %v3159 = vld [vmem:[%s3 + $0x42c8] sm:$0xff]
  %v3160 = vld [vmem:[%s3 + $0x42d0] sm:$0xff]
  %v3161 = vld [vmem:[%s3 + $0x42d8] sm:$0xff]
  %v3162 = vld [vmem:[%s3 + $0x42e0] sm:$0xff]
  %v3163 = vld [vmem:[%s3 + $0x42e8] sm:$0xff]
  %v3164 = vld [vmem:[%s3 + $0x42f0] sm:$0xff]
  %v3165 = vld [vmem:[%s3 + $0x42f8] sm:$0xff]
  %v3166 = vld [vmem:[%s3 + $0x4300] sm:$0xff]
  %v3167 = vld [vmem:[%s3 + $0x4308] sm:$0xff]
  %v3168 = vld [vmem:[%s3 + $0x4310] sm:$0xff]
  %v3169 = vld [vmem:[%s3 + $0x4318] sm:$0xff]
  %v3170 = vld [vmem:[%s3 + $0x4320] sm:$0xff]
  %v3171 = vld [vmem:[%s3 + $0x4328] sm:$0xff]
  %v3172 = vld [vmem:[%s3 + $0x4330] sm:$0xff]
  %v3173 = vld [vmem:[%s3 + $0x4338] sm:$0xff]
  %v3174 = vld [vmem:[%s3 + $0x4340] sm:$0xff]
  %v3175 = vld [vmem:[%s3 + $0x4348] sm:$0xff]
  %v3176 = vld [vmem:[%s3 + $0x4350] sm:$0xff]
  %v3177 = vld [vmem:[%s3 + $0x4358] sm:$0xff]
  %v3178 = vld [vmem:[%s3 + $0x4360] sm:$0xff]
  %v3179 = vld [vmem:[%s3 + $0x4368] sm:$0xff]
  %v3180 = vld [vmem:[%s3 + $0x4370] sm:$0xff]
  %v3181 = vld [vmem:[%s3 + $0x4378] sm:$0xff]
  %v3182 = vld [vmem:[%s3 + $0x4380] sm:$0xff]
  %v3183 = vld [vmem:[%s3 + $0x4388] sm:$0xff]
  %v3184 = vld [vmem:[%s3 + $0x4390] sm:$0xff]
  %v3185 = vld [vmem:[%s3 + $0x4398] sm:$0xff]
  %v3186 = vld [vmem:[%s3 + $0x43a0] sm:$0xff]
  %v3187 = vld [vmem:[%s3 + $0x43a8] sm:$0xff]
  %v3188 = vld [vmem:[%s3 + $0x43b0] sm:$0xff]
  %v3189 = vld [vmem:[%s3 + $0x43b8] sm:$0xff]
  %v3190 = vld [vmem:[%s3 + $0x43c0] sm:$0xff]
  %v3191 = vld [vmem:[%s3 + $0x43c8] sm:$0xff]
  %v3192 = vld [vmem:[%s3 + $0x43d0] sm:$0xff]
  %v3193 = vld [vmem:[%s3 + $0x43d8] sm:$0xff]
  %v3194 = vld [vmem:[%s3 + $0x43e0] sm:$0xff]
  %v3195 = vld [vmem:[%s3 + $0x43e8] sm:$0xff]
  %v3196 = vld [vmem:[%s3 + $0x43f0] sm:$0xff]
  %v3197 = vld [vmem:[%s3 + $0x43f8] sm:$0xff]
  %v3198 = vld [vmem:[%s3 + $0x4400] sm:$0xff]
  %v3199 = vld [vmem:[%s3 + $0x4408] sm:$0xff]
  %v3200 = vld [vmem:[%s3 + $0x4410] sm:$0xff]
  %v3201 = vld [vmem:[%s3 + $0x4418] sm:$0xff]
  %v3202 = vld [vmem:[%s3 + $0x4420] sm:$0xff]
  %v3203 = vld [vmem:[%s3 + $0x4428] sm:$0xff]
  %v3204 = vld [vmem:[%s3 + $0x4430] sm:$0xff]
  %v3205 = vld [vmem:[%s3 + $0x4438] sm:$0xff]
  %v3206 = vld [vmem:[%s3 + $0x4440] sm:$0xff]
  %v3207 = vld [vmem:[%s3 + $0x4448] sm:$0xff]
  %v3208 = vld [vmem:[%s3 + $0x4450] sm:$0xff]
  %v3209 = vld [vmem:[%s3 + $0x4458] sm:$0xff]
  %v3210 = vld [vmem:[%s3 + $0x4460] sm:$0xff]
  %v3211 = vld [vmem:[%s3 + $0x4468] sm:$0xff]
  %v3212 = vld [vmem:[%s3 + $0x4470] sm:$0xff]
  %v3213 = vld [vmem:[%s3 + $0x4478] sm:$0xff]
  %v3214 = vld [vmem:[%s3 + $0x4480] sm:$0xff]
  %v3215 = vld [vmem:[%s3 + $0x4488] sm:$0xff]
  %v3216 = vld [vmem:[%s3 + $0x4490] sm:$0xff]
  %v3217 = vld [vmem:[%s3 + $0x4498] sm:$0xff]
  %v3218 = vld [vmem:[%s3 + $0x44a0] sm:$0xff]
  %v3219 = vld [vmem:[%s3 + $0x44a8] sm:$0xff]
  %v3220 = vld [vmem:[%s3 + $0x44b0] sm:$0xff]
  %v3221 = vld [vmem:[%s3 + $0x44b8] sm:$0xff]
  %v3222 = vld [vmem:[%s3 + $0x44c0] sm:$0xff]
  %v3223 = vld [vmem:[%s3 + $0x44c8] sm:$0xff]
  %v3224 = vld [vmem:[%s3 + $0x44d0] sm:$0xff]
  %v3225 = vld [vmem:[%s3 + $0x44d8] sm:$0xff]
  %v3226 = vld [vmem:[%s3 + $0x44e0] sm:$0xff]
  %v3227 = vld [vmem:[%s3 + $0x44e8] sm:$0xff]
  %v3228 = vld [vmem:[%s3 + $0x44f0] sm:$0xff]
  %v3229 = vld [vmem:[%s3 + $0x44f8] sm:$0xff]
  %v3230 = vld [vmem:[%s3 + $0x4500] sm:$0xff]
  %v3231 = vld [vmem:[%s3 + $0x4508] sm:$0xff]
  %v3232 = vld [vmem:[%s3 + $0x4510] sm:$0xff]
  %v3233 = vld [vmem:[%s3 + $0x4518] sm:$0xff]
  %v3234 = vld [vmem:[%s3 + $0x4520] sm:$0xff]
  %v3235 = vld [vmem:[%s3 + $0x4528] sm:$0xff]
  %v3236 = vld [vmem:[%s3 + $0x4530] sm:$0xff]
  %v3237 = vld [vmem:[%s3 + $0x4538] sm:$0xff]
  %v3238 = vld [vmem:[%s3 + $0x4540] sm:$0xff]
  %v3239 = vld [vmem:[%s3 + $0x4548] sm:$0xff]
  %v3240 = vld [vmem:[%s3 + $0x4550] sm:$0xff]
  %v3241 = vld [vmem:[%s3 + $0x4558] sm:$0xff]
  %v3242 = vld [vmem:[%s3 + $0x4560] sm:$0xff]
  %v3243 = vld [vmem:[%s3 + $0x4568] sm:$0xff]
  %v3244 = vld [vmem:[%s3 + $0x4570] sm:$0xff]
  %v3245 = vld [vmem:[%s3 + $0x4578] sm:$0xff]
  %v3246 = vld [vmem:[%s3 + $0x4580] sm:$0xff]
  %v3247 = vld [vmem:[%s3 + $0x4588] sm:$0xff]
  %v3248 = vld [vmem:[%s3 + $0x4590] sm:$0xff]
  %v3249 = vld [vmem:[%s3 + $0x4598] sm:$0xff]
  %v3250 = vld [vmem:[%s3 + $0x45a0] sm:$0xff]
  %v3251 = vld [vmem:[%s3 + $0x45a8] sm:$0xff]
  %v3252 = vld [vmem:[%s3 + $0x45b0] sm:$0xff]
  %v3253 = vld [vmem:[%s3 + $0x45b8] sm:$0xff]
  %v3254 = vld [vmem:[%s3 + $0x45c0] sm:$0xff]
  %v3255 = vld [vmem:[%s3 + $0x45c8] sm:$0xff]
  %v3256 = vld [vmem:[%s3 + $0x45d0] sm:$0xff]
  %v3257 = vld [vmem:[%s3 + $0x45d8] sm:$0xff]
  %v3258 = vld [vmem:[%s3 + $0x45e0] sm:$0xff]
  %v3259 = vld [vmem:[%s3 + $0x45e8] sm:$0xff]
  %v3260 = vld [vmem:[%s3 + $0x45f0] sm:$0xff]
  %v3261 = vld [vmem:[%s3 + $0x45f8] sm:$0xff]
  %v3262 = vld [vmem:[%s3 + $0x4600] sm:$0xff]
  %v3263 = vld [vmem:[%s3 + $0x4608] sm:$0xff]
  %v3264 = vld [vmem:[%s3 + $0x4610] sm:$0xff]
  %v3265 = vld [vmem:[%s3 + $0x4618] sm:$0xff]
  %v3266 = vld [vmem:[%s3 + $0x4620] sm:$0xff]
  %v3267 = vld [vmem:[%s3 + $0x4628] sm:$0xff]
  %v3268 = vld [vmem:[%s3 + $0x4630] sm:$0xff]
  %v3269 = vld [vmem:[%s3 + $0x4638] sm:$0xff]
  %v3270 = vld [vmem:[%s3 + $0x4640] sm:$0xff]
  %v3271 = vld [vmem:[%s3 + $0x4648] sm:$0xff]
  %v3272 = vld [vmem:[%s3 + $0x4650] sm:$0xff]
  %v3273 = vld [vmem:[%s3 + $0x4658] sm:$0xff]
  %v3274 = vld [vmem:[%s3 + $0x4660] sm:$0xff]
  %v3275 = vld [vmem:[%s3 + $0x4668] sm:$0xff]
  %v3276 = vld [vmem:[%s3 + $0x4670] sm:$0xff]
  %v3277 = vld [vmem:[%s3 + $0x4678] sm:$0xff]
  %v3278 = vld [vmem:[%s3 + $0x4680] sm:$0xff]
  %v3279 = vld [vmem:[%s3 + $0x4688] sm:$0xff]
  %v3280 = vld [vmem:[%s3 + $0x4690] sm:$0xff]
  %v3281 = vld [vmem:[%s3 + $0x4698] sm:$0xff]
  %v3282 = vld [vmem:[%s3 + $0x46a0] sm:$0xff]
  %v3283 = vld [vmem:[%s3 + $0x46a8] sm:$0xff]
  %v3284 = vld [vmem:[%s3 + $0x46b0] sm:$0xff]
  %v3285 = vld [vmem:[%s3 + $0x46b8] sm:$0xff]
  %v3286 = vld [vmem:[%s3 + $0x46c0] sm:$0xff]
  %v3287 = vld [vmem:[%s3 + $0x46c8] sm:$0xff]
  %v3288 = vld [vmem:[%s3 + $0x46d0] sm:$0xff]
  %v3289 = vld [vmem:[%s3 + $0x46d8] sm:$0xff]
  %v3290 = vld [vmem:[%s3 + $0x46e0] sm:$0xff]
  %v3291 = vld [vmem:[%s3 + $0x46e8] sm:$0xff]
  %v3292 = vld [vmem:[%s3 + $0x46f0] sm:$0xff]
  %v3293 = vld [vmem:[%s3 + $0x46f8] sm:$0xff]
  %v3294 = vld [vmem:[%s3 + $0x4700] sm:$0xff]
  %v3295 = vld [vmem:[%s3 + $0x4708] sm:$0xff]
  %v3296 = vld [vmem:[%s3 + $0x4710] sm:$0xff]
  %v3297 = vld [vmem:[%s3 + $0x4718] sm:$0xff]
  %v3298 = vld [vmem:[%s3 + $0x4720] sm:$0xff]
  %v3299 = vld [vmem:[%s3 + $0x4728] sm:$0xff]
  %v3300 = vld [vmem:[%s3 + $0x4730] sm:$0xff]
  %v3301 = vld [vmem:[%s3 + $0x4738] sm:$0xff]
  %v3302 = vld [vmem:[%s3 + $0x4740] sm:$0xff]
  %v3303 = vld [vmem:[%s3 + $0x4748] sm:$0xff]
  %v3304 = vld [vmem:[%s3 + $0x4750] sm:$0xff]
  %v3305 = vld [vmem:[%s3 + $0x4758] sm:$0xff]
  %v3306 = vld [vmem:[%s3 + $0x4760] sm:$0xff]
  %v3307 = vld [vmem:[%s3 + $0x4768] sm:$0xff]
  %v3308 = vld [vmem:[%s3 + $0x4770] sm:$0xff]
  %v3309 = vld [vmem:[%s3 + $0x4778] sm:$0xff]
  %v3310 = vld [vmem:[%s3 + $0x4780] sm:$0xff]
  %v3311 = vld [vmem:[%s3 + $0x4788] sm:$0xff]
  %v3312 = vld [vmem:[%s3 + $0x4790] sm:$0xff]
  %v3313 = vld [vmem:[%s3 + $0x4798] sm:$0xff]
  %v3314 = vld [vmem:[%s3 + $0x47a0] sm:$0xff]
  %v3315 = vld [vmem:[%s3 + $0x47a8] sm:$0xff]
  %v3316 = vld [vmem:[%s3 + $0x47b0] sm:$0xff]
  %v3317 = vld [vmem:[%s3 + $0x47b8] sm:$0xff]
  %v3318 = vld [vmem:[%s3 + $0x47c0] sm:$0xff]
  %v3319 = vld [vmem:[%s3 + $0x47c8] sm:$0xff]
  %v3320 = vld [vmem:[%s3 + $0x47d0] sm:$0xff]
  %v3321 = vld [vmem:[%s3 + $0x47d8] sm:$0xff]
  %v3322 = vld [vmem:[%s3 + $0x47e0] sm:$0xff]
  %v3323 = vld [vmem:[%s3 + $0x47e8] sm:$0xff]
  %v3324 = vld [vmem:[%s3 + $0x47f0] sm:$0xff]
  %v3325 = vld [vmem:[%s3 + $0x47f8] sm:$0xff]
  %v3326 = vld [vmem:[%s3 + $0x4800] sm:$0xff]
  %v3327 = vld [vmem:[%s3 + $0x4808] sm:$0xff]
  %v3328 = vld [vmem:[%s3 + $0x4810] sm:$0xff]
  %v3329 = vld [vmem:[%s3 + $0x4818] sm:$0xff]
  %v3330 = vld [vmem:[%s3 + $0x4820] sm:$0xff]
  %v3331 = vld [vmem:[%s3 + $0x4828] sm:$0xff]
  %v3332 = vld [vmem:[%s3 + $0x4830] sm:$0xff]
  %v3333 = vld [vmem:[%s3 + $0x4838] sm:$0xff]
  %v3334 = vld [vmem:[%s3 + $0x4840] sm:$0xff]
  %v3335 = vld [vmem:[%s3 + $0x4848] sm:$0xff]
  %v3336 = vld [vmem:[%s3 + $0x4850] sm:$0xff]
  %v3337 = vld [vmem:[%s3 + $0x4858] sm:$0xff]
  %v3338 = vld [vmem:[%s3 + $0x4860] sm:$0xff]
  %v3339 = vld [vmem:[%s3 + $0x4868] sm:$0xff]
  %v3340 = vld [vmem:[%s3 + $0x4870] sm:$0xff]
  %v3341 = vld [vmem:[%s3 + $0x4878] sm:$0xff]
  %v3342 = vld [vmem:[%s3 + $0x4880] sm:$0xff]
  %v3343 = vld [vmem:[%s3 + $0x4888] sm:$0xff]
  %v3344 = vld [vmem:[%s3 + $0x4890] sm:$0xff]
  %v3345 = vld [vmem:[%s3 + $0x4898] sm:$0xff]
  %v3346 = vld [vmem:[%s3 + $0x48a0] sm:$0xff]
  %v3347 = vld [vmem:[%s3 + $0x48a8] sm:$0xff]
  %v3348 = vld [vmem:[%s3 + $0x48b0] sm:$0xff]
  %v3349 = vld [vmem:[%s3 + $0x48b8] sm:$0xff]
  %v3350 = vld [vmem:[%s3 + $0x48c0] sm:$0xff]
  %v3351 = vld [vmem:[%s3 + $0x48c8] sm:$0xff]
  %v3352 = vld [vmem:[%s3 + $0x48d0] sm:$0xff]
  %v3353 = vld [vmem:[%s3 + $0x48d8] sm:$0xff]
  %v3354 = vld [vmem:[%s3 + $0x48e0] sm:$0xff]
  %v3355 = vld [vmem:[%s3 + $0x48e8] sm:$0xff]
  %v3356 = vld [vmem:[%s3 + $0x48f0] sm:$0xff]
  %v3357 = vld [vmem:[%s3 + $0x48f8] sm:$0xff]
  %v3358 = vld [vmem:[%s3 + $0x4900] sm:$0xff]
  %v3359 = vld [vmem:[%s3 + $0x4908] sm:$0xff]
  %v3360 = vld [vmem:[%s3 + $0x4910] sm:$0xff]
  %v3361 = vld [vmem:[%s3 + $0x4918] sm:$0xff]
  %v3362 = vld [vmem:[%s3 + $0x4920] sm:$0xff]
  %v3363 = vld [vmem:[%s3 + $0x4928] sm:$0xff]
  %v3364 = vld [vmem:[%s3 + $0x4930] sm:$0xff]
  %v3365 = vld [vmem:[%s3 + $0x4938] sm:$0xff]
  %v3366 = vld [vmem:[%s3 + $0x4940] sm:$0xff]
  %v3367 = vld [vmem:[%s3 + $0x4948] sm:$0xff]
  %v3368 = vld [vmem:[%s3 + $0x4950] sm:$0xff]
  %v3369 = vld [vmem:[%s3 + $0x4958] sm:$0xff]
  %v3370 = vld [vmem:[%s3 + $0x4960] sm:$0xff]
  %v3371 = vld [vmem:[%s3 + $0x4968] sm:$0xff]
  %v3372 = vld [vmem:[%s3 + $0x4970] sm:$0xff]
  %v3373 = vld [vmem:[%s3 + $0x4978] sm:$0xff]
  %v3374 = vld [vmem:[%s3 + $0x4980] sm:$0xff]
  %v3375 = vld [vmem:[%s3 + $0x4988] sm:$0xff]
  %v3376 = vld [vmem:[%s3 + $0x4990] sm:$0xff]
  %v3377 = vld [vmem:[%s3 + $0x4998] sm:$0xff]
  %v3378 = vld [vmem:[%s3 + $0x49a0] sm:$0xff]
  %v3379 = vld [vmem:[%s3 + $0x49a8] sm:$0xff]
  %v3380 = vld [vmem:[%s3 + $0x49b0] sm:$0xff]
  %v3381 = vld [vmem:[%s3 + $0x49b8] sm:$0xff]
  %v3382 = vld [vmem:[%s3 + $0x49c0] sm:$0xff]
  %v3383 = vld [vmem:[%s3 + $0x49c8] sm:$0xff]
  %v3384 = vld [vmem:[%s3 + $0x49d0] sm:$0xff]
  %v3385 = vld [vmem:[%s3 + $0x49d8] sm:$0xff]
  %v3386 = vld [vmem:[%s3 + $0x49e0] sm:$0xff]
  %v3387 = vld [vmem:[%s3 + $0x49e8] sm:$0xff]
  %v3388 = vld [vmem:[%s3 + $0x49f0] sm:$0xff]
  %v3389 = vld [vmem:[%s3 + $0x49f8] sm:$0xff]
  %v3390 = vld [vmem:[%s3 + $0x4a00] sm:$0xff]
  %v3391 = vld [vmem:[%s3 + $0x4a08] sm:$0xff]
  %v3392 = vld [vmem:[%s3 + $0x4a10] sm:$0xff]
  %v3393 = vld [vmem:[%s3 + $0x4a18] sm:$0xff]
  %v3394 = vld [vmem:[%s3 + $0x4a20] sm:$0xff]
  %v3395 = vld [vmem:[%s3 + $0x4a28] sm:$0xff]
  %v3396 = vld [vmem:[%s3 + $0x4a30] sm:$0xff]
  %v3397 = vld [vmem:[%s3 + $0x4a38] sm:$0xff]
  %v3398 = vld [vmem:[%s3 + $0x4a40] sm:$0xff]
  %v3399 = vld [vmem:[%s3 + $0x4a48] sm:$0xff]
  %v3400 = vld [vmem:[%s3 + $0x4a50] sm:$0xff]
  %v3401 = vld [vmem:[%s3 + $0x4a58] sm:$0xff]
  %v3402 = vld [vmem:[%s3 + $0x4a60] sm:$0xff]
  %v3403 = vld [vmem:[%s3 + $0x4a68] sm:$0xff]
  %v3404 = vld [vmem:[%s3 + $0x4a70] sm:$0xff]
  %v3405 = vld [vmem:[%s3 + $0x4a78] sm:$0xff]
  %v3406 = vld [vmem:[%s3 + $0x4a80] sm:$0xff]
  %v3407 = vld [vmem:[%s3 + $0x4a88] sm:$0xff]
  %v3408 = vld [vmem:[%s3 + $0x4a90] sm:$0xff]
  %v3409 = vld [vmem:[%s3 + $0x4a98] sm:$0xff]
  %v3410 = vld [vmem:[%s3 + $0x4aa0] sm:$0xff]
  %v3411 = vld [vmem:[%s3 + $0x4aa8] sm:$0xff]
  %v3412 = vld [vmem:[%s3 + $0x4ab0] sm:$0xff]
  %v3413 = vld [vmem:[%s3 + $0x4ab8] sm:$0xff]
  %v3414 = vld [vmem:[%s3 + $0x4ac0] sm:$0xff]
  %v3415 = vld [vmem:[%s3 + $0x4ac8] sm:$0xff]
  %v3416 = vld [vmem:[%s3 + $0x4ad0] sm:$0xff]
  %v3417 = vld [vmem:[%s3 + $0x4ad8] sm:$0xff]
  %v3418 = vld [vmem:[%s3 + $0x4ae0] sm:$0xff]
  %v3419 = vld [vmem:[%s3 + $0x4ae8] sm:$0xff]
  %v3420 = vld [vmem:[%s3 + $0x4af0] sm:$0xff]
  %v3421 = vld [vmem:[%s3 + $0x4af8] sm:$0xff]
  %v3422 = vld [vmem:[%s3 + $0x4b00] sm:$0xff]
  %v3423 = vld [vmem:[%s3 + $0x4b08] sm:$0xff]
  %v3424 = vld [vmem:[%s3 + $0x4b10] sm:$0xff]
  %v3425 = vld [vmem:[%s3 + $0x4b18] sm:$0xff]
  %v3426 = vld [vmem:[%s3 + $0x4b20] sm:$0xff]
  %v3427 = vld [vmem:[%s3 + $0x4b28] sm:$0xff]
  %v3428 = vld [vmem:[%s3 + $0x4b30] sm:$0xff]
  %v3429 = vld [vmem:[%s3 + $0x4b38] sm:$0xff]
  %v3430 = vld [vmem:[%s3 + $0x4b40] sm:$0xff]
  %v3431 = vld [vmem:[%s3 + $0x4b48] sm:$0xff]
  %v3432 = vld [vmem:[%s3 + $0x4b50] sm:$0xff]
  %v3433 = vld [vmem:[%s3 + $0x4b58] sm:$0xff]
  %v3434 = vld [vmem:[%s3 + $0x4b60] sm:$0xff]
  %v3435 = vld [vmem:[%s3 + $0x4b68] sm:$0xff]
  %v3436 = vld [vmem:[%s3 + $0x4b70] sm:$0xff]
  %v3437 = vld [vmem:[%s3 + $0x4b78] sm:$0xff]
  %v3438 = vld [vmem:[%s3 + $0x4b80] sm:$0xff]
  %v3439 = vld [vmem:[%s3 + $0x4b88] sm:$0xff]
  %v3440 = vld [vmem:[%s3 + $0x4b90] sm:$0xff]
  %v3441 = vld [vmem:[%s3 + $0x4b98] sm:$0xff]
  %v3442 = vld [vmem:[%s3 + $0x4ba0] sm:$0xff]
  %v3443 = vld [vmem:[%s3 + $0x4ba8] sm:$0xff]
  %v3444 = vld [vmem:[%s3 + $0x4bb0] sm:$0xff]
  %v3445 = vld [vmem:[%s3 + $0x4bb8] sm:$0xff]
  %v3446 = vld [vmem:[%s3 + $0x4bc0] sm:$0xff]
  %v3447 = vld [vmem:[%s3 + $0x4bc8] sm:$0xff]
  %v3448 = vld [vmem:[%s3 + $0x4bd0] sm:$0xff]
  %v3449 = vld [vmem:[%s3 + $0x4bd8] sm:$0xff]
  %v3450 = vld [vmem:[%s3 + $0x4be0] sm:$0xff]
  %v3451 = vld [vmem:[%s3 + $0x4be8] sm:$0xff]
  %v3452 = vld [vmem:[%s3 + $0x4bf0] sm:$0xff]
  %v3453 = vld [vmem:[%s3 + $0x4bf8] sm:$0xff]
  %v3454 = vld [vmem:[%s3 + $0x4c00] sm:$0xff]
  %v3455 = vld [vmem:[%s3 + $0x4c08] sm:$0xff]
  %v3456 = vld [vmem:[%s3 + $0x4c10] sm:$0xff]
  %v3457 = vld [vmem:[%s3 + $0x4c18] sm:$0xff]
  %v3458 = vld [vmem:[%s3 + $0x4c20] sm:$0xff]
  %v3459 = vld [vmem:[%s3 + $0x4c28] sm:$0xff]
  %v3460 = vld [vmem:[%s3 + $0x4c30] sm:$0xff]
  %v3461 = vld [vmem:[%s3 + $0x4c38] sm:$0xff]
  %v3462 = vld [vmem:[%s3 + $0x4c40] sm:$0xff]
  %v3463 = vld [vmem:[%s3 + $0x4c48] sm:$0xff]
  %v3464 = vld [vmem:[%s3 + $0x4c50] sm:$0xff]
  %v3465 = vld [vmem:[%s3 + $0x4c58] sm:$0xff]
  %v3466 = vld [vmem:[%s3 + $0x4c60] sm:$0xff]
  %v3467 = vld [vmem:[%s3 + $0x4c68] sm:$0xff]
  %v3468 = vld [vmem:[%s3 + $0x4c70] sm:$0xff]
  %v3469 = vld [vmem:[%s3 + $0x4c78] sm:$0xff]
  %v3470 = vld [vmem:[%s3 + $0x4c80] sm:$0xff]
  %v3471 = vld [vmem:[%s3 + $0x4c88] sm:$0xff]
  %v3472 = vld [vmem:[%s3 + $0x4c90] sm:$0xff]
  %v3473 = vld [vmem:[%s3 + $0x4c98] sm:$0xff]
  %v3474 = vld [vmem:[%s3 + $0x4ca0] sm:$0xff]
  %v3475 = vld [vmem:[%s3 + $0x4ca8] sm:$0xff]
  %v3476 = vld [vmem:[%s3 + $0x4cb0] sm:$0xff]
  %v3477 = vld [vmem:[%s3 + $0x4cb8] sm:$0xff]
  %v3478 = vld [vmem:[%s3 + $0x4cc0] sm:$0xff]
  %v3479 = vld [vmem:[%s3 + $0x4cc8] sm:$0xff]
  %v3480 = vld [vmem:[%s3 + $0x4cd0] sm:$0xff]
  %v3481 = vld [vmem:[%s3 + $0x4cd8] sm:$0xff]
  %v3482 = vld [vmem:[%s3 + $0x4ce0] sm:$0xff]
  %v3483 = vld [vmem:[%s3 + $0x4ce8] sm:$0xff]
  %v3484 = vld [vmem:[%s3 + $0x4cf0] sm:$0xff]
  %v3485 = vld [vmem:[%s3 + $0x4cf8] sm:$0xff]
  %v3486 = vld [vmem:[%s3 + $0x4d00] sm:$0xff]
  %v3487 = vld [vmem:[%s3 + $0x4d08] sm:$0xff]
  %v3488 = vld [vmem:[%s3 + $0x4d10] sm:$0xff]
  %v3489 = vld [vmem:[%s3 + $0x4d18] sm:$0xff]
  %v3490 = vld [vmem:[%s3 + $0x4d20] sm:$0xff]
  %v3491 = vld [vmem:[%s3 + $0x4d28] sm:$0xff]
  %v3492 = vld [vmem:[%s3 + $0x4d30] sm:$0xff]
  %v3493 = vld [vmem:[%s3 + $0x4d38] sm:$0xff]
  %v3494 = vld [vmem:[%s3 + $0x4d40] sm:$0xff]
  %v3495 = vld [vmem:[%s3 + $0x4d48] sm:$0xff]
  %v3496 = vld [vmem:[%s3 + $0x4d50] sm:$0xff]
  %v3497 = vld [vmem:[%s3 + $0x4d58] sm:$0xff]
  %v3498 = vld [vmem:[%s3 + $0x4d60] sm:$0xff]
  %v3499 = vld [vmem:[%s3 + $0x4d68] sm:$0xff]
  %v3500 = vld [vmem:[%s3 + $0x4d70] sm:$0xff]
  %v3501 = vld [vmem:[%s3 + $0x4d78] sm:$0xff]
  %v3502 = vld [vmem:[%s3 + $0x4d80] sm:$0xff]
  %v3503 = vld [vmem:[%s3 + $0x4d88] sm:$0xff]
  %v3504 = vld [vmem:[%s3 + $0x4d90] sm:$0xff]
  %v3505 = vld [vmem:[%s3 + $0x4d98] sm:$0xff]
  %v3506 = vld [vmem:[%s3 + $0x4da0] sm:$0xff]
  %v3507 = vld [vmem:[%s3 + $0x4da8] sm:$0xff]
  %v3508 = vld [vmem:[%s3 + $0x4db0] sm:$0xff]
  %v3509 = vld [vmem:[%s3 + $0x4db8] sm:$0xff]
  %v3510 = vld [vmem:[%s3 + $0x4dc0] sm:$0xff]
  %v3511 = vld [vmem:[%s3 + $0x4dc8] sm:$0xff]
  %v3512 = vld [vmem:[%s3 + $0x4dd0] sm:$0xff]
  %v3513 = vld [vmem:[%s3 + $0x4dd8] sm:$0xff]
  %v3514 = vld [vmem:[%s3 + $0x4de0] sm:$0xff]
  %v3515 = vld [vmem:[%s3 + $0x4de8] sm:$0xff]
  %v3516 = vld [vmem:[%s3 + $0x4df0] sm:$0xff]
  %v3517 = vld [vmem:[%s3 + $0x4df8] sm:$0xff]
  %v3518 = vld [vmem:[%s3 + $0x4e00] sm:$0xff]
  %v3519 = vld [vmem:[%s3 + $0x4e08] sm:$0xff]
  %v3520 = vld [vmem:[%s3 + $0x4e10] sm:$0xff]
  %v3521 = vld [vmem:[%s3 + $0x4e18] sm:$0xff]
  %v3522 = vld [vmem:[%s3 + $0x4e20] sm:$0xff]
  %v3523 = vld [vmem:[%s3 + $0x4e28] sm:$0xff]
  %v3524 = vld [vmem:[%s3 + $0x4e30] sm:$0xff]
  %v3525 = vld [vmem:[%s3 + $0x4e38] sm:$0xff]
  %v3526 = vld [vmem:[%s3 + $0x4e40] sm:$0xff]
  %v3527 = vld [vmem:[%s3 + $0x4e48] sm:$0xff]
  %v3528 = vld [vmem:[%s3 + $0x4e50] sm:$0xff]
  %v3529 = vld [vmem:[%s3 + $0x4e58] sm:$0xff]
  %v3530 = vld [vmem:[%s3 + $0x4e60] sm:$0xff]
  %v3531 = vld [vmem:[%s3 + $0x4e68] sm:$0xff]
  %v3532 = vld [vmem:[%s3 + $0x4e70] sm:$0xff]
  %v3533 = vld [vmem:[%s3 + $0x4e78] sm:$0xff]
  %v3534 = vld [vmem:[%s3 + $0x4e80] sm:$0xff]
  %v3535 = vld [vmem:[%s3 + $0x4e88] sm:$0xff]
  %v3536 = vld [vmem:[%s3 + $0x4e90] sm:$0xff]
  %v3537 = vld [vmem:[%s3 + $0x4e98] sm:$0xff]
  %v3538 = vld [vmem:[%s3 + $0x4ea0] sm:$0xff]
  %v3539 = vld [vmem:[%s3 + $0x4ea8] sm:$0xff]
  %v3540 = vld [vmem:[%s3 + $0x4eb0] sm:$0xff]
  %v3541 = vld [vmem:[%s3 + $0x4eb8] sm:$0xff]
  %v3542 = vld [vmem:[%s3 + $0x4ec0] sm:$0xff]
  %v3543 = vld [vmem:[%s3 + $0x4ec8] sm:$0xff]
  %v3544 = vld [vmem:[%s3 + $0x4ed0] sm:$0xff]
  %v3545 = vld [vmem:[%s3 + $0x4ed8] sm:$0xff]
  %v3546 = vld [vmem:[%s3 + $0x4ee0] sm:$0xff]
  %v3547 = vld [vmem:[%s3 + $0x4ee8] sm:$0xff]
  %v3548 = vld [vmem:[%s3 + $0x4ef0] sm:$0xff]
  %v3549 = vld [vmem:[%s3 + $0x4ef8] sm:$0xff]
  %v3550 = vld [vmem:[%s3 + $0x4f00] sm:$0xff]
  %v3551 = vld [vmem:[%s3 + $0x4f08] sm:$0xff]
  %v3552 = vld [vmem:[%s3 + $0x4f10] sm:$0xff]
  %v3553 = vld [vmem:[%s3 + $0x4f18] sm:$0xff]
  %v3554 = vld [vmem:[%s3 + $0x4f20] sm:$0xff]
  %v3555 = vld [vmem:[%s3 + $0x4f28] sm:$0xff]
  %v3556 = vld [vmem:[%s3 + $0x4f30] sm:$0xff]
  %v3557 = vld [vmem:[%s3 + $0x4f38] sm:$0xff]
  %v3558 = vld [vmem:[%s3 + $0x4f40] sm:$0xff]
  %v3559 = vld [vmem:[%s3 + $0x4f48] sm:$0xff]
  %v3560 = vld [vmem:[%s3 + $0x4f50] sm:$0xff]
  %v3561 = vld [vmem:[%s3 + $0x4f58] sm:$0xff]
  %v3562 = vld [vmem:[%s3 + $0x4f60] sm:$0xff]
  %v3563 = vld [vmem:[%s3 + $0x4f68] sm:$0xff]
  %v3564 = vld [vmem:[%s3 + $0x4f70] sm:$0xff]
  %v3565 = vld [vmem:[%s3 + $0x4f78] sm:$0xff]
  %v3566 = vld [vmem:[%s3 + $0x4f80] sm:$0xff]
  %v3567 = vld [vmem:[%s3 + $0x4f88] sm:$0xff]
  %v3568 = vld [vmem:[%s3 + $0x4f90] sm:$0xff]
  %v3569 = vld [vmem:[%s3 + $0x4f98] sm:$0xff]
  %v3570 = vld [vmem:[%s3 + $0x4fa0] sm:$0xff]
  %v3571 = vld [vmem:[%s3 + $0x4fa8] sm:$0xff]
  %v3572 = vld [vmem:[%s3 + $0x4fb0] sm:$0xff]
  %v3573 = vld [vmem:[%s3 + $0x4fb8] sm:$0xff]
  %v3574 = vld [vmem:[%s3 + $0x4fc0] sm:$0xff]
  %v3575 = vld [vmem:[%s3 + $0x4fc8] sm:$0xff]
  %v3576 = vld [vmem:[%s3 + $0x4fd0] sm:$0xff]
  %v3577 = vld [vmem:[%s3 + $0x4fd8] sm:$0xff]
  %v3578 = vld [vmem:[%s3 + $0x4fe0] sm:$0xff]
  %v3579 = vld [vmem:[%s3 + $0x4fe8] sm:$0xff]
  %v3580 = vld [vmem:[%s3 + $0x4ff0] sm:$0xff]
  %v3581 = vld [vmem:[%s3 + $0x4ff8] sm:$0xff]
  %v3582 = vld [vmem:[%s3 + $0x5000] sm:$0xff]
  %v3583 = vld [vmem:[%s3 + $0x5008] sm:$0xff]
  %v3584 = vld [vmem:[%s3 + $0x5010] sm:$0xff]
  %v3585 = vld [vmem:[%s3 + $0x5018] sm:$0xff]
  %v3586 = vld [vmem:[%s3 + $0x5020] sm:$0xff]
  %v3587 = vld [vmem:[%s3 + $0x5028] sm:$0xff]
  %v3588 = vld [vmem:[%s3 + $0x5030] sm:$0xff]
  %v3589 = vld [vmem:[%s3 + $0x5038] sm:$0xff]
  %v3590 = vld [vmem:[%s3 + $0x5040] sm:$0xff]
  %v3591 = vld [vmem:[%s3 + $0x5048] sm:$0xff]
  %v3592 = vld [vmem:[%s3 + $0x5050] sm:$0xff]
  %v3593 = vld [vmem:[%s3 + $0x5058] sm:$0xff]
  %v3594 = vld [vmem:[%s3 + $0x5060] sm:$0xff]
  %v3595 = vld [vmem:[%s3 + $0x5068] sm:$0xff]
  %v3596 = vld [vmem:[%s3 + $0x5070] sm:$0xff]
  %v3597 = vld [vmem:[%s3 + $0x5078] sm:$0xff]
  %v3598 = vld [vmem:[%s3 + $0x5080] sm:$0xff]
  %v3599 = vld [vmem:[%s3 + $0x5088] sm:$0xff]
  %v3600 = vld [vmem:[%s3 + $0x5090] sm:$0xff]
  %v3601 = vld [vmem:[%s3 + $0x5098] sm:$0xff]
  %v3602 = vld [vmem:[%s3 + $0x50a0] sm:$0xff]
  %v3603 = vld [vmem:[%s3 + $0x50a8] sm:$0xff]
  %v3604 = vld [vmem:[%s3 + $0x50b0] sm:$0xff]
  %v3605 = vld [vmem:[%s3 + $0x50b8] sm:$0xff]
  %v3606 = vld [vmem:[%s3 + $0x50c0] sm:$0xff]
  %v3607 = vld [vmem:[%s3 + $0x50c8] sm:$0xff]
  %v3608 = vld [vmem:[%s3 + $0x50d0] sm:$0xff]
  %v3609 = vld [vmem:[%s3 + $0x50d8] sm:$0xff]
  %v3610 = vld [vmem:[%s3 + $0x50e0] sm:$0xff]
  %v3611 = vld [vmem:[%s3 + $0x50e8] sm:$0xff]
  %v3612 = vld [vmem:[%s3 + $0x50f0] sm:$0xff]
  %v3613 = vld [vmem:[%s3 + $0x50f8] sm:$0xff]
  %v3614 = vld [vmem:[%s3 + $0x5100] sm:$0xff]
  %v3615 = vld [vmem:[%s3 + $0x5108] sm:$0xff]
  %v3616 = vld [vmem:[%s3 + $0x5110] sm:$0xff]
  %v3617 = vld [vmem:[%s3 + $0x5118] sm:$0xff]
  %v3618 = vld [vmem:[%s3 + $0x5120] sm:$0xff]
  %v3619 = vld [vmem:[%s3 + $0x5128] sm:$0xff]
  %v3620 = vld [vmem:[%s3 + $0x5130] sm:$0xff]
  %v3621 = vld [vmem:[%s3 + $0x5138] sm:$0xff]
  %v3622 = vld [vmem:[%s3 + $0x5140] sm:$0xff]
  %v3623 = vld [vmem:[%s3 + $0x5148] sm:$0xff]
  %v3624 = vld [vmem:[%s3 + $0x5150] sm:$0xff]
  %v3625 = vld [vmem:[%s3 + $0x5158] sm:$0xff]
  %v3626 = vld [vmem:[%s3 + $0x5160] sm:$0xff]
  %v3627 = vld [vmem:[%s3 + $0x5168] sm:$0xff]
  %v3628 = vld [vmem:[%s3 + $0x5170] sm:$0xff]
  %v3629 = vld [vmem:[%s3 + $0x5178] sm:$0xff]
  %v3630 = vld [vmem:[%s3 + $0x5180] sm:$0xff]
  %v3631 = vld [vmem:[%s3 + $0x5188] sm:$0xff]
  %v3632 = vld [vmem:[%s3 + $0x5190] sm:$0xff]
  %v3633 = vld [vmem:[%s3 + $0x5198] sm:$0xff]
  %v3634 = vld [vmem:[%s3 + $0x51a0] sm:$0xff]
  %v3635 = vld [vmem:[%s3 + $0x51a8] sm:$0xff]
  %v3636 = vld [vmem:[%s3 + $0x51b0] sm:$0xff]
  %v3637 = vld [vmem:[%s3 + $0x51b8] sm:$0xff]
  %v3638 = vld [vmem:[%s3 + $0x51c0] sm:$0xff]
  %v3639 = vld [vmem:[%s3 + $0x51c8] sm:$0xff]
  %v3640 = vld [vmem:[%s3 + $0x51d0] sm:$0xff]
  %v3641 = vld [vmem:[%s3 + $0x51d8] sm:$0xff]
  %v3642 = vld [vmem:[%s3 + $0x51e0] sm:$0xff]
  %v3643 = vld [vmem:[%s3 + $0x51e8] sm:$0xff]
  %v3644 = vld [vmem:[%s3 + $0x51f0] sm:$0xff]
  %v3645 = vld [vmem:[%s3 + $0x51f8] sm:$0xff]
  %v3646 = vld [vmem:[%s3 + $0x5200] sm:$0xff]
  %v3647 = vld [vmem:[%s3 + $0x5208] sm:$0xff]
  %v3648 = vld [vmem:[%s3 + $0x5210] sm:$0xff]
  %v3649 = vld [vmem:[%s3 + $0x5218] sm:$0xff]
  %v3650 = vld [vmem:[%s3 + $0x5220] sm:$0xff]
  %v3651 = vld [vmem:[%s3 + $0x5228] sm:$0xff]
  %v3652 = vld [vmem:[%s3 + $0x5230] sm:$0xff]
  %v3653 = vld [vmem:[%s3 + $0x5238] sm:$0xff]
  %v3654 = vld [vmem:[%s3 + $0x5240] sm:$0xff]
  %v3655 = vld [vmem:[%s3 + $0x5248] sm:$0xff]
  %v3656 = vld [vmem:[%s3 + $0x5250] sm:$0xff]
  %v3657 = vld [vmem:[%s3 + $0x5258] sm:$0xff]
  %v3658 = vld [vmem:[%s3 + $0x5260] sm:$0xff]
  %v3659 = vld [vmem:[%s3 + $0x5268] sm:$0xff]
  %v3660 = vld [vmem:[%s3 + $0x5270] sm:$0xff]
  %v3661 = vld [vmem:[%s3 + $0x5278] sm:$0xff]
  %v3662 = vld [vmem:[%s3 + $0x5280] sm:$0xff]
  %v3663 = vld [vmem:[%s3 + $0x5288] sm:$0xff]
  %v3664 = vld [vmem:[%s3 + $0x5290] sm:$0xff]
  %v3665 = vld [vmem:[%s3 + $0x5298] sm:$0xff]
  %v3666 = vld [vmem:[%s3 + $0x52a0] sm:$0xff]
  %v3667 = vld [vmem:[%s3 + $0x52a8] sm:$0xff]
  %v3668 = vld [vmem:[%s3 + $0x52b0] sm:$0xff]
  %v3669 = vld [vmem:[%s3 + $0x52b8] sm:$0xff]
  %v3670 = vld [vmem:[%s3 + $0x52c0] sm:$0xff]
  %v3671 = vld [vmem:[%s3 + $0x52c8] sm:$0xff]
  %v3672 = vld [vmem:[%s3 + $0x52d0] sm:$0xff]
  %v3673 = vld [vmem:[%s3 + $0x52d8] sm:$0xff]
  %v3674 = vld [vmem:[%s3 + $0x52e0] sm:$0xff]
  %v3675 = vld [vmem:[%s3 + $0x52e8] sm:$0xff]
  %v3676 = vld [vmem:[%s3 + $0x52f0] sm:$0xff]
  %v3677 = vld [vmem:[%s3 + $0x52f8] sm:$0xff]
  %v3678 = vld [vmem:[%s3 + $0x5300] sm:$0xff]
  %v3679 = vld [vmem:[%s3 + $0x5308] sm:$0xff]
  %v3680 = vld [vmem:[%s3 + $0x5310] sm:$0xff]
  %v3681 = vld [vmem:[%s3 + $0x5318] sm:$0xff]
  %v3682 = vld [vmem:[%s3 + $0x5320] sm:$0xff]
  %v3683 = vld [vmem:[%s3 + $0x5328] sm:$0xff]
  %v3684 = vld [vmem:[%s3 + $0x5330] sm:$0xff]
  %v3685 = vld [vmem:[%s3 + $0x5338] sm:$0xff]
  %v3686 = vld [vmem:[%s3 + $0x5340] sm:$0xff]
  %v3687 = vld [vmem:[%s3 + $0x5348] sm:$0xff]
  %v3688 = vld [vmem:[%s3 + $0x5350] sm:$0xff]
  %v3689 = vld [vmem:[%s3 + $0x5358] sm:$0xff]
  %v3690 = vld [vmem:[%s3 + $0x5360] sm:$0xff]
  %v3691 = vld [vmem:[%s3 + $0x5368] sm:$0xff]
  %v3692 = vld [vmem:[%s3 + $0x5370] sm:$0xff]
  %v3693 = vld [vmem:[%s3 + $0x5378] sm:$0xff]
  %v3694 = vld [vmem:[%s3 + $0x5380] sm:$0xff]
  %v3695 = vld [vmem:[%s3 + $0x5388] sm:$0xff]
  %v3696 = vld [vmem:[%s3 + $0x5390] sm:$0xff]
  %v3697 = vld [vmem:[%s3 + $0x5398] sm:$0xff]
  %v3698 = vld [vmem:[%s3 + $0x53a0] sm:$0xff]
  %v3699 = vld [vmem:[%s3 + $0x53a8] sm:$0xff]
  %v3700 = vld [vmem:[%s3 + $0x53b0] sm:$0xff]
  %v3701 = vld [vmem:[%s3 + $0x53b8] sm:$0xff]
  %v3702 = vld [vmem:[%s3 + $0x53c0] sm:$0xff]
  %v3703 = vld [vmem:[%s3 + $0x53c8] sm:$0xff]
  %v3704 = vld [vmem:[%s3 + $0x53d0] sm:$0xff]
  %v3705 = vld [vmem:[%s3 + $0x53d8] sm:$0xff]
  %v3706 = vld [vmem:[%s3 + $0x53e0] sm:$0xff]
  %v3707 = vld [vmem:[%s3 + $0x53e8] sm:$0xff]
  %v3708 = vld [vmem:[%s3 + $0x53f0] sm:$0xff]
  %v3709 = vld [vmem:[%s3 + $0x53f8] sm:$0xff]
  %v3710 = vld [vmem:[%s3 + $0x5400] sm:$0xff]
  %v3711 = vld [vmem:[%s3 + $0x5408] sm:$0xff]
  %v3712 = vld [vmem:[%s3 + $0x5410] sm:$0xff]
  %v3713 = vld [vmem:[%s3 + $0x5418] sm:$0xff]
  %v3714 = vld [vmem:[%s3 + $0x5420] sm:$0xff]
  %v3715 = vld [vmem:[%s3 + $0x5428] sm:$0xff]
  %v3716 = vld [vmem:[%s3 + $0x5430] sm:$0xff]
  %v3717 = vld [vmem:[%s3 + $0x5438] sm:$0xff]
  %v3718 = vld [vmem:[%s3 + $0x5440] sm:$0xff]
  %v3719 = vld [vmem:[%s3 + $0x5448] sm:$0xff]
  %v3720 = vld [vmem:[%s3 + $0x5450] sm:$0xff]
  %v3721 = vld [vmem:[%s3 + $0x5458] sm:$0xff]
  %v3722 = vld [vmem:[%s3 + $0x5460] sm:$0xff]
  %v3723 = vld [vmem:[%s3 + $0x5468] sm:$0xff]
  %v3724 = vld [vmem:[%s3 + $0x5470] sm:$0xff]
  %v3725 = vld [vmem:[%s3 + $0x5478] sm:$0xff]
  %v3726 = vld [vmem:[%s3 + $0x5480] sm:$0xff]
  %v3727 = vld [vmem:[%s3 + $0x5488] sm:$0xff]
  %v3728 = vld [vmem:[%s3 + $0x5490] sm:$0xff]
  %v3729 = vld [vmem:[%s3 + $0x5498] sm:$0xff]
  %v3730 = vld [vmem:[%s3 + $0x54a0] sm:$0xff]
  %v3731 = vld [vmem:[%s3 + $0x54a8] sm:$0xff]
  %v3732 = vld [vmem:[%s3 + $0x54b0] sm:$0xff]
  %v3733 = vld [vmem:[%s3 + $0x54b8] sm:$0xff]
  %v3734 = vld [vmem:[%s3 + $0x54c0] sm:$0xff]
  %v3735 = vld [vmem:[%s3 + $0x54c8] sm:$0xff]
  %v3736 = vld [vmem:[%s3 + $0x54d0] sm:$0xff]
  %v3737 = vld [vmem:[%s3 + $0x54d8] sm:$0xff]
  %v3738 = vld [vmem:[%s3 + $0x54e0] sm:$0xff]
  %v3739 = vld [vmem:[%s3 + $0x54e8] sm:$0xff]
  %v3740 = vld [vmem:[%s3 + $0x54f0] sm:$0xff]
  %v3741 = vld [vmem:[%s3 + $0x54f8] sm:$0xff]
  %v3742 = vld [vmem:[%s3 + $0x5500] sm:$0xff]
  %v3743 = vld [vmem:[%s3 + $0x5508] sm:$0xff]
  %v3744 = vld [vmem:[%s3 + $0x5510] sm:$0xff]
  %v3745 = vld [vmem:[%s3 + $0x5518] sm:$0xff]
  %v3746 = vld [vmem:[%s3 + $0x5520] sm:$0xff]
  %v3747 = vld [vmem:[%s3 + $0x5528] sm:$0xff]
  %v3748 = vld [vmem:[%s3 + $0x5530] sm:$0xff]
  %v3749 = vld [vmem:[%s3 + $0x5538] sm:$0xff]
  %v3750 = vld [vmem:[%s3 + $0x5540] sm:$0xff]
  %v3751 = vld [vmem:[%s3 + $0x5548] sm:$0xff]
  %v3752 = vld [vmem:[%s3 + $0x5550] sm:$0xff]
  %v3753 = vld [vmem:[%s3 + $0x5558] sm:$0xff]
  %v3754 = vld [vmem:[%s3 + $0x5560] sm:$0xff]
  %v3755 = vld [vmem:[%s3 + $0x5568] sm:$0xff]
  %v3756 = vld [vmem:[%s3 + $0x5570] sm:$0xff]
  %v3757 = vld [vmem:[%s3 + $0x5578] sm:$0xff]
  %v3758 = vld [vmem:[%s3 + $0x5580] sm:$0xff]
  %v3759 = vld [vmem:[%s3 + $0x5588] sm:$0xff]
  %v3760 = vld [vmem:[%s3 + $0x5590] sm:$0xff]
  %v3761 = vld [vmem:[%s3 + $0x5598] sm:$0xff]
  %v3762 = vld [vmem:[%s3 + $0x55a0] sm:$0xff]
  %v3763 = vld [vmem:[%s3 + $0x55a8] sm:$0xff]
  %v3764 = vld [vmem:[%s3 + $0x55b0] sm:$0xff]
  %v3765 = vld [vmem:[%s3 + $0x55b8] sm:$0xff]
  %v3766 = vld [vmem:[%s3 + $0x55c0] sm:$0xff]
  %v3767 = vld [vmem:[%s3 + $0x55c8] sm:$0xff]
  %v3768 = vld [vmem:[%s3 + $0x55d0] sm:$0xff]
  %v3769 = vld [vmem:[%s3 + $0x55d8] sm:$0xff]
  %v3770 = vld [vmem:[%s3 + $0x55e0] sm:$0xff]
  %v3771 = vld [vmem:[%s3 + $0x55e8] sm:$0xff]
  %v3772 = vld [vmem:[%s3 + $0x55f0] sm:$0xff]
  %v3773 = vld [vmem:[%s3 + $0x55f8] sm:$0xff]
  %v3774 = vld [vmem:[%s3 + $0x5600] sm:$0xff]
  %v3775 = vld [vmem:[%s3 + $0x5608] sm:$0xff]
  %v3776 = vld [vmem:[%s3 + $0x5610] sm:$0xff]
  %v3777 = vld [vmem:[%s3 + $0x5618] sm:$0xff]
  %v3778 = vld [vmem:[%s3 + $0x5620] sm:$0xff]
  %v3779 = vld [vmem:[%s3 + $0x5628] sm:$0xff]
  %v3780 = vld [vmem:[%s3 + $0x5630] sm:$0xff]
  %v3781 = vld [vmem:[%s3 + $0x5638] sm:$0xff]
  %v3782 = vld [vmem:[%s3 + $0x5640] sm:$0xff]
  %v3783 = vld [vmem:[%s3 + $0x5648] sm:$0xff]
  %v3784 = vld [vmem:[%s3 + $0x5650] sm:$0xff]
  %v3785 = vld [vmem:[%s3 + $0x5658] sm:$0xff]
  %v3786 = vld [vmem:[%s3 + $0x5660] sm:$0xff]
  %v3787 = vld [vmem:[%s3 + $0x5668] sm:$0xff]
  %v3788 = vld [vmem:[%s3 + $0x5670] sm:$0xff]
  %v3789 = vld [vmem:[%s3 + $0x5678] sm:$0xff]
  %v3790 = vld [vmem:[%s3 + $0x5680] sm:$0xff]
  %v3791 = vld [vmem:[%s3 + $0x5688] sm:$0xff]
  %v3792 = vld [vmem:[%s3 + $0x5690] sm:$0xff]
  %v3793 = vld [vmem:[%s3 + $0x5698] sm:$0xff]
  %v3794 = vld [vmem:[%s3 + $0x56a0] sm:$0xff]
  %v3795 = vld [vmem:[%s3 + $0x56a8] sm:$0xff]
  %v3796 = vld [vmem:[%s3 + $0x56b0] sm:$0xff]
  %v3797 = vld [vmem:[%s3 + $0x56b8] sm:$0xff]
  %v3798 = vld [vmem:[%s3 + $0x56c0] sm:$0xff]
  %v3799 = vld [vmem:[%s3 + $0x56c8] sm:$0xff]
  %v3800 = vld [vmem:[%s3 + $0x56d0] sm:$0xff]
  %v3801 = vld [vmem:[%s3 + $0x56d8] sm:$0xff]
  %v3802 = vld [vmem:[%s3 + $0x56e0] sm:$0xff]
  %v3803 = vld [vmem:[%s3 + $0x56e8] sm:$0xff]
  %v3804 = vld [vmem:[%s3 + $0x56f0] sm:$0xff]
  %v3805 = vld [vmem:[%s3 + $0x56f8] sm:$0xff]
  %v3806 = vld [vmem:[%s3 + $0x5700] sm:$0xff]
  %v3807 = vld [vmem:[%s3 + $0x5708] sm:$0xff]
  %v3808 = vld [vmem:[%s3 + $0x5710] sm:$0xff]
  %v3809 = vld [vmem:[%s3 + $0x5718] sm:$0xff]
  %v3810 = vld [vmem:[%s3 + $0x5720] sm:$0xff]
  %v3811 = vld [vmem:[%s3 + $0x5728] sm:$0xff]
  %v3812 = vld [vmem:[%s3 + $0x5730] sm:$0xff]
  %v3813 = vld [vmem:[%s3 + $0x5738] sm:$0xff]
  %v3814 = vld [vmem:[%s3 + $0x5740] sm:$0xff]
  %v3815 = vld [vmem:[%s3 + $0x5748] sm:$0xff]
  %v3816 = vld [vmem:[%s3 + $0x5750] sm:$0xff]
  %v3817 = vld [vmem:[%s3 + $0x5758] sm:$0xff]
  %v3818 = vld [vmem:[%s3 + $0x5760] sm:$0xff]
  %v3819 = vld [vmem:[%s3 + $0x5768] sm:$0xff]
  %v3820 = vld [vmem:[%s3 + $0x5770] sm:$0xff]
  %v3821 = vld [vmem:[%s3 + $0x5778] sm:$0xff]
  %v3822 = vld [vmem:[%s3 + $0x5780] sm:$0xff]
  %v3823 = vld [vmem:[%s3 + $0x5788] sm:$0xff]
  %v3824 = vld [vmem:[%s3 + $0x5790] sm:$0xff]
  %v3825 = vld [vmem:[%s3 + $0x5798] sm:$0xff]
  %v3826 = vld [vmem:[%s3 + $0x57a0] sm:$0xff]
  %v3827 = vld [vmem:[%s3 + $0x57a8] sm:$0xff]
  %v3828 = vld [vmem:[%s3 + $0x57b0] sm:$0xff]
  %v3829 = vld [vmem:[%s3 + $0x57b8] sm:$0xff]
  %v3830 = vld [vmem:[%s3 + $0x57c0] sm:$0xff]
  %v3831 = vld [vmem:[%s3 + $0x57c8] sm:$0xff]
  %v3832 = vld [vmem:[%s3 + $0x57d0] sm:$0xff]
  %v3833 = vld [vmem:[%s3 + $0x57d8] sm:$0xff]
  %v3834 = vld [vmem:[%s3 + $0x57e0] sm:$0xff]
  %v3835 = vld [vmem:[%s3 + $0x57e8] sm:$0xff]
  %v3836 = vld [vmem:[%s3 + $0x57f0] sm:$0xff]
  %v3837 = vld [vmem:[%s3 + $0x57f8] sm:$0xff]
  %v3838 = vld [vmem:[%s3 + $0x5800] sm:$0xff]
  %v3839 = vld [vmem:[%s3 + $0x5808] sm:$0xff]
  %v3840 = vld [vmem:[%s3 + $0x5810] sm:$0xff]
  %v3841 = vld [vmem:[%s3 + $0x5818] sm:$0xff]
  %v3842 = vld [vmem:[%s3 + $0x5820] sm:$0xff]
  %v3843 = vld [vmem:[%s3 + $0x5828] sm:$0xff]
  %v3844 = vld [vmem:[%s3 + $0x5830] sm:$0xff]
  %v3845 = vld [vmem:[%s3 + $0x5838] sm:$0xff]
  %v3846 = vld [vmem:[%s3 + $0x5840] sm:$0xff]
  %v3847 = vld [vmem:[%s3 + $0x5848] sm:$0xff]
  %v3848 = vld [vmem:[%s3 + $0x5850] sm:$0xff]
  %v3849 = vld [vmem:[%s3 + $0x5858] sm:$0xff]
  %v3850 = vld [vmem:[%s3 + $0x5860] sm:$0xff]
  %v3851 = vld [vmem:[%s3 + $0x5868] sm:$0xff]
  %v3852 = vld [vmem:[%s3 + $0x5870] sm:$0xff]
  %v3853 = vld [vmem:[%s3 + $0x5878] sm:$0xff]
  %v3854 = vld [vmem:[%s3 + $0x5880] sm:$0xff]
  %v3855 = vld [vmem:[%s3 + $0x5888] sm:$0xff]
  %v3856 = vld [vmem:[%s3 + $0x5890] sm:$0xff]
  %v3857 = vld [vmem:[%s3 + $0x5898] sm:$0xff]
  %v3858 = vld [vmem:[%s3 + $0x58a0] sm:$0xff]
  %v3859 = vld [vmem:[%s3 + $0x58a8] sm:$0xff]
  %v3860 = vld [vmem:[%s3 + $0x58b0] sm:$0xff]
  %v3861 = vld [vmem:[%s3 + $0x58b8] sm:$0xff]
  %v3862 = vld [vmem:[%s3 + $0x58c0] sm:$0xff]
  %v3863 = vld [vmem:[%s3 + $0x58c8] sm:$0xff]
  %v3864 = vld [vmem:[%s3 + $0x58d0] sm:$0xff]
  %v3865 = vld [vmem:[%s3 + $0x58d8] sm:$0xff]
  %v3866 = vld [vmem:[%s3 + $0x58e0] sm:$0xff]
  %v3867 = vld [vmem:[%s3 + $0x58e8] sm:$0xff]
  %v3868 = vld [vmem:[%s3 + $0x58f0] sm:$0xff]
  %v3869 = vld [vmem:[%s3 + $0x58f8] sm:$0xff]
  %v3870 = vld [vmem:[%s3 + $0x5900] sm:$0xff]
  %v3871 = vld [vmem:[%s3 + $0x5908] sm:$0xff]
  %v3872 = vld [vmem:[%s3 + $0x5910] sm:$0xff]
  %v3873 = vld [vmem:[%s3 + $0x5918] sm:$0xff]
  %v3874 = vld [vmem:[%s3 + $0x5920] sm:$0xff]
  %v3875 = vld [vmem:[%s3 + $0x5928] sm:$0xff]
  %v3876 = vld [vmem:[%s3 + $0x5930] sm:$0xff]
  %v3877 = vld [vmem:[%s3 + $0x5938] sm:$0xff]
  %v3878 = vld [vmem:[%s3 + $0x5940] sm:$0xff]
  %v3879 = vld [vmem:[%s3 + $0x5948] sm:$0xff]
  %v3880 = vld [vmem:[%s3 + $0x5950] sm:$0xff]
  %v3881 = vld [vmem:[%s3 + $0x5958] sm:$0xff]
  %v3882 = vld [vmem:[%s3 + $0x5960] sm:$0xff]
  %v3883 = vld [vmem:[%s3 + $0x5968] sm:$0xff]
  %v3884 = vld [vmem:[%s3 + $0x5970] sm:$0xff]
  %v3885 = vld [vmem:[%s3 + $0x5978] sm:$0xff]
  %v3886 = vld [vmem:[%s3 + $0x5980] sm:$0xff]
  %v3887 = vld [vmem:[%s3 + $0x5988] sm:$0xff]
  %v3888 = vld [vmem:[%s3 + $0x5990] sm:$0xff]
  %v3889 = vld [vmem:[%s3 + $0x5998] sm:$0xff]
  %v3890 = vld [vmem:[%s3 + $0x59a0] sm:$0xff]
  %v3891 = vld [vmem:[%s3 + $0x59a8] sm:$0xff]
  %v3892 = vld [vmem:[%s3 + $0x59b0] sm:$0xff]
  %v3893 = vld [vmem:[%s3 + $0x59b8] sm:$0xff]
  %v3894 = vld [vmem:[%s3 + $0x59c0] sm:$0xff]
  %v3895 = vld [vmem:[%s3 + $0x59c8] sm:$0xff]
  %v3896 = vld [vmem:[%s3 + $0x59d0] sm:$0xff]
  %v3897 = vld [vmem:[%s3 + $0x59d8] sm:$0xff]
  %v3898 = vld [vmem:[%s3 + $0x59e0] sm:$0xff]
  %v3899 = vld [vmem:[%s3 + $0x59e8] sm:$0xff]
  %v3900 = vld [vmem:[%s3 + $0x59f0] sm:$0xff]
  %v3901 = vld [vmem:[%s3 + $0x59f8] sm:$0xff]
  %v3902 = vld [vmem:[%s3 + $0x5a00] sm:$0xff]
  %v3903 = vld [vmem:[%s3 + $0x5a08] sm:$0xff]
  %v3904 = vld [vmem:[%s3 + $0x5a10] sm:$0xff]
  %v3905 = vld [vmem:[%s3 + $0x5a18] sm:$0xff]
  %v3906 = vld [vmem:[%s3 + $0x5a20] sm:$0xff]
  %v3907 = vld [vmem:[%s3 + $0x5a28] sm:$0xff]
  %v3908 = vld [vmem:[%s3 + $0x5a30] sm:$0xff]
  %v3909 = vld [vmem:[%s3 + $0x5a38] sm:$0xff]
  %v3910 = vld [vmem:[%s3 + $0x5a40] sm:$0xff]
  %v3911 = vld [vmem:[%s3 + $0x5a48] sm:$0xff]
  %v3912 = vld [vmem:[%s3 + $0x5a50] sm:$0xff]
  %v3913 = vld [vmem:[%s3 + $0x5a58] sm:$0xff]
  %v3914 = vld [vmem:[%s3 + $0x5a60] sm:$0xff]
  %v3915 = vld [vmem:[%s3 + $0x5a68] sm:$0xff]
  %v3916 = vld [vmem:[%s3 + $0x5a70] sm:$0xff]
  %v3917 = vld [vmem:[%s3 + $0x5a78] sm:$0xff]
  %v3918 = vld [vmem:[%s3 + $0x5a80] sm:$0xff]
  %v3919 = vld [vmem:[%s3 + $0x5a88] sm:$0xff]
  %v3920 = vld [vmem:[%s3 + $0x5a90] sm:$0xff]
  %v3921 = vld [vmem:[%s3 + $0x5a98] sm:$0xff]
  %v3922 = vld [vmem:[%s3 + $0x5aa0] sm:$0xff]
  %v3923 = vld [vmem:[%s3 + $0x5aa8] sm:$0xff]
  %v3924 = vld [vmem:[%s3 + $0x5ab0] sm:$0xff]
  %v3925 = vld [vmem:[%s3 + $0x5ab8] sm:$0xff]
  %v3926 = vld [vmem:[%s3 + $0x5ac0] sm:$0xff]
  %v3927 = vld [vmem:[%s3 + $0x5ac8] sm:$0xff]
  %v3928 = vld [vmem:[%s3 + $0x5ad0] sm:$0xff]
  %v3929 = vld [vmem:[%s3 + $0x5ad8] sm:$0xff]
  %v3930 = vld [vmem:[%s3 + $0x5ae0] sm:$0xff]
  %v3931 = vld [vmem:[%s3 + $0x5ae8] sm:$0xff]
  %v3932 = vld [vmem:[%s3 + $0x5af0] sm:$0xff]
  %v3933 = vld [vmem:[%s3 + $0x5af8] sm:$0xff]
  %v3934 = vld [vmem:[%s3 + $0x5b00] sm:$0xff]
  %v3935 = vld [vmem:[%s3 + $0x5b08] sm:$0xff]
  %v3936 = vld [vmem:[%s3 + $0x5b10] sm:$0xff]
  %v3937 = vld [vmem:[%s3 + $0x5b18] sm:$0xff]
  %v3938 = vld [vmem:[%s3 + $0x5b20] sm:$0xff]
  %v3939 = vld [vmem:[%s3 + $0x5b28] sm:$0xff]
  %v3940 = vld [vmem:[%s3 + $0x5b30] sm:$0xff]
  %v3941 = vld [vmem:[%s3 + $0x5b38] sm:$0xff]
  %v3942 = vld [vmem:[%s3 + $0x5b40] sm:$0xff]
  %v3943 = vld [vmem:[%s3 + $0x5b48] sm:$0xff]
  %v3944 = vld [vmem:[%s3 + $0x5b50] sm:$0xff]
  %v3945 = vld [vmem:[%s3 + $0x5b58] sm:$0xff]
  %v3946 = vld [vmem:[%s3 + $0x5b60] sm:$0xff]
  %v3947 = vld [vmem:[%s3 + $0x5b68] sm:$0xff]
  %v3948 = vld [vmem:[%s3 + $0x5b70] sm:$0xff]
  %v3949 = vld [vmem:[%s3 + $0x5b78] sm:$0xff]
  %v3950 = vld [vmem:[%s3 + $0x5b80] sm:$0xff]
  %v3951 = vld [vmem:[%s3 + $0x5b88] sm:$0xff]
  %v3952 = vld [vmem:[%s3 + $0x5b90] sm:$0xff]
  %v3953 = vld [vmem:[%s3 + $0x5b98] sm:$0xff]
  %v3954 = vld [vmem:[%s3 + $0x5ba0] sm:$0xff]
  %v3955 = vld [vmem:[%s3 + $0x5ba8] sm:$0xff]
  %v3956 = vld [vmem:[%s3 + $0x5bb0] sm:$0xff]
  %v3957 = vld [vmem:[%s3 + $0x5bb8] sm:$0xff]
  %v3958 = vld [vmem:[%s3 + $0x5bc0] sm:$0xff]
  %v3959 = vld [vmem:[%s3 + $0x5bc8] sm:$0xff]
  %v3960 = vld [vmem:[%s3 + $0x5bd0] sm:$0xff]
  %v3961 = vld [vmem:[%s3 + $0x5bd8] sm:$0xff]
  %v3962 = vld [vmem:[%s3 + $0x5be0] sm:$0xff]
  %v3963 = vld [vmem:[%s3 + $0x5be8] sm:$0xff]
  %v3964 = vld [vmem:[%s3 + $0x5bf0] sm:$0xff]
  %v3965 = vld [vmem:[%s3 + $0x5bf8] sm:$0xff]
  %v3966 = vld [vmem:[%s3 + $0x5c00] sm:$0xff]
  %v3967 = vld [vmem:[%s3 + $0x5c08] sm:$0xff]
  %v3968 = vld [vmem:[%s3 + $0x5c10] sm:$0xff]
  %v3969 = vld [vmem:[%s3 + $0x5c18] sm:$0xff]
  %v3970 = vld [vmem:[%s3 + $0x5c20] sm:$0xff]
  %v3971 = vld [vmem:[%s3 + $0x5c28] sm:$0xff]
  %v3972 = vld [vmem:[%s3 + $0x5c30] sm:$0xff]
  %v3973 = vld [vmem:[%s3 + $0x5c38] sm:$0xff]
  %v3974 = vld [vmem:[%s3 + $0x5c40] sm:$0xff]
  %v3975 = vld [vmem:[%s3 + $0x5c48] sm:$0xff]
  %v3976 = vld [vmem:[%s3 + $0x5c50] sm:$0xff]
  %v3977 = vld [vmem:[%s3 + $0x5c58] sm:$0xff]
  %v3978 = vld [vmem:[%s3 + $0x5c60] sm:$0xff]
  %v3979 = vld [vmem:[%s3 + $0x5c68] sm:$0xff]
  %v3980 = vld [vmem:[%s3 + $0x5c70] sm:$0xff]
  %v3981 = vld [vmem:[%s3 + $0x5c78] sm:$0xff]
  %v3982 = vld [vmem:[%s3 + $0x5c80] sm:$0xff]
  %v3983 = vld [vmem:[%s3 + $0x5c88] sm:$0xff]
  %v3984 = vld [vmem:[%s3 + $0x5c90] sm:$0xff]
  %v3985 = vld [vmem:[%s3 + $0x5c98] sm:$0xff]
  %v3986 = vld [vmem:[%s3 + $0x5ca0] sm:$0xff]
  %v3987 = vld [vmem:[%s3 + $0x5ca8] sm:$0xff]
  %v3988 = vld [vmem:[%s3 + $0x5cb0] sm:$0xff]
  %v3989 = vld [vmem:[%s3 + $0x5cb8] sm:$0xff]
  %v3990 = vld [vmem:[%s3 + $0x5cc0] sm:$0xff]
  %v3991 = vld [vmem:[%s3 + $0x5cc8] sm:$0xff]
  %v3992 = vld [vmem:[%s3 + $0x5cd0] sm:$0xff]
  %v3993 = vld [vmem:[%s3 + $0x5cd8] sm:$0xff]
  %v3994 = vld [vmem:[%s3 + $0x5ce0] sm:$0xff]
  %v3995 = vld [vmem:[%s3 + $0x5ce8] sm:$0xff]
  %v3996 = vld [vmem:[%s3 + $0x5cf0] sm:$0xff]
  %v3997 = vld [vmem:[%s3 + $0x5cf8] sm:$0xff]
  %v3998 = vld [vmem:[%s3 + $0x5d00] sm:$0xff]
  %v3999 = vld [vmem:[%s3 + $0x5d08] sm:$0xff]
  %v4000 = vld [vmem:[%s3 + $0x5d10] sm:$0xff]
  %v4001 = vld [vmem:[%s3 + $0x5d18] sm:$0xff]
  %v4002 = vld [vmem:[%s3 + $0x5d20] sm:$0xff]
  %v4003 = vld [vmem:[%s3 + $0x5d28] sm:$0xff]
  %v4004 = vld [vmem:[%s3 + $0x5d30] sm:$0xff]
  %v4005 = vld [vmem:[%s3 + $0x5d38] sm:$0xff]
  %v4006 = vld [vmem:[%s3 + $0x5d40] sm:$0xff]
  %v4007 = vld [vmem:[%s3 + $0x5d48] sm:$0xff]
  %v4008 = vld [vmem:[%s3 + $0x5d50] sm:$0xff]
  %v4009 = vld [vmem:[%s3 + $0x5d58] sm:$0xff]
  %v4010 = vld [vmem:[%s3 + $0x5d60] sm:$0xff]
  %v4011 = vld [vmem:[%s3 + $0x5d68] sm:$0xff]
  %v4012 = vld [vmem:[%s3 + $0x5d70] sm:$0xff]
  %v4013 = vld [vmem:[%s3 + $0x5d78] sm:$0xff]
  %v4014 = vld [vmem:[%s3 + $0x5d80] sm:$0xff]
  %v4015 = vld [vmem:[%s3 + $0x5d88] sm:$0xff]
  %v4016 = vld [vmem:[%s3 + $0x5d90] sm:$0xff]
  %v4017 = vld [vmem:[%s3 + $0x5d98] sm:$0xff]
  %v4018 = vld [vmem:[%s3 + $0x5da0] sm:$0xff]
  %v4019 = vld [vmem:[%s3 + $0x5da8] sm:$0xff]
  %v4020 = vld [vmem:[%s3 + $0x5db0] sm:$0xff]
  %v4021 = vld [vmem:[%s3 + $0x5db8] sm:$0xff]
  %v4022 = vld [vmem:[%s3 + $0x5dc0] sm:$0xff]
  %v4023 = vld [vmem:[%s3 + $0x5dc8] sm:$0xff]
  %v4024 = vld [vmem:[%s3 + $0x5dd0] sm:$0xff]
  %v4025 = vld [vmem:[%s3 + $0x5dd8] sm:$0xff]
  %v4026 = vld [vmem:[%s3 + $0x5de0] sm:$0xff]
  %v4027 = vld [vmem:[%s3 + $0x5de8] sm:$0xff]
  %v4028 = vld [vmem:[%s3 + $0x5df0] sm:$0xff]
  %v4029 = vld [vmem:[%s3 + $0x5df8] sm:$0xff]
  %v4030 = vld [vmem:[%s3 + $0x5e00] sm:$0xff]
  %v4031 = vld [vmem:[%s3 + $0x5e08] sm:$0xff]
  %v4032 = vld [vmem:[%s3 + $0x5e10] sm:$0xff]
  %v4033 = vld [vmem:[%s3 + $0x5e18] sm:$0xff]
  %v4034 = vld [vmem:[%s3 + $0x5e20] sm:$0xff]
  %v4035 = vld [vmem:[%s3 + $0x5e28] sm:$0xff]
  %v4036 = vld [vmem:[%s3 + $0x5e30] sm:$0xff]
  %v4037 = vld [vmem:[%s3 + $0x5e38] sm:$0xff]
  %v4038 = vld [vmem:[%s3 + $0x5e40] sm:$0xff]
  %v4039 = vld [vmem:[%s3 + $0x5e48] sm:$0xff]
  %v4040 = vld [vmem:[%s3 + $0x5e50] sm:$0xff]
  %v4041 = vld [vmem:[%s3 + $0x5e58] sm:$0xff]
  %v4042 = vld [vmem:[%s3 + $0x5e60] sm:$0xff]
  %v4043 = vld [vmem:[%s3 + $0x5e68] sm:$0xff]
  %v4044 = vld [vmem:[%s3 + $0x5e70] sm:$0xff]
  %v4045 = vld [vmem:[%s3 + $0x5e78] sm:$0xff]
  %v4046 = vld [vmem:[%s3 + $0x5e80] sm:$0xff]
  %v4047 = vld [vmem:[%s3 + $0x5e88] sm:$0xff]
  %v4048 = vld [vmem:[%s3 + $0x5e90] sm:$0xff]
  %v4049 = vld [vmem:[%s3 + $0x5e98] sm:$0xff]
  %v4050 = vld [vmem:[%s3 + $0x5ea0] sm:$0xff]
  %v4051 = vld [vmem:[%s3 + $0x5ea8] sm:$0xff]
  %v4052 = vld [vmem:[%s3 + $0x5eb0] sm:$0xff]
  %v4053 = vld [vmem:[%s3 + $0x5eb8] sm:$0xff]
  %v4054 = vld [vmem:[%s3 + $0x5ec0] sm:$0xff]
  %v4055 = vld [vmem:[%s3 + $0x5ec8] sm:$0xff]
  %v4056 = vld [vmem:[%s3 + $0x5ed0] sm:$0xff]
  %v4057 = vld [vmem:[%s3 + $0x5ed8] sm:$0xff]
  %v4058 = vld [vmem:[%s3 + $0x5ee0] sm:$0xff]
  %v4059 = vld [vmem:[%s3 + $0x5ee8] sm:$0xff]
  %v4060 = vld [vmem:[%s3 + $0x5ef0] sm:$0xff]
  %v4061 = vld [vmem:[%s3 + $0x5ef8] sm:$0xff]
  %v4062 = vld [vmem:[%s3 + $0x5f00] sm:$0xff]
  %v4063 = vld [vmem:[%s3 + $0x5f08] sm:$0xff]
  %v4064 = vld [vmem:[%s3 + $0x5f10] sm:$0xff]
  %v4065 = vld [vmem:[%s3 + $0x5f18] sm:$0xff]
  %v4066 = vld [vmem:[%s3 + $0x5f20] sm:$0xff]
  %v4067 = vld [vmem:[%s3 + $0x5f28] sm:$0xff]
  %v4068 = vld [vmem:[%s3 + $0x5f30] sm:$0xff]
  %v4069 = vld [vmem:[%s3 + $0x5f38] sm:$0xff]
  %v4070 = vld [vmem:[%s3 + $0x5f40] sm:$0xff]
  %v4071 = vld [vmem:[%s3 + $0x5f48] sm:$0xff]
  %v4072 = vld [vmem:[%s3 + $0x5f50] sm:$0xff]
  %v4073 = vld [vmem:[%s3 + $0x5f58] sm:$0xff]
  %v4074 = vld [vmem:[%s3 + $0x5f60] sm:$0xff]
  %v4075 = vld [vmem:[%s3 + $0x5f68] sm:$0xff]
  %v4076 = vld [vmem:[%s3 + $0x5f70] sm:$0xff]
  %v4077 = vld [vmem:[%s3 + $0x5f78] sm:$0xff]
  %v4078 = vld [vmem:[%s3 + $0x5f80] sm:$0xff]
  %v4079 = vld [vmem:[%s3 + $0x5f88] sm:$0xff]
  %v4080 = vld [vmem:[%s3 + $0x5f90] sm:$0xff]
  %v4081 = vld [vmem:[%s3 + $0x5f98] sm:$0xff]
  %v4082 = vld [vmem:[%s3 + $0x5fa0] sm:$0xff]
  %v4083 = vld [vmem:[%s3 + $0x5fa8] sm:$0xff]
  %v4084 = vld [vmem:[%s3 + $0x5fb0] sm:$0xff]
  %v4085 = vld [vmem:[%s3 + $0x5fb8] sm:$0xff]
  %v4086 = vld [vmem:[%s3 + $0x5fc0] sm:$0xff]
  %v4087 = vld [vmem:[%s3 + $0x5fc8] sm:$0xff]
  %v4088 = vld [vmem:[%s3 + $0x5fd0] sm:$0xff]
  %v4089 = vld [vmem:[%s3 + $0x5fd8] sm:$0xff]
  %v4090 = vld [vmem:[%s3 + $0x5fe0] sm:$0xff]
  %v4091 = vld [vmem:[%s3 + $0x5fe8] sm:$0xff]
  %v4092 = vld [vmem:[%s3 + $0x5ff0] sm:$0xff]
  %v4093 = vld [vmem:[%s3 + $0x5ff8] sm:$0xff]
  %v4094 = vld [vmem:[%s3 + $0x6000] sm:$0xff]
  %v4095 = vld [vmem:[%s3 + $0x6008] sm:$0xff]
  %v4096 = vld [vmem:[%s3 + $0x6010] sm:$0xff]
  %v4097 = vld [vmem:[%s3 + $0x6018] sm:$0xff]
  %v4098 = vld [vmem:[%s3 + $0x6020] sm:$0xff]
  %v4099 = vld [vmem:[%s3 + $0x6028] sm:$0xff]
  %v4100 = vld [vmem:[%s3 + $0x6030] sm:$0xff]
  %v4101 = vld [vmem:[%s3 + $0x6038] sm:$0xff]
  %v4102 = vld [vmem:[%s3 + $0x6040] sm:$0xff]
  %v4103 = vld [vmem:[%s3 + $0x6048] sm:$0xff]
  %v4104 = vld [vmem:[%s3 + $0x6050] sm:$0xff]
  %v4105 = vld [vmem:[%s3 + $0x6058] sm:$0xff]
  %v4106 = vld [vmem:[%s3 + $0x6060] sm:$0xff]
  %v4107 = vld [vmem:[%s3 + $0x6068] sm:$0xff]
  %v4108 = vld [vmem:[%s3 + $0x6070] sm:$0xff]
  %v4109 = vld [vmem:[%s3 + $0x6078] sm:$0xff]
  %v4110 = vld [vmem:[%s3 + $0x6080] sm:$0xff]
  %v4111 = vld [vmem:[%s3 + $0x6088] sm:$0xff]
  %v4112 = vld [vmem:[%s3 + $0x6090] sm:$0xff]
  %v4113 = vld [vmem:[%s3 + $0x6098] sm:$0xff]
  %v4114 = vld [vmem:[%s3 + $0x60a0] sm:$0xff]
  %v4115 = vld [vmem:[%s3 + $0x60a8] sm:$0xff]
  %v4116 = vld [vmem:[%s3 + $0x60b0] sm:$0xff]
  %v4117 = vld [vmem:[%s3 + $0x60b8] sm:$0xff]
  %v4118 = vld [vmem:[%s3 + $0x60c0] sm:$0xff]
  %v4119 = vld [vmem:[%s3 + $0x60c8] sm:$0xff]
  %v4120 = vld [vmem:[%s3 + $0x60d0] sm:$0xff]
  %v4121 = vld [vmem:[%s3 + $0x60d8] sm:$0xff]
  %v4122 = vld [vmem:[%s3 + $0x60e0] sm:$0xff]
  %v4123 = vld [vmem:[%s3 + $0x60e8] sm:$0xff]
  %v4124 = vld [vmem:[%s3 + $0x60f0] sm:$0xff]
  %v4125 = vld [vmem:[%s3 + $0x60f8] sm:$0xff]
  %v4126 = vld [vmem:[%s3 + $0x6100] sm:$0xff]
  %v4127 = vld [vmem:[%s3 + $0x6108] sm:$0xff]
  %v4128 = vld [vmem:[%s3 + $0x6110] sm:$0xff]
  %v4129 = vld [vmem:[%s3 + $0x6118] sm:$0xff]
  %v4130 = vld [vmem:[%s3 + $0x6120] sm:$0xff]
  %v4131 = vld [vmem:[%s3 + $0x6128] sm:$0xff]
  %v4132 = vld [vmem:[%s3 + $0x6130] sm:$0xff]
  %v4133 = vld [vmem:[%s3 + $0x6138] sm:$0xff]
  %v4134 = vld [vmem:[%s3 + $0x6140] sm:$0xff]
  %v4135 = vld [vmem:[%s3 + $0x6148] sm:$0xff]
  %v4136 = vld [vmem:[%s3 + $0x6150] sm:$0xff]
  %v4137 = vld [vmem:[%s3 + $0x6158] sm:$0xff]
  %v4138 = vld [vmem:[%s3 + $0x6160] sm:$0xff]
  %v4139 = vld [vmem:[%s3 + $0x6168] sm:$0xff]
  %v4140 = vld [vmem:[%s3 + $0x6170] sm:$0xff]
  %v4141 = vld [vmem:[%s3 + $0x6178] sm:$0xff]
  %v4142 = vld [vmem:[%s3 + $0x6180] sm:$0xff]
  %v4143 = vld [vmem:[%s3 + $0x6188] sm:$0xff]
  %v4144 = vld [vmem:[%s3 + $0x6190] sm:$0xff]
  %v4145 = vld [vmem:[%s3 + $0x6198] sm:$0xff]
  %v4146 = vld [vmem:[%s3 + $0x61a0] sm:$0xff]
  %v4147 = vld [vmem:[%s3 + $0x61a8] sm:$0xff]
  %v4148 = vld [vmem:[%s3 + $0x61b0] sm:$0xff]
  %v4149 = vld [vmem:[%s3 + $0x61b8] sm:$0xff]
  %v4150 = vld [vmem:[%s3 + $0x61c0] sm:$0xff]
  %v4151 = vld [vmem:[%s3 + $0x61c8] sm:$0xff]
  %v4152 = vld [vmem:[%s3 + $0x61d0] sm:$0xff]
  %v4153 = vld [vmem:[%s3 + $0x61d8] sm:$0xff]
  %v4154 = vld [vmem:[%s3 + $0x61e0] sm:$0xff]
  %v4155 = vld [vmem:[%s3 + $0x61e8] sm:$0xff]
  %v4156 = vld [vmem:[%s3 + $0x61f0] sm:$0xff]
  %v4157 = vld [vmem:[%s3 + $0x61f8] sm:$0xff]
  %v4158 = vld [vmem:[%s3 + $0x6200] sm:$0xff]
  %v4159 = vld [vmem:[%s3 + $0x6208] sm:$0xff]
  %v4160 = vld [vmem:[%s3 + $0x6210] sm:$0xff]
  %v4161 = vld [vmem:[%s3 + $0x6218] sm:$0xff]
  %v4162 = vld [vmem:[%s3 + $0x6220] sm:$0xff]
  %v4163 = vld [vmem:[%s3 + $0x6228] sm:$0xff]
  %v4164 = vld [vmem:[%s3 + $0x6230] sm:$0xff]
  %v4165 = vld [vmem:[%s3 + $0x6238] sm:$0xff]
  %v4166 = vld [vmem:[%s3 + $0x6240] sm:$0xff]
  %v4167 = vld [vmem:[%s3 + $0x6248] sm:$0xff]
  %v4168 = vld [vmem:[%s3 + $0x6250] sm:$0xff]
  %v4169 = vld [vmem:[%s3 + $0x6258] sm:$0xff]
  %v4170 = vld [vmem:[%s3 + $0x6260] sm:$0xff]
  %v4171 = vld [vmem:[%s3 + $0x6268] sm:$0xff]
  %v4172 = vld [vmem:[%s3 + $0x6270] sm:$0xff]
  %v4173 = vld [vmem:[%s3 + $0x6278] sm:$0xff]
  %v4174 = vld [vmem:[%s3 + $0x6280] sm:$0xff]
  %v4175 = vld [vmem:[%s3 + $0x6288] sm:$0xff]
  %v4176 = vld [vmem:[%s3 + $0x6290] sm:$0xff]
  %v4177 = vld [vmem:[%s3 + $0x6298] sm:$0xff]
  %v4178 = vld [vmem:[%s3 + $0x62a0] sm:$0xff]
  %v4179 = vld [vmem:[%s3 + $0x62a8] sm:$0xff]
  %v4180 = vld [vmem:[%s3 + $0x62b0] sm:$0xff]
  %v4181 = vld [vmem:[%s3 + $0x62b8] sm:$0xff]
  %v4182 = vld [vmem:[%s3 + $0x62c0] sm:$0xff]
  %v4183 = vld [vmem:[%s3 + $0x62c8] sm:$0xff]
  %v4184 = vld [vmem:[%s3 + $0x62d0] sm:$0xff]
  %v4185 = vld [vmem:[%s3 + $0x62d8] sm:$0xff]
  %v4186 = vld [vmem:[%s3 + $0x62e0] sm:$0xff]
  %v4187 = vld [vmem:[%s3 + $0x62e8] sm:$0xff]
  %v4188 = vld [vmem:[%s3 + $0x62f0] sm:$0xff]
  %v4189 = vld [vmem:[%s3 + $0x62f8] sm:$0xff]
  %v4190 = vld [vmem:[%s3 + $0x6300] sm:$0xff]
  %v4191 = vld [vmem:[%s3 + $0x6308] sm:$0xff]
  %v4192 = vld [vmem:[%s3 + $0x6310] sm:$0xff]
  %v4193 = vld [vmem:[%s3 + $0x6318] sm:$0xff]
  %v4194 = vld [vmem:[%s3 + $0x6320] sm:$0xff]
  %v4195 = vld [vmem:[%s3 + $0x6328] sm:$0xff]
  %v4196 = vld [vmem:[%s3 + $0x6330] sm:$0xff]
  %v4197 = vld [vmem:[%s3 + $0x6338] sm:$0xff]
  %v4198 = vld [vmem:[%s3 + $0x6340] sm:$0xff]
  %v4199 = vld [vmem:[%s3 + $0x6348] sm:$0xff]
  %v4200 = vld [vmem:[%s3 + $0x6350] sm:$0xff]
  %v4201 = vld [vmem:[%s3 + $0x6358] sm:$0xff]
  %v4202 = vld [vmem:[%s3 + $0x6360] sm:$0xff]
  %v4203 = vld [vmem:[%s3 + $0x6368] sm:$0xff]
  %v4204 = vld [vmem:[%s3 + $0x6370] sm:$0xff]
  %v4205 = vld [vmem:[%s3 + $0x6378] sm:$0xff]
  %v4206 = vld [vmem:[%s3 + $0x6380] sm:$0xff]
  %v4207 = vld [vmem:[%s3 + $0x6388] sm:$0xff]
  %v4208 = vld [vmem:[%s3 + $0x6390] sm:$0xff]
  %v4209 = vld [vmem:[%s3 + $0x6398] sm:$0xff]
  %v4210 = vld [vmem:[%s3 + $0x63a0] sm:$0xff]
  %v4211 = vld [vmem:[%s3 + $0x63a8] sm:$0xff]
  %v4212 = vld [vmem:[%s3 + $0x63b0] sm:$0xff]
  %v4213 = vld [vmem:[%s3 + $0x63b8] sm:$0xff]
  %v4214 = vld [vmem:[%s3 + $0x63c0] sm:$0xff]
  %v4215 = vld [vmem:[%s3 + $0x63c8] sm:$0xff]
  %v4216 = vld [vmem:[%s3 + $0x63d0] sm:$0xff]
  %v4217 = vld [vmem:[%s3 + $0x63d8] sm:$0xff]
  %v4218 = vld [vmem:[%s3 + $0x63e0] sm:$0xff]
  %v4219 = vld [vmem:[%s3 + $0x63e8] sm:$0xff]
  %v4220 = vld [vmem:[%s3 + $0x63f0] sm:$0xff]
  %v4221 = vld [vmem:[%s3 + $0x63f8] sm:$0xff]
  %4222 = vmatpush.msra.mxu0 %v1772
  %4223 = vmatpush.msra.mxu0 %v1722
  %4224 = vmatpush.msra.mxu0 %v1672
  %4225 = vmatpush.msra.mxu0 %v1622
  %4226 = vmatpush.msra.mxu0 %v1572
  %4227 = vmatpush.msra.mxu0 %v1522
  %4228 = vmatpush.msra.mxu0 %v1472
  %4229 = vmatpush.msra.mxu0 %v1422
  %4230 = vmatpush.msra.mxu0 %v1372
  %4231 = vmatpush.msra.mxu0 %v1322
  %4232 = vmatpush.msra.mxu0 %v1272
  %4233 = vmatpush.msra.mxu0 %v1222
  %4234 = vmatpush.msra.mxu0 %v1172
  %4235 = vmatpush.msra.mxu0 %v1122
  %4236 = vmatpush.msra.mxu0 %v1072
  %4237 = vmatpush.msra.mxu0 %v1022
  %4238 = vmatmul.f32.gmra.mxu0 %v1018
  %v4239 = vpop.f32.mrf.mxu0
  %v4240 = vadd.f32 0.0, %v4239
  %4241 = vdwg.mxu0
  %4242 = vmatpush.msra.mxu0 %v2572
  %4243 = vmatpush.msra.mxu0 %v2522
  %4244 = vmatpush.msra.mxu0 %v2472
  %4245 = vmatpush.msra.mxu0 %v2422
  %4246 = vmatpush.msra.mxu0 %v2372
  %4247 = vmatpush.msra.mxu0 %v2322
  %4248 = vmatpush.msra.mxu0 %v2272
  %4249 = vmatpush.msra.mxu0 %v2222
  %4250 = vmatpush.msra.mxu0 %v2172
  %4251 = vmatpush.msra.mxu0 %v2122
  %4252 = vmatpush.msra.mxu0 %v2072
  %4253 = vmatpush.msra.mxu0 %v2022
  %4254 = vmatpush.msra.mxu0 %v1972
  %4255 = vmatpush.msra.mxu0 %v1922
  %4256 = vmatpush.msra.mxu0 %v1872
  %4257 = vmatpush.msra.mxu0 %v1822
  %4258 = vmatmul.f32.gmra.mxu0 %v1019
  %v4259 = vpop.f32.mrf.mxu0
  %v4260 = vadd.f32 %v4240, %v4259
  %4261 = vdwg.mxu0
  %4262 = vmatpush.msra.mxu0 %v3372
  %4263 = vmatpush.msra.mxu0 %v3322
  %4264 = vmatpush.msra.mxu0 %v3272
  %4265 = vmatpush.msra.mxu0 %v3222
  %4266 = vmatpush.msra.mxu0 %v3172
  %4267 = vmatpush.msra.mxu0 %v3122
  %4268 = vmatpush.msra.mxu0 %v3072
  %4269 = vmatpush.msra.mxu0 %v3022
  %4270 = vmatpush.msra.mxu0 %v2972
  %4271 = vmatpush.msra.mxu0 %v2922
  %4272 = vmatpush.msra.mxu0 %v2872
  %4273 = vmatpush.msra.mxu0 %v2822
  %4274 = vmatpush.msra.mxu0 %v2772
  %4275 = vmatpush.msra.mxu0 %v2722
  %4276 = vmatpush.msra.mxu0 %v2672
  %4277 = vmatpush.msra.mxu0 %v2622
  %4278 = vmatmul.f32.gmra.mxu0 %v1020
  %v4279 = vpop.f32.mrf.mxu0
  %v4280 = vadd.f32 %v4260, %v4279
  %4281 = vdwg.mxu0
  %4282 = vmatpush.msra.mxu0 %v4172
  %4283 = vmatpush.msra.mxu0 %v4122
  %4284 = vmatpush.msra.mxu0 %v4072
  %4285 = vmatpush.msra.mxu0 %v4022
  %4286 = vmatpush.msra.mxu0 %v3972
  %4287 = vmatpush.msra.mxu0 %v3922
  %4288 = vmatpush.msra.mxu0 %v3872
  %4289 = vmatpush.msra.mxu0 %v3822
  %4290 = vmatpush.msra.mxu0 %v3772
  %4291 = vmatpush.msra.mxu0 %v3722
  %4292 = vmatpush.msra.mxu0 %v3672
  %4293 = vmatpush.msra.mxu0 %v3622
  %4294 = vmatpush.msra.mxu0 %v3572
  %4295 = vmatpush.msra.mxu0 %v3522
  %4296 = vmatpush.msra.mxu0 %v3472
  %4297 = vmatpush.msra.mxu0 %v3422
  %4298 = vmatmul.f32.gmra.mxu0 %v1021
  %v4299 = vpop.f32.mrf.mxu0
  %v4300 = vadd.f32 %v4280, %v4299
  %4301 = vdwg.mxu0
  %4302 = vmatpush.msra.mxu0 %v1773
  %4303 = vmatpush.msra.mxu0 %v1723
  %4304 = vmatpush.msra.mxu0 %v1673
  %4305 = vmatpush.msra.mxu0 %v1623
  %4306 = vmatpush.msra.mxu0 %v1573
  %4307 = vmatpush.msra.mxu0 %v1523
  %4308 = vmatpush.msra.mxu0 %v1473
  %4309 = vmatpush.msra.mxu0 %v1423
  %4310 = vmatpush.msra.mxu0 %v1373
  %4311 = vmatpush.msra.mxu0 %v1323
  %4312 = vmatpush.msra.mxu0 %v1273
  %4313 = vmatpush.msra.mxu0 %v1223
  %4314 = vmatpush.msra.mxu0 %v1173
  %4315 = vmatpush.msra.mxu0 %v1123
  %4316 = vmatpush.msra.mxu0 %v1073
  %4317 = vmatpush.msra.mxu0 %v1023
  %4318 = vmatmul.f32.gmra.mxu0 %v1018
  %v4319 = vpop.f32.mrf.mxu0
  %v4320 = vadd.f32 0.0, %v4319
  %4321 = vdwg.mxu0
  %4322 = vmatpush.msra.mxu0 %v2573
  %4323 = vmatpush.msra.mxu0 %v2523
  %4324 = vmatpush.msra.mxu0 %v2473
  %4325 = vmatpush.msra.mxu0 %v2423
  %4326 = vmatpush.msra.mxu0 %v2373
  %4327 = vmatpush.msra.mxu0 %v2323
  %4328 = vmatpush.msra.mxu0 %v2273
  %4329 = vmatpush.msra.mxu0 %v2223
  %4330 = vmatpush.msra.mxu0 %v2173
  %4331 = vmatpush.msra.mxu0 %v2123
  %4332 = vmatpush.msra.mxu0 %v2073
  %4333 = vmatpush.msra.mxu0 %v2023
  %4334 = vmatpush.msra.mxu0 %v1973
  %4335 = vmatpush.msra.mxu0 %v1923
  %4336 = vmatpush.msra.mxu0 %v1873
  %4337 = vmatpush.msra.mxu0 %v1823
  %4338 = vmatmul.f32.gmra.mxu0 %v1019
  %v4339 = vpop.f32.mrf.mxu0
  %v4340 = vadd.f32 %v4320, %v4339
  %4341 = vdwg.mxu0
  %4342 = vmatpush.msra.mxu0 %v3373
  %4343 = vmatpush.msra.mxu0 %v3323
  %4344 = vmatpush.msra.mxu0 %v3273
  %4345 = vmatpush.msra.mxu0 %v3223
  %4346 = vmatpush.msra.mxu0 %v3173
  %4347 = vmatpush.msra.mxu0 %v3123
  %4348 = vmatpush.msra.mxu0 %v3073
  %4349 = vmatpush.msra.mxu0 %v3023
  %4350 = vmatpush.msra.mxu0 %v2973
  %4351 = vmatpush.msra.mxu0 %v2923
  %4352 = vmatpush.msra.mxu0 %v2873
  %4353 = vmatpush.msra.mxu0 %v2823
  %4354 = vmatpush.msra.mxu0 %v2773
  %4355 = vmatpush.msra.mxu0 %v2723
  %4356 = vmatpush.msra.mxu0 %v2673
  %4357 = vmatpush.msra.mxu0 %v2623
  %4358 = vmatmul.f32.gmra.mxu0 %v1020
  %v4359 = vpop.f32.mrf.mxu0
  %v4360 = vadd.f32 %v4340, %v4359
  %4361 = vdwg.mxu0
  %4362 = vmatpush.msra.mxu0 %v4173
  %4363 = vmatpush.msra.mxu0 %v4123
  %4364 = vmatpush.msra.mxu0 %v4073
  %4365 = vmatpush.msra.mxu0 %v4023
  %4366 = vmatpush.msra.mxu0 %v3973
  %4367 = vmatpush.msra.mxu0 %v3923
  %4368 = vmatpush.msra.mxu0 %v3873
  %4369 = vmatpush.msra.mxu0 %v3823
  %4370 = vmatpush.msra.mxu0 %v3773
  %4371 = vmatpush.msra.mxu0 %v3723
  %4372 = vmatpush.msra.mxu0 %v3673
  %4373 = vmatpush.msra.mxu0 %v3623
  %4374 = vmatpush.msra.mxu0 %v3573
  %4375 = vmatpush.msra.mxu0 %v3523
  %4376 = vmatpush.msra.mxu0 %v3473
  %4377 = vmatpush.msra.mxu0 %v3423
  %4378 = vmatmul.f32.gmra.mxu0 %v1021
  %v4379 = vpop.f32.mrf.mxu0
  %v4380 = vadd.f32 %v4360, %v4379
  %4381 = vdwg.mxu0
  %4382 = vmatpush.msra.mxu0 %v1774
  %4383 = vmatpush.msra.mxu0 %v1724
  %4384 = vmatpush.msra.mxu0 %v1674
  %4385 = vmatpush.msra.mxu0 %v1624
  %4386 = vmatpush.msra.mxu0 %v1574
  %4387 = vmatpush.msra.mxu0 %v1524
  %4388 = vmatpush.msra.mxu0 %v1474
  %4389 = vmatpush.msra.mxu0 %v1424
  %4390 = vmatpush.msra.mxu0 %v1374
  %4391 = vmatpush.msra.mxu0 %v1324
  %4392 = vmatpush.msra.mxu0 %v1274
  %4393 = vmatpush.msra.mxu0 %v1224
  %4394 = vmatpush.msra.mxu0 %v1174
  %4395 = vmatpush.msra.mxu0 %v1124
  %4396 = vmatpush.msra.mxu0 %v1074
  %4397 = vmatpush.msra.mxu0 %v1024
  %4398 = vmatmul.f32.gmra.mxu0 %v1018
  %v4399 = vpop.f32.mrf.mxu0
  %v4400 = vadd.f32 0.0, %v4399
  %4401 = vdwg.mxu0
  %4402 = vmatpush.msra.mxu0 %v2574
  %4403 = vmatpush.msra.mxu0 %v2524
  %4404 = vmatpush.msra.mxu0 %v2474
  %4405 = vmatpush.msra.mxu0 %v2424
  %4406 = vmatpush.msra.mxu0 %v2374
  %4407 = vmatpush.msra.mxu0 %v2324
  %4408 = vmatpush.msra.mxu0 %v2274
  %4409 = vmatpush.msra.mxu0 %v2224
  %4410 = vmatpush.msra.mxu0 %v2174
  %4411 = vmatpush.msra.mxu0 %v2124
  %4412 = vmatpush.msra.mxu0 %v2074
  %4413 = vmatpush.msra.mxu0 %v2024
  %4414 = vmatpush.msra.mxu0 %v1974
  %4415 = vmatpush.msra.mxu0 %v1924
  %4416 = vmatpush.msra.mxu0 %v1874
  %4417 = vmatpush.msra.mxu0 %v1824
  %4418 = vmatmul.f32.gmra.mxu0 %v1019
  %v4419 = vpop.f32.mrf.mxu0
  %v4420 = vadd.f32 %v4400, %v4419
  %4421 = vdwg.mxu0
  %4422 = vmatpush.msra.mxu0 %v3374
  %4423 = vmatpush.msra.mxu0 %v3324
  %4424 = vmatpush.msra.mxu0 %v3274
  %4425 = vmatpush.msra.mxu0 %v3224
  %4426 = vmatpush.msra.mxu0 %v3174
  %4427 = vmatpush.msra.mxu0 %v3124
  %4428 = vmatpush.msra.mxu0 %v3074
  %4429 = vmatpush.msra.mxu0 %v3024
  %4430 = vmatpush.msra.mxu0 %v2974
  %4431 = vmatpush.msra.mxu0 %v2924
  %4432 = vmatpush.msra.mxu0 %v2874
  %4433 = vmatpush.msra.mxu0 %v2824
  %4434 = vmatpush.msra.mxu0 %v2774
  %4435 = vmatpush.msra.mxu0 %v2724
  %4436 = vmatpush.msra.mxu0 %v2674
  %4437 = vmatpush.msra.mxu0 %v2624
  %4438 = vmatmul.f32.gmra.mxu0 %v1020
  %v4439 = vpop.f32.mrf.mxu0
  %v4440 = vadd.f32 %v4420, %v4439
  %4441 = vdwg.mxu0
  %4442 = vmatpush.msra.mxu0 %v4174
  %4443 = vmatpush.msra.mxu0 %v4124
  %4444 = vmatpush.msra.mxu0 %v4074
  %4445 = vmatpush.msra.mxu0 %v4024
  %4446 = vmatpush.msra.mxu0 %v3974
  %4447 = vmatpush.msra.mxu0 %v3924
  %4448 = vmatpush.msra.mxu0 %v3874
  %4449 = vmatpush.msra.mxu0 %v3824
  %4450 = vmatpush.msra.mxu0 %v3774
  %4451 = vmatpush.msra.mxu0 %v3724
  %4452 = vmatpush.msra.mxu0 %v3674
  %4453 = vmatpush.msra.mxu0 %v3624
  %4454 = vmatpush.msra.mxu0 %v3574
  %4455 = vmatpush.msra.mxu0 %v3524
  %4456 = vmatpush.msra.mxu0 %v3474
  %4457 = vmatpush.msra.mxu0 %v3424
  %4458 = vmatmul.f32.gmra.mxu0 %v1021
  %v4459 = vpop.f32.mrf.mxu0
  %v4460 = vadd.f32 %v4440, %v4459
  %4461 = vdwg.mxu0
  %4462 = vmatpush.msra.mxu0 %v1775
  %4463 = vmatpush.msra.mxu0 %v1725
  %4464 = vmatpush.msra.mxu0 %v1675
  %4465 = vmatpush.msra.mxu0 %v1625
  %4466 = vmatpush.msra.mxu0 %v1575
  %4467 = vmatpush.msra.mxu0 %v1525
  %4468 = vmatpush.msra.mxu0 %v1475
  %4469 = vmatpush.msra.mxu0 %v1425
  %4470 = vmatpush.msra.mxu0 %v1375
  %4471 = vmatpush.msra.mxu0 %v1325
  %4472 = vmatpush.msra.mxu0 %v1275
  %4473 = vmatpush.msra.mxu0 %v1225
  %4474 = vmatpush.msra.mxu0 %v1175
  %4475 = vmatpush.msra.mxu0 %v1125
  %4476 = vmatpush.msra.mxu0 %v1075
  %4477 = vmatpush.msra.mxu0 %v1025
  %4478 = vmatmul.f32.gmra.mxu0 %v1018
  %v4479 = vpop.f32.mrf.mxu0
  %v4480 = vadd.f32 0.0, %v4479
  %4481 = vdwg.mxu0
  %4482 = vmatpush.msra.mxu0 %v2575
  %4483 = vmatpush.msra.mxu0 %v2525
  %4484 = vmatpush.msra.mxu0 %v2475
  %4485 = vmatpush.msra.mxu0 %v2425
  %4486 = vmatpush.msra.mxu0 %v2375
  %4487 = vmatpush.msra.mxu0 %v2325
  %4488 = vmatpush.msra.mxu0 %v2275
  %4489 = vmatpush.msra.mxu0 %v2225
  %4490 = vmatpush.msra.mxu0 %v2175
  %4491 = vmatpush.msra.mxu0 %v2125
  %4492 = vmatpush.msra.mxu0 %v2075
  %4493 = vmatpush.msra.mxu0 %v2025
  %4494 = vmatpush.msra.mxu0 %v1975
  %4495 = vmatpush.msra.mxu0 %v1925
  %4496 = vmatpush.msra.mxu0 %v1875
  %4497 = vmatpush.msra.mxu0 %v1825
  %4498 = vmatmul.f32.gmra.mxu0 %v1019
  %v4499 = vpop.f32.mrf.mxu0
  %v4500 = vadd.f32 %v4480, %v4499
  %4501 = vdwg.mxu0
  %4502 = vmatpush.msra.mxu0 %v3375
  %4503 = vmatpush.msra.mxu0 %v3325
  %4504 = vmatpush.msra.mxu0 %v3275
  %4505 = vmatpush.msra.mxu0 %v3225
  %4506 = vmatpush.msra.mxu0 %v3175
  %4507 = vmatpush.msra.mxu0 %v3125
  %4508 = vmatpush.msra.mxu0 %v3075
  %4509 = vmatpush.msra.mxu0 %v3025
  %4510 = vmatpush.msra.mxu0 %v2975
  %4511 = vmatpush.msra.mxu0 %v2925
  %4512 = vmatpush.msra.mxu0 %v2875
  %4513 = vmatpush.msra.mxu0 %v2825
  %4514 = vmatpush.msra.mxu0 %v2775
  %4515 = vmatpush.msra.mxu0 %v2725
  %4516 = vmatpush.msra.mxu0 %v2675
  %4517 = vmatpush.msra.mxu0 %v2625
  %4518 = vmatmul.f32.gmra.mxu0 %v1020
  %v4519 = vpop.f32.mrf.mxu0
  %v4520 = vadd.f32 %v4500, %v4519
  %4521 = vdwg.mxu0
  %4522 = vmatpush.msra.mxu0 %v4175
  %4523 = vmatpush.msra.mxu0 %v4125
  %4524 = vmatpush.msra.mxu0 %v4075
  %4525 = vmatpush.msra.mxu0 %v4025
  %4526 = vmatpush.msra.mxu0 %v3975
  %4527 = vmatpush.msra.mxu0 %v3925
  %4528 = vmatpush.msra.mxu0 %v3875
  %4529 = vmatpush.msra.mxu0 %v3825
  %4530 = vmatpush.msra.mxu0 %v3775
  %4531 = vmatpush.msra.mxu0 %v3725
  %4532 = vmatpush.msra.mxu0 %v3675
  %4533 = vmatpush.msra.mxu0 %v3625
  %4534 = vmatpush.msra.mxu0 %v3575
  %4535 = vmatpush.msra.mxu0 %v3525
  %4536 = vmatpush.msra.mxu0 %v3475
  %4537 = vmatpush.msra.mxu0 %v3425
  %4538 = vmatmul.f32.gmra.mxu0 %v1021
  %v4539 = vpop.f32.mrf.mxu0
  %v4540 = vadd.f32 %v4520, %v4539
  %4541 = vdwg.mxu0
  %4542 = vmatpush.msra.mxu0 %v1776
  %4543 = vmatpush.msra.mxu0 %v1726
  %4544 = vmatpush.msra.mxu0 %v1676
  %4545 = vmatpush.msra.mxu0 %v1626
  %4546 = vmatpush.msra.mxu0 %v1576
  %4547 = vmatpush.msra.mxu0 %v1526
  %4548 = vmatpush.msra.mxu0 %v1476
  %4549 = vmatpush.msra.mxu0 %v1426
  %4550 = vmatpush.msra.mxu0 %v1376
  %4551 = vmatpush.msra.mxu0 %v1326
  %4552 = vmatpush.msra.mxu0 %v1276
  %4553 = vmatpush.msra.mxu0 %v1226
  %4554 = vmatpush.msra.mxu0 %v1176
  %4555 = vmatpush.msra.mxu0 %v1126
  %4556 = vmatpush.msra.mxu0 %v1076
  %4557 = vmatpush.msra.mxu0 %v1026
  %4558 = vmatmul.f32.gmra.mxu0 %v1018
  %v4559 = vpop.f32.mrf.mxu0
  %v4560 = vadd.f32 0.0, %v4559
  %4561 = vdwg.mxu0
  %4562 = vmatpush.msra.mxu0 %v2576
  %4563 = vmatpush.msra.mxu0 %v2526
  %4564 = vmatpush.msra.mxu0 %v2476
  %4565 = vmatpush.msra.mxu0 %v2426
  %4566 = vmatpush.msra.mxu0 %v2376
  %4567 = vmatpush.msra.mxu0 %v2326
  %4568 = vmatpush.msra.mxu0 %v2276
  %4569 = vmatpush.msra.mxu0 %v2226
  %4570 = vmatpush.msra.mxu0 %v2176
  %4571 = vmatpush.msra.mxu0 %v2126
  %4572 = vmatpush.msra.mxu0 %v2076
  %4573 = vmatpush.msra.mxu0 %v2026
  %4574 = vmatpush.msra.mxu0 %v1976
  %4575 = vmatpush.msra.mxu0 %v1926
  %4576 = vmatpush.msra.mxu0 %v1876
  %4577 = vmatpush.msra.mxu0 %v1826
  %4578 = vmatmul.f32.gmra.mxu0 %v1019
  %v4579 = vpop.f32.mrf.mxu0
  %v4580 = vadd.f32 %v4560, %v4579
  %4581 = vdwg.mxu0
  %4582 = vmatpush.msra.mxu0 %v3376
  %4583 = vmatpush.msra.mxu0 %v3326
  %4584 = vmatpush.msra.mxu0 %v3276
  %4585 = vmatpush.msra.mxu0 %v3226
  %4586 = vmatpush.msra.mxu0 %v3176
  %4587 = vmatpush.msra.mxu0 %v3126
  %4588 = vmatpush.msra.mxu0 %v3076
  %4589 = vmatpush.msra.mxu0 %v3026
  %4590 = vmatpush.msra.mxu0 %v2976
  %4591 = vmatpush.msra.mxu0 %v2926
  %4592 = vmatpush.msra.mxu0 %v2876
  %4593 = vmatpush.msra.mxu0 %v2826
  %4594 = vmatpush.msra.mxu0 %v2776
  %4595 = vmatpush.msra.mxu0 %v2726
  %4596 = vmatpush.msra.mxu0 %v2676
  %4597 = vmatpush.msra.mxu0 %v2626
  %4598 = vmatmul.f32.gmra.mxu0 %v1020
  %v4599 = vpop.f32.mrf.mxu0
  %v4600 = vadd.f32 %v4580, %v4599
  %4601 = vdwg.mxu0
  %4602 = vmatpush.msra.mxu0 %v4176
  %4603 = vmatpush.msra.mxu0 %v4126
  %4604 = vmatpush.msra.mxu0 %v4076
  %4605 = vmatpush.msra.mxu0 %v4026
  %4606 = vmatpush.msra.mxu0 %v3976
  %4607 = vmatpush.msra.mxu0 %v3926
  %4608 = vmatpush.msra.mxu0 %v3876
  %4609 = vmatpush.msra.mxu0 %v3826
  %4610 = vmatpush.msra.mxu0 %v3776
  %4611 = vmatpush.msra.mxu0 %v3726
  %4612 = vmatpush.msra.mxu0 %v3676
  %4613 = vmatpush.msra.mxu0 %v3626
  %4614 = vmatpush.msra.mxu0 %v3576
  %4615 = vmatpush.msra.mxu0 %v3526
  %4616 = vmatpush.msra.mxu0 %v3476
  %4617 = vmatpush.msra.mxu0 %v3426
  %4618 = vmatmul.f32.gmra.mxu0 %v1021
  %v4619 = vpop.f32.mrf.mxu0
  %v4620 = vadd.f32 %v4600, %v4619
  %4621 = vdwg.mxu0
  %4622 = vmatpush.msra.mxu0 %v1777
  %4623 = vmatpush.msra.mxu0 %v1727
  %4624 = vmatpush.msra.mxu0 %v1677
  %4625 = vmatpush.msra.mxu0 %v1627
  %4626 = vmatpush.msra.mxu0 %v1577
  %4627 = vmatpush.msra.mxu0 %v1527
  %4628 = vmatpush.msra.mxu0 %v1477
  %4629 = vmatpush.msra.mxu0 %v1427
  %4630 = vmatpush.msra.mxu0 %v1377
  %4631 = vmatpush.msra.mxu0 %v1327
  %4632 = vmatpush.msra.mxu0 %v1277
  %4633 = vmatpush.msra.mxu0 %v1227
  %4634 = vmatpush.msra.mxu0 %v1177
  %4635 = vmatpush.msra.mxu0 %v1127
  %4636 = vmatpush.msra.mxu0 %v1077
  %4637 = vmatpush.msra.mxu0 %v1027
  %4638 = vmatmul.f32.gmra.mxu0 %v1018
  %v4639 = vpop.f32.mrf.mxu0
  %v4640 = vadd.f32 0.0, %v4639
  %4641 = vdwg.mxu0
  %4642 = vmatpush.msra.mxu0 %v2577
  %4643 = vmatpush.msra.mxu0 %v2527
  %4644 = vmatpush.msra.mxu0 %v2477
  %4645 = vmatpush.msra.mxu0 %v2427
  %4646 = vmatpush.msra.mxu0 %v2377
  %4647 = vmatpush.msra.mxu0 %v2327
  %4648 = vmatpush.msra.mxu0 %v2277
  %4649 = vmatpush.msra.mxu0 %v2227
  %4650 = vmatpush.msra.mxu0 %v2177
  %4651 = vmatpush.msra.mxu0 %v2127
  %4652 = vmatpush.msra.mxu0 %v2077
  %4653 = vmatpush.msra.mxu0 %v2027
  %4654 = vmatpush.msra.mxu0 %v1977
  %4655 = vmatpush.msra.mxu0 %v1927
  %4656 = vmatpush.msra.mxu0 %v1877
  %4657 = vmatpush.msra.mxu0 %v1827
  %4658 = vmatmul.f32.gmra.mxu0 %v1019
  %v4659 = vpop.f32.mrf.mxu0
  %v4660 = vadd.f32 %v4640, %v4659
  %4661 = vdwg.mxu0
  %4662 = vmatpush.msra.mxu0 %v3377
  %4663 = vmatpush.msra.mxu0 %v3327
  %4664 = vmatpush.msra.mxu0 %v3277
  %4665 = vmatpush.msra.mxu0 %v3227
  %4666 = vmatpush.msra.mxu0 %v3177
  %4667 = vmatpush.msra.mxu0 %v3127
  %4668 = vmatpush.msra.mxu0 %v3077
  %4669 = vmatpush.msra.mxu0 %v3027
  %4670 = vmatpush.msra.mxu0 %v2977
  %4671 = vmatpush.msra.mxu0 %v2927
  %4672 = vmatpush.msra.mxu0 %v2877
  %4673 = vmatpush.msra.mxu0 %v2827
  %4674 = vmatpush.msra.mxu0 %v2777
  %4675 = vmatpush.msra.mxu0 %v2727
  %4676 = vmatpush.msra.mxu0 %v2677
  %4677 = vmatpush.msra.mxu0 %v2627
  %4678 = vmatmul.f32.gmra.mxu0 %v1020
  %v4679 = vpop.f32.mrf.mxu0
  %v4680 = vadd.f32 %v4660, %v4679
  %4681 = vdwg.mxu0
  %4682 = vmatpush.msra.mxu0 %v4177
  %4683 = vmatpush.msra.mxu0 %v4127
  %4684 = vmatpush.msra.mxu0 %v4077
  %4685 = vmatpush.msra.mxu0 %v4027
  %4686 = vmatpush.msra.mxu0 %v3977
  %4687 = vmatpush.msra.mxu0 %v3927
  %4688 = vmatpush.msra.mxu0 %v3877
  %4689 = vmatpush.msra.mxu0 %v3827
  %4690 = vmatpush.msra.mxu0 %v3777
  %4691 = vmatpush.msra.mxu0 %v3727
  %4692 = vmatpush.msra.mxu0 %v3677
  %4693 = vmatpush.msra.mxu0 %v3627
  %4694 = vmatpush.msra.mxu0 %v3577
  %4695 = vmatpush.msra.mxu0 %v3527
  %4696 = vmatpush.msra.mxu0 %v3477
  %4697 = vmatpush.msra.mxu0 %v3427
  %4698 = vmatmul.f32.gmra.mxu0 %v1021
  %v4699 = vpop.f32.mrf.mxu0
  %v4700 = vadd.f32 %v4680, %v4699
  %4701 = vdwg.mxu0
  %4702 = vmatpush.msra.mxu0 %v1778
  %4703 = vmatpush.msra.mxu0 %v1728
  %4704 = vmatpush.msra.mxu0 %v1678
  %4705 = vmatpush.msra.mxu0 %v1628
  %4706 = vmatpush.msra.mxu0 %v1578
  %4707 = vmatpush.msra.mxu0 %v1528
  %4708 = vmatpush.msra.mxu0 %v1478
  %4709 = vmatpush.msra.mxu0 %v1428
  %4710 = vmatpush.msra.mxu0 %v1378
  %4711 = vmatpush.msra.mxu0 %v1328
  %4712 = vmatpush.msra.mxu0 %v1278
  %4713 = vmatpush.msra.mxu0 %v1228
  %4714 = vmatpush.msra.mxu0 %v1178
  %4715 = vmatpush.msra.mxu0 %v1128
  %4716 = vmatpush.msra.mxu0 %v1078
  %4717 = vmatpush.msra.mxu0 %v1028
  %4718 = vmatmul.f32.gmra.mxu0 %v1018
  %v4719 = vpop.f32.mrf.mxu0
  %v4720 = vadd.f32 0.0, %v4719
  %4721 = vdwg.mxu0
  %4722 = vmatpush.msra.mxu0 %v2578
  %4723 = vmatpush.msra.mxu0 %v2528
  %4724 = vmatpush.msra.mxu0 %v2478
  %4725 = vmatpush.msra.mxu0 %v2428
  %4726 = vmatpush.msra.mxu0 %v2378
  %4727 = vmatpush.msra.mxu0 %v2328
  %4728 = vmatpush.msra.mxu0 %v2278
  %4729 = vmatpush.msra.mxu0 %v2228
  %4730 = vmatpush.msra.mxu0 %v2178
  %4731 = vmatpush.msra.mxu0 %v2128
  %4732 = vmatpush.msra.mxu0 %v2078
  %4733 = vmatpush.msra.mxu0 %v2028
  %4734 = vmatpush.msra.mxu0 %v1978
  %4735 = vmatpush.msra.mxu0 %v1928
  %4736 = vmatpush.msra.mxu0 %v1878
  %4737 = vmatpush.msra.mxu0 %v1828
  %4738 = vmatmul.f32.gmra.mxu0 %v1019
  %v4739 = vpop.f32.mrf.mxu0
  %v4740 = vadd.f32 %v4720, %v4739
  %4741 = vdwg.mxu0
  %4742 = vmatpush.msra.mxu0 %v3378
  %4743 = vmatpush.msra.mxu0 %v3328
  %4744 = vmatpush.msra.mxu0 %v3278
  %4745 = vmatpush.msra.mxu0 %v3228
  %4746 = vmatpush.msra.mxu0 %v3178
  %4747 = vmatpush.msra.mxu0 %v3128
  %4748 = vmatpush.msra.mxu0 %v3078
  %4749 = vmatpush.msra.mxu0 %v3028
  %4750 = vmatpush.msra.mxu0 %v2978
  %4751 = vmatpush.msra.mxu0 %v2928
  %4752 = vmatpush.msra.mxu0 %v2878
  %4753 = vmatpush.msra.mxu0 %v2828
  %4754 = vmatpush.msra.mxu0 %v2778
  %4755 = vmatpush.msra.mxu0 %v2728
  %4756 = vmatpush.msra.mxu0 %v2678
  %4757 = vmatpush.msra.mxu0 %v2628
  %4758 = vmatmul.f32.gmra.mxu0 %v1020
  %v4759 = vpop.f32.mrf.mxu0
  %v4760 = vadd.f32 %v4740, %v4759
  %4761 = vdwg.mxu0
  %4762 = vmatpush.msra.mxu0 %v4178
  %4763 = vmatpush.msra.mxu0 %v4128
  %4764 = vmatpush.msra.mxu0 %v4078
  %4765 = vmatpush.msra.mxu0 %v4028
  %4766 = vmatpush.msra.mxu0 %v3978
  %4767 = vmatpush.msra.mxu0 %v3928
  %4768 = vmatpush.msra.mxu0 %v3878
  %4769 = vmatpush.msra.mxu0 %v3828
  %4770 = vmatpush.msra.mxu0 %v3778
  %4771 = vmatpush.msra.mxu0 %v3728
  %4772 = vmatpush.msra.mxu0 %v3678
  %4773 = vmatpush.msra.mxu0 %v3628
  %4774 = vmatpush.msra.mxu0 %v3578
  %4775 = vmatpush.msra.mxu0 %v3528
  %4776 = vmatpush.msra.mxu0 %v3478
  %4777 = vmatpush.msra.mxu0 %v3428
  %4778 = vmatmul.f32.gmra.mxu0 %v1021
  %v4779 = vpop.f32.mrf.mxu0
  %v4780 = vadd.f32 %v4760, %v4779
  %4781 = vdwg.mxu0
  %4782 = vmatpush.msra.mxu0 %v1779
  %4783 = vmatpush.msra.mxu0 %v1729
  %4784 = vmatpush.msra.mxu0 %v1679
  %4785 = vmatpush.msra.mxu0 %v1629
  %4786 = vmatpush.msra.mxu0 %v1579
  %4787 = vmatpush.msra.mxu0 %v1529
  %4788 = vmatpush.msra.mxu0 %v1479
  %4789 = vmatpush.msra.mxu0 %v1429
  %4790 = vmatpush.msra.mxu0 %v1379
  %4791 = vmatpush.msra.mxu0 %v1329
  %4792 = vmatpush.msra.mxu0 %v1279
  %4793 = vmatpush.msra.mxu0 %v1229
  %4794 = vmatpush.msra.mxu0 %v1179
  %4795 = vmatpush.msra.mxu0 %v1129
  %4796 = vmatpush.msra.mxu0 %v1079
  %4797 = vmatpush.msra.mxu0 %v1029
  %4798 = vmatmul.f32.gmra.mxu0 %v1018
  %v4799 = vpop.f32.mrf.mxu0
  %v4800 = vadd.f32 0.0, %v4799
  %4801 = vdwg.mxu0
  %4802 = vmatpush.msra.mxu0 %v2579
  %4803 = vmatpush.msra.mxu0 %v2529
  %4804 = vmatpush.msra.mxu0 %v2479
  %4805 = vmatpush.msra.mxu0 %v2429
  %4806 = vmatpush.msra.mxu0 %v2379
  %4807 = vmatpush.msra.mxu0 %v2329
  %4808 = vmatpush.msra.mxu0 %v2279
  %4809 = vmatpush.msra.mxu0 %v2229
  %4810 = vmatpush.msra.mxu0 %v2179
  %4811 = vmatpush.msra.mxu0 %v2129
  %4812 = vmatpush.msra.mxu0 %v2079
  %4813 = vmatpush.msra.mxu0 %v2029
  %4814 = vmatpush.msra.mxu0 %v1979
  %4815 = vmatpush.msra.mxu0 %v1929
  %4816 = vmatpush.msra.mxu0 %v1879
  %4817 = vmatpush.msra.mxu0 %v1829
  %4818 = vmatmul.f32.gmra.mxu0 %v1019
  %v4819 = vpop.f32.mrf.mxu0
  %v4820 = vadd.f32 %v4800, %v4819
  %4821 = vdwg.mxu0
  %4822 = vmatpush.msra.mxu0 %v3379
  %4823 = vmatpush.msra.mxu0 %v3329
  %4824 = vmatpush.msra.mxu0 %v3279
  %4825 = vmatpush.msra.mxu0 %v3229
  %4826 = vmatpush.msra.mxu0 %v3179
  %4827 = vmatpush.msra.mxu0 %v3129
  %4828 = vmatpush.msra.mxu0 %v3079
  %4829 = vmatpush.msra.mxu0 %v3029
  %4830 = vmatpush.msra.mxu0 %v2979
  %4831 = vmatpush.msra.mxu0 %v2929
  %4832 = vmatpush.msra.mxu0 %v2879
  %4833 = vmatpush.msra.mxu0 %v2829
  %4834 = vmatpush.msra.mxu0 %v2779
  %4835 = vmatpush.msra.mxu0 %v2729
  %4836 = vmatpush.msra.mxu0 %v2679
  %4837 = vmatpush.msra.mxu0 %v2629
  %4838 = vmatmul.f32.gmra.mxu0 %v1020
  %v4839 = vpop.f32.mrf.mxu0
  %v4840 = vadd.f32 %v4820, %v4839
  %4841 = vdwg.mxu0
  %4842 = vmatpush.msra.mxu0 %v4179
  %4843 = vmatpush.msra.mxu0 %v4129
  %4844 = vmatpush.msra.mxu0 %v4079
  %4845 = vmatpush.msra.mxu0 %v4029
  %4846 = vmatpush.msra.mxu0 %v3979
  %4847 = vmatpush.msra.mxu0 %v3929
  %4848 = vmatpush.msra.mxu0 %v3879
  %4849 = vmatpush.msra.mxu0 %v3829
  %4850 = vmatpush.msra.mxu0 %v3779
  %4851 = vmatpush.msra.mxu0 %v3729
  %4852 = vmatpush.msra.mxu0 %v3679
  %4853 = vmatpush.msra.mxu0 %v3629
  %4854 = vmatpush.msra.mxu0 %v3579
  %4855 = vmatpush.msra.mxu0 %v3529
  %4856 = vmatpush.msra.mxu0 %v3479
  %4857 = vmatpush.msra.mxu0 %v3429
  %4858 = vmatmul.f32.gmra.mxu0 %v1021
  %v4859 = vpop.f32.mrf.mxu0
  %v4860 = vadd.f32 %v4840, %v4859
  %4861 = vdwg.mxu0
  %4862 = vmatpush.msra.mxu0 %v1780
  %4863 = vmatpush.msra.mxu0 %v1730
  %4864 = vmatpush.msra.mxu0 %v1680
  %4865 = vmatpush.msra.mxu0 %v1630
  %4866 = vmatpush.msra.mxu0 %v1580
  %4867 = vmatpush.msra.mxu0 %v1530
  %4868 = vmatpush.msra.mxu0 %v1480
  %4869 = vmatpush.msra.mxu0 %v1430
  %4870 = vmatpush.msra.mxu0 %v1380
  %4871 = vmatpush.msra.mxu0 %v1330
  %4872 = vmatpush.msra.mxu0 %v1280
  %4873 = vmatpush.msra.mxu0 %v1230
  %4874 = vmatpush.msra.mxu0 %v1180
  %4875 = vmatpush.msra.mxu0 %v1130
  %4876 = vmatpush.msra.mxu0 %v1080
  %4877 = vmatpush.msra.mxu0 %v1030
  %4878 = vmatmul.f32.gmra.mxu0 %v1018
  %v4879 = vpop.f32.mrf.mxu0
  %v4880 = vadd.f32 0.0, %v4879
  %4881 = vdwg.mxu0
  %4882 = vmatpush.msra.mxu0 %v2580
  %4883 = vmatpush.msra.mxu0 %v2530
  %4884 = vmatpush.msra.mxu0 %v2480
  %4885 = vmatpush.msra.mxu0 %v2430
  %4886 = vmatpush.msra.mxu0 %v2380
  %4887 = vmatpush.msra.mxu0 %v2330
  %4888 = vmatpush.msra.mxu0 %v2280
  %4889 = vmatpush.msra.mxu0 %v2230
  %4890 = vmatpush.msra.mxu0 %v2180
  %4891 = vmatpush.msra.mxu0 %v2130
  %4892 = vmatpush.msra.mxu0 %v2080
  %4893 = vmatpush.msra.mxu0 %v2030
  %4894 = vmatpush.msra.mxu0 %v1980
  %4895 = vmatpush.msra.mxu0 %v1930
  %4896 = vmatpush.msra.mxu0 %v1880
  %4897 = vmatpush.msra.mxu0 %v1830
  %4898 = vmatmul.f32.gmra.mxu0 %v1019
  %v4899 = vpop.f32.mrf.mxu0
  %v4900 = vadd.f32 %v4880, %v4899
  %4901 = vdwg.mxu0
  %4902 = vmatpush.msra.mxu0 %v3380
  %4903 = vmatpush.msra.mxu0 %v3330
  %4904 = vmatpush.msra.mxu0 %v3280
  %4905 = vmatpush.msra.mxu0 %v3230
  %4906 = vmatpush.msra.mxu0 %v3180
  %4907 = vmatpush.msra.mxu0 %v3130
  %4908 = vmatpush.msra.mxu0 %v3080
  %4909 = vmatpush.msra.mxu0 %v3030
  %4910 = vmatpush.msra.mxu0 %v2980
  %4911 = vmatpush.msra.mxu0 %v2930
  %4912 = vmatpush.msra.mxu0 %v2880
  %4913 = vmatpush.msra.mxu0 %v2830
  %4914 = vmatpush.msra.mxu0 %v2780
  %4915 = vmatpush.msra.mxu0 %v2730
  %4916 = vmatpush.msra.mxu0 %v2680
  %4917 = vmatpush.msra.mxu0 %v2630
  %4918 = vmatmul.f32.gmra.mxu0 %v1020
  %v4919 = vpop.f32.mrf.mxu0
  %v4920 = vadd.f32 %v4900, %v4919
  %4921 = vdwg.mxu0
  %4922 = vmatpush.msra.mxu0 %v4180
  %4923 = vmatpush.msra.mxu0 %v4130
  %4924 = vmatpush.msra.mxu0 %v4080
  %4925 = vmatpush.msra.mxu0 %v4030
  %4926 = vmatpush.msra.mxu0 %v3980
  %4927 = vmatpush.msra.mxu0 %v3930
  %4928 = vmatpush.msra.mxu0 %v3880
  %4929 = vmatpush.msra.mxu0 %v3830
  %4930 = vmatpush.msra.mxu0 %v3780
  %4931 = vmatpush.msra.mxu0 %v3730
  %4932 = vmatpush.msra.mxu0 %v3680
  %4933 = vmatpush.msra.mxu0 %v3630
  %4934 = vmatpush.msra.mxu0 %v3580
  %4935 = vmatpush.msra.mxu0 %v3530
  %4936 = vmatpush.msra.mxu0 %v3480
  %4937 = vmatpush.msra.mxu0 %v3430
  %4938 = vmatmul.f32.gmra.mxu0 %v1021
  %v4939 = vpop.f32.mrf.mxu0
  %v4940 = vadd.f32 %v4920, %v4939
  %4941 = vdwg.mxu0
  %4942 = vmatpush.msra.mxu0 %v1781
  %4943 = vmatpush.msra.mxu0 %v1731
  %4944 = vmatpush.msra.mxu0 %v1681
  %4945 = vmatpush.msra.mxu0 %v1631
  %4946 = vmatpush.msra.mxu0 %v1581
  %4947 = vmatpush.msra.mxu0 %v1531
  %4948 = vmatpush.msra.mxu0 %v1481
  %4949 = vmatpush.msra.mxu0 %v1431
  %4950 = vmatpush.msra.mxu0 %v1381
  %4951 = vmatpush.msra.mxu0 %v1331
  %4952 = vmatpush.msra.mxu0 %v1281
  %4953 = vmatpush.msra.mxu0 %v1231
  %4954 = vmatpush.msra.mxu0 %v1181
  %4955 = vmatpush.msra.mxu0 %v1131
  %4956 = vmatpush.msra.mxu0 %v1081
  %4957 = vmatpush.msra.mxu0 %v1031
  %4958 = vmatmul.f32.gmra.mxu0 %v1018
  %v4959 = vpop.f32.mrf.mxu0
  %v4960 = vadd.f32 0.0, %v4959
  %4961 = vdwg.mxu0
  %4962 = vmatpush.msra.mxu0 %v2581
  %4963 = vmatpush.msra.mxu0 %v2531
  %4964 = vmatpush.msra.mxu0 %v2481
  %4965 = vmatpush.msra.mxu0 %v2431
  %4966 = vmatpush.msra.mxu0 %v2381
  %4967 = vmatpush.msra.mxu0 %v2331
  %4968 = vmatpush.msra.mxu0 %v2281
  %4969 = vmatpush.msra.mxu0 %v2231
  %4970 = vmatpush.msra.mxu0 %v2181
  %4971 = vmatpush.msra.mxu0 %v2131
  %4972 = vmatpush.msra.mxu0 %v2081
  %4973 = vmatpush.msra.mxu0 %v2031
  %4974 = vmatpush.msra.mxu0 %v1981
  %4975 = vmatpush.msra.mxu0 %v1931
  %4976 = vmatpush.msra.mxu0 %v1881
  %4977 = vmatpush.msra.mxu0 %v1831
  %4978 = vmatmul.f32.gmra.mxu0 %v1019
  %v4979 = vpop.f32.mrf.mxu0
  %v4980 = vadd.f32 %v4960, %v4979
  %4981 = vdwg.mxu0
  %4982 = vmatpush.msra.mxu0 %v3381
  %4983 = vmatpush.msra.mxu0 %v3331
  %4984 = vmatpush.msra.mxu0 %v3281
  %4985 = vmatpush.msra.mxu0 %v3231
  %4986 = vmatpush.msra.mxu0 %v3181
  %4987 = vmatpush.msra.mxu0 %v3131
  %4988 = vmatpush.msra.mxu0 %v3081
  %4989 = vmatpush.msra.mxu0 %v3031
  %4990 = vmatpush.msra.mxu0 %v2981
  %4991 = vmatpush.msra.mxu0 %v2931
  %4992 = vmatpush.msra.mxu0 %v2881
  %4993 = vmatpush.msra.mxu0 %v2831
  %4994 = vmatpush.msra.mxu0 %v2781
  %4995 = vmatpush.msra.mxu0 %v2731
  %4996 = vmatpush.msra.mxu0 %v2681
  %4997 = vmatpush.msra.mxu0 %v2631
  %4998 = vmatmul.f32.gmra.mxu0 %v1020
  %v4999 = vpop.f32.mrf.mxu0
  %v5000 = vadd.f32 %v4980, %v4999
  %5001 = vdwg.mxu0
  %5002 = vmatpush.msra.mxu0 %v4181
  %5003 = vmatpush.msra.mxu0 %v4131
  %5004 = vmatpush.msra.mxu0 %v4081
  %5005 = vmatpush.msra.mxu0 %v4031
  %5006 = vmatpush.msra.mxu0 %v3981
  %5007 = vmatpush.msra.mxu0 %v3931
  %5008 = vmatpush.msra.mxu0 %v3881
  %5009 = vmatpush.msra.mxu0 %v3831
  %5010 = vmatpush.msra.mxu0 %v3781
  %5011 = vmatpush.msra.mxu0 %v3731
  %5012 = vmatpush.msra.mxu0 %v3681
  %5013 = vmatpush.msra.mxu0 %v3631
  %5014 = vmatpush.msra.mxu0 %v3581
  %5015 = vmatpush.msra.mxu0 %v3531
  %5016 = vmatpush.msra.mxu0 %v3481
  %5017 = vmatpush.msra.mxu0 %v3431
  %5018 = vmatmul.f32.gmra.mxu0 %v1021
  %v5019 = vpop.f32.mrf.mxu0
  %v5020 = vadd.f32 %v5000, %v5019
  %5021 = vdwg.mxu0
  %5022 = vmatpush.msra.mxu0 %v1782
  %5023 = vmatpush.msra.mxu0 %v1732
  %5024 = vmatpush.msra.mxu0 %v1682
  %5025 = vmatpush.msra.mxu0 %v1632
  %5026 = vmatpush.msra.mxu0 %v1582
  %5027 = vmatpush.msra.mxu0 %v1532
  %5028 = vmatpush.msra.mxu0 %v1482
  %5029 = vmatpush.msra.mxu0 %v1432
  %5030 = vmatpush.msra.mxu0 %v1382
  %5031 = vmatpush.msra.mxu0 %v1332
  %5032 = vmatpush.msra.mxu0 %v1282
  %5033 = vmatpush.msra.mxu0 %v1232
  %5034 = vmatpush.msra.mxu0 %v1182
  %5035 = vmatpush.msra.mxu0 %v1132
  %5036 = vmatpush.msra.mxu0 %v1082
  %5037 = vmatpush.msra.mxu0 %v1032
  %5038 = vmatmul.f32.gmra.mxu0 %v1018
  %v5039 = vpop.f32.mrf.mxu0
  %v5040 = vadd.f32 0.0, %v5039
  %5041 = vdwg.mxu0
  %5042 = vmatpush.msra.mxu0 %v2582
  %5043 = vmatpush.msra.mxu0 %v2532
  %5044 = vmatpush.msra.mxu0 %v2482
  %5045 = vmatpush.msra.mxu0 %v2432
  %5046 = vmatpush.msra.mxu0 %v2382
  %5047 = vmatpush.msra.mxu0 %v2332
  %5048 = vmatpush.msra.mxu0 %v2282
  %5049 = vmatpush.msra.mxu0 %v2232
  %5050 = vmatpush.msra.mxu0 %v2182
  %5051 = vmatpush.msra.mxu0 %v2132
  %5052 = vmatpush.msra.mxu0 %v2082
  %5053 = vmatpush.msra.mxu0 %v2032
  %5054 = vmatpush.msra.mxu0 %v1982
  %5055 = vmatpush.msra.mxu0 %v1932
  %5056 = vmatpush.msra.mxu0 %v1882
  %5057 = vmatpush.msra.mxu0 %v1832
  %5058 = vmatmul.f32.gmra.mxu0 %v1019
  %v5059 = vpop.f32.mrf.mxu0
  %v5060 = vadd.f32 %v5040, %v5059
  %5061 = vdwg.mxu0
  %5062 = vmatpush.msra.mxu0 %v3382
  %5063 = vmatpush.msra.mxu0 %v3332
  %5064 = vmatpush.msra.mxu0 %v3282
  %5065 = vmatpush.msra.mxu0 %v3232
  %5066 = vmatpush.msra.mxu0 %v3182
  %5067 = vmatpush.msra.mxu0 %v3132
  %5068 = vmatpush.msra.mxu0 %v3082
  %5069 = vmatpush.msra.mxu0 %v3032
  %5070 = vmatpush.msra.mxu0 %v2982
  %5071 = vmatpush.msra.mxu0 %v2932
  %5072 = vmatpush.msra.mxu0 %v2882
  %5073 = vmatpush.msra.mxu0 %v2832
  %5074 = vmatpush.msra.mxu0 %v2782
  %5075 = vmatpush.msra.mxu0 %v2732
  %5076 = vmatpush.msra.mxu0 %v2682
  %5077 = vmatpush.msra.mxu0 %v2632
  %5078 = vmatmul.f32.gmra.mxu0 %v1020
  %v5079 = vpop.f32.mrf.mxu0
  %v5080 = vadd.f32 %v5060, %v5079
  %5081 = vdwg.mxu0
  %5082 = vmatpush.msra.mxu0 %v4182
  %5083 = vmatpush.msra.mxu0 %v4132
  %5084 = vmatpush.msra.mxu0 %v4082
  %5085 = vmatpush.msra.mxu0 %v4032
  %5086 = vmatpush.msra.mxu0 %v3982
  %5087 = vmatpush.msra.mxu0 %v3932
  %5088 = vmatpush.msra.mxu0 %v3882
  %5089 = vmatpush.msra.mxu0 %v3832
  %5090 = vmatpush.msra.mxu0 %v3782
  %5091 = vmatpush.msra.mxu0 %v3732
  %5092 = vmatpush.msra.mxu0 %v3682
  %5093 = vmatpush.msra.mxu0 %v3632
  %5094 = vmatpush.msra.mxu0 %v3582
  %5095 = vmatpush.msra.mxu0 %v3532
  %5096 = vmatpush.msra.mxu0 %v3482
  %5097 = vmatpush.msra.mxu0 %v3432
  %5098 = vmatmul.f32.gmra.mxu0 %v1021
  %v5099 = vpop.f32.mrf.mxu0
  %v5100 = vadd.f32 %v5080, %v5099
  %5101 = vdwg.mxu0
  %5102 = vmatpush.msra.mxu0 %v1783
  %5103 = vmatpush.msra.mxu0 %v1733
  %5104 = vmatpush.msra.mxu0 %v1683
  %5105 = vmatpush.msra.mxu0 %v1633
  %5106 = vmatpush.msra.mxu0 %v1583
  %5107 = vmatpush.msra.mxu0 %v1533
  %5108 = vmatpush.msra.mxu0 %v1483
  %5109 = vmatpush.msra.mxu0 %v1433
  %5110 = vmatpush.msra.mxu0 %v1383
  %5111 = vmatpush.msra.mxu0 %v1333
  %5112 = vmatpush.msra.mxu0 %v1283
  %5113 = vmatpush.msra.mxu0 %v1233
  %5114 = vmatpush.msra.mxu0 %v1183
  %5115 = vmatpush.msra.mxu0 %v1133
  %5116 = vmatpush.msra.mxu0 %v1083
  %5117 = vmatpush.msra.mxu0 %v1033
  %5118 = vmatmul.f32.gmra.mxu0 %v1018
  %v5119 = vpop.f32.mrf.mxu0
  %v5120 = vadd.f32 0.0, %v5119
  %5121 = vdwg.mxu0
  %5122 = vmatpush.msra.mxu0 %v2583
  %5123 = vmatpush.msra.mxu0 %v2533
  %5124 = vmatpush.msra.mxu0 %v2483
  %5125 = vmatpush.msra.mxu0 %v2433
  %5126 = vmatpush.msra.mxu0 %v2383
  %5127 = vmatpush.msra.mxu0 %v2333
  %5128 = vmatpush.msra.mxu0 %v2283
  %5129 = vmatpush.msra.mxu0 %v2233
  %5130 = vmatpush.msra.mxu0 %v2183
  %5131 = vmatpush.msra.mxu0 %v2133
  %5132 = vmatpush.msra.mxu0 %v2083
  %5133 = vmatpush.msra.mxu0 %v2033
  %5134 = vmatpush.msra.mxu0 %v1983
  %5135 = vmatpush.msra.mxu0 %v1933
  %5136 = vmatpush.msra.mxu0 %v1883
  %5137 = vmatpush.msra.mxu0 %v1833
  %5138 = vmatmul.f32.gmra.mxu0 %v1019
  %v5139 = vpop.f32.mrf.mxu0
  %v5140 = vadd.f32 %v5120, %v5139
  %5141 = vdwg.mxu0
  %5142 = vmatpush.msra.mxu0 %v3383
  %5143 = vmatpush.msra.mxu0 %v3333
  %5144 = vmatpush.msra.mxu0 %v3283
  %5145 = vmatpush.msra.mxu0 %v3233
  %5146 = vmatpush.msra.mxu0 %v3183
  %5147 = vmatpush.msra.mxu0 %v3133
  %5148 = vmatpush.msra.mxu0 %v3083
  %5149 = vmatpush.msra.mxu0 %v3033
  %5150 = vmatpush.msra.mxu0 %v2983
  %5151 = vmatpush.msra.mxu0 %v2933
  %5152 = vmatpush.msra.mxu0 %v2883
  %5153 = vmatpush.msra.mxu0 %v2833
  %5154 = vmatpush.msra.mxu0 %v2783
  %5155 = vmatpush.msra.mxu0 %v2733
  %5156 = vmatpush.msra.mxu0 %v2683
  %5157 = vmatpush.msra.mxu0 %v2633
  %5158 = vmatmul.f32.gmra.mxu0 %v1020
  %v5159 = vpop.f32.mrf.mxu0
  %v5160 = vadd.f32 %v5140, %v5159
  %5161 = vdwg.mxu0
  %5162 = vmatpush.msra.mxu0 %v4183
  %5163 = vmatpush.msra.mxu0 %v4133
  %5164 = vmatpush.msra.mxu0 %v4083
  %5165 = vmatpush.msra.mxu0 %v4033
  %5166 = vmatpush.msra.mxu0 %v3983
  %5167 = vmatpush.msra.mxu0 %v3933
  %5168 = vmatpush.msra.mxu0 %v3883
  %5169 = vmatpush.msra.mxu0 %v3833
  %5170 = vmatpush.msra.mxu0 %v3783
  %5171 = vmatpush.msra.mxu0 %v3733
  %5172 = vmatpush.msra.mxu0 %v3683
  %5173 = vmatpush.msra.mxu0 %v3633
  %5174 = vmatpush.msra.mxu0 %v3583
  %5175 = vmatpush.msra.mxu0 %v3533
  %5176 = vmatpush.msra.mxu0 %v3483
  %5177 = vmatpush.msra.mxu0 %v3433
  %5178 = vmatmul.f32.gmra.mxu0 %v1021
  %v5179 = vpop.f32.mrf.mxu0
  %v5180 = vadd.f32 %v5160, %v5179
  %5181 = vdwg.mxu0
  %5182 = vmatpush.msra.mxu0 %v1784
  %5183 = vmatpush.msra.mxu0 %v1734
  %5184 = vmatpush.msra.mxu0 %v1684
  %5185 = vmatpush.msra.mxu0 %v1634
  %5186 = vmatpush.msra.mxu0 %v1584
  %5187 = vmatpush.msra.mxu0 %v1534
  %5188 = vmatpush.msra.mxu0 %v1484
  %5189 = vmatpush.msra.mxu0 %v1434
  %5190 = vmatpush.msra.mxu0 %v1384
  %5191 = vmatpush.msra.mxu0 %v1334
  %5192 = vmatpush.msra.mxu0 %v1284
  %5193 = vmatpush.msra.mxu0 %v1234
  %5194 = vmatpush.msra.mxu0 %v1184
  %5195 = vmatpush.msra.mxu0 %v1134
  %5196 = vmatpush.msra.mxu0 %v1084
  %5197 = vmatpush.msra.mxu0 %v1034
  %5198 = vmatmul.f32.gmra.mxu0 %v1018
  %v5199 = vpop.f32.mrf.mxu0
  %v5200 = vadd.f32 0.0, %v5199
  %5201 = vdwg.mxu0
  %5202 = vmatpush.msra.mxu0 %v2584
  %5203 = vmatpush.msra.mxu0 %v2534
  %5204 = vmatpush.msra.mxu0 %v2484
  %5205 = vmatpush.msra.mxu0 %v2434
  %5206 = vmatpush.msra.mxu0 %v2384
  %5207 = vmatpush.msra.mxu0 %v2334
  %5208 = vmatpush.msra.mxu0 %v2284
  %5209 = vmatpush.msra.mxu0 %v2234
  %5210 = vmatpush.msra.mxu0 %v2184
  %5211 = vmatpush.msra.mxu0 %v2134
  %5212 = vmatpush.msra.mxu0 %v2084
  %5213 = vmatpush.msra.mxu0 %v2034
  %5214 = vmatpush.msra.mxu0 %v1984
  %5215 = vmatpush.msra.mxu0 %v1934
  %5216 = vmatpush.msra.mxu0 %v1884
  %5217 = vmatpush.msra.mxu0 %v1834
  %5218 = vmatmul.f32.gmra.mxu0 %v1019
  %v5219 = vpop.f32.mrf.mxu0
  %v5220 = vadd.f32 %v5200, %v5219
  %5221 = vdwg.mxu0
  %5222 = vmatpush.msra.mxu0 %v3384
  %5223 = vmatpush.msra.mxu0 %v3334
  %5224 = vmatpush.msra.mxu0 %v3284
  %5225 = vmatpush.msra.mxu0 %v3234
  %5226 = vmatpush.msra.mxu0 %v3184
  %5227 = vmatpush.msra.mxu0 %v3134
  %5228 = vmatpush.msra.mxu0 %v3084
  %5229 = vmatpush.msra.mxu0 %v3034
  %5230 = vmatpush.msra.mxu0 %v2984
  %5231 = vmatpush.msra.mxu0 %v2934
  %5232 = vmatpush.msra.mxu0 %v2884
  %5233 = vmatpush.msra.mxu0 %v2834
  %5234 = vmatpush.msra.mxu0 %v2784
  %5235 = vmatpush.msra.mxu0 %v2734
  %5236 = vmatpush.msra.mxu0 %v2684
  %5237 = vmatpush.msra.mxu0 %v2634
  %5238 = vmatmul.f32.gmra.mxu0 %v1020
  %v5239 = vpop.f32.mrf.mxu0
  %v5240 = vadd.f32 %v5220, %v5239
  %5241 = vdwg.mxu0
  %5242 = vmatpush.msra.mxu0 %v4184
  %5243 = vmatpush.msra.mxu0 %v4134
  %5244 = vmatpush.msra.mxu0 %v4084
  %5245 = vmatpush.msra.mxu0 %v4034
  %5246 = vmatpush.msra.mxu0 %v3984
  %5247 = vmatpush.msra.mxu0 %v3934
  %5248 = vmatpush.msra.mxu0 %v3884
  %5249 = vmatpush.msra.mxu0 %v3834
  %5250 = vmatpush.msra.mxu0 %v3784
  %5251 = vmatpush.msra.mxu0 %v3734
  %5252 = vmatpush.msra.mxu0 %v3684
  %5253 = vmatpush.msra.mxu0 %v3634
  %5254 = vmatpush.msra.mxu0 %v3584
  %5255 = vmatpush.msra.mxu0 %v3534
  %5256 = vmatpush.msra.mxu0 %v3484
  %5257 = vmatpush.msra.mxu0 %v3434
  %5258 = vmatmul.f32.gmra.mxu0 %v1021
  %v5259 = vpop.f32.mrf.mxu0
  %v5260 = vadd.f32 %v5240, %v5259
  %5261 = vdwg.mxu0
  %5262 = vmatpush.msra.mxu0 %v1785
  %5263 = vmatpush.msra.mxu0 %v1735
  %5264 = vmatpush.msra.mxu0 %v1685
  %5265 = vmatpush.msra.mxu0 %v1635
  %5266 = vmatpush.msra.mxu0 %v1585
  %5267 = vmatpush.msra.mxu0 %v1535
  %5268 = vmatpush.msra.mxu0 %v1485
  %5269 = vmatpush.msra.mxu0 %v1435
  %5270 = vmatpush.msra.mxu0 %v1385
  %5271 = vmatpush.msra.mxu0 %v1335
  %5272 = vmatpush.msra.mxu0 %v1285
  %5273 = vmatpush.msra.mxu0 %v1235
  %5274 = vmatpush.msra.mxu0 %v1185
  %5275 = vmatpush.msra.mxu0 %v1135
  %5276 = vmatpush.msra.mxu0 %v1085
  %5277 = vmatpush.msra.mxu0 %v1035
  %5278 = vmatmul.f32.gmra.mxu0 %v1018
  %v5279 = vpop.f32.mrf.mxu0
  %v5280 = vadd.f32 0.0, %v5279
  %5281 = vdwg.mxu0
  %5282 = vmatpush.msra.mxu0 %v2585
  %5283 = vmatpush.msra.mxu0 %v2535
  %5284 = vmatpush.msra.mxu0 %v2485
  %5285 = vmatpush.msra.mxu0 %v2435
  %5286 = vmatpush.msra.mxu0 %v2385
  %5287 = vmatpush.msra.mxu0 %v2335
  %5288 = vmatpush.msra.mxu0 %v2285
  %5289 = vmatpush.msra.mxu0 %v2235
  %5290 = vmatpush.msra.mxu0 %v2185
  %5291 = vmatpush.msra.mxu0 %v2135
  %5292 = vmatpush.msra.mxu0 %v2085
  %5293 = vmatpush.msra.mxu0 %v2035
  %5294 = vmatpush.msra.mxu0 %v1985
  %5295 = vmatpush.msra.mxu0 %v1935
  %5296 = vmatpush.msra.mxu0 %v1885
  %5297 = vmatpush.msra.mxu0 %v1835
  %5298 = vmatmul.f32.gmra.mxu0 %v1019
  %v5299 = vpop.f32.mrf.mxu0
  %v5300 = vadd.f32 %v5280, %v5299
  %5301 = vdwg.mxu0
  %5302 = vmatpush.msra.mxu0 %v3385
  %5303 = vmatpush.msra.mxu0 %v3335
  %5304 = vmatpush.msra.mxu0 %v3285
  %5305 = vmatpush.msra.mxu0 %v3235
  %5306 = vmatpush.msra.mxu0 %v3185
  %5307 = vmatpush.msra.mxu0 %v3135
  %5308 = vmatpush.msra.mxu0 %v3085
  %5309 = vmatpush.msra.mxu0 %v3035
  %5310 = vmatpush.msra.mxu0 %v2985
  %5311 = vmatpush.msra.mxu0 %v2935
  %5312 = vmatpush.msra.mxu0 %v2885
  %5313 = vmatpush.msra.mxu0 %v2835
  %5314 = vmatpush.msra.mxu0 %v2785
  %5315 = vmatpush.msra.mxu0 %v2735
  %5316 = vmatpush.msra.mxu0 %v2685
  %5317 = vmatpush.msra.mxu0 %v2635
  %5318 = vmatmul.f32.gmra.mxu0 %v1020
  %v5319 = vpop.f32.mrf.mxu0
  %v5320 = vadd.f32 %v5300, %v5319
  %5321 = vdwg.mxu0
  %5322 = vmatpush.msra.mxu0 %v4185
  %5323 = vmatpush.msra.mxu0 %v4135
  %5324 = vmatpush.msra.mxu0 %v4085
  %5325 = vmatpush.msra.mxu0 %v4035
  %5326 = vmatpush.msra.mxu0 %v3985
  %5327 = vmatpush.msra.mxu0 %v3935
  %5328 = vmatpush.msra.mxu0 %v3885
  %5329 = vmatpush.msra.mxu0 %v3835
  %5330 = vmatpush.msra.mxu0 %v3785
  %5331 = vmatpush.msra.mxu0 %v3735
  %5332 = vmatpush.msra.mxu0 %v3685
  %5333 = vmatpush.msra.mxu0 %v3635
  %5334 = vmatpush.msra.mxu0 %v3585
  %5335 = vmatpush.msra.mxu0 %v3535
  %5336 = vmatpush.msra.mxu0 %v3485
  %5337 = vmatpush.msra.mxu0 %v3435
  %5338 = vmatmul.f32.gmra.mxu0 %v1021
  %v5339 = vpop.f32.mrf.mxu0
  %v5340 = vadd.f32 %v5320, %v5339
  %5341 = vdwg.mxu0
  %5342 = vmatpush.msra.mxu0 %v1786
  %5343 = vmatpush.msra.mxu0 %v1736
  %5344 = vmatpush.msra.mxu0 %v1686
  %5345 = vmatpush.msra.mxu0 %v1636
  %5346 = vmatpush.msra.mxu0 %v1586
  %5347 = vmatpush.msra.mxu0 %v1536
  %5348 = vmatpush.msra.mxu0 %v1486
  %5349 = vmatpush.msra.mxu0 %v1436
  %5350 = vmatpush.msra.mxu0 %v1386
  %5351 = vmatpush.msra.mxu0 %v1336
  %5352 = vmatpush.msra.mxu0 %v1286
  %5353 = vmatpush.msra.mxu0 %v1236
  %5354 = vmatpush.msra.mxu0 %v1186
  %5355 = vmatpush.msra.mxu0 %v1136
  %5356 = vmatpush.msra.mxu0 %v1086
  %5357 = vmatpush.msra.mxu0 %v1036
  %5358 = vmatmul.f32.gmra.mxu0 %v1018
  %v5359 = vpop.f32.mrf.mxu0
  %v5360 = vadd.f32 0.0, %v5359
  %5361 = vdwg.mxu0
  %5362 = vmatpush.msra.mxu0 %v2586
  %5363 = vmatpush.msra.mxu0 %v2536
  %5364 = vmatpush.msra.mxu0 %v2486
  %5365 = vmatpush.msra.mxu0 %v2436
  %5366 = vmatpush.msra.mxu0 %v2386
  %5367 = vmatpush.msra.mxu0 %v2336
  %5368 = vmatpush.msra.mxu0 %v2286
  %5369 = vmatpush.msra.mxu0 %v2236
  %5370 = vmatpush.msra.mxu0 %v2186
  %5371 = vmatpush.msra.mxu0 %v2136
  %5372 = vmatpush.msra.mxu0 %v2086
  %5373 = vmatpush.msra.mxu0 %v2036
  %5374 = vmatpush.msra.mxu0 %v1986
  %5375 = vmatpush.msra.mxu0 %v1936
  %5376 = vmatpush.msra.mxu0 %v1886
  %5377 = vmatpush.msra.mxu0 %v1836
  %5378 = vmatmul.f32.gmra.mxu0 %v1019
  %v5379 = vpop.f32.mrf.mxu0
  %v5380 = vadd.f32 %v5360, %v5379
  %5381 = vdwg.mxu0
  %5382 = vmatpush.msra.mxu0 %v3386
  %5383 = vmatpush.msra.mxu0 %v3336
  %5384 = vmatpush.msra.mxu0 %v3286
  %5385 = vmatpush.msra.mxu0 %v3236
  %5386 = vmatpush.msra.mxu0 %v3186
  %5387 = vmatpush.msra.mxu0 %v3136
  %5388 = vmatpush.msra.mxu0 %v3086
  %5389 = vmatpush.msra.mxu0 %v3036
  %5390 = vmatpush.msra.mxu0 %v2986
  %5391 = vmatpush.msra.mxu0 %v2936
  %5392 = vmatpush.msra.mxu0 %v2886
  %5393 = vmatpush.msra.mxu0 %v2836
  %5394 = vmatpush.msra.mxu0 %v2786
  %5395 = vmatpush.msra.mxu0 %v2736
  %5396 = vmatpush.msra.mxu0 %v2686
  %5397 = vmatpush.msra.mxu0 %v2636
  %5398 = vmatmul.f32.gmra.mxu0 %v1020
  %v5399 = vpop.f32.mrf.mxu0
  %v5400 = vadd.f32 %v5380, %v5399
  %5401 = vdwg.mxu0
  %5402 = vmatpush.msra.mxu0 %v4186
  %5403 = vmatpush.msra.mxu0 %v4136
  %5404 = vmatpush.msra.mxu0 %v4086
  %5405 = vmatpush.msra.mxu0 %v4036
  %5406 = vmatpush.msra.mxu0 %v3986
  %5407 = vmatpush.msra.mxu0 %v3936
  %5408 = vmatpush.msra.mxu0 %v3886
  %5409 = vmatpush.msra.mxu0 %v3836
  %5410 = vmatpush.msra.mxu0 %v3786
  %5411 = vmatpush.msra.mxu0 %v3736
  %5412 = vmatpush.msra.mxu0 %v3686
  %5413 = vmatpush.msra.mxu0 %v3636
  %5414 = vmatpush.msra.mxu0 %v3586
  %5415 = vmatpush.msra.mxu0 %v3536
  %5416 = vmatpush.msra.mxu0 %v3486
  %5417 = vmatpush.msra.mxu0 %v3436
  %5418 = vmatmul.f32.gmra.mxu0 %v1021
  %v5419 = vpop.f32.mrf.mxu0
  %v5420 = vadd.f32 %v5400, %v5419
  %5421 = vdwg.mxu0
  %5422 = vmatpush.msra.mxu0 %v1787
  %5423 = vmatpush.msra.mxu0 %v1737
  %5424 = vmatpush.msra.mxu0 %v1687
  %5425 = vmatpush.msra.mxu0 %v1637
  %5426 = vmatpush.msra.mxu0 %v1587
  %5427 = vmatpush.msra.mxu0 %v1537
  %5428 = vmatpush.msra.mxu0 %v1487
  %5429 = vmatpush.msra.mxu0 %v1437
  %5430 = vmatpush.msra.mxu0 %v1387
  %5431 = vmatpush.msra.mxu0 %v1337
  %5432 = vmatpush.msra.mxu0 %v1287
  %5433 = vmatpush.msra.mxu0 %v1237
  %5434 = vmatpush.msra.mxu0 %v1187
  %5435 = vmatpush.msra.mxu0 %v1137
  %5436 = vmatpush.msra.mxu0 %v1087
  %5437 = vmatpush.msra.mxu0 %v1037
  %5438 = vmatmul.f32.gmra.mxu0 %v1018
  %v5439 = vpop.f32.mrf.mxu0
  %v5440 = vadd.f32 0.0, %v5439
  %5441 = vdwg.mxu0
  %5442 = vmatpush.msra.mxu0 %v2587
  %5443 = vmatpush.msra.mxu0 %v2537
  %5444 = vmatpush.msra.mxu0 %v2487
  %5445 = vmatpush.msra.mxu0 %v2437
  %5446 = vmatpush.msra.mxu0 %v2387
  %5447 = vmatpush.msra.mxu0 %v2337
  %5448 = vmatpush.msra.mxu0 %v2287
  %5449 = vmatpush.msra.mxu0 %v2237
  %5450 = vmatpush.msra.mxu0 %v2187
  %5451 = vmatpush.msra.mxu0 %v2137
  %5452 = vmatpush.msra.mxu0 %v2087
  %5453 = vmatpush.msra.mxu0 %v2037
  %5454 = vmatpush.msra.mxu0 %v1987
  %5455 = vmatpush.msra.mxu0 %v1937
  %5456 = vmatpush.msra.mxu0 %v1887
  %5457 = vmatpush.msra.mxu0 %v1837
  %5458 = vmatmul.f32.gmra.mxu0 %v1019
  %v5459 = vpop.f32.mrf.mxu0
  %v5460 = vadd.f32 %v5440, %v5459
  %5461 = vdwg.mxu0
  %5462 = vmatpush.msra.mxu0 %v3387
  %5463 = vmatpush.msra.mxu0 %v3337
  %5464 = vmatpush.msra.mxu0 %v3287
  %5465 = vmatpush.msra.mxu0 %v3237
  %5466 = vmatpush.msra.mxu0 %v3187
  %5467 = vmatpush.msra.mxu0 %v3137
  %5468 = vmatpush.msra.mxu0 %v3087
  %5469 = vmatpush.msra.mxu0 %v3037
  %5470 = vmatpush.msra.mxu0 %v2987
  %5471 = vmatpush.msra.mxu0 %v2937
  %5472 = vmatpush.msra.mxu0 %v2887
  %5473 = vmatpush.msra.mxu0 %v2837
  %5474 = vmatpush.msra.mxu0 %v2787
  %5475 = vmatpush.msra.mxu0 %v2737
  %5476 = vmatpush.msra.mxu0 %v2687
  %5477 = vmatpush.msra.mxu0 %v2637
  %5478 = vmatmul.f32.gmra.mxu0 %v1020
  %v5479 = vpop.f32.mrf.mxu0
  %v5480 = vadd.f32 %v5460, %v5479
  %5481 = vdwg.mxu0
  %5482 = vmatpush.msra.mxu0 %v4187
  %5483 = vmatpush.msra.mxu0 %v4137
  %5484 = vmatpush.msra.mxu0 %v4087
  %5485 = vmatpush.msra.mxu0 %v4037
  %5486 = vmatpush.msra.mxu0 %v3987
  %5487 = vmatpush.msra.mxu0 %v3937
  %5488 = vmatpush.msra.mxu0 %v3887
  %5489 = vmatpush.msra.mxu0 %v3837
  %5490 = vmatpush.msra.mxu0 %v3787
  %5491 = vmatpush.msra.mxu0 %v3737
  %5492 = vmatpush.msra.mxu0 %v3687
  %5493 = vmatpush.msra.mxu0 %v3637
  %5494 = vmatpush.msra.mxu0 %v3587
  %5495 = vmatpush.msra.mxu0 %v3537
  %5496 = vmatpush.msra.mxu0 %v3487
  %5497 = vmatpush.msra.mxu0 %v3437
  %5498 = vmatmul.f32.gmra.mxu0 %v1021
  %v5499 = vpop.f32.mrf.mxu0
  %v5500 = vadd.f32 %v5480, %v5499
  %5501 = vdwg.mxu0
  %5502 = vmatpush.msra.mxu0 %v1788
  %5503 = vmatpush.msra.mxu0 %v1738
  %5504 = vmatpush.msra.mxu0 %v1688
  %5505 = vmatpush.msra.mxu0 %v1638
  %5506 = vmatpush.msra.mxu0 %v1588
  %5507 = vmatpush.msra.mxu0 %v1538
  %5508 = vmatpush.msra.mxu0 %v1488
  %5509 = vmatpush.msra.mxu0 %v1438
  %5510 = vmatpush.msra.mxu0 %v1388
  %5511 = vmatpush.msra.mxu0 %v1338
  %5512 = vmatpush.msra.mxu0 %v1288
  %5513 = vmatpush.msra.mxu0 %v1238
  %5514 = vmatpush.msra.mxu0 %v1188
  %5515 = vmatpush.msra.mxu0 %v1138
  %5516 = vmatpush.msra.mxu0 %v1088
  %5517 = vmatpush.msra.mxu0 %v1038
  %5518 = vmatmul.f32.gmra.mxu0 %v1018
  %v5519 = vpop.f32.mrf.mxu0
  %v5520 = vadd.f32 0.0, %v5519
  %5521 = vdwg.mxu0
  %5522 = vmatpush.msra.mxu0 %v2588
  %5523 = vmatpush.msra.mxu0 %v2538
  %5524 = vmatpush.msra.mxu0 %v2488
  %5525 = vmatpush.msra.mxu0 %v2438
  %5526 = vmatpush.msra.mxu0 %v2388
  %5527 = vmatpush.msra.mxu0 %v2338
  %5528 = vmatpush.msra.mxu0 %v2288
  %5529 = vmatpush.msra.mxu0 %v2238
  %5530 = vmatpush.msra.mxu0 %v2188
  %5531 = vmatpush.msra.mxu0 %v2138
  %5532 = vmatpush.msra.mxu0 %v2088
  %5533 = vmatpush.msra.mxu0 %v2038
  %5534 = vmatpush.msra.mxu0 %v1988
  %5535 = vmatpush.msra.mxu0 %v1938
  %5536 = vmatpush.msra.mxu0 %v1888
  %5537 = vmatpush.msra.mxu0 %v1838
  %5538 = vmatmul.f32.gmra.mxu0 %v1019
  %v5539 = vpop.f32.mrf.mxu0
  %v5540 = vadd.f32 %v5520, %v5539
  %5541 = vdwg.mxu0
  %5542 = vmatpush.msra.mxu0 %v3388
  %5543 = vmatpush.msra.mxu0 %v3338
  %5544 = vmatpush.msra.mxu0 %v3288
  %5545 = vmatpush.msra.mxu0 %v3238
  %5546 = vmatpush.msra.mxu0 %v3188
  %5547 = vmatpush.msra.mxu0 %v3138
  %5548 = vmatpush.msra.mxu0 %v3088
  %5549 = vmatpush.msra.mxu0 %v3038
  %5550 = vmatpush.msra.mxu0 %v2988
  %5551 = vmatpush.msra.mxu0 %v2938
  %5552 = vmatpush.msra.mxu0 %v2888
  %5553 = vmatpush.msra.mxu0 %v2838
  %5554 = vmatpush.msra.mxu0 %v2788
  %5555 = vmatpush.msra.mxu0 %v2738
  %5556 = vmatpush.msra.mxu0 %v2688
  %5557 = vmatpush.msra.mxu0 %v2638
  %5558 = vmatmul.f32.gmra.mxu0 %v1020
  %v5559 = vpop.f32.mrf.mxu0
  %v5560 = vadd.f32 %v5540, %v5559
  %5561 = vdwg.mxu0
  %5562 = vmatpush.msra.mxu0 %v4188
  %5563 = vmatpush.msra.mxu0 %v4138
  %5564 = vmatpush.msra.mxu0 %v4088
  %5565 = vmatpush.msra.mxu0 %v4038
  %5566 = vmatpush.msra.mxu0 %v3988
  %5567 = vmatpush.msra.mxu0 %v3938
  %5568 = vmatpush.msra.mxu0 %v3888
  %5569 = vmatpush.msra.mxu0 %v3838
  %5570 = vmatpush.msra.mxu0 %v3788
  %5571 = vmatpush.msra.mxu0 %v3738
  %5572 = vmatpush.msra.mxu0 %v3688
  %5573 = vmatpush.msra.mxu0 %v3638
  %5574 = vmatpush.msra.mxu0 %v3588
  %5575 = vmatpush.msra.mxu0 %v3538
  %5576 = vmatpush.msra.mxu0 %v3488
  %5577 = vmatpush.msra.mxu0 %v3438
  %5578 = vmatmul.f32.gmra.mxu0 %v1021
  %v5579 = vpop.f32.mrf.mxu0
  %v5580 = vadd.f32 %v5560, %v5579
  %5581 = vdwg.mxu0
  %5582 = vmatpush.msra.mxu0 %v1789
  %5583 = vmatpush.msra.mxu0 %v1739
  %5584 = vmatpush.msra.mxu0 %v1689
  %5585 = vmatpush.msra.mxu0 %v1639
  %5586 = vmatpush.msra.mxu0 %v1589
  %5587 = vmatpush.msra.mxu0 %v1539
  %5588 = vmatpush.msra.mxu0 %v1489
  %5589 = vmatpush.msra.mxu0 %v1439
  %5590 = vmatpush.msra.mxu0 %v1389
  %5591 = vmatpush.msra.mxu0 %v1339
  %5592 = vmatpush.msra.mxu0 %v1289
  %5593 = vmatpush.msra.mxu0 %v1239
  %5594 = vmatpush.msra.mxu0 %v1189
  %5595 = vmatpush.msra.mxu0 %v1139
  %5596 = vmatpush.msra.mxu0 %v1089
  %5597 = vmatpush.msra.mxu0 %v1039
  %5598 = vmatmul.f32.gmra.mxu0 %v1018
  %v5599 = vpop.f32.mrf.mxu0
  %v5600 = vadd.f32 0.0, %v5599
  %5601 = vdwg.mxu0
  %5602 = vmatpush.msra.mxu0 %v2589
  %5603 = vmatpush.msra.mxu0 %v2539
  %5604 = vmatpush.msra.mxu0 %v2489
  %5605 = vmatpush.msra.mxu0 %v2439
  %5606 = vmatpush.msra.mxu0 %v2389
  %5607 = vmatpush.msra.mxu0 %v2339
  %5608 = vmatpush.msra.mxu0 %v2289
  %5609 = vmatpush.msra.mxu0 %v2239
  %5610 = vmatpush.msra.mxu0 %v2189
  %5611 = vmatpush.msra.mxu0 %v2139
  %5612 = vmatpush.msra.mxu0 %v2089
  %5613 = vmatpush.msra.mxu0 %v2039
  %5614 = vmatpush.msra.mxu0 %v1989
  %5615 = vmatpush.msra.mxu0 %v1939
  %5616 = vmatpush.msra.mxu0 %v1889
  %5617 = vmatpush.msra.mxu0 %v1839
  %5618 = vmatmul.f32.gmra.mxu0 %v1019
  %v5619 = vpop.f32.mrf.mxu0
  %v5620 = vadd.f32 %v5600, %v5619
  %5621 = vdwg.mxu0
  %5622 = vmatpush.msra.mxu0 %v3389
  %5623 = vmatpush.msra.mxu0 %v3339
  %5624 = vmatpush.msra.mxu0 %v3289
  %5625 = vmatpush.msra.mxu0 %v3239
  %5626 = vmatpush.msra.mxu0 %v3189
  %5627 = vmatpush.msra.mxu0 %v3139
  %5628 = vmatpush.msra.mxu0 %v3089
  %5629 = vmatpush.msra.mxu0 %v3039
  %5630 = vmatpush.msra.mxu0 %v2989
  %5631 = vmatpush.msra.mxu0 %v2939
  %5632 = vmatpush.msra.mxu0 %v2889
  %5633 = vmatpush.msra.mxu0 %v2839
  %5634 = vmatpush.msra.mxu0 %v2789
  %5635 = vmatpush.msra.mxu0 %v2739
  %5636 = vmatpush.msra.mxu0 %v2689
  %5637 = vmatpush.msra.mxu0 %v2639
  %5638 = vmatmul.f32.gmra.mxu0 %v1020
  %v5639 = vpop.f32.mrf.mxu0
  %v5640 = vadd.f32 %v5620, %v5639
  %5641 = vdwg.mxu0
  %5642 = vmatpush.msra.mxu0 %v4189
  %5643 = vmatpush.msra.mxu0 %v4139
  %5644 = vmatpush.msra.mxu0 %v4089
  %5645 = vmatpush.msra.mxu0 %v4039
  %5646 = vmatpush.msra.mxu0 %v3989
  %5647 = vmatpush.msra.mxu0 %v3939
  %5648 = vmatpush.msra.mxu0 %v3889
  %5649 = vmatpush.msra.mxu0 %v3839
  %5650 = vmatpush.msra.mxu0 %v3789
  %5651 = vmatpush.msra.mxu0 %v3739
  %5652 = vmatpush.msra.mxu0 %v3689
  %5653 = vmatpush.msra.mxu0 %v3639
  %5654 = vmatpush.msra.mxu0 %v3589
  %5655 = vmatpush.msra.mxu0 %v3539
  %5656 = vmatpush.msra.mxu0 %v3489
  %5657 = vmatpush.msra.mxu0 %v3439
  %5658 = vmatmul.f32.gmra.mxu0 %v1021
  %v5659 = vpop.f32.mrf.mxu0
  %v5660 = vadd.f32 %v5640, %v5659
  %5661 = vdwg.mxu0
  %5662 = vmatpush.msra.mxu0 %v1790
  %5663 = vmatpush.msra.mxu0 %v1740
  %5664 = vmatpush.msra.mxu0 %v1690
  %5665 = vmatpush.msra.mxu0 %v1640
  %5666 = vmatpush.msra.mxu0 %v1590
  %5667 = vmatpush.msra.mxu0 %v1540
  %5668 = vmatpush.msra.mxu0 %v1490
  %5669 = vmatpush.msra.mxu0 %v1440
  %5670 = vmatpush.msra.mxu0 %v1390
  %5671 = vmatpush.msra.mxu0 %v1340
  %5672 = vmatpush.msra.mxu0 %v1290
  %5673 = vmatpush.msra.mxu0 %v1240
  %5674 = vmatpush.msra.mxu0 %v1190
  %5675 = vmatpush.msra.mxu0 %v1140
  %5676 = vmatpush.msra.mxu0 %v1090
  %5677 = vmatpush.msra.mxu0 %v1040
  %5678 = vmatmul.f32.gmra.mxu0 %v1018
  %v5679 = vpop.f32.mrf.mxu0
  %v5680 = vadd.f32 0.0, %v5679
  %5681 = vdwg.mxu0
  %5682 = vmatpush.msra.mxu0 %v2590
  %5683 = vmatpush.msra.mxu0 %v2540
  %5684 = vmatpush.msra.mxu0 %v2490
  %5685 = vmatpush.msra.mxu0 %v2440
  %5686 = vmatpush.msra.mxu0 %v2390
  %5687 = vmatpush.msra.mxu0 %v2340
  %5688 = vmatpush.msra.mxu0 %v2290
  %5689 = vmatpush.msra.mxu0 %v2240
  %5690 = vmatpush.msra.mxu0 %v2190
  %5691 = vmatpush.msra.mxu0 %v2140
  %5692 = vmatpush.msra.mxu0 %v2090
  %5693 = vmatpush.msra.mxu0 %v2040
  %5694 = vmatpush.msra.mxu0 %v1990
  %5695 = vmatpush.msra.mxu0 %v1940
  %5696 = vmatpush.msra.mxu0 %v1890
  %5697 = vmatpush.msra.mxu0 %v1840
  %5698 = vmatmul.f32.gmra.mxu0 %v1019
  %v5699 = vpop.f32.mrf.mxu0
  %v5700 = vadd.f32 %v5680, %v5699
  %5701 = vdwg.mxu0
  %5702 = vmatpush.msra.mxu0 %v3390
  %5703 = vmatpush.msra.mxu0 %v3340
  %5704 = vmatpush.msra.mxu0 %v3290
  %5705 = vmatpush.msra.mxu0 %v3240
  %5706 = vmatpush.msra.mxu0 %v3190
  %5707 = vmatpush.msra.mxu0 %v3140
  %5708 = vmatpush.msra.mxu0 %v3090
  %5709 = vmatpush.msra.mxu0 %v3040
  %5710 = vmatpush.msra.mxu0 %v2990
  %5711 = vmatpush.msra.mxu0 %v2940
  %5712 = vmatpush.msra.mxu0 %v2890
  %5713 = vmatpush.msra.mxu0 %v2840
  %5714 = vmatpush.msra.mxu0 %v2790
  %5715 = vmatpush.msra.mxu0 %v2740
  %5716 = vmatpush.msra.mxu0 %v2690
  %5717 = vmatpush.msra.mxu0 %v2640
  %5718 = vmatmul.f32.gmra.mxu0 %v1020
  %v5719 = vpop.f32.mrf.mxu0
  %v5720 = vadd.f32 %v5700, %v5719
  %5721 = vdwg.mxu0
  %5722 = vmatpush.msra.mxu0 %v4190
  %5723 = vmatpush.msra.mxu0 %v4140
  %5724 = vmatpush.msra.mxu0 %v4090
  %5725 = vmatpush.msra.mxu0 %v4040
  %5726 = vmatpush.msra.mxu0 %v3990
  %5727 = vmatpush.msra.mxu0 %v3940
  %5728 = vmatpush.msra.mxu0 %v3890
  %5729 = vmatpush.msra.mxu0 %v3840
  %5730 = vmatpush.msra.mxu0 %v3790
  %5731 = vmatpush.msra.mxu0 %v3740
  %5732 = vmatpush.msra.mxu0 %v3690
  %5733 = vmatpush.msra.mxu0 %v3640
  %5734 = vmatpush.msra.mxu0 %v3590
  %5735 = vmatpush.msra.mxu0 %v3540
  %5736 = vmatpush.msra.mxu0 %v3490
  %5737 = vmatpush.msra.mxu0 %v3440
  %5738 = vmatmul.f32.gmra.mxu0 %v1021
  %v5739 = vpop.f32.mrf.mxu0
  %v5740 = vadd.f32 %v5720, %v5739
  %5741 = vdwg.mxu0
  %5742 = vmatpush.msra.mxu0 %v1791
  %5743 = vmatpush.msra.mxu0 %v1741
  %5744 = vmatpush.msra.mxu0 %v1691
  %5745 = vmatpush.msra.mxu0 %v1641
  %5746 = vmatpush.msra.mxu0 %v1591
  %5747 = vmatpush.msra.mxu0 %v1541
  %5748 = vmatpush.msra.mxu0 %v1491
  %5749 = vmatpush.msra.mxu0 %v1441
  %5750 = vmatpush.msra.mxu0 %v1391
  %5751 = vmatpush.msra.mxu0 %v1341
  %5752 = vmatpush.msra.mxu0 %v1291
  %5753 = vmatpush.msra.mxu0 %v1241
  %5754 = vmatpush.msra.mxu0 %v1191
  %5755 = vmatpush.msra.mxu0 %v1141
  %5756 = vmatpush.msra.mxu0 %v1091
  %5757 = vmatpush.msra.mxu0 %v1041
  %5758 = vmatmul.f32.gmra.mxu0 %v1018
  %v5759 = vpop.f32.mrf.mxu0
  %v5760 = vadd.f32 0.0, %v5759
  %5761 = vdwg.mxu0
  %5762 = vmatpush.msra.mxu0 %v2591
  %5763 = vmatpush.msra.mxu0 %v2541
  %5764 = vmatpush.msra.mxu0 %v2491
  %5765 = vmatpush.msra.mxu0 %v2441
  %5766 = vmatpush.msra.mxu0 %v2391
  %5767 = vmatpush.msra.mxu0 %v2341
  %5768 = vmatpush.msra.mxu0 %v2291
  %5769 = vmatpush.msra.mxu0 %v2241
  %5770 = vmatpush.msra.mxu0 %v2191
  %5771 = vmatpush.msra.mxu0 %v2141
  %5772 = vmatpush.msra.mxu0 %v2091
  %5773 = vmatpush.msra.mxu0 %v2041
  %5774 = vmatpush.msra.mxu0 %v1991
  %5775 = vmatpush.msra.mxu0 %v1941
  %5776 = vmatpush.msra.mxu0 %v1891
  %5777 = vmatpush.msra.mxu0 %v1841
  %5778 = vmatmul.f32.gmra.mxu0 %v1019
  %v5779 = vpop.f32.mrf.mxu0
  %v5780 = vadd.f32 %v5760, %v5779
  %5781 = vdwg.mxu0
  %5782 = vmatpush.msra.mxu0 %v3391
  %5783 = vmatpush.msra.mxu0 %v3341
  %5784 = vmatpush.msra.mxu0 %v3291
  %5785 = vmatpush.msra.mxu0 %v3241
  %5786 = vmatpush.msra.mxu0 %v3191
  %5787 = vmatpush.msra.mxu0 %v3141
  %5788 = vmatpush.msra.mxu0 %v3091
  %5789 = vmatpush.msra.mxu0 %v3041
  %5790 = vmatpush.msra.mxu0 %v2991
  %5791 = vmatpush.msra.mxu0 %v2941
  %5792 = vmatpush.msra.mxu0 %v2891
  %5793 = vmatpush.msra.mxu0 %v2841
  %5794 = vmatpush.msra.mxu0 %v2791
  %5795 = vmatpush.msra.mxu0 %v2741
  %5796 = vmatpush.msra.mxu0 %v2691
  %5797 = vmatpush.msra.mxu0 %v2641
  %5798 = vmatmul.f32.gmra.mxu0 %v1020
  %v5799 = vpop.f32.mrf.mxu0
  %v5800 = vadd.f32 %v5780, %v5799
  %5801 = vdwg.mxu0
  %5802 = vmatpush.msra.mxu0 %v4191
  %5803 = vmatpush.msra.mxu0 %v4141
  %5804 = vmatpush.msra.mxu0 %v4091
  %5805 = vmatpush.msra.mxu0 %v4041
  %5806 = vmatpush.msra.mxu0 %v3991
  %5807 = vmatpush.msra.mxu0 %v3941
  %5808 = vmatpush.msra.mxu0 %v3891
  %5809 = vmatpush.msra.mxu0 %v3841
  %5810 = vmatpush.msra.mxu0 %v3791
  %5811 = vmatpush.msra.mxu0 %v3741
  %5812 = vmatpush.msra.mxu0 %v3691
  %5813 = vmatpush.msra.mxu0 %v3641
  %5814 = vmatpush.msra.mxu0 %v3591
  %5815 = vmatpush.msra.mxu0 %v3541
  %5816 = vmatpush.msra.mxu0 %v3491
  %5817 = vmatpush.msra.mxu0 %v3441
  %5818 = vmatmul.f32.gmra.mxu0 %v1021
  %v5819 = vpop.f32.mrf.mxu0
  %v5820 = vadd.f32 %v5800, %v5819
  %5821 = vdwg.mxu0
  %5822 = vmatpush.msra.mxu0 %v1792
  %5823 = vmatpush.msra.mxu0 %v1742
  %5824 = vmatpush.msra.mxu0 %v1692
  %5825 = vmatpush.msra.mxu0 %v1642
  %5826 = vmatpush.msra.mxu0 %v1592
  %5827 = vmatpush.msra.mxu0 %v1542
  %5828 = vmatpush.msra.mxu0 %v1492
  %5829 = vmatpush.msra.mxu0 %v1442
  %5830 = vmatpush.msra.mxu0 %v1392
  %5831 = vmatpush.msra.mxu0 %v1342
  %5832 = vmatpush.msra.mxu0 %v1292
  %5833 = vmatpush.msra.mxu0 %v1242
  %5834 = vmatpush.msra.mxu0 %v1192
  %5835 = vmatpush.msra.mxu0 %v1142
  %5836 = vmatpush.msra.mxu0 %v1092
  %5837 = vmatpush.msra.mxu0 %v1042
  %5838 = vmatmul.f32.gmra.mxu0 %v1018
  %v5839 = vpop.f32.mrf.mxu0
  %v5840 = vadd.f32 0.0, %v5839
  %5841 = vdwg.mxu0
  %5842 = vmatpush.msra.mxu0 %v2592
  %5843 = vmatpush.msra.mxu0 %v2542
  %5844 = vmatpush.msra.mxu0 %v2492
  %5845 = vmatpush.msra.mxu0 %v2442
  %5846 = vmatpush.msra.mxu0 %v2392
  %5847 = vmatpush.msra.mxu0 %v2342
  %5848 = vmatpush.msra.mxu0 %v2292
  %5849 = vmatpush.msra.mxu0 %v2242
  %5850 = vmatpush.msra.mxu0 %v2192
  %5851 = vmatpush.msra.mxu0 %v2142
  %5852 = vmatpush.msra.mxu0 %v2092
  %5853 = vmatpush.msra.mxu0 %v2042
  %5854 = vmatpush.msra.mxu0 %v1992
  %5855 = vmatpush.msra.mxu0 %v1942
  %5856 = vmatpush.msra.mxu0 %v1892
  %5857 = vmatpush.msra.mxu0 %v1842
  %5858 = vmatmul.f32.gmra.mxu0 %v1019
  %v5859 = vpop.f32.mrf.mxu0
  %v5860 = vadd.f32 %v5840, %v5859
  %5861 = vdwg.mxu0
  %5862 = vmatpush.msra.mxu0 %v3392
  %5863 = vmatpush.msra.mxu0 %v3342
  %5864 = vmatpush.msra.mxu0 %v3292
  %5865 = vmatpush.msra.mxu0 %v3242
  %5866 = vmatpush.msra.mxu0 %v3192
  %5867 = vmatpush.msra.mxu0 %v3142
  %5868 = vmatpush.msra.mxu0 %v3092
  %5869 = vmatpush.msra.mxu0 %v3042
  %5870 = vmatpush.msra.mxu0 %v2992
  %5871 = vmatpush.msra.mxu0 %v2942
  %5872 = vmatpush.msra.mxu0 %v2892
  %5873 = vmatpush.msra.mxu0 %v2842
  %5874 = vmatpush.msra.mxu0 %v2792
  %5875 = vmatpush.msra.mxu0 %v2742
  %5876 = vmatpush.msra.mxu0 %v2692
  %5877 = vmatpush.msra.mxu0 %v2642
  %5878 = vmatmul.f32.gmra.mxu0 %v1020
  %v5879 = vpop.f32.mrf.mxu0
  %v5880 = vadd.f32 %v5860, %v5879
  %5881 = vdwg.mxu0
  %5882 = vmatpush.msra.mxu0 %v4192
  %5883 = vmatpush.msra.mxu0 %v4142
  %5884 = vmatpush.msra.mxu0 %v4092
  %5885 = vmatpush.msra.mxu0 %v4042
  %5886 = vmatpush.msra.mxu0 %v3992
  %5887 = vmatpush.msra.mxu0 %v3942
  %5888 = vmatpush.msra.mxu0 %v3892
  %5889 = vmatpush.msra.mxu0 %v3842
  %5890 = vmatpush.msra.mxu0 %v3792
  %5891 = vmatpush.msra.mxu0 %v3742
  %5892 = vmatpush.msra.mxu0 %v3692
  %5893 = vmatpush.msra.mxu0 %v3642
  %5894 = vmatpush.msra.mxu0 %v3592
  %5895 = vmatpush.msra.mxu0 %v3542
  %5896 = vmatpush.msra.mxu0 %v3492
  %5897 = vmatpush.msra.mxu0 %v3442
  %5898 = vmatmul.f32.gmra.mxu0 %v1021
  %v5899 = vpop.f32.mrf.mxu0
  %v5900 = vadd.f32 %v5880, %v5899
  %5901 = vdwg.mxu0
  %5902 = vmatpush.msra.mxu0 %v1793
  %5903 = vmatpush.msra.mxu0 %v1743
  %5904 = vmatpush.msra.mxu0 %v1693
  %5905 = vmatpush.msra.mxu0 %v1643
  %5906 = vmatpush.msra.mxu0 %v1593
  %5907 = vmatpush.msra.mxu0 %v1543
  %5908 = vmatpush.msra.mxu0 %v1493
  %5909 = vmatpush.msra.mxu0 %v1443
  %5910 = vmatpush.msra.mxu0 %v1393
  %5911 = vmatpush.msra.mxu0 %v1343
  %5912 = vmatpush.msra.mxu0 %v1293
  %5913 = vmatpush.msra.mxu0 %v1243
  %5914 = vmatpush.msra.mxu0 %v1193
  %5915 = vmatpush.msra.mxu0 %v1143
  %5916 = vmatpush.msra.mxu0 %v1093
  %5917 = vmatpush.msra.mxu0 %v1043
  %5918 = vmatmul.f32.gmra.mxu0 %v1018
  %v5919 = vpop.f32.mrf.mxu0
  %v5920 = vadd.f32 0.0, %v5919
  %5921 = vdwg.mxu0
  %5922 = vmatpush.msra.mxu0 %v2593
  %5923 = vmatpush.msra.mxu0 %v2543
  %5924 = vmatpush.msra.mxu0 %v2493
  %5925 = vmatpush.msra.mxu0 %v2443
  %5926 = vmatpush.msra.mxu0 %v2393
  %5927 = vmatpush.msra.mxu0 %v2343
  %5928 = vmatpush.msra.mxu0 %v2293
  %5929 = vmatpush.msra.mxu0 %v2243
  %5930 = vmatpush.msra.mxu0 %v2193
  %5931 = vmatpush.msra.mxu0 %v2143
  %5932 = vmatpush.msra.mxu0 %v2093
  %5933 = vmatpush.msra.mxu0 %v2043
  %5934 = vmatpush.msra.mxu0 %v1993
  %5935 = vmatpush.msra.mxu0 %v1943
  %5936 = vmatpush.msra.mxu0 %v1893
  %5937 = vmatpush.msra.mxu0 %v1843
  %5938 = vmatmul.f32.gmra.mxu0 %v1019
  %v5939 = vpop.f32.mrf.mxu0
  %v5940 = vadd.f32 %v5920, %v5939
  %5941 = vdwg.mxu0
  %5942 = vmatpush.msra.mxu0 %v3393
  %5943 = vmatpush.msra.mxu0 %v3343
  %5944 = vmatpush.msra.mxu0 %v3293
  %5945 = vmatpush.msra.mxu0 %v3243
  %5946 = vmatpush.msra.mxu0 %v3193
  %5947 = vmatpush.msra.mxu0 %v3143
  %5948 = vmatpush.msra.mxu0 %v3093
  %5949 = vmatpush.msra.mxu0 %v3043
  %5950 = vmatpush.msra.mxu0 %v2993
  %5951 = vmatpush.msra.mxu0 %v2943
  %5952 = vmatpush.msra.mxu0 %v2893
  %5953 = vmatpush.msra.mxu0 %v2843
  %5954 = vmatpush.msra.mxu0 %v2793
  %5955 = vmatpush.msra.mxu0 %v2743
  %5956 = vmatpush.msra.mxu0 %v2693
  %5957 = vmatpush.msra.mxu0 %v2643
  %5958 = vmatmul.f32.gmra.mxu0 %v1020
  %v5959 = vpop.f32.mrf.mxu0
  %v5960 = vadd.f32 %v5940, %v5959
  %5961 = vdwg.mxu0
  %5962 = vmatpush.msra.mxu0 %v4193
  %5963 = vmatpush.msra.mxu0 %v4143
  %5964 = vmatpush.msra.mxu0 %v4093
  %5965 = vmatpush.msra.mxu0 %v4043
  %5966 = vmatpush.msra.mxu0 %v3993
  %5967 = vmatpush.msra.mxu0 %v3943
  %5968 = vmatpush.msra.mxu0 %v3893
  %5969 = vmatpush.msra.mxu0 %v3843
  %5970 = vmatpush.msra.mxu0 %v3793
  %5971 = vmatpush.msra.mxu0 %v3743
  %5972 = vmatpush.msra.mxu0 %v3693
  %5973 = vmatpush.msra.mxu0 %v3643
  %5974 = vmatpush.msra.mxu0 %v3593
  %5975 = vmatpush.msra.mxu0 %v3543
  %5976 = vmatpush.msra.mxu0 %v3493
  %5977 = vmatpush.msra.mxu0 %v3443
  %5978 = vmatmul.f32.gmra.mxu0 %v1021
  %v5979 = vpop.f32.mrf.mxu0
  %v5980 = vadd.f32 %v5960, %v5979
  %5981 = vdwg.mxu0
  %5982 = vmatpush.msra.mxu0 %v1794
  %5983 = vmatpush.msra.mxu0 %v1744
  %5984 = vmatpush.msra.mxu0 %v1694
  %5985 = vmatpush.msra.mxu0 %v1644
  %5986 = vmatpush.msra.mxu0 %v1594
  %5987 = vmatpush.msra.mxu0 %v1544
  %5988 = vmatpush.msra.mxu0 %v1494
  %5989 = vmatpush.msra.mxu0 %v1444
  %5990 = vmatpush.msra.mxu0 %v1394
  %5991 = vmatpush.msra.mxu0 %v1344
  %5992 = vmatpush.msra.mxu0 %v1294
  %5993 = vmatpush.msra.mxu0 %v1244
  %5994 = vmatpush.msra.mxu0 %v1194
  %5995 = vmatpush.msra.mxu0 %v1144
  %5996 = vmatpush.msra.mxu0 %v1094
  %5997 = vmatpush.msra.mxu0 %v1044
  %5998 = vmatmul.f32.gmra.mxu0 %v1018
  %v5999 = vpop.f32.mrf.mxu0
  %v6000 = vadd.f32 0.0, %v5999
  %6001 = vdwg.mxu0
  %6002 = vmatpush.msra.mxu0 %v2594
  %6003 = vmatpush.msra.mxu0 %v2544
  %6004 = vmatpush.msra.mxu0 %v2494
  %6005 = vmatpush.msra.mxu0 %v2444
  %6006 = vmatpush.msra.mxu0 %v2394
  %6007 = vmatpush.msra.mxu0 %v2344
  %6008 = vmatpush.msra.mxu0 %v2294
  %6009 = vmatpush.msra.mxu0 %v2244
  %6010 = vmatpush.msra.mxu0 %v2194
  %6011 = vmatpush.msra.mxu0 %v2144
  %6012 = vmatpush.msra.mxu0 %v2094
  %6013 = vmatpush.msra.mxu0 %v2044
  %6014 = vmatpush.msra.mxu0 %v1994
  %6015 = vmatpush.msra.mxu0 %v1944
  %6016 = vmatpush.msra.mxu0 %v1894
  %6017 = vmatpush.msra.mxu0 %v1844
  %6018 = vmatmul.f32.gmra.mxu0 %v1019
  %v6019 = vpop.f32.mrf.mxu0
  %v6020 = vadd.f32 %v6000, %v6019
  %6021 = vdwg.mxu0
  %6022 = vmatpush.msra.mxu0 %v3394
  %6023 = vmatpush.msra.mxu0 %v3344
  %6024 = vmatpush.msra.mxu0 %v3294
  %6025 = vmatpush.msra.mxu0 %v3244
  %6026 = vmatpush.msra.mxu0 %v3194
  %6027 = vmatpush.msra.mxu0 %v3144
  %6028 = vmatpush.msra.mxu0 %v3094
  %6029 = vmatpush.msra.mxu0 %v3044
  %6030 = vmatpush.msra.mxu0 %v2994
  %6031 = vmatpush.msra.mxu0 %v2944
  %6032 = vmatpush.msra.mxu0 %v2894
  %6033 = vmatpush.msra.mxu0 %v2844
  %6034 = vmatpush.msra.mxu0 %v2794
  %6035 = vmatpush.msra.mxu0 %v2744
  %6036 = vmatpush.msra.mxu0 %v2694
  %6037 = vmatpush.msra.mxu0 %v2644
  %6038 = vmatmul.f32.gmra.mxu0 %v1020
  %v6039 = vpop.f32.mrf.mxu0
  %v6040 = vadd.f32 %v6020, %v6039
  %6041 = vdwg.mxu0
  %6042 = vmatpush.msra.mxu0 %v4194
  %6043 = vmatpush.msra.mxu0 %v4144
  %6044 = vmatpush.msra.mxu0 %v4094
  %6045 = vmatpush.msra.mxu0 %v4044
  %6046 = vmatpush.msra.mxu0 %v3994
  %6047 = vmatpush.msra.mxu0 %v3944
  %6048 = vmatpush.msra.mxu0 %v3894
  %6049 = vmatpush.msra.mxu0 %v3844
  %6050 = vmatpush.msra.mxu0 %v3794
  %6051 = vmatpush.msra.mxu0 %v3744
  %6052 = vmatpush.msra.mxu0 %v3694
  %6053 = vmatpush.msra.mxu0 %v3644
  %6054 = vmatpush.msra.mxu0 %v3594
  %6055 = vmatpush.msra.mxu0 %v3544
  %6056 = vmatpush.msra.mxu0 %v3494
  %6057 = vmatpush.msra.mxu0 %v3444
  %6058 = vmatmul.f32.gmra.mxu0 %v1021
  %v6059 = vpop.f32.mrf.mxu0
  %v6060 = vadd.f32 %v6040, %v6059
  %6061 = vdwg.mxu0
  %6062 = vmatpush.msra.mxu0 %v1795
  %6063 = vmatpush.msra.mxu0 %v1745
  %6064 = vmatpush.msra.mxu0 %v1695
  %6065 = vmatpush.msra.mxu0 %v1645
  %6066 = vmatpush.msra.mxu0 %v1595
  %6067 = vmatpush.msra.mxu0 %v1545
  %6068 = vmatpush.msra.mxu0 %v1495
  %6069 = vmatpush.msra.mxu0 %v1445
  %6070 = vmatpush.msra.mxu0 %v1395
  %6071 = vmatpush.msra.mxu0 %v1345
  %6072 = vmatpush.msra.mxu0 %v1295
  %6073 = vmatpush.msra.mxu0 %v1245
  %6074 = vmatpush.msra.mxu0 %v1195
  %6075 = vmatpush.msra.mxu0 %v1145
  %6076 = vmatpush.msra.mxu0 %v1095
  %6077 = vmatpush.msra.mxu0 %v1045
  %6078 = vmatmul.f32.gmra.mxu0 %v1018
  %v6079 = vpop.f32.mrf.mxu0
  %v6080 = vadd.f32 0.0, %v6079
  %6081 = vdwg.mxu0
  %6082 = vmatpush.msra.mxu0 %v2595
  %6083 = vmatpush.msra.mxu0 %v2545
  %6084 = vmatpush.msra.mxu0 %v2495
  %6085 = vmatpush.msra.mxu0 %v2445
  %6086 = vmatpush.msra.mxu0 %v2395
  %6087 = vmatpush.msra.mxu0 %v2345
  %6088 = vmatpush.msra.mxu0 %v2295
  %6089 = vmatpush.msra.mxu0 %v2245
  %6090 = vmatpush.msra.mxu0 %v2195
  %6091 = vmatpush.msra.mxu0 %v2145
  %6092 = vmatpush.msra.mxu0 %v2095
  %6093 = vmatpush.msra.mxu0 %v2045
  %6094 = vmatpush.msra.mxu0 %v1995
  %6095 = vmatpush.msra.mxu0 %v1945
  %6096 = vmatpush.msra.mxu0 %v1895
  %6097 = vmatpush.msra.mxu0 %v1845
  %6098 = vmatmul.f32.gmra.mxu0 %v1019
  %v6099 = vpop.f32.mrf.mxu0
  %v6100 = vadd.f32 %v6080, %v6099
  %6101 = vdwg.mxu0
  %6102 = vmatpush.msra.mxu0 %v3395
  %6103 = vmatpush.msra.mxu0 %v3345
  %6104 = vmatpush.msra.mxu0 %v3295
  %6105 = vmatpush.msra.mxu0 %v3245
  %6106 = vmatpush.msra.mxu0 %v3195
  %6107 = vmatpush.msra.mxu0 %v3145
  %6108 = vmatpush.msra.mxu0 %v3095
  %6109 = vmatpush.msra.mxu0 %v3045
  %6110 = vmatpush.msra.mxu0 %v2995
  %6111 = vmatpush.msra.mxu0 %v2945
  %6112 = vmatpush.msra.mxu0 %v2895
  %6113 = vmatpush.msra.mxu0 %v2845
  %6114 = vmatpush.msra.mxu0 %v2795
  %6115 = vmatpush.msra.mxu0 %v2745
  %6116 = vmatpush.msra.mxu0 %v2695
  %6117 = vmatpush.msra.mxu0 %v2645
  %6118 = vmatmul.f32.gmra.mxu0 %v1020
  %v6119 = vpop.f32.mrf.mxu0
  %v6120 = vadd.f32 %v6100, %v6119
  %6121 = vdwg.mxu0
  %6122 = vmatpush.msra.mxu0 %v4195
  %6123 = vmatpush.msra.mxu0 %v4145
  %6124 = vmatpush.msra.mxu0 %v4095
  %6125 = vmatpush.msra.mxu0 %v4045
  %6126 = vmatpush.msra.mxu0 %v3995
  %6127 = vmatpush.msra.mxu0 %v3945
  %6128 = vmatpush.msra.mxu0 %v3895
  %6129 = vmatpush.msra.mxu0 %v3845
  %6130 = vmatpush.msra.mxu0 %v3795
  %6131 = vmatpush.msra.mxu0 %v3745
  %6132 = vmatpush.msra.mxu0 %v3695
  %6133 = vmatpush.msra.mxu0 %v3645
  %6134 = vmatpush.msra.mxu0 %v3595
  %6135 = vmatpush.msra.mxu0 %v3545
  %6136 = vmatpush.msra.mxu0 %v3495
  %6137 = vmatpush.msra.mxu0 %v3445
  %6138 = vmatmul.f32.gmra.mxu0 %v1021
  %v6139 = vpop.f32.mrf.mxu0
  %v6140 = vadd.f32 %v6120, %v6139
  %6141 = vdwg.mxu0
  %6142 = vmatpush.msra.mxu0 %v1796
  %6143 = vmatpush.msra.mxu0 %v1746
  %6144 = vmatpush.msra.mxu0 %v1696
  %6145 = vmatpush.msra.mxu0 %v1646
  %6146 = vmatpush.msra.mxu0 %v1596
  %6147 = vmatpush.msra.mxu0 %v1546
  %6148 = vmatpush.msra.mxu0 %v1496
  %6149 = vmatpush.msra.mxu0 %v1446
  %6150 = vmatpush.msra.mxu0 %v1396
  %6151 = vmatpush.msra.mxu0 %v1346
  %6152 = vmatpush.msra.mxu0 %v1296
  %6153 = vmatpush.msra.mxu0 %v1246
  %6154 = vmatpush.msra.mxu0 %v1196
  %6155 = vmatpush.msra.mxu0 %v1146
  %6156 = vmatpush.msra.mxu0 %v1096
  %6157 = vmatpush.msra.mxu0 %v1046
  %6158 = vmatmul.f32.gmra.mxu0 %v1018
  %v6159 = vpop.f32.mrf.mxu0
  %v6160 = vadd.f32 0.0, %v6159
  %6161 = vdwg.mxu0
  %6162 = vmatpush.msra.mxu0 %v2596
  %6163 = vmatpush.msra.mxu0 %v2546
  %6164 = vmatpush.msra.mxu0 %v2496
  %6165 = vmatpush.msra.mxu0 %v2446
  %6166 = vmatpush.msra.mxu0 %v2396
  %6167 = vmatpush.msra.mxu0 %v2346
  %6168 = vmatpush.msra.mxu0 %v2296
  %6169 = vmatpush.msra.mxu0 %v2246
  %6170 = vmatpush.msra.mxu0 %v2196
  %6171 = vmatpush.msra.mxu0 %v2146
  %6172 = vmatpush.msra.mxu0 %v2096
  %6173 = vmatpush.msra.mxu0 %v2046
  %6174 = vmatpush.msra.mxu0 %v1996
  %6175 = vmatpush.msra.mxu0 %v1946
  %6176 = vmatpush.msra.mxu0 %v1896
  %6177 = vmatpush.msra.mxu0 %v1846
  %6178 = vmatmul.f32.gmra.mxu0 %v1019
  %v6179 = vpop.f32.mrf.mxu0
  %v6180 = vadd.f32 %v6160, %v6179
  %6181 = vdwg.mxu0
  %6182 = vmatpush.msra.mxu0 %v3396
  %6183 = vmatpush.msra.mxu0 %v3346
  %6184 = vmatpush.msra.mxu0 %v3296
  %6185 = vmatpush.msra.mxu0 %v3246
  %6186 = vmatpush.msra.mxu0 %v3196
  %6187 = vmatpush.msra.mxu0 %v3146
  %6188 = vmatpush.msra.mxu0 %v3096
  %6189 = vmatpush.msra.mxu0 %v3046
  %6190 = vmatpush.msra.mxu0 %v2996
  %6191 = vmatpush.msra.mxu0 %v2946
  %6192 = vmatpush.msra.mxu0 %v2896
  %6193 = vmatpush.msra.mxu0 %v2846
  %6194 = vmatpush.msra.mxu0 %v2796
  %6195 = vmatpush.msra.mxu0 %v2746
  %6196 = vmatpush.msra.mxu0 %v2696
  %6197 = vmatpush.msra.mxu0 %v2646
  %6198 = vmatmul.f32.gmra.mxu0 %v1020
  %v6199 = vpop.f32.mrf.mxu0
  %v6200 = vadd.f32 %v6180, %v6199
  %6201 = vdwg.mxu0
  %6202 = vmatpush.msra.mxu0 %v4196
  %6203 = vmatpush.msra.mxu0 %v4146
  %6204 = vmatpush.msra.mxu0 %v4096
  %6205 = vmatpush.msra.mxu0 %v4046
  %6206 = vmatpush.msra.mxu0 %v3996
  %6207 = vmatpush.msra.mxu0 %v3946
  %6208 = vmatpush.msra.mxu0 %v3896
  %6209 = vmatpush.msra.mxu0 %v3846
  %6210 = vmatpush.msra.mxu0 %v3796
  %6211 = vmatpush.msra.mxu0 %v3746
  %6212 = vmatpush.msra.mxu0 %v3696
  %6213 = vmatpush.msra.mxu0 %v3646
  %6214 = vmatpush.msra.mxu0 %v3596
  %6215 = vmatpush.msra.mxu0 %v3546
  %6216 = vmatpush.msra.mxu0 %v3496
  %6217 = vmatpush.msra.mxu0 %v3446
  %6218 = vmatmul.f32.gmra.mxu0 %v1021
  %v6219 = vpop.f32.mrf.mxu0
  %v6220 = vadd.f32 %v6200, %v6219
  %6221 = vdwg.mxu0
  %6222 = vmatpush.msra.mxu0 %v1797
  %6223 = vmatpush.msra.mxu0 %v1747
  %6224 = vmatpush.msra.mxu0 %v1697
  %6225 = vmatpush.msra.mxu0 %v1647
  %6226 = vmatpush.msra.mxu0 %v1597
  %6227 = vmatpush.msra.mxu0 %v1547
  %6228 = vmatpush.msra.mxu0 %v1497
  %6229 = vmatpush.msra.mxu0 %v1447
  %6230 = vmatpush.msra.mxu0 %v1397
  %6231 = vmatpush.msra.mxu0 %v1347
  %6232 = vmatpush.msra.mxu0 %v1297
  %6233 = vmatpush.msra.mxu0 %v1247
  %6234 = vmatpush.msra.mxu0 %v1197
  %6235 = vmatpush.msra.mxu0 %v1147
  %6236 = vmatpush.msra.mxu0 %v1097
  %6237 = vmatpush.msra.mxu0 %v1047
  %6238 = vmatmul.f32.gmra.mxu0 %v1018
  %v6239 = vpop.f32.mrf.mxu0
  %v6240 = vadd.f32 0.0, %v6239
  %6241 = vdwg.mxu0
  %6242 = vmatpush.msra.mxu0 %v2597
  %6243 = vmatpush.msra.mxu0 %v2547
  %6244 = vmatpush.msra.mxu0 %v2497
  %6245 = vmatpush.msra.mxu0 %v2447
  %6246 = vmatpush.msra.mxu0 %v2397
  %6247 = vmatpush.msra.mxu0 %v2347
  %6248 = vmatpush.msra.mxu0 %v2297
  %6249 = vmatpush.msra.mxu0 %v2247
  %6250 = vmatpush.msra.mxu0 %v2197
  %6251 = vmatpush.msra.mxu0 %v2147
  %6252 = vmatpush.msra.mxu0 %v2097
  %6253 = vmatpush.msra.mxu0 %v2047
  %6254 = vmatpush.msra.mxu0 %v1997
  %6255 = vmatpush.msra.mxu0 %v1947
  %6256 = vmatpush.msra.mxu0 %v1897
  %6257 = vmatpush.msra.mxu0 %v1847
  %6258 = vmatmul.f32.gmra.mxu0 %v1019
  %v6259 = vpop.f32.mrf.mxu0
  %v6260 = vadd.f32 %v6240, %v6259
  %6261 = vdwg.mxu0
  %6262 = vmatpush.msra.mxu0 %v3397
  %6263 = vmatpush.msra.mxu0 %v3347
  %6264 = vmatpush.msra.mxu0 %v3297
  %6265 = vmatpush.msra.mxu0 %v3247
  %6266 = vmatpush.msra.mxu0 %v3197
  %6267 = vmatpush.msra.mxu0 %v3147
  %6268 = vmatpush.msra.mxu0 %v3097
  %6269 = vmatpush.msra.mxu0 %v3047
  %6270 = vmatpush.msra.mxu0 %v2997
  %6271 = vmatpush.msra.mxu0 %v2947
  %6272 = vmatpush.msra.mxu0 %v2897
  %6273 = vmatpush.msra.mxu0 %v2847
  %6274 = vmatpush.msra.mxu0 %v2797
  %6275 = vmatpush.msra.mxu0 %v2747
  %6276 = vmatpush.msra.mxu0 %v2697
  %6277 = vmatpush.msra.mxu0 %v2647
  %6278 = vmatmul.f32.gmra.mxu0 %v1020
  %v6279 = vpop.f32.mrf.mxu0
  %v6280 = vadd.f32 %v6260, %v6279
  %6281 = vdwg.mxu0
  %6282 = vmatpush.msra.mxu0 %v4197
  %6283 = vmatpush.msra.mxu0 %v4147
  %6284 = vmatpush.msra.mxu0 %v4097
  %6285 = vmatpush.msra.mxu0 %v4047
  %6286 = vmatpush.msra.mxu0 %v3997
  %6287 = vmatpush.msra.mxu0 %v3947
  %6288 = vmatpush.msra.mxu0 %v3897
  %6289 = vmatpush.msra.mxu0 %v3847
  %6290 = vmatpush.msra.mxu0 %v3797
  %6291 = vmatpush.msra.mxu0 %v3747
  %6292 = vmatpush.msra.mxu0 %v3697
  %6293 = vmatpush.msra.mxu0 %v3647
  %6294 = vmatpush.msra.mxu0 %v3597
  %6295 = vmatpush.msra.mxu0 %v3547
  %6296 = vmatpush.msra.mxu0 %v3497
  %6297 = vmatpush.msra.mxu0 %v3447
  %6298 = vmatmul.f32.gmra.mxu0 %v1021
  %v6299 = vpop.f32.mrf.mxu0
  %v6300 = vadd.f32 %v6280, %v6299
  %6301 = vdwg.mxu0
  %6302 = vmatpush.msra.mxu0 %v1798
  %6303 = vmatpush.msra.mxu0 %v1748
  %6304 = vmatpush.msra.mxu0 %v1698
  %6305 = vmatpush.msra.mxu0 %v1648
  %6306 = vmatpush.msra.mxu0 %v1598
  %6307 = vmatpush.msra.mxu0 %v1548
  %6308 = vmatpush.msra.mxu0 %v1498
  %6309 = vmatpush.msra.mxu0 %v1448
  %6310 = vmatpush.msra.mxu0 %v1398
  %6311 = vmatpush.msra.mxu0 %v1348
  %6312 = vmatpush.msra.mxu0 %v1298
  %6313 = vmatpush.msra.mxu0 %v1248
  %6314 = vmatpush.msra.mxu0 %v1198
  %6315 = vmatpush.msra.mxu0 %v1148
  %6316 = vmatpush.msra.mxu0 %v1098
  %6317 = vmatpush.msra.mxu0 %v1048
  %6318 = vmatmul.f32.gmra.mxu0 %v1018
  %v6319 = vpop.f32.mrf.mxu0
  %v6320 = vadd.f32 0.0, %v6319
  %6321 = vdwg.mxu0
  %6322 = vmatpush.msra.mxu0 %v2598
  %6323 = vmatpush.msra.mxu0 %v2548
  %6324 = vmatpush.msra.mxu0 %v2498
  %6325 = vmatpush.msra.mxu0 %v2448
  %6326 = vmatpush.msra.mxu0 %v2398
  %6327 = vmatpush.msra.mxu0 %v2348
  %6328 = vmatpush.msra.mxu0 %v2298
  %6329 = vmatpush.msra.mxu0 %v2248
  %6330 = vmatpush.msra.mxu0 %v2198
  %6331 = vmatpush.msra.mxu0 %v2148
  %6332 = vmatpush.msra.mxu0 %v2098
  %6333 = vmatpush.msra.mxu0 %v2048
  %6334 = vmatpush.msra.mxu0 %v1998
  %6335 = vmatpush.msra.mxu0 %v1948
  %6336 = vmatpush.msra.mxu0 %v1898
  %6337 = vmatpush.msra.mxu0 %v1848
  %6338 = vmatmul.f32.gmra.mxu0 %v1019
  %v6339 = vpop.f32.mrf.mxu0
  %v6340 = vadd.f32 %v6320, %v6339
  %6341 = vdwg.mxu0
  %6342 = vmatpush.msra.mxu0 %v3398
  %6343 = vmatpush.msra.mxu0 %v3348
  %6344 = vmatpush.msra.mxu0 %v3298
  %6345 = vmatpush.msra.mxu0 %v3248
  %6346 = vmatpush.msra.mxu0 %v3198
  %6347 = vmatpush.msra.mxu0 %v3148
  %6348 = vmatpush.msra.mxu0 %v3098
  %6349 = vmatpush.msra.mxu0 %v3048
  %6350 = vmatpush.msra.mxu0 %v2998
  %6351 = vmatpush.msra.mxu0 %v2948
  %6352 = vmatpush.msra.mxu0 %v2898
  %6353 = vmatpush.msra.mxu0 %v2848
  %6354 = vmatpush.msra.mxu0 %v2798
  %6355 = vmatpush.msra.mxu0 %v2748
  %6356 = vmatpush.msra.mxu0 %v2698
  %6357 = vmatpush.msra.mxu0 %v2648
  %6358 = vmatmul.f32.gmra.mxu0 %v1020
  %v6359 = vpop.f32.mrf.mxu0
  %v6360 = vadd.f32 %v6340, %v6359
  %6361 = vdwg.mxu0
  %6362 = vmatpush.msra.mxu0 %v4198
  %6363 = vmatpush.msra.mxu0 %v4148
  %6364 = vmatpush.msra.mxu0 %v4098
  %6365 = vmatpush.msra.mxu0 %v4048
  %6366 = vmatpush.msra.mxu0 %v3998
  %6367 = vmatpush.msra.mxu0 %v3948
  %6368 = vmatpush.msra.mxu0 %v3898
  %6369 = vmatpush.msra.mxu0 %v3848
  %6370 = vmatpush.msra.mxu0 %v3798
  %6371 = vmatpush.msra.mxu0 %v3748
  %6372 = vmatpush.msra.mxu0 %v3698
  %6373 = vmatpush.msra.mxu0 %v3648
  %6374 = vmatpush.msra.mxu0 %v3598
  %6375 = vmatpush.msra.mxu0 %v3548
  %6376 = vmatpush.msra.mxu0 %v3498
  %6377 = vmatpush.msra.mxu0 %v3448
  %6378 = vmatmul.f32.gmra.mxu0 %v1021
  %v6379 = vpop.f32.mrf.mxu0
  %v6380 = vadd.f32 %v6360, %v6379
  %6381 = vdwg.mxu0
  %6382 = vmatpush.msra.mxu0 %v1799
  %6383 = vmatpush.msra.mxu0 %v1749
  %6384 = vmatpush.msra.mxu0 %v1699
  %6385 = vmatpush.msra.mxu0 %v1649
  %6386 = vmatpush.msra.mxu0 %v1599
  %6387 = vmatpush.msra.mxu0 %v1549
  %6388 = vmatpush.msra.mxu0 %v1499
  %6389 = vmatpush.msra.mxu0 %v1449
  %6390 = vmatpush.msra.mxu0 %v1399
  %6391 = vmatpush.msra.mxu0 %v1349
  %6392 = vmatpush.msra.mxu0 %v1299
  %6393 = vmatpush.msra.mxu0 %v1249
  %6394 = vmatpush.msra.mxu0 %v1199
  %6395 = vmatpush.msra.mxu0 %v1149
  %6396 = vmatpush.msra.mxu0 %v1099
  %6397 = vmatpush.msra.mxu0 %v1049
  %6398 = vmatmul.f32.gmra.mxu0 %v1018
  %v6399 = vpop.f32.mrf.mxu0
  %v6400 = vadd.f32 0.0, %v6399
  %6401 = vdwg.mxu0
  %6402 = vmatpush.msra.mxu0 %v2599
  %6403 = vmatpush.msra.mxu0 %v2549
  %6404 = vmatpush.msra.mxu0 %v2499
  %6405 = vmatpush.msra.mxu0 %v2449
  %6406 = vmatpush.msra.mxu0 %v2399
  %6407 = vmatpush.msra.mxu0 %v2349
  %6408 = vmatpush.msra.mxu0 %v2299
  %6409 = vmatpush.msra.mxu0 %v2249
  %6410 = vmatpush.msra.mxu0 %v2199
  %6411 = vmatpush.msra.mxu0 %v2149
  %6412 = vmatpush.msra.mxu0 %v2099
  %6413 = vmatpush.msra.mxu0 %v2049
  %6414 = vmatpush.msra.mxu0 %v1999
  %6415 = vmatpush.msra.mxu0 %v1949
  %6416 = vmatpush.msra.mxu0 %v1899
  %6417 = vmatpush.msra.mxu0 %v1849
  %6418 = vmatmul.f32.gmra.mxu0 %v1019
  %v6419 = vpop.f32.mrf.mxu0
  %v6420 = vadd.f32 %v6400, %v6419
  %6421 = vdwg.mxu0
  %6422 = vmatpush.msra.mxu0 %v3399
  %6423 = vmatpush.msra.mxu0 %v3349
  %6424 = vmatpush.msra.mxu0 %v3299
  %6425 = vmatpush.msra.mxu0 %v3249
  %6426 = vmatpush.msra.mxu0 %v3199
  %6427 = vmatpush.msra.mxu0 %v3149
  %6428 = vmatpush.msra.mxu0 %v3099
  %6429 = vmatpush.msra.mxu0 %v3049
  %6430 = vmatpush.msra.mxu0 %v2999
  %6431 = vmatpush.msra.mxu0 %v2949
  %6432 = vmatpush.msra.mxu0 %v2899
  %6433 = vmatpush.msra.mxu0 %v2849
  %6434 = vmatpush.msra.mxu0 %v2799
  %6435 = vmatpush.msra.mxu0 %v2749
  %6436 = vmatpush.msra.mxu0 %v2699
  %6437 = vmatpush.msra.mxu0 %v2649
  %6438 = vmatmul.f32.gmra.mxu0 %v1020
  %v6439 = vpop.f32.mrf.mxu0
  %v6440 = vadd.f32 %v6420, %v6439
  %6441 = vdwg.mxu0
  %6442 = vmatpush.msra.mxu0 %v4199
  %6443 = vmatpush.msra.mxu0 %v4149
  %6444 = vmatpush.msra.mxu0 %v4099
  %6445 = vmatpush.msra.mxu0 %v4049
  %6446 = vmatpush.msra.mxu0 %v3999
  %6447 = vmatpush.msra.mxu0 %v3949
  %6448 = vmatpush.msra.mxu0 %v3899
  %6449 = vmatpush.msra.mxu0 %v3849
  %6450 = vmatpush.msra.mxu0 %v3799
  %6451 = vmatpush.msra.mxu0 %v3749
  %6452 = vmatpush.msra.mxu0 %v3699
  %6453 = vmatpush.msra.mxu0 %v3649
  %6454 = vmatpush.msra.mxu0 %v3599
  %6455 = vmatpush.msra.mxu0 %v3549
  %6456 = vmatpush.msra.mxu0 %v3499
  %6457 = vmatpush.msra.mxu0 %v3449
  %6458 = vmatmul.f32.gmra.mxu0 %v1021
  %v6459 = vpop.f32.mrf.mxu0
  %v6460 = vadd.f32 %v6440, %v6459
  %6461 = vdwg.mxu0
  %6462 = vmatpush.msra.mxu0 %v1800
  %6463 = vmatpush.msra.mxu0 %v1750
  %6464 = vmatpush.msra.mxu0 %v1700
  %6465 = vmatpush.msra.mxu0 %v1650
  %6466 = vmatpush.msra.mxu0 %v1600
  %6467 = vmatpush.msra.mxu0 %v1550
  %6468 = vmatpush.msra.mxu0 %v1500
  %6469 = vmatpush.msra.mxu0 %v1450
  %6470 = vmatpush.msra.mxu0 %v1400
  %6471 = vmatpush.msra.mxu0 %v1350
  %6472 = vmatpush.msra.mxu0 %v1300
  %6473 = vmatpush.msra.mxu0 %v1250
  %6474 = vmatpush.msra.mxu0 %v1200
  %6475 = vmatpush.msra.mxu0 %v1150
  %6476 = vmatpush.msra.mxu0 %v1100
  %6477 = vmatpush.msra.mxu0 %v1050
  %6478 = vmatmul.f32.gmra.mxu0 %v1018
  %v6479 = vpop.f32.mrf.mxu0
  %v6480 = vadd.f32 0.0, %v6479
  %6481 = vdwg.mxu0
  %6482 = vmatpush.msra.mxu0 %v2600
  %6483 = vmatpush.msra.mxu0 %v2550
  %6484 = vmatpush.msra.mxu0 %v2500
  %6485 = vmatpush.msra.mxu0 %v2450
  %6486 = vmatpush.msra.mxu0 %v2400
  %6487 = vmatpush.msra.mxu0 %v2350
  %6488 = vmatpush.msra.mxu0 %v2300
  %6489 = vmatpush.msra.mxu0 %v2250
  %6490 = vmatpush.msra.mxu0 %v2200
  %6491 = vmatpush.msra.mxu0 %v2150
  %6492 = vmatpush.msra.mxu0 %v2100
  %6493 = vmatpush.msra.mxu0 %v2050
  %6494 = vmatpush.msra.mxu0 %v2000
  %6495 = vmatpush.msra.mxu0 %v1950
  %6496 = vmatpush.msra.mxu0 %v1900
  %6497 = vmatpush.msra.mxu0 %v1850
  %6498 = vmatmul.f32.gmra.mxu0 %v1019
  %v6499 = vpop.f32.mrf.mxu0
  %v6500 = vadd.f32 %v6480, %v6499
  %6501 = vdwg.mxu0
  %6502 = vmatpush.msra.mxu0 %v3400
  %6503 = vmatpush.msra.mxu0 %v3350
  %6504 = vmatpush.msra.mxu0 %v3300
  %6505 = vmatpush.msra.mxu0 %v3250
  %6506 = vmatpush.msra.mxu0 %v3200
  %6507 = vmatpush.msra.mxu0 %v3150
  %6508 = vmatpush.msra.mxu0 %v3100
  %6509 = vmatpush.msra.mxu0 %v3050
  %6510 = vmatpush.msra.mxu0 %v3000
  %6511 = vmatpush.msra.mxu0 %v2950
  %6512 = vmatpush.msra.mxu0 %v2900
  %6513 = vmatpush.msra.mxu0 %v2850
  %6514 = vmatpush.msra.mxu0 %v2800
  %6515 = vmatpush.msra.mxu0 %v2750
  %6516 = vmatpush.msra.mxu0 %v2700
  %6517 = vmatpush.msra.mxu0 %v2650
  %6518 = vmatmul.f32.gmra.mxu0 %v1020
  %v6519 = vpop.f32.mrf.mxu0
  %v6520 = vadd.f32 %v6500, %v6519
  %6521 = vdwg.mxu0
  %6522 = vmatpush.msra.mxu0 %v4200
  %6523 = vmatpush.msra.mxu0 %v4150
  %6524 = vmatpush.msra.mxu0 %v4100
  %6525 = vmatpush.msra.mxu0 %v4050
  %6526 = vmatpush.msra.mxu0 %v4000
  %6527 = vmatpush.msra.mxu0 %v3950
  %6528 = vmatpush.msra.mxu0 %v3900
  %6529 = vmatpush.msra.mxu0 %v3850
  %6530 = vmatpush.msra.mxu0 %v3800
  %6531 = vmatpush.msra.mxu0 %v3750
  %6532 = vmatpush.msra.mxu0 %v3700
  %6533 = vmatpush.msra.mxu0 %v3650
  %6534 = vmatpush.msra.mxu0 %v3600
  %6535 = vmatpush.msra.mxu0 %v3550
  %6536 = vmatpush.msra.mxu0 %v3500
  %6537 = vmatpush.msra.mxu0 %v3450
  %6538 = vmatmul.f32.gmra.mxu0 %v1021
  %v6539 = vpop.f32.mrf.mxu0
  %v6540 = vadd.f32 %v6520, %v6539
  %6541 = vdwg.mxu0
  %6542 = vmatpush.msra.mxu0 %v1801
  %6543 = vmatpush.msra.mxu0 %v1751
  %6544 = vmatpush.msra.mxu0 %v1701
  %6545 = vmatpush.msra.mxu0 %v1651
  %6546 = vmatpush.msra.mxu0 %v1601
  %6547 = vmatpush.msra.mxu0 %v1551
  %6548 = vmatpush.msra.mxu0 %v1501
  %6549 = vmatpush.msra.mxu0 %v1451
  %6550 = vmatpush.msra.mxu0 %v1401
  %6551 = vmatpush.msra.mxu0 %v1351
  %6552 = vmatpush.msra.mxu0 %v1301
  %6553 = vmatpush.msra.mxu0 %v1251
  %6554 = vmatpush.msra.mxu0 %v1201
  %6555 = vmatpush.msra.mxu0 %v1151
  %6556 = vmatpush.msra.mxu0 %v1101
  %6557 = vmatpush.msra.mxu0 %v1051
  %6558 = vmatmul.f32.gmra.mxu0 %v1018
  %v6559 = vpop.f32.mrf.mxu0
  %v6560 = vadd.f32 0.0, %v6559
  %6561 = vdwg.mxu0
  %6562 = vmatpush.msra.mxu0 %v2601
  %6563 = vmatpush.msra.mxu0 %v2551
  %6564 = vmatpush.msra.mxu0 %v2501
  %6565 = vmatpush.msra.mxu0 %v2451
  %6566 = vmatpush.msra.mxu0 %v2401
  %6567 = vmatpush.msra.mxu0 %v2351
  %6568 = vmatpush.msra.mxu0 %v2301
  %6569 = vmatpush.msra.mxu0 %v2251
  %6570 = vmatpush.msra.mxu0 %v2201
  %6571 = vmatpush.msra.mxu0 %v2151
  %6572 = vmatpush.msra.mxu0 %v2101
  %6573 = vmatpush.msra.mxu0 %v2051
  %6574 = vmatpush.msra.mxu0 %v2001
  %6575 = vmatpush.msra.mxu0 %v1951
  %6576 = vmatpush.msra.mxu0 %v1901
  %6577 = vmatpush.msra.mxu0 %v1851
  %6578 = vmatmul.f32.gmra.mxu0 %v1019
  %v6579 = vpop.f32.mrf.mxu0
  %v6580 = vadd.f32 %v6560, %v6579
  %6581 = vdwg.mxu0
  %6582 = vmatpush.msra.mxu0 %v3401
  %6583 = vmatpush.msra.mxu0 %v3351
  %6584 = vmatpush.msra.mxu0 %v3301
  %6585 = vmatpush.msra.mxu0 %v3251
  %6586 = vmatpush.msra.mxu0 %v3201
  %6587 = vmatpush.msra.mxu0 %v3151
  %6588 = vmatpush.msra.mxu0 %v3101
  %6589 = vmatpush.msra.mxu0 %v3051
  %6590 = vmatpush.msra.mxu0 %v3001
  %6591 = vmatpush.msra.mxu0 %v2951
  %6592 = vmatpush.msra.mxu0 %v2901
  %6593 = vmatpush.msra.mxu0 %v2851
  %6594 = vmatpush.msra.mxu0 %v2801
  %6595 = vmatpush.msra.mxu0 %v2751
  %6596 = vmatpush.msra.mxu0 %v2701
  %6597 = vmatpush.msra.mxu0 %v2651
  %6598 = vmatmul.f32.gmra.mxu0 %v1020
  %v6599 = vpop.f32.mrf.mxu0
  %v6600 = vadd.f32 %v6580, %v6599
  %6601 = vdwg.mxu0
  %6602 = vmatpush.msra.mxu0 %v4201
  %6603 = vmatpush.msra.mxu0 %v4151
  %6604 = vmatpush.msra.mxu0 %v4101
  %6605 = vmatpush.msra.mxu0 %v4051
  %6606 = vmatpush.msra.mxu0 %v4001
  %6607 = vmatpush.msra.mxu0 %v3951
  %6608 = vmatpush.msra.mxu0 %v3901
  %6609 = vmatpush.msra.mxu0 %v3851
  %6610 = vmatpush.msra.mxu0 %v3801
  %6611 = vmatpush.msra.mxu0 %v3751
  %6612 = vmatpush.msra.mxu0 %v3701
  %6613 = vmatpush.msra.mxu0 %v3651
  %6614 = vmatpush.msra.mxu0 %v3601
  %6615 = vmatpush.msra.mxu0 %v3551
  %6616 = vmatpush.msra.mxu0 %v3501
  %6617 = vmatpush.msra.mxu0 %v3451
  %6618 = vmatmul.f32.gmra.mxu0 %v1021
  %v6619 = vpop.f32.mrf.mxu0
  %v6620 = vadd.f32 %v6600, %v6619
  %6621 = vdwg.mxu0
  %6622 = vmatpush.msra.mxu0 %v1802
  %6623 = vmatpush.msra.mxu0 %v1752
  %6624 = vmatpush.msra.mxu0 %v1702
  %6625 = vmatpush.msra.mxu0 %v1652
  %6626 = vmatpush.msra.mxu0 %v1602
  %6627 = vmatpush.msra.mxu0 %v1552
  %6628 = vmatpush.msra.mxu0 %v1502
  %6629 = vmatpush.msra.mxu0 %v1452
  %6630 = vmatpush.msra.mxu0 %v1402
  %6631 = vmatpush.msra.mxu0 %v1352
  %6632 = vmatpush.msra.mxu0 %v1302
  %6633 = vmatpush.msra.mxu0 %v1252
  %6634 = vmatpush.msra.mxu0 %v1202
  %6635 = vmatpush.msra.mxu0 %v1152
  %6636 = vmatpush.msra.mxu0 %v1102
  %6637 = vmatpush.msra.mxu0 %v1052
  %6638 = vmatmul.f32.gmra.mxu0 %v1018
  %v6639 = vpop.f32.mrf.mxu0
  %v6640 = vadd.f32 0.0, %v6639
  %6641 = vdwg.mxu0
  %6642 = vmatpush.msra.mxu0 %v2602
  %6643 = vmatpush.msra.mxu0 %v2552
  %6644 = vmatpush.msra.mxu0 %v2502
  %6645 = vmatpush.msra.mxu0 %v2452
  %6646 = vmatpush.msra.mxu0 %v2402
  %6647 = vmatpush.msra.mxu0 %v2352
  %6648 = vmatpush.msra.mxu0 %v2302
  %6649 = vmatpush.msra.mxu0 %v2252
  %6650 = vmatpush.msra.mxu0 %v2202
  %6651 = vmatpush.msra.mxu0 %v2152
  %6652 = vmatpush.msra.mxu0 %v2102
  %6653 = vmatpush.msra.mxu0 %v2052
  %6654 = vmatpush.msra.mxu0 %v2002
  %6655 = vmatpush.msra.mxu0 %v1952
  %6656 = vmatpush.msra.mxu0 %v1902
  %6657 = vmatpush.msra.mxu0 %v1852
  %6658 = vmatmul.f32.gmra.mxu0 %v1019
  %v6659 = vpop.f32.mrf.mxu0
  %v6660 = vadd.f32 %v6640, %v6659
  %6661 = vdwg.mxu0
  %6662 = vmatpush.msra.mxu0 %v3402
  %6663 = vmatpush.msra.mxu0 %v3352
  %6664 = vmatpush.msra.mxu0 %v3302
  %6665 = vmatpush.msra.mxu0 %v3252
  %6666 = vmatpush.msra.mxu0 %v3202
  %6667 = vmatpush.msra.mxu0 %v3152
  %6668 = vmatpush.msra.mxu0 %v3102
  %6669 = vmatpush.msra.mxu0 %v3052
  %6670 = vmatpush.msra.mxu0 %v3002
  %6671 = vmatpush.msra.mxu0 %v2952
  %6672 = vmatpush.msra.mxu0 %v2902
  %6673 = vmatpush.msra.mxu0 %v2852
  %6674 = vmatpush.msra.mxu0 %v2802
  %6675 = vmatpush.msra.mxu0 %v2752
  %6676 = vmatpush.msra.mxu0 %v2702
  %6677 = vmatpush.msra.mxu0 %v2652
  %6678 = vmatmul.f32.gmra.mxu0 %v1020
  %v6679 = vpop.f32.mrf.mxu0
  %v6680 = vadd.f32 %v6660, %v6679
  %6681 = vdwg.mxu0
  %6682 = vmatpush.msra.mxu0 %v4202
  %6683 = vmatpush.msra.mxu0 %v4152
  %6684 = vmatpush.msra.mxu0 %v4102
  %6685 = vmatpush.msra.mxu0 %v4052
  %6686 = vmatpush.msra.mxu0 %v4002
  %6687 = vmatpush.msra.mxu0 %v3952
  %6688 = vmatpush.msra.mxu0 %v3902
  %6689 = vmatpush.msra.mxu0 %v3852
  %6690 = vmatpush.msra.mxu0 %v3802
  %6691 = vmatpush.msra.mxu0 %v3752
  %6692 = vmatpush.msra.mxu0 %v3702
  %6693 = vmatpush.msra.mxu0 %v3652
  %6694 = vmatpush.msra.mxu0 %v3602
  %6695 = vmatpush.msra.mxu0 %v3552
  %6696 = vmatpush.msra.mxu0 %v3502
  %6697 = vmatpush.msra.mxu0 %v3452
  %6698 = vmatmul.f32.gmra.mxu0 %v1021
  %v6699 = vpop.f32.mrf.mxu0
  %v6700 = vadd.f32 %v6680, %v6699
  %6701 = vdwg.mxu0
  %6702 = vmatpush.msra.mxu0 %v1803
  %6703 = vmatpush.msra.mxu0 %v1753
  %6704 = vmatpush.msra.mxu0 %v1703
  %6705 = vmatpush.msra.mxu0 %v1653
  %6706 = vmatpush.msra.mxu0 %v1603
  %6707 = vmatpush.msra.mxu0 %v1553
  %6708 = vmatpush.msra.mxu0 %v1503
  %6709 = vmatpush.msra.mxu0 %v1453
  %6710 = vmatpush.msra.mxu0 %v1403
  %6711 = vmatpush.msra.mxu0 %v1353
  %6712 = vmatpush.msra.mxu0 %v1303
  %6713 = vmatpush.msra.mxu0 %v1253
  %6714 = vmatpush.msra.mxu0 %v1203
  %6715 = vmatpush.msra.mxu0 %v1153
  %6716 = vmatpush.msra.mxu0 %v1103
  %6717 = vmatpush.msra.mxu0 %v1053
  %6718 = vmatmul.f32.gmra.mxu0 %v1018
  %v6719 = vpop.f32.mrf.mxu0
  %v6720 = vadd.f32 0.0, %v6719
  %6721 = vdwg.mxu0
  %6722 = vmatpush.msra.mxu0 %v2603
  %6723 = vmatpush.msra.mxu0 %v2553
  %6724 = vmatpush.msra.mxu0 %v2503
  %6725 = vmatpush.msra.mxu0 %v2453
  %6726 = vmatpush.msra.mxu0 %v2403
  %6727 = vmatpush.msra.mxu0 %v2353
  %6728 = vmatpush.msra.mxu0 %v2303
  %6729 = vmatpush.msra.mxu0 %v2253
  %6730 = vmatpush.msra.mxu0 %v2203
  %6731 = vmatpush.msra.mxu0 %v2153
  %6732 = vmatpush.msra.mxu0 %v2103
  %6733 = vmatpush.msra.mxu0 %v2053
  %6734 = vmatpush.msra.mxu0 %v2003
  %6735 = vmatpush.msra.mxu0 %v1953
  %6736 = vmatpush.msra.mxu0 %v1903
  %6737 = vmatpush.msra.mxu0 %v1853
  %6738 = vmatmul.f32.gmra.mxu0 %v1019
  %v6739 = vpop.f32.mrf.mxu0
  %v6740 = vadd.f32 %v6720, %v6739
  %6741 = vdwg.mxu0
  %6742 = vmatpush.msra.mxu0 %v3403
  %6743 = vmatpush.msra.mxu0 %v3353
  %6744 = vmatpush.msra.mxu0 %v3303
  %6745 = vmatpush.msra.mxu0 %v3253
  %6746 = vmatpush.msra.mxu0 %v3203
  %6747 = vmatpush.msra.mxu0 %v3153
  %6748 = vmatpush.msra.mxu0 %v3103
  %6749 = vmatpush.msra.mxu0 %v3053
  %6750 = vmatpush.msra.mxu0 %v3003
  %6751 = vmatpush.msra.mxu0 %v2953
  %6752 = vmatpush.msra.mxu0 %v2903
  %6753 = vmatpush.msra.mxu0 %v2853
  %6754 = vmatpush.msra.mxu0 %v2803
  %6755 = vmatpush.msra.mxu0 %v2753
  %6756 = vmatpush.msra.mxu0 %v2703
  %6757 = vmatpush.msra.mxu0 %v2653
  %6758 = vmatmul.f32.gmra.mxu0 %v1020
  %v6759 = vpop.f32.mrf.mxu0
  %v6760 = vadd.f32 %v6740, %v6759
  %6761 = vdwg.mxu0
  %6762 = vmatpush.msra.mxu0 %v4203
  %6763 = vmatpush.msra.mxu0 %v4153
  %6764 = vmatpush.msra.mxu0 %v4103
  %6765 = vmatpush.msra.mxu0 %v4053
  %6766 = vmatpush.msra.mxu0 %v4003
  %6767 = vmatpush.msra.mxu0 %v3953
  %6768 = vmatpush.msra.mxu0 %v3903
  %6769 = vmatpush.msra.mxu0 %v3853
  %6770 = vmatpush.msra.mxu0 %v3803
  %6771 = vmatpush.msra.mxu0 %v3753
  %6772 = vmatpush.msra.mxu0 %v3703
  %6773 = vmatpush.msra.mxu0 %v3653
  %6774 = vmatpush.msra.mxu0 %v3603
  %6775 = vmatpush.msra.mxu0 %v3553
  %6776 = vmatpush.msra.mxu0 %v3503
  %6777 = vmatpush.msra.mxu0 %v3453
  %6778 = vmatmul.f32.gmra.mxu0 %v1021
  %v6779 = vpop.f32.mrf.mxu0
  %v6780 = vadd.f32 %v6760, %v6779
  %6781 = vdwg.mxu0
  %6782 = vmatpush.msra.mxu0 %v1804
  %6783 = vmatpush.msra.mxu0 %v1754
  %6784 = vmatpush.msra.mxu0 %v1704
  %6785 = vmatpush.msra.mxu0 %v1654
  %6786 = vmatpush.msra.mxu0 %v1604
  %6787 = vmatpush.msra.mxu0 %v1554
  %6788 = vmatpush.msra.mxu0 %v1504
  %6789 = vmatpush.msra.mxu0 %v1454
  %6790 = vmatpush.msra.mxu0 %v1404
  %6791 = vmatpush.msra.mxu0 %v1354
  %6792 = vmatpush.msra.mxu0 %v1304
  %6793 = vmatpush.msra.mxu0 %v1254
  %6794 = vmatpush.msra.mxu0 %v1204
  %6795 = vmatpush.msra.mxu0 %v1154
  %6796 = vmatpush.msra.mxu0 %v1104
  %6797 = vmatpush.msra.mxu0 %v1054
  %6798 = vmatmul.f32.gmra.mxu0 %v1018
  %v6799 = vpop.f32.mrf.mxu0
  %v6800 = vadd.f32 0.0, %v6799
  %6801 = vdwg.mxu0
  %6802 = vmatpush.msra.mxu0 %v2604
  %6803 = vmatpush.msra.mxu0 %v2554
  %6804 = vmatpush.msra.mxu0 %v2504
  %6805 = vmatpush.msra.mxu0 %v2454
  %6806 = vmatpush.msra.mxu0 %v2404
  %6807 = vmatpush.msra.mxu0 %v2354
  %6808 = vmatpush.msra.mxu0 %v2304
  %6809 = vmatpush.msra.mxu0 %v2254
  %6810 = vmatpush.msra.mxu0 %v2204
  %6811 = vmatpush.msra.mxu0 %v2154
  %6812 = vmatpush.msra.mxu0 %v2104
  %6813 = vmatpush.msra.mxu0 %v2054
  %6814 = vmatpush.msra.mxu0 %v2004
  %6815 = vmatpush.msra.mxu0 %v1954
  %6816 = vmatpush.msra.mxu0 %v1904
  %6817 = vmatpush.msra.mxu0 %v1854
  %6818 = vmatmul.f32.gmra.mxu0 %v1019
  %v6819 = vpop.f32.mrf.mxu0
  %v6820 = vadd.f32 %v6800, %v6819
  %6821 = vdwg.mxu0
  %6822 = vmatpush.msra.mxu0 %v3404
  %6823 = vmatpush.msra.mxu0 %v3354
  %6824 = vmatpush.msra.mxu0 %v3304
  %6825 = vmatpush.msra.mxu0 %v3254
  %6826 = vmatpush.msra.mxu0 %v3204
  %6827 = vmatpush.msra.mxu0 %v3154
  %6828 = vmatpush.msra.mxu0 %v3104
  %6829 = vmatpush.msra.mxu0 %v3054
  %6830 = vmatpush.msra.mxu0 %v3004
  %6831 = vmatpush.msra.mxu0 %v2954
  %6832 = vmatpush.msra.mxu0 %v2904
  %6833 = vmatpush.msra.mxu0 %v2854
  %6834 = vmatpush.msra.mxu0 %v2804
  %6835 = vmatpush.msra.mxu0 %v2754
  %6836 = vmatpush.msra.mxu0 %v2704
  %6837 = vmatpush.msra.mxu0 %v2654
  %6838 = vmatmul.f32.gmra.mxu0 %v1020
  %v6839 = vpop.f32.mrf.mxu0
  %v6840 = vadd.f32 %v6820, %v6839
  %6841 = vdwg.mxu0
  %6842 = vmatpush.msra.mxu0 %v4204
  %6843 = vmatpush.msra.mxu0 %v4154
  %6844 = vmatpush.msra.mxu0 %v4104
  %6845 = vmatpush.msra.mxu0 %v4054
  %6846 = vmatpush.msra.mxu0 %v4004
  %6847 = vmatpush.msra.mxu0 %v3954
  %6848 = vmatpush.msra.mxu0 %v3904
  %6849 = vmatpush.msra.mxu0 %v3854
  %6850 = vmatpush.msra.mxu0 %v3804
  %6851 = vmatpush.msra.mxu0 %v3754
  %6852 = vmatpush.msra.mxu0 %v3704
  %6853 = vmatpush.msra.mxu0 %v3654
  %6854 = vmatpush.msra.mxu0 %v3604
  %6855 = vmatpush.msra.mxu0 %v3554
  %6856 = vmatpush.msra.mxu0 %v3504
  %6857 = vmatpush.msra.mxu0 %v3454
  %6858 = vmatmul.f32.gmra.mxu0 %v1021
  %v6859 = vpop.f32.mrf.mxu0
  %v6860 = vadd.f32 %v6840, %v6859
  %6861 = vdwg.mxu0
  %6862 = vmatpush.msra.mxu0 %v1805
  %6863 = vmatpush.msra.mxu0 %v1755
  %6864 = vmatpush.msra.mxu0 %v1705
  %6865 = vmatpush.msra.mxu0 %v1655
  %6866 = vmatpush.msra.mxu0 %v1605
  %6867 = vmatpush.msra.mxu0 %v1555
  %6868 = vmatpush.msra.mxu0 %v1505
  %6869 = vmatpush.msra.mxu0 %v1455
  %6870 = vmatpush.msra.mxu0 %v1405
  %6871 = vmatpush.msra.mxu0 %v1355
  %6872 = vmatpush.msra.mxu0 %v1305
  %6873 = vmatpush.msra.mxu0 %v1255
  %6874 = vmatpush.msra.mxu0 %v1205
  %6875 = vmatpush.msra.mxu0 %v1155
  %6876 = vmatpush.msra.mxu0 %v1105
  %6877 = vmatpush.msra.mxu0 %v1055
  %6878 = vmatmul.f32.gmra.mxu0 %v1018
  %v6879 = vpop.f32.mrf.mxu0
  %v6880 = vadd.f32 0.0, %v6879
  %6881 = vdwg.mxu0
  %6882 = vmatpush.msra.mxu0 %v2605
  %6883 = vmatpush.msra.mxu0 %v2555
  %6884 = vmatpush.msra.mxu0 %v2505
  %6885 = vmatpush.msra.mxu0 %v2455
  %6886 = vmatpush.msra.mxu0 %v2405
  %6887 = vmatpush.msra.mxu0 %v2355
  %6888 = vmatpush.msra.mxu0 %v2305
  %6889 = vmatpush.msra.mxu0 %v2255
  %6890 = vmatpush.msra.mxu0 %v2205
  %6891 = vmatpush.msra.mxu0 %v2155
  %6892 = vmatpush.msra.mxu0 %v2105
  %6893 = vmatpush.msra.mxu0 %v2055
  %6894 = vmatpush.msra.mxu0 %v2005
  %6895 = vmatpush.msra.mxu0 %v1955
  %6896 = vmatpush.msra.mxu0 %v1905
  %6897 = vmatpush.msra.mxu0 %v1855
  %6898 = vmatmul.f32.gmra.mxu0 %v1019
  %v6899 = vpop.f32.mrf.mxu0
  %v6900 = vadd.f32 %v6880, %v6899
  %6901 = vdwg.mxu0
  %6902 = vmatpush.msra.mxu0 %v3405
  %6903 = vmatpush.msra.mxu0 %v3355
  %6904 = vmatpush.msra.mxu0 %v3305
  %6905 = vmatpush.msra.mxu0 %v3255
  %6906 = vmatpush.msra.mxu0 %v3205
  %6907 = vmatpush.msra.mxu0 %v3155
  %6908 = vmatpush.msra.mxu0 %v3105
  %6909 = vmatpush.msra.mxu0 %v3055
  %6910 = vmatpush.msra.mxu0 %v3005
  %6911 = vmatpush.msra.mxu0 %v2955
  %6912 = vmatpush.msra.mxu0 %v2905
  %6913 = vmatpush.msra.mxu0 %v2855
  %6914 = vmatpush.msra.mxu0 %v2805
  %6915 = vmatpush.msra.mxu0 %v2755
  %6916 = vmatpush.msra.mxu0 %v2705
  %6917 = vmatpush.msra.mxu0 %v2655
  %6918 = vmatmul.f32.gmra.mxu0 %v1020
  %v6919 = vpop.f32.mrf.mxu0
  %v6920 = vadd.f32 %v6900, %v6919
  %6921 = vdwg.mxu0
  %6922 = vmatpush.msra.mxu0 %v4205
  %6923 = vmatpush.msra.mxu0 %v4155
  %6924 = vmatpush.msra.mxu0 %v4105
  %6925 = vmatpush.msra.mxu0 %v4055
  %6926 = vmatpush.msra.mxu0 %v4005
  %6927 = vmatpush.msra.mxu0 %v3955
  %6928 = vmatpush.msra.mxu0 %v3905
  %6929 = vmatpush.msra.mxu0 %v3855
  %6930 = vmatpush.msra.mxu0 %v3805
  %6931 = vmatpush.msra.mxu0 %v3755
  %6932 = vmatpush.msra.mxu0 %v3705
  %6933 = vmatpush.msra.mxu0 %v3655
  %6934 = vmatpush.msra.mxu0 %v3605
  %6935 = vmatpush.msra.mxu0 %v3555
  %6936 = vmatpush.msra.mxu0 %v3505
  %6937 = vmatpush.msra.mxu0 %v3455
  %6938 = vmatmul.f32.gmra.mxu0 %v1021
  %v6939 = vpop.f32.mrf.mxu0
  %v6940 = vadd.f32 %v6920, %v6939
  %6941 = vdwg.mxu0
  %6942 = vmatpush.msra.mxu0 %v1806
  %6943 = vmatpush.msra.mxu0 %v1756
  %6944 = vmatpush.msra.mxu0 %v1706
  %6945 = vmatpush.msra.mxu0 %v1656
  %6946 = vmatpush.msra.mxu0 %v1606
  %6947 = vmatpush.msra.mxu0 %v1556
  %6948 = vmatpush.msra.mxu0 %v1506
  %6949 = vmatpush.msra.mxu0 %v1456
  %6950 = vmatpush.msra.mxu0 %v1406
  %6951 = vmatpush.msra.mxu0 %v1356
  %6952 = vmatpush.msra.mxu0 %v1306
  %6953 = vmatpush.msra.mxu0 %v1256
  %6954 = vmatpush.msra.mxu0 %v1206
  %6955 = vmatpush.msra.mxu0 %v1156
  %6956 = vmatpush.msra.mxu0 %v1106
  %6957 = vmatpush.msra.mxu0 %v1056
  %6958 = vmatmul.f32.gmra.mxu0 %v1018
  %v6959 = vpop.f32.mrf.mxu0
  %v6960 = vadd.f32 0.0, %v6959
  %6961 = vdwg.mxu0
  %6962 = vmatpush.msra.mxu0 %v2606
  %6963 = vmatpush.msra.mxu0 %v2556
  %6964 = vmatpush.msra.mxu0 %v2506
  %6965 = vmatpush.msra.mxu0 %v2456
  %6966 = vmatpush.msra.mxu0 %v2406
  %6967 = vmatpush.msra.mxu0 %v2356
  %6968 = vmatpush.msra.mxu0 %v2306
  %6969 = vmatpush.msra.mxu0 %v2256
  %6970 = vmatpush.msra.mxu0 %v2206
  %6971 = vmatpush.msra.mxu0 %v2156
  %6972 = vmatpush.msra.mxu0 %v2106
  %6973 = vmatpush.msra.mxu0 %v2056
  %6974 = vmatpush.msra.mxu0 %v2006
  %6975 = vmatpush.msra.mxu0 %v1956
  %6976 = vmatpush.msra.mxu0 %v1906
  %6977 = vmatpush.msra.mxu0 %v1856
  %6978 = vmatmul.f32.gmra.mxu0 %v1019
  %v6979 = vpop.f32.mrf.mxu0
  %v6980 = vadd.f32 %v6960, %v6979
  %6981 = vdwg.mxu0
  %6982 = vmatpush.msra.mxu0 %v3406
  %6983 = vmatpush.msra.mxu0 %v3356
  %6984 = vmatpush.msra.mxu0 %v3306
  %6985 = vmatpush.msra.mxu0 %v3256
  %6986 = vmatpush.msra.mxu0 %v3206
  %6987 = vmatpush.msra.mxu0 %v3156
  %6988 = vmatpush.msra.mxu0 %v3106
  %6989 = vmatpush.msra.mxu0 %v3056
  %6990 = vmatpush.msra.mxu0 %v3006
  %6991 = vmatpush.msra.mxu0 %v2956
  %6992 = vmatpush.msra.mxu0 %v2906
  %6993 = vmatpush.msra.mxu0 %v2856
  %6994 = vmatpush.msra.mxu0 %v2806
  %6995 = vmatpush.msra.mxu0 %v2756
  %6996 = vmatpush.msra.mxu0 %v2706
  %6997 = vmatpush.msra.mxu0 %v2656
  %6998 = vmatmul.f32.gmra.mxu0 %v1020
  %v6999 = vpop.f32.mrf.mxu0
  %v7000 = vadd.f32 %v6980, %v6999
  %7001 = vdwg.mxu0
  %7002 = vmatpush.msra.mxu0 %v4206
  %7003 = vmatpush.msra.mxu0 %v4156
  %7004 = vmatpush.msra.mxu0 %v4106
  %7005 = vmatpush.msra.mxu0 %v4056
  %7006 = vmatpush.msra.mxu0 %v4006
  %7007 = vmatpush.msra.mxu0 %v3956
  %7008 = vmatpush.msra.mxu0 %v3906
  %7009 = vmatpush.msra.mxu0 %v3856
  %7010 = vmatpush.msra.mxu0 %v3806
  %7011 = vmatpush.msra.mxu0 %v3756
  %7012 = vmatpush.msra.mxu0 %v3706
  %7013 = vmatpush.msra.mxu0 %v3656
  %7014 = vmatpush.msra.mxu0 %v3606
  %7015 = vmatpush.msra.mxu0 %v3556
  %7016 = vmatpush.msra.mxu0 %v3506
  %7017 = vmatpush.msra.mxu0 %v3456
  %7018 = vmatmul.f32.gmra.mxu0 %v1021
  %v7019 = vpop.f32.mrf.mxu0
  %v7020 = vadd.f32 %v7000, %v7019
  %7021 = vdwg.mxu0
  %7022 = vmatpush.msra.mxu0 %v1807
  %7023 = vmatpush.msra.mxu0 %v1757
  %7024 = vmatpush.msra.mxu0 %v1707
  %7025 = vmatpush.msra.mxu0 %v1657
  %7026 = vmatpush.msra.mxu0 %v1607
  %7027 = vmatpush.msra.mxu0 %v1557
  %7028 = vmatpush.msra.mxu0 %v1507
  %7029 = vmatpush.msra.mxu0 %v1457
  %7030 = vmatpush.msra.mxu0 %v1407
  %7031 = vmatpush.msra.mxu0 %v1357
  %7032 = vmatpush.msra.mxu0 %v1307
  %7033 = vmatpush.msra.mxu0 %v1257
  %7034 = vmatpush.msra.mxu0 %v1207
  %7035 = vmatpush.msra.mxu0 %v1157
  %7036 = vmatpush.msra.mxu0 %v1107
  %7037 = vmatpush.msra.mxu0 %v1057
  %7038 = vmatmul.f32.gmra.mxu0 %v1018
  %v7039 = vpop.f32.mrf.mxu0
  %v7040 = vadd.f32 0.0, %v7039
  %7041 = vdwg.mxu0
  %7042 = vmatpush.msra.mxu0 %v2607
  %7043 = vmatpush.msra.mxu0 %v2557
  %7044 = vmatpush.msra.mxu0 %v2507
  %7045 = vmatpush.msra.mxu0 %v2457
  %7046 = vmatpush.msra.mxu0 %v2407
  %7047 = vmatpush.msra.mxu0 %v2357
  %7048 = vmatpush.msra.mxu0 %v2307
  %7049 = vmatpush.msra.mxu0 %v2257
  %7050 = vmatpush.msra.mxu0 %v2207
  %7051 = vmatpush.msra.mxu0 %v2157
  %7052 = vmatpush.msra.mxu0 %v2107
  %7053 = vmatpush.msra.mxu0 %v2057
  %7054 = vmatpush.msra.mxu0 %v2007
  %7055 = vmatpush.msra.mxu0 %v1957
  %7056 = vmatpush.msra.mxu0 %v1907
  %7057 = vmatpush.msra.mxu0 %v1857
  %7058 = vmatmul.f32.gmra.mxu0 %v1019
  %v7059 = vpop.f32.mrf.mxu0
  %v7060 = vadd.f32 %v7040, %v7059
  %7061 = vdwg.mxu0
  %7062 = vmatpush.msra.mxu0 %v3407
  %7063 = vmatpush.msra.mxu0 %v3357
  %7064 = vmatpush.msra.mxu0 %v3307
  %7065 = vmatpush.msra.mxu0 %v3257
  %7066 = vmatpush.msra.mxu0 %v3207
  %7067 = vmatpush.msra.mxu0 %v3157
  %7068 = vmatpush.msra.mxu0 %v3107
  %7069 = vmatpush.msra.mxu0 %v3057
  %7070 = vmatpush.msra.mxu0 %v3007
  %7071 = vmatpush.msra.mxu0 %v2957
  %7072 = vmatpush.msra.mxu0 %v2907
  %7073 = vmatpush.msra.mxu0 %v2857
  %7074 = vmatpush.msra.mxu0 %v2807
  %7075 = vmatpush.msra.mxu0 %v2757
  %7076 = vmatpush.msra.mxu0 %v2707
  %7077 = vmatpush.msra.mxu0 %v2657
  %7078 = vmatmul.f32.gmra.mxu0 %v1020
  %v7079 = vpop.f32.mrf.mxu0
  %v7080 = vadd.f32 %v7060, %v7079
  %7081 = vdwg.mxu0
  %7082 = vmatpush.msra.mxu0 %v4207
  %7083 = vmatpush.msra.mxu0 %v4157
  %7084 = vmatpush.msra.mxu0 %v4107
  %7085 = vmatpush.msra.mxu0 %v4057
  %7086 = vmatpush.msra.mxu0 %v4007
  %7087 = vmatpush.msra.mxu0 %v3957
  %7088 = vmatpush.msra.mxu0 %v3907
  %7089 = vmatpush.msra.mxu0 %v3857
  %7090 = vmatpush.msra.mxu0 %v3807
  %7091 = vmatpush.msra.mxu0 %v3757
  %7092 = vmatpush.msra.mxu0 %v3707
  %7093 = vmatpush.msra.mxu0 %v3657
  %7094 = vmatpush.msra.mxu0 %v3607
  %7095 = vmatpush.msra.mxu0 %v3557
  %7096 = vmatpush.msra.mxu0 %v3507
  %7097 = vmatpush.msra.mxu0 %v3457
  %7098 = vmatmul.f32.gmra.mxu0 %v1021
  %v7099 = vpop.f32.mrf.mxu0
  %v7100 = vadd.f32 %v7080, %v7099
  %7101 = vdwg.mxu0
  %7102 = vmatpush.msra.mxu0 %v1808
  %7103 = vmatpush.msra.mxu0 %v1758
  %7104 = vmatpush.msra.mxu0 %v1708
  %7105 = vmatpush.msra.mxu0 %v1658
  %7106 = vmatpush.msra.mxu0 %v1608
  %7107 = vmatpush.msra.mxu0 %v1558
  %7108 = vmatpush.msra.mxu0 %v1508
  %7109 = vmatpush.msra.mxu0 %v1458
  %7110 = vmatpush.msra.mxu0 %v1408
  %7111 = vmatpush.msra.mxu0 %v1358
  %7112 = vmatpush.msra.mxu0 %v1308
  %7113 = vmatpush.msra.mxu0 %v1258
  %7114 = vmatpush.msra.mxu0 %v1208
  %7115 = vmatpush.msra.mxu0 %v1158
  %7116 = vmatpush.msra.mxu0 %v1108
  %7117 = vmatpush.msra.mxu0 %v1058
  %7118 = vmatmul.f32.gmra.mxu0 %v1018
  %v7119 = vpop.f32.mrf.mxu0
  %v7120 = vadd.f32 0.0, %v7119
  %7121 = vdwg.mxu0
  %7122 = vmatpush.msra.mxu0 %v2608
  %7123 = vmatpush.msra.mxu0 %v2558
  %7124 = vmatpush.msra.mxu0 %v2508
  %7125 = vmatpush.msra.mxu0 %v2458
  %7126 = vmatpush.msra.mxu0 %v2408
  %7127 = vmatpush.msra.mxu0 %v2358
  %7128 = vmatpush.msra.mxu0 %v2308
  %7129 = vmatpush.msra.mxu0 %v2258
  %7130 = vmatpush.msra.mxu0 %v2208
  %7131 = vmatpush.msra.mxu0 %v2158
  %7132 = vmatpush.msra.mxu0 %v2108
  %7133 = vmatpush.msra.mxu0 %v2058
  %7134 = vmatpush.msra.mxu0 %v2008
  %7135 = vmatpush.msra.mxu0 %v1958
  %7136 = vmatpush.msra.mxu0 %v1908
  %7137 = vmatpush.msra.mxu0 %v1858
  %7138 = vmatmul.f32.gmra.mxu0 %v1019
  %v7139 = vpop.f32.mrf.mxu0
  %v7140 = vadd.f32 %v7120, %v7139
  %7141 = vdwg.mxu0
  %7142 = vmatpush.msra.mxu0 %v3408
  %7143 = vmatpush.msra.mxu0 %v3358
  %7144 = vmatpush.msra.mxu0 %v3308
  %7145 = vmatpush.msra.mxu0 %v3258
  %7146 = vmatpush.msra.mxu0 %v3208
  %7147 = vmatpush.msra.mxu0 %v3158
  %7148 = vmatpush.msra.mxu0 %v3108
  %7149 = vmatpush.msra.mxu0 %v3058
  %7150 = vmatpush.msra.mxu0 %v3008
  %7151 = vmatpush.msra.mxu0 %v2958
  %7152 = vmatpush.msra.mxu0 %v2908
  %7153 = vmatpush.msra.mxu0 %v2858
  %7154 = vmatpush.msra.mxu0 %v2808
  %7155 = vmatpush.msra.mxu0 %v2758
  %7156 = vmatpush.msra.mxu0 %v2708
  %7157 = vmatpush.msra.mxu0 %v2658
  %7158 = vmatmul.f32.gmra.mxu0 %v1020
  %v7159 = vpop.f32.mrf.mxu0
  %v7160 = vadd.f32 %v7140, %v7159
  %7161 = vdwg.mxu0
  %7162 = vmatpush.msra.mxu0 %v4208
  %7163 = vmatpush.msra.mxu0 %v4158
  %7164 = vmatpush.msra.mxu0 %v4108
  %7165 = vmatpush.msra.mxu0 %v4058
  %7166 = vmatpush.msra.mxu0 %v4008
  %7167 = vmatpush.msra.mxu0 %v3958
  %7168 = vmatpush.msra.mxu0 %v3908
  %7169 = vmatpush.msra.mxu0 %v3858
  %7170 = vmatpush.msra.mxu0 %v3808
  %7171 = vmatpush.msra.mxu0 %v3758
  %7172 = vmatpush.msra.mxu0 %v3708
  %7173 = vmatpush.msra.mxu0 %v3658
  %7174 = vmatpush.msra.mxu0 %v3608
  %7175 = vmatpush.msra.mxu0 %v3558
  %7176 = vmatpush.msra.mxu0 %v3508
  %7177 = vmatpush.msra.mxu0 %v3458
  %7178 = vmatmul.f32.gmra.mxu0 %v1021
  %v7179 = vpop.f32.mrf.mxu0
  %v7180 = vadd.f32 %v7160, %v7179
  %7181 = vdwg.mxu0
  %7182 = vmatpush.msra.mxu0 %v1809
  %7183 = vmatpush.msra.mxu0 %v1759
  %7184 = vmatpush.msra.mxu0 %v1709
  %7185 = vmatpush.msra.mxu0 %v1659
  %7186 = vmatpush.msra.mxu0 %v1609
  %7187 = vmatpush.msra.mxu0 %v1559
  %7188 = vmatpush.msra.mxu0 %v1509
  %7189 = vmatpush.msra.mxu0 %v1459
  %7190 = vmatpush.msra.mxu0 %v1409
  %7191 = vmatpush.msra.mxu0 %v1359
  %7192 = vmatpush.msra.mxu0 %v1309
  %7193 = vmatpush.msra.mxu0 %v1259
  %7194 = vmatpush.msra.mxu0 %v1209
  %7195 = vmatpush.msra.mxu0 %v1159
  %7196 = vmatpush.msra.mxu0 %v1109
  %7197 = vmatpush.msra.mxu0 %v1059
  %7198 = vmatmul.f32.gmra.mxu0 %v1018
  %v7199 = vpop.f32.mrf.mxu0
  %v7200 = vadd.f32 0.0, %v7199
  %7201 = vdwg.mxu0
  %7202 = vmatpush.msra.mxu0 %v2609
  %7203 = vmatpush.msra.mxu0 %v2559
  %7204 = vmatpush.msra.mxu0 %v2509
  %7205 = vmatpush.msra.mxu0 %v2459
  %7206 = vmatpush.msra.mxu0 %v2409
  %7207 = vmatpush.msra.mxu0 %v2359
  %7208 = vmatpush.msra.mxu0 %v2309
  %7209 = vmatpush.msra.mxu0 %v2259
  %7210 = vmatpush.msra.mxu0 %v2209
  %7211 = vmatpush.msra.mxu0 %v2159
  %7212 = vmatpush.msra.mxu0 %v2109
  %7213 = vmatpush.msra.mxu0 %v2059
  %7214 = vmatpush.msra.mxu0 %v2009
  %7215 = vmatpush.msra.mxu0 %v1959
  %7216 = vmatpush.msra.mxu0 %v1909
  %7217 = vmatpush.msra.mxu0 %v1859
  %7218 = vmatmul.f32.gmra.mxu0 %v1019
  %v7219 = vpop.f32.mrf.mxu0
  %v7220 = vadd.f32 %v7200, %v7219
  %7221 = vdwg.mxu0
  %7222 = vmatpush.msra.mxu0 %v3409
  %7223 = vmatpush.msra.mxu0 %v3359
  %7224 = vmatpush.msra.mxu0 %v3309
  %7225 = vmatpush.msra.mxu0 %v3259
  %7226 = vmatpush.msra.mxu0 %v3209
  %7227 = vmatpush.msra.mxu0 %v3159
  %7228 = vmatpush.msra.mxu0 %v3109
  %7229 = vmatpush.msra.mxu0 %v3059
  %7230 = vmatpush.msra.mxu0 %v3009
  %7231 = vmatpush.msra.mxu0 %v2959
  %7232 = vmatpush.msra.mxu0 %v2909
  %7233 = vmatpush.msra.mxu0 %v2859
  %7234 = vmatpush.msra.mxu0 %v2809
  %7235 = vmatpush.msra.mxu0 %v2759
  %7236 = vmatpush.msra.mxu0 %v2709
  %7237 = vmatpush.msra.mxu0 %v2659
  %7238 = vmatmul.f32.gmra.mxu0 %v1020
  %v7239 = vpop.f32.mrf.mxu0
  %v7240 = vadd.f32 %v7220, %v7239
  %7241 = vdwg.mxu0
  %7242 = vmatpush.msra.mxu0 %v4209
  %7243 = vmatpush.msra.mxu0 %v4159
  %7244 = vmatpush.msra.mxu0 %v4109
  %7245 = vmatpush.msra.mxu0 %v4059
  %7246 = vmatpush.msra.mxu0 %v4009
  %7247 = vmatpush.msra.mxu0 %v3959
  %7248 = vmatpush.msra.mxu0 %v3909
  %7249 = vmatpush.msra.mxu0 %v3859
  %7250 = vmatpush.msra.mxu0 %v3809
  %7251 = vmatpush.msra.mxu0 %v3759
  %7252 = vmatpush.msra.mxu0 %v3709
  %7253 = vmatpush.msra.mxu0 %v3659
  %7254 = vmatpush.msra.mxu0 %v3609
  %7255 = vmatpush.msra.mxu0 %v3559
  %7256 = vmatpush.msra.mxu0 %v3509
  %7257 = vmatpush.msra.mxu0 %v3459
  %7258 = vmatmul.f32.gmra.mxu0 %v1021
  %v7259 = vpop.f32.mrf.mxu0
  %v7260 = vadd.f32 %v7240, %v7259
  %7261 = vdwg.mxu0
  %7262 = vmatpush.msra.mxu0 %v1810
  %7263 = vmatpush.msra.mxu0 %v1760
  %7264 = vmatpush.msra.mxu0 %v1710
  %7265 = vmatpush.msra.mxu0 %v1660
  %7266 = vmatpush.msra.mxu0 %v1610
  %7267 = vmatpush.msra.mxu0 %v1560
  %7268 = vmatpush.msra.mxu0 %v1510
  %7269 = vmatpush.msra.mxu0 %v1460
  %7270 = vmatpush.msra.mxu0 %v1410
  %7271 = vmatpush.msra.mxu0 %v1360
  %7272 = vmatpush.msra.mxu0 %v1310
  %7273 = vmatpush.msra.mxu0 %v1260
  %7274 = vmatpush.msra.mxu0 %v1210
  %7275 = vmatpush.msra.mxu0 %v1160
  %7276 = vmatpush.msra.mxu0 %v1110
  %7277 = vmatpush.msra.mxu0 %v1060
  %7278 = vmatmul.f32.gmra.mxu0 %v1018
  %v7279 = vpop.f32.mrf.mxu0
  %v7280 = vadd.f32 0.0, %v7279
  %7281 = vdwg.mxu0
  %7282 = vmatpush.msra.mxu0 %v2610
  %7283 = vmatpush.msra.mxu0 %v2560
  %7284 = vmatpush.msra.mxu0 %v2510
  %7285 = vmatpush.msra.mxu0 %v2460
  %7286 = vmatpush.msra.mxu0 %v2410
  %7287 = vmatpush.msra.mxu0 %v2360
  %7288 = vmatpush.msra.mxu0 %v2310
  %7289 = vmatpush.msra.mxu0 %v2260
  %7290 = vmatpush.msra.mxu0 %v2210
  %7291 = vmatpush.msra.mxu0 %v2160
  %7292 = vmatpush.msra.mxu0 %v2110
  %7293 = vmatpush.msra.mxu0 %v2060
  %7294 = vmatpush.msra.mxu0 %v2010
  %7295 = vmatpush.msra.mxu0 %v1960
  %7296 = vmatpush.msra.mxu0 %v1910
  %7297 = vmatpush.msra.mxu0 %v1860
  %7298 = vmatmul.f32.gmra.mxu0 %v1019
  %v7299 = vpop.f32.mrf.mxu0
  %v7300 = vadd.f32 %v7280, %v7299
  %7301 = vdwg.mxu0
  %7302 = vmatpush.msra.mxu0 %v3410
  %7303 = vmatpush.msra.mxu0 %v3360
  %7304 = vmatpush.msra.mxu0 %v3310
  %7305 = vmatpush.msra.mxu0 %v3260
  %7306 = vmatpush.msra.mxu0 %v3210
  %7307 = vmatpush.msra.mxu0 %v3160
  %7308 = vmatpush.msra.mxu0 %v3110
  %7309 = vmatpush.msra.mxu0 %v3060
  %7310 = vmatpush.msra.mxu0 %v3010
  %7311 = vmatpush.msra.mxu0 %v2960
  %7312 = vmatpush.msra.mxu0 %v2910
  %7313 = vmatpush.msra.mxu0 %v2860
  %7314 = vmatpush.msra.mxu0 %v2810
  %7315 = vmatpush.msra.mxu0 %v2760
  %7316 = vmatpush.msra.mxu0 %v2710
  %7317 = vmatpush.msra.mxu0 %v2660
  %7318 = vmatmul.f32.gmra.mxu0 %v1020
  %v7319 = vpop.f32.mrf.mxu0
  %v7320 = vadd.f32 %v7300, %v7319
  %7321 = vdwg.mxu0
  %7322 = vmatpush.msra.mxu0 %v4210
  %7323 = vmatpush.msra.mxu0 %v4160
  %7324 = vmatpush.msra.mxu0 %v4110
  %7325 = vmatpush.msra.mxu0 %v4060
  %7326 = vmatpush.msra.mxu0 %v4010
  %7327 = vmatpush.msra.mxu0 %v3960
  %7328 = vmatpush.msra.mxu0 %v3910
  %7329 = vmatpush.msra.mxu0 %v3860
  %7330 = vmatpush.msra.mxu0 %v3810
  %7331 = vmatpush.msra.mxu0 %v3760
  %7332 = vmatpush.msra.mxu0 %v3710
  %7333 = vmatpush.msra.mxu0 %v3660
  %7334 = vmatpush.msra.mxu0 %v3610
  %7335 = vmatpush.msra.mxu0 %v3560
  %7336 = vmatpush.msra.mxu0 %v3510
  %7337 = vmatpush.msra.mxu0 %v3460
  %7338 = vmatmul.f32.gmra.mxu0 %v1021
  %v7339 = vpop.f32.mrf.mxu0
  %v7340 = vadd.f32 %v7320, %v7339
  %7341 = vdwg.mxu0
  %7342 = vmatpush.msra.mxu0 %v1811
  %7343 = vmatpush.msra.mxu0 %v1761
  %7344 = vmatpush.msra.mxu0 %v1711
  %7345 = vmatpush.msra.mxu0 %v1661
  %7346 = vmatpush.msra.mxu0 %v1611
  %7347 = vmatpush.msra.mxu0 %v1561
  %7348 = vmatpush.msra.mxu0 %v1511
  %7349 = vmatpush.msra.mxu0 %v1461
  %7350 = vmatpush.msra.mxu0 %v1411
  %7351 = vmatpush.msra.mxu0 %v1361
  %7352 = vmatpush.msra.mxu0 %v1311
  %7353 = vmatpush.msra.mxu0 %v1261
  %7354 = vmatpush.msra.mxu0 %v1211
  %7355 = vmatpush.msra.mxu0 %v1161
  %7356 = vmatpush.msra.mxu0 %v1111
  %7357 = vmatpush.msra.mxu0 %v1061
  %7358 = vmatmul.f32.gmra.mxu0 %v1018
  %v7359 = vpop.f32.mrf.mxu0
  %v7360 = vadd.f32 0.0, %v7359
  %7361 = vdwg.mxu0
  %7362 = vmatpush.msra.mxu0 %v2611
  %7363 = vmatpush.msra.mxu0 %v2561
  %7364 = vmatpush.msra.mxu0 %v2511
  %7365 = vmatpush.msra.mxu0 %v2461
  %7366 = vmatpush.msra.mxu0 %v2411
  %7367 = vmatpush.msra.mxu0 %v2361
  %7368 = vmatpush.msra.mxu0 %v2311
  %7369 = vmatpush.msra.mxu0 %v2261
  %7370 = vmatpush.msra.mxu0 %v2211
  %7371 = vmatpush.msra.mxu0 %v2161
  %7372 = vmatpush.msra.mxu0 %v2111
  %7373 = vmatpush.msra.mxu0 %v2061
  %7374 = vmatpush.msra.mxu0 %v2011
  %7375 = vmatpush.msra.mxu0 %v1961
  %7376 = vmatpush.msra.mxu0 %v1911
  %7377 = vmatpush.msra.mxu0 %v1861
  %7378 = vmatmul.f32.gmra.mxu0 %v1019
  %v7379 = vpop.f32.mrf.mxu0
  %v7380 = vadd.f32 %v7360, %v7379
  %7381 = vdwg.mxu0
  %7382 = vmatpush.msra.mxu0 %v3411
  %7383 = vmatpush.msra.mxu0 %v3361
  %7384 = vmatpush.msra.mxu0 %v3311
  %7385 = vmatpush.msra.mxu0 %v3261
  %7386 = vmatpush.msra.mxu0 %v3211
  %7387 = vmatpush.msra.mxu0 %v3161
  %7388 = vmatpush.msra.mxu0 %v3111
  %7389 = vmatpush.msra.mxu0 %v3061
  %7390 = vmatpush.msra.mxu0 %v3011
  %7391 = vmatpush.msra.mxu0 %v2961
  %7392 = vmatpush.msra.mxu0 %v2911
  %7393 = vmatpush.msra.mxu0 %v2861
  %7394 = vmatpush.msra.mxu0 %v2811
  %7395 = vmatpush.msra.mxu0 %v2761
  %7396 = vmatpush.msra.mxu0 %v2711
  %7397 = vmatpush.msra.mxu0 %v2661
  %7398 = vmatmul.f32.gmra.mxu0 %v1020
  %v7399 = vpop.f32.mrf.mxu0
  %v7400 = vadd.f32 %v7380, %v7399
  %7401 = vdwg.mxu0
  %7402 = vmatpush.msra.mxu0 %v4211
  %7403 = vmatpush.msra.mxu0 %v4161
  %7404 = vmatpush.msra.mxu0 %v4111
  %7405 = vmatpush.msra.mxu0 %v4061
  %7406 = vmatpush.msra.mxu0 %v4011
  %7407 = vmatpush.msra.mxu0 %v3961
  %7408 = vmatpush.msra.mxu0 %v3911
  %7409 = vmatpush.msra.mxu0 %v3861
  %7410 = vmatpush.msra.mxu0 %v3811
  %7411 = vmatpush.msra.mxu0 %v3761
  %7412 = vmatpush.msra.mxu0 %v3711
  %7413 = vmatpush.msra.mxu0 %v3661
  %7414 = vmatpush.msra.mxu0 %v3611
  %7415 = vmatpush.msra.mxu0 %v3561
  %7416 = vmatpush.msra.mxu0 %v3511
  %7417 = vmatpush.msra.mxu0 %v3461
  %7418 = vmatmul.f32.gmra.mxu0 %v1021
  %v7419 = vpop.f32.mrf.mxu0
  %v7420 = vadd.f32 %v7400, %v7419
  %7421 = vdwg.mxu0
  %7422 = vmatpush.msra.mxu0 %v1812
  %7423 = vmatpush.msra.mxu0 %v1762
  %7424 = vmatpush.msra.mxu0 %v1712
  %7425 = vmatpush.msra.mxu0 %v1662
  %7426 = vmatpush.msra.mxu0 %v1612
  %7427 = vmatpush.msra.mxu0 %v1562
  %7428 = vmatpush.msra.mxu0 %v1512
  %7429 = vmatpush.msra.mxu0 %v1462
  %7430 = vmatpush.msra.mxu0 %v1412
  %7431 = vmatpush.msra.mxu0 %v1362
  %7432 = vmatpush.msra.mxu0 %v1312
  %7433 = vmatpush.msra.mxu0 %v1262
  %7434 = vmatpush.msra.mxu0 %v1212
  %7435 = vmatpush.msra.mxu0 %v1162
  %7436 = vmatpush.msra.mxu0 %v1112
  %7437 = vmatpush.msra.mxu0 %v1062
  %7438 = vmatmul.f32.gmra.mxu0 %v1018
  %v7439 = vpop.f32.mrf.mxu0
  %v7440 = vadd.f32 0.0, %v7439
  %7441 = vdwg.mxu0
  %7442 = vmatpush.msra.mxu0 %v2612
  %7443 = vmatpush.msra.mxu0 %v2562
  %7444 = vmatpush.msra.mxu0 %v2512
  %7445 = vmatpush.msra.mxu0 %v2462
  %7446 = vmatpush.msra.mxu0 %v2412
  %7447 = vmatpush.msra.mxu0 %v2362
  %7448 = vmatpush.msra.mxu0 %v2312
  %7449 = vmatpush.msra.mxu0 %v2262
  %7450 = vmatpush.msra.mxu0 %v2212
  %7451 = vmatpush.msra.mxu0 %v2162
  %7452 = vmatpush.msra.mxu0 %v2112
  %7453 = vmatpush.msra.mxu0 %v2062
  %7454 = vmatpush.msra.mxu0 %v2012
  %7455 = vmatpush.msra.mxu0 %v1962
  %7456 = vmatpush.msra.mxu0 %v1912
  %7457 = vmatpush.msra.mxu0 %v1862
  %7458 = vmatmul.f32.gmra.mxu0 %v1019
  %v7459 = vpop.f32.mrf.mxu0
  %v7460 = vadd.f32 %v7440, %v7459
  %7461 = vdwg.mxu0
  %7462 = vmatpush.msra.mxu0 %v3412
  %7463 = vmatpush.msra.mxu0 %v3362
  %7464 = vmatpush.msra.mxu0 %v3312
  %7465 = vmatpush.msra.mxu0 %v3262
  %7466 = vmatpush.msra.mxu0 %v3212
  %7467 = vmatpush.msra.mxu0 %v3162
  %7468 = vmatpush.msra.mxu0 %v3112
  %7469 = vmatpush.msra.mxu0 %v3062
  %7470 = vmatpush.msra.mxu0 %v3012
  %7471 = vmatpush.msra.mxu0 %v2962
  %7472 = vmatpush.msra.mxu0 %v2912
  %7473 = vmatpush.msra.mxu0 %v2862
  %7474 = vmatpush.msra.mxu0 %v2812
  %7475 = vmatpush.msra.mxu0 %v2762
  %7476 = vmatpush.msra.mxu0 %v2712
  %7477 = vmatpush.msra.mxu0 %v2662
  %7478 = vmatmul.f32.gmra.mxu0 %v1020
  %v7479 = vpop.f32.mrf.mxu0
  %v7480 = vadd.f32 %v7460, %v7479
  %7481 = vdwg.mxu0
  %7482 = vmatpush.msra.mxu0 %v4212
  %7483 = vmatpush.msra.mxu0 %v4162
  %7484 = vmatpush.msra.mxu0 %v4112
  %7485 = vmatpush.msra.mxu0 %v4062
  %7486 = vmatpush.msra.mxu0 %v4012
  %7487 = vmatpush.msra.mxu0 %v3962
  %7488 = vmatpush.msra.mxu0 %v3912
  %7489 = vmatpush.msra.mxu0 %v3862
  %7490 = vmatpush.msra.mxu0 %v3812
  %7491 = vmatpush.msra.mxu0 %v3762
  %7492 = vmatpush.msra.mxu0 %v3712
  %7493 = vmatpush.msra.mxu0 %v3662
  %7494 = vmatpush.msra.mxu0 %v3612
  %7495 = vmatpush.msra.mxu0 %v3562
  %7496 = vmatpush.msra.mxu0 %v3512
  %7497 = vmatpush.msra.mxu0 %v3462
  %7498 = vmatmul.f32.gmra.mxu0 %v1021
  %v7499 = vpop.f32.mrf.mxu0
  %v7500 = vadd.f32 %v7480, %v7499
  %7501 = vdwg.mxu0
  %7502 = vmatpush.msra.mxu0 %v1813
  %7503 = vmatpush.msra.mxu0 %v1763
  %7504 = vmatpush.msra.mxu0 %v1713
  %7505 = vmatpush.msra.mxu0 %v1663
  %7506 = vmatpush.msra.mxu0 %v1613
  %7507 = vmatpush.msra.mxu0 %v1563
  %7508 = vmatpush.msra.mxu0 %v1513
  %7509 = vmatpush.msra.mxu0 %v1463
  %7510 = vmatpush.msra.mxu0 %v1413
  %7511 = vmatpush.msra.mxu0 %v1363
  %7512 = vmatpush.msra.mxu0 %v1313
  %7513 = vmatpush.msra.mxu0 %v1263
  %7514 = vmatpush.msra.mxu0 %v1213
  %7515 = vmatpush.msra.mxu0 %v1163
  %7516 = vmatpush.msra.mxu0 %v1113
  %7517 = vmatpush.msra.mxu0 %v1063
  %7518 = vmatmul.f32.gmra.mxu0 %v1018
  %v7519 = vpop.f32.mrf.mxu0
  %v7520 = vadd.f32 0.0, %v7519
  %7521 = vdwg.mxu0
  %7522 = vmatpush.msra.mxu0 %v2613
  %7523 = vmatpush.msra.mxu0 %v2563
  %7524 = vmatpush.msra.mxu0 %v2513
  %7525 = vmatpush.msra.mxu0 %v2463
  %7526 = vmatpush.msra.mxu0 %v2413
  %7527 = vmatpush.msra.mxu0 %v2363
  %7528 = vmatpush.msra.mxu0 %v2313
  %7529 = vmatpush.msra.mxu0 %v2263
  %7530 = vmatpush.msra.mxu0 %v2213
  %7531 = vmatpush.msra.mxu0 %v2163
  %7532 = vmatpush.msra.mxu0 %v2113
  %7533 = vmatpush.msra.mxu0 %v2063
  %7534 = vmatpush.msra.mxu0 %v2013
  %7535 = vmatpush.msra.mxu0 %v1963
  %7536 = vmatpush.msra.mxu0 %v1913
  %7537 = vmatpush.msra.mxu0 %v1863
  %7538 = vmatmul.f32.gmra.mxu0 %v1019
  %v7539 = vpop.f32.mrf.mxu0
  %v7540 = vadd.f32 %v7520, %v7539
  %7541 = vdwg.mxu0
  %7542 = vmatpush.msra.mxu0 %v3413
  %7543 = vmatpush.msra.mxu0 %v3363
  %7544 = vmatpush.msra.mxu0 %v3313
  %7545 = vmatpush.msra.mxu0 %v3263
  %7546 = vmatpush.msra.mxu0 %v3213
  %7547 = vmatpush.msra.mxu0 %v3163
  %7548 = vmatpush.msra.mxu0 %v3113
  %7549 = vmatpush.msra.mxu0 %v3063
  %7550 = vmatpush.msra.mxu0 %v3013
  %7551 = vmatpush.msra.mxu0 %v2963
  %7552 = vmatpush.msra.mxu0 %v2913
  %7553 = vmatpush.msra.mxu0 %v2863
  %7554 = vmatpush.msra.mxu0 %v2813
  %7555 = vmatpush.msra.mxu0 %v2763
  %7556 = vmatpush.msra.mxu0 %v2713
  %7557 = vmatpush.msra.mxu0 %v2663
  %7558 = vmatmul.f32.gmra.mxu0 %v1020
  %v7559 = vpop.f32.mrf.mxu0
  %v7560 = vadd.f32 %v7540, %v7559
  %7561 = vdwg.mxu0
  %7562 = vmatpush.msra.mxu0 %v4213
  %7563 = vmatpush.msra.mxu0 %v4163
  %7564 = vmatpush.msra.mxu0 %v4113
  %7565 = vmatpush.msra.mxu0 %v4063
  %7566 = vmatpush.msra.mxu0 %v4013
  %7567 = vmatpush.msra.mxu0 %v3963
  %7568 = vmatpush.msra.mxu0 %v3913
  %7569 = vmatpush.msra.mxu0 %v3863
  %7570 = vmatpush.msra.mxu0 %v3813
  %7571 = vmatpush.msra.mxu0 %v3763
  %7572 = vmatpush.msra.mxu0 %v3713
  %7573 = vmatpush.msra.mxu0 %v3663
  %7574 = vmatpush.msra.mxu0 %v3613
  %7575 = vmatpush.msra.mxu0 %v3563
  %7576 = vmatpush.msra.mxu0 %v3513
  %7577 = vmatpush.msra.mxu0 %v3463
  %7578 = vmatmul.f32.gmra.mxu0 %v1021
  %v7579 = vpop.f32.mrf.mxu0
  %v7580 = vadd.f32 %v7560, %v7579
  %7581 = vdwg.mxu0
  %7582 = vmatpush.msra.mxu0 %v1814
  %7583 = vmatpush.msra.mxu0 %v1764
  %7584 = vmatpush.msra.mxu0 %v1714
  %7585 = vmatpush.msra.mxu0 %v1664
  %7586 = vmatpush.msra.mxu0 %v1614
  %7587 = vmatpush.msra.mxu0 %v1564
  %7588 = vmatpush.msra.mxu0 %v1514
  %7589 = vmatpush.msra.mxu0 %v1464
  %7590 = vmatpush.msra.mxu0 %v1414
  %7591 = vmatpush.msra.mxu0 %v1364
  %7592 = vmatpush.msra.mxu0 %v1314
  %7593 = vmatpush.msra.mxu0 %v1264
  %7594 = vmatpush.msra.mxu0 %v1214
  %7595 = vmatpush.msra.mxu0 %v1164
  %7596 = vmatpush.msra.mxu0 %v1114
  %7597 = vmatpush.msra.mxu0 %v1064
  %7598 = vmatmul.f32.gmra.mxu0 %v1018
  %v7599 = vpop.f32.mrf.mxu0
  %v7600 = vadd.f32 0.0, %v7599
  %7601 = vdwg.mxu0
  %7602 = vmatpush.msra.mxu0 %v2614
  %7603 = vmatpush.msra.mxu0 %v2564
  %7604 = vmatpush.msra.mxu0 %v2514
  %7605 = vmatpush.msra.mxu0 %v2464
  %7606 = vmatpush.msra.mxu0 %v2414
  %7607 = vmatpush.msra.mxu0 %v2364
  %7608 = vmatpush.msra.mxu0 %v2314
  %7609 = vmatpush.msra.mxu0 %v2264
  %7610 = vmatpush.msra.mxu0 %v2214
  %7611 = vmatpush.msra.mxu0 %v2164
  %7612 = vmatpush.msra.mxu0 %v2114
  %7613 = vmatpush.msra.mxu0 %v2064
  %7614 = vmatpush.msra.mxu0 %v2014
  %7615 = vmatpush.msra.mxu0 %v1964
  %7616 = vmatpush.msra.mxu0 %v1914
  %7617 = vmatpush.msra.mxu0 %v1864
  %7618 = vmatmul.f32.gmra.mxu0 %v1019
  %v7619 = vpop.f32.mrf.mxu0
  %v7620 = vadd.f32 %v7600, %v7619
  %7621 = vdwg.mxu0
  %7622 = vmatpush.msra.mxu0 %v3414
  %7623 = vmatpush.msra.mxu0 %v3364
  %7624 = vmatpush.msra.mxu0 %v3314
  %7625 = vmatpush.msra.mxu0 %v3264
  %7626 = vmatpush.msra.mxu0 %v3214
  %7627 = vmatpush.msra.mxu0 %v3164
  %7628 = vmatpush.msra.mxu0 %v3114
  %7629 = vmatpush.msra.mxu0 %v3064
  %7630 = vmatpush.msra.mxu0 %v3014
  %7631 = vmatpush.msra.mxu0 %v2964
  %7632 = vmatpush.msra.mxu0 %v2914
  %7633 = vmatpush.msra.mxu0 %v2864
  %7634 = vmatpush.msra.mxu0 %v2814
  %7635 = vmatpush.msra.mxu0 %v2764
  %7636 = vmatpush.msra.mxu0 %v2714
  %7637 = vmatpush.msra.mxu0 %v2664
  %7638 = vmatmul.f32.gmra.mxu0 %v1020
  %v7639 = vpop.f32.mrf.mxu0
  %v7640 = vadd.f32 %v7620, %v7639
  %7641 = vdwg.mxu0
  %7642 = vmatpush.msra.mxu0 %v4214
  %7643 = vmatpush.msra.mxu0 %v4164
  %7644 = vmatpush.msra.mxu0 %v4114
  %7645 = vmatpush.msra.mxu0 %v4064
  %7646 = vmatpush.msra.mxu0 %v4014
  %7647 = vmatpush.msra.mxu0 %v3964
  %7648 = vmatpush.msra.mxu0 %v3914
  %7649 = vmatpush.msra.mxu0 %v3864
  %7650 = vmatpush.msra.mxu0 %v3814
  %7651 = vmatpush.msra.mxu0 %v3764
  %7652 = vmatpush.msra.mxu0 %v3714
  %7653 = vmatpush.msra.mxu0 %v3664
  %7654 = vmatpush.msra.mxu0 %v3614
  %7655 = vmatpush.msra.mxu0 %v3564
  %7656 = vmatpush.msra.mxu0 %v3514
  %7657 = vmatpush.msra.mxu0 %v3464
  %7658 = vmatmul.f32.gmra.mxu0 %v1021
  %v7659 = vpop.f32.mrf.mxu0
  %v7660 = vadd.f32 %v7640, %v7659
  %7661 = vdwg.mxu0
  %7662 = vmatpush.msra.mxu0 %v1815
  %7663 = vmatpush.msra.mxu0 %v1765
  %7664 = vmatpush.msra.mxu0 %v1715
  %7665 = vmatpush.msra.mxu0 %v1665
  %7666 = vmatpush.msra.mxu0 %v1615
  %7667 = vmatpush.msra.mxu0 %v1565
  %7668 = vmatpush.msra.mxu0 %v1515
  %7669 = vmatpush.msra.mxu0 %v1465
  %7670 = vmatpush.msra.mxu0 %v1415
  %7671 = vmatpush.msra.mxu0 %v1365
  %7672 = vmatpush.msra.mxu0 %v1315
  %7673 = vmatpush.msra.mxu0 %v1265
  %7674 = vmatpush.msra.mxu0 %v1215
  %7675 = vmatpush.msra.mxu0 %v1165
  %7676 = vmatpush.msra.mxu0 %v1115
  %7677 = vmatpush.msra.mxu0 %v1065
  %7678 = vmatmul.f32.gmra.mxu0 %v1018
  %v7679 = vpop.f32.mrf.mxu0
  %v7680 = vadd.f32 0.0, %v7679
  %7681 = vdwg.mxu0
  %7682 = vmatpush.msra.mxu0 %v2615
  %7683 = vmatpush.msra.mxu0 %v2565
  %7684 = vmatpush.msra.mxu0 %v2515
  %7685 = vmatpush.msra.mxu0 %v2465
  %7686 = vmatpush.msra.mxu0 %v2415
  %7687 = vmatpush.msra.mxu0 %v2365
  %7688 = vmatpush.msra.mxu0 %v2315
  %7689 = vmatpush.msra.mxu0 %v2265
  %7690 = vmatpush.msra.mxu0 %v2215
  %7691 = vmatpush.msra.mxu0 %v2165
  %7692 = vmatpush.msra.mxu0 %v2115
  %7693 = vmatpush.msra.mxu0 %v2065
  %7694 = vmatpush.msra.mxu0 %v2015
  %7695 = vmatpush.msra.mxu0 %v1965
  %7696 = vmatpush.msra.mxu0 %v1915
  %7697 = vmatpush.msra.mxu0 %v1865
  %7698 = vmatmul.f32.gmra.mxu0 %v1019
  %v7699 = vpop.f32.mrf.mxu0
  %v7700 = vadd.f32 %v7680, %v7699
  %7701 = vdwg.mxu0
  %7702 = vmatpush.msra.mxu0 %v3415
  %7703 = vmatpush.msra.mxu0 %v3365
  %7704 = vmatpush.msra.mxu0 %v3315
  %7705 = vmatpush.msra.mxu0 %v3265
  %7706 = vmatpush.msra.mxu0 %v3215
  %7707 = vmatpush.msra.mxu0 %v3165
  %7708 = vmatpush.msra.mxu0 %v3115
  %7709 = vmatpush.msra.mxu0 %v3065
  %7710 = vmatpush.msra.mxu0 %v3015
  %7711 = vmatpush.msra.mxu0 %v2965
  %7712 = vmatpush.msra.mxu0 %v2915
  %7713 = vmatpush.msra.mxu0 %v2865
  %7714 = vmatpush.msra.mxu0 %v2815
  %7715 = vmatpush.msra.mxu0 %v2765
  %7716 = vmatpush.msra.mxu0 %v2715
  %7717 = vmatpush.msra.mxu0 %v2665
  %7718 = vmatmul.f32.gmra.mxu0 %v1020
  %v7719 = vpop.f32.mrf.mxu0
  %v7720 = vadd.f32 %v7700, %v7719
  %7721 = vdwg.mxu0
  %7722 = vmatpush.msra.mxu0 %v4215
  %7723 = vmatpush.msra.mxu0 %v4165
  %7724 = vmatpush.msra.mxu0 %v4115
  %7725 = vmatpush.msra.mxu0 %v4065
  %7726 = vmatpush.msra.mxu0 %v4015
  %7727 = vmatpush.msra.mxu0 %v3965
  %7728 = vmatpush.msra.mxu0 %v3915
  %7729 = vmatpush.msra.mxu0 %v3865
  %7730 = vmatpush.msra.mxu0 %v3815
  %7731 = vmatpush.msra.mxu0 %v3765
  %7732 = vmatpush.msra.mxu0 %v3715
  %7733 = vmatpush.msra.mxu0 %v3665
  %7734 = vmatpush.msra.mxu0 %v3615
  %7735 = vmatpush.msra.mxu0 %v3565
  %7736 = vmatpush.msra.mxu0 %v3515
  %7737 = vmatpush.msra.mxu0 %v3465
  %7738 = vmatmul.f32.gmra.mxu0 %v1021
  %v7739 = vpop.f32.mrf.mxu0
  %v7740 = vadd.f32 %v7720, %v7739
  %7741 = vdwg.mxu0
  %7742 = vmatpush.msra.mxu0 %v1816
  %7743 = vmatpush.msra.mxu0 %v1766
  %7744 = vmatpush.msra.mxu0 %v1716
  %7745 = vmatpush.msra.mxu0 %v1666
  %7746 = vmatpush.msra.mxu0 %v1616
  %7747 = vmatpush.msra.mxu0 %v1566
  %7748 = vmatpush.msra.mxu0 %v1516
  %7749 = vmatpush.msra.mxu0 %v1466
  %7750 = vmatpush.msra.mxu0 %v1416
  %7751 = vmatpush.msra.mxu0 %v1366
  %7752 = vmatpush.msra.mxu0 %v1316
  %7753 = vmatpush.msra.mxu0 %v1266
  %7754 = vmatpush.msra.mxu0 %v1216
  %7755 = vmatpush.msra.mxu0 %v1166
  %7756 = vmatpush.msra.mxu0 %v1116
  %7757 = vmatpush.msra.mxu0 %v1066
  %7758 = vmatmul.f32.gmra.mxu0 %v1018
  %v7759 = vpop.f32.mrf.mxu0
  %v7760 = vadd.f32 0.0, %v7759
  %7761 = vdwg.mxu0
  %7762 = vmatpush.msra.mxu0 %v2616
  %7763 = vmatpush.msra.mxu0 %v2566
  %7764 = vmatpush.msra.mxu0 %v2516
  %7765 = vmatpush.msra.mxu0 %v2466
  %7766 = vmatpush.msra.mxu0 %v2416
  %7767 = vmatpush.msra.mxu0 %v2366
  %7768 = vmatpush.msra.mxu0 %v2316
  %7769 = vmatpush.msra.mxu0 %v2266
  %7770 = vmatpush.msra.mxu0 %v2216
  %7771 = vmatpush.msra.mxu0 %v2166
  %7772 = vmatpush.msra.mxu0 %v2116
  %7773 = vmatpush.msra.mxu0 %v2066
  %7774 = vmatpush.msra.mxu0 %v2016
  %7775 = vmatpush.msra.mxu0 %v1966
  %7776 = vmatpush.msra.mxu0 %v1916
  %7777 = vmatpush.msra.mxu0 %v1866
  %7778 = vmatmul.f32.gmra.mxu0 %v1019
  %v7779 = vpop.f32.mrf.mxu0
  %v7780 = vadd.f32 %v7760, %v7779
  %7781 = vdwg.mxu0
  %7782 = vmatpush.msra.mxu0 %v3416
  %7783 = vmatpush.msra.mxu0 %v3366
  %7784 = vmatpush.msra.mxu0 %v3316
  %7785 = vmatpush.msra.mxu0 %v3266
  %7786 = vmatpush.msra.mxu0 %v3216
  %7787 = vmatpush.msra.mxu0 %v3166
  %7788 = vmatpush.msra.mxu0 %v3116
  %7789 = vmatpush.msra.mxu0 %v3066
  %7790 = vmatpush.msra.mxu0 %v3016
  %7791 = vmatpush.msra.mxu0 %v2966
  %7792 = vmatpush.msra.mxu0 %v2916
  %7793 = vmatpush.msra.mxu0 %v2866
  %7794 = vmatpush.msra.mxu0 %v2816
  %7795 = vmatpush.msra.mxu0 %v2766
  %7796 = vmatpush.msra.mxu0 %v2716
  %7797 = vmatpush.msra.mxu0 %v2666
  %7798 = vmatmul.f32.gmra.mxu0 %v1020
  %v7799 = vpop.f32.mrf.mxu0
  %v7800 = vadd.f32 %v7780, %v7799
  %7801 = vdwg.mxu0
  %7802 = vmatpush.msra.mxu0 %v4216
  %7803 = vmatpush.msra.mxu0 %v4166
  %7804 = vmatpush.msra.mxu0 %v4116
  %7805 = vmatpush.msra.mxu0 %v4066
  %7806 = vmatpush.msra.mxu0 %v4016
  %7807 = vmatpush.msra.mxu0 %v3966
  %7808 = vmatpush.msra.mxu0 %v3916
  %7809 = vmatpush.msra.mxu0 %v3866
  %7810 = vmatpush.msra.mxu0 %v3816
  %7811 = vmatpush.msra.mxu0 %v3766
  %7812 = vmatpush.msra.mxu0 %v3716
  %7813 = vmatpush.msra.mxu0 %v3666
  %7814 = vmatpush.msra.mxu0 %v3616
  %7815 = vmatpush.msra.mxu0 %v3566
  %7816 = vmatpush.msra.mxu0 %v3516
  %7817 = vmatpush.msra.mxu0 %v3466
  %7818 = vmatmul.f32.gmra.mxu0 %v1021
  %v7819 = vpop.f32.mrf.mxu0
  %v7820 = vadd.f32 %v7800, %v7819
  %7821 = vdwg.mxu0
  %7822 = vmatpush.msra.mxu0 %v1817
  %7823 = vmatpush.msra.mxu0 %v1767
  %7824 = vmatpush.msra.mxu0 %v1717
  %7825 = vmatpush.msra.mxu0 %v1667
  %7826 = vmatpush.msra.mxu0 %v1617
  %7827 = vmatpush.msra.mxu0 %v1567
  %7828 = vmatpush.msra.mxu0 %v1517
  %7829 = vmatpush.msra.mxu0 %v1467
  %7830 = vmatpush.msra.mxu0 %v1417
  %7831 = vmatpush.msra.mxu0 %v1367
  %7832 = vmatpush.msra.mxu0 %v1317
  %7833 = vmatpush.msra.mxu0 %v1267
  %7834 = vmatpush.msra.mxu0 %v1217
  %7835 = vmatpush.msra.mxu0 %v1167
  %7836 = vmatpush.msra.mxu0 %v1117
  %7837 = vmatpush.msra.mxu0 %v1067
  %7838 = vmatmul.f32.gmra.mxu0 %v1018
  %v7839 = vpop.f32.mrf.mxu0
  %v7840 = vadd.f32 0.0, %v7839
  %7841 = vdwg.mxu0
  %7842 = vmatpush.msra.mxu0 %v2617
  %7843 = vmatpush.msra.mxu0 %v2567
  %7844 = vmatpush.msra.mxu0 %v2517
  %7845 = vmatpush.msra.mxu0 %v2467
  %7846 = vmatpush.msra.mxu0 %v2417
  %7847 = vmatpush.msra.mxu0 %v2367
  %7848 = vmatpush.msra.mxu0 %v2317
  %7849 = vmatpush.msra.mxu0 %v2267
  %7850 = vmatpush.msra.mxu0 %v2217
  %7851 = vmatpush.msra.mxu0 %v2167
  %7852 = vmatpush.msra.mxu0 %v2117
  %7853 = vmatpush.msra.mxu0 %v2067
  %7854 = vmatpush.msra.mxu0 %v2017
  %7855 = vmatpush.msra.mxu0 %v1967
  %7856 = vmatpush.msra.mxu0 %v1917
  %7857 = vmatpush.msra.mxu0 %v1867
  %7858 = vmatmul.f32.gmra.mxu0 %v1019
  %v7859 = vpop.f32.mrf.mxu0
  %v7860 = vadd.f32 %v7840, %v7859
  %7861 = vdwg.mxu0
  %7862 = vmatpush.msra.mxu0 %v3417
  %7863 = vmatpush.msra.mxu0 %v3367
  %7864 = vmatpush.msra.mxu0 %v3317
  %7865 = vmatpush.msra.mxu0 %v3267
  %7866 = vmatpush.msra.mxu0 %v3217
  %7867 = vmatpush.msra.mxu0 %v3167
  %7868 = vmatpush.msra.mxu0 %v3117
  %7869 = vmatpush.msra.mxu0 %v3067
  %7870 = vmatpush.msra.mxu0 %v3017
  %7871 = vmatpush.msra.mxu0 %v2967
  %7872 = vmatpush.msra.mxu0 %v2917
  %7873 = vmatpush.msra.mxu0 %v2867
  %7874 = vmatpush.msra.mxu0 %v2817
  %7875 = vmatpush.msra.mxu0 %v2767
  %7876 = vmatpush.msra.mxu0 %v2717
  %7877 = vmatpush.msra.mxu0 %v2667
  %7878 = vmatmul.f32.gmra.mxu0 %v1020
  %v7879 = vpop.f32.mrf.mxu0
  %v7880 = vadd.f32 %v7860, %v7879
  %7881 = vdwg.mxu0
  %7882 = vmatpush.msra.mxu0 %v4217
  %7883 = vmatpush.msra.mxu0 %v4167
  %7884 = vmatpush.msra.mxu0 %v4117
  %7885 = vmatpush.msra.mxu0 %v4067
  %7886 = vmatpush.msra.mxu0 %v4017
  %7887 = vmatpush.msra.mxu0 %v3967
  %7888 = vmatpush.msra.mxu0 %v3917
  %7889 = vmatpush.msra.mxu0 %v3867
  %7890 = vmatpush.msra.mxu0 %v3817
  %7891 = vmatpush.msra.mxu0 %v3767
  %7892 = vmatpush.msra.mxu0 %v3717
  %7893 = vmatpush.msra.mxu0 %v3667
  %7894 = vmatpush.msra.mxu0 %v3617
  %7895 = vmatpush.msra.mxu0 %v3567
  %7896 = vmatpush.msra.mxu0 %v3517
  %7897 = vmatpush.msra.mxu0 %v3467
  %7898 = vmatmul.f32.gmra.mxu0 %v1021
  %v7899 = vpop.f32.mrf.mxu0
  %v7900 = vadd.f32 %v7880, %v7899
  %7901 = vdwg.mxu0
  %7902 = vmatpush.msra.mxu0 %v1818
  %7903 = vmatpush.msra.mxu0 %v1768
  %7904 = vmatpush.msra.mxu0 %v1718
  %7905 = vmatpush.msra.mxu0 %v1668
  %7906 = vmatpush.msra.mxu0 %v1618
  %7907 = vmatpush.msra.mxu0 %v1568
  %7908 = vmatpush.msra.mxu0 %v1518
  %7909 = vmatpush.msra.mxu0 %v1468
  %7910 = vmatpush.msra.mxu0 %v1418
  %7911 = vmatpush.msra.mxu0 %v1368
  %7912 = vmatpush.msra.mxu0 %v1318
  %7913 = vmatpush.msra.mxu0 %v1268
  %7914 = vmatpush.msra.mxu0 %v1218
  %7915 = vmatpush.msra.mxu0 %v1168
  %7916 = vmatpush.msra.mxu0 %v1118
  %7917 = vmatpush.msra.mxu0 %v1068
  %7918 = vmatmul.f32.gmra.mxu0 %v1018
  %v7919 = vpop.f32.mrf.mxu0
  %v7920 = vadd.f32 0.0, %v7919
  %7921 = vdwg.mxu0
  %7922 = vmatpush.msra.mxu0 %v2618
  %7923 = vmatpush.msra.mxu0 %v2568
  %7924 = vmatpush.msra.mxu0 %v2518
  %7925 = vmatpush.msra.mxu0 %v2468
  %7926 = vmatpush.msra.mxu0 %v2418
  %7927 = vmatpush.msra.mxu0 %v2368
  %7928 = vmatpush.msra.mxu0 %v2318
  %7929 = vmatpush.msra.mxu0 %v2268
  %7930 = vmatpush.msra.mxu0 %v2218
  %7931 = vmatpush.msra.mxu0 %v2168
  %7932 = vmatpush.msra.mxu0 %v2118
  %7933 = vmatpush.msra.mxu0 %v2068
  %7934 = vmatpush.msra.mxu0 %v2018
  %7935 = vmatpush.msra.mxu0 %v1968
  %7936 = vmatpush.msra.mxu0 %v1918
  %7937 = vmatpush.msra.mxu0 %v1868
  %7938 = vmatmul.f32.gmra.mxu0 %v1019
  %v7939 = vpop.f32.mrf.mxu0
  %v7940 = vadd.f32 %v7920, %v7939
  %7941 = vdwg.mxu0
  %7942 = vmatpush.msra.mxu0 %v3418
  %7943 = vmatpush.msra.mxu0 %v3368
  %7944 = vmatpush.msra.mxu0 %v3318
  %7945 = vmatpush.msra.mxu0 %v3268
  %7946 = vmatpush.msra.mxu0 %v3218
  %7947 = vmatpush.msra.mxu0 %v3168
  %7948 = vmatpush.msra.mxu0 %v3118
  %7949 = vmatpush.msra.mxu0 %v3068
  %7950 = vmatpush.msra.mxu0 %v3018
  %7951 = vmatpush.msra.mxu0 %v2968
  %7952 = vmatpush.msra.mxu0 %v2918
  %7953 = vmatpush.msra.mxu0 %v2868
  %7954 = vmatpush.msra.mxu0 %v2818
  %7955 = vmatpush.msra.mxu0 %v2768
  %7956 = vmatpush.msra.mxu0 %v2718
  %7957 = vmatpush.msra.mxu0 %v2668
  %7958 = vmatmul.f32.gmra.mxu0 %v1020
  %v7959 = vpop.f32.mrf.mxu0
  %v7960 = vadd.f32 %v7940, %v7959
  %7961 = vdwg.mxu0
  %7962 = vmatpush.msra.mxu0 %v4218
  %7963 = vmatpush.msra.mxu0 %v4168
  %7964 = vmatpush.msra.mxu0 %v4118
  %7965 = vmatpush.msra.mxu0 %v4068
  %7966 = vmatpush.msra.mxu0 %v4018
  %7967 = vmatpush.msra.mxu0 %v3968
  %7968 = vmatpush.msra.mxu0 %v3918
  %7969 = vmatpush.msra.mxu0 %v3868
  %7970 = vmatpush.msra.mxu0 %v3818
  %7971 = vmatpush.msra.mxu0 %v3768
  %7972 = vmatpush.msra.mxu0 %v3718
  %7973 = vmatpush.msra.mxu0 %v3668
  %7974 = vmatpush.msra.mxu0 %v3618
  %7975 = vmatpush.msra.mxu0 %v3568
  %7976 = vmatpush.msra.mxu0 %v3518
  %7977 = vmatpush.msra.mxu0 %v3468
  %7978 = vmatmul.f32.gmra.mxu0 %v1021
  %v7979 = vpop.f32.mrf.mxu0
  %v7980 = vadd.f32 %v7960, %v7979
  %7981 = vdwg.mxu0
  %7982 = vmatpush.msra.mxu0 %v1819
  %7983 = vmatpush.msra.mxu0 %v1769
  %7984 = vmatpush.msra.mxu0 %v1719
  %7985 = vmatpush.msra.mxu0 %v1669
  %7986 = vmatpush.msra.mxu0 %v1619
  %7987 = vmatpush.msra.mxu0 %v1569
  %7988 = vmatpush.msra.mxu0 %v1519
  %7989 = vmatpush.msra.mxu0 %v1469
  %7990 = vmatpush.msra.mxu0 %v1419
  %7991 = vmatpush.msra.mxu0 %v1369
  %7992 = vmatpush.msra.mxu0 %v1319
  %7993 = vmatpush.msra.mxu0 %v1269
  %7994 = vmatpush.msra.mxu0 %v1219
  %7995 = vmatpush.msra.mxu0 %v1169
  %7996 = vmatpush.msra.mxu0 %v1119
  %7997 = vmatpush.msra.mxu0 %v1069
  %7998 = vmatmul.f32.gmra.mxu0 %v1018
  %v7999 = vpop.f32.mrf.mxu0
  %v8000 = vadd.f32 0.0, %v7999
  %8001 = vdwg.mxu0
  %8002 = vmatpush.msra.mxu0 %v2619
  %8003 = vmatpush.msra.mxu0 %v2569
  %8004 = vmatpush.msra.mxu0 %v2519
  %8005 = vmatpush.msra.mxu0 %v2469
  %8006 = vmatpush.msra.mxu0 %v2419
  %8007 = vmatpush.msra.mxu0 %v2369
  %8008 = vmatpush.msra.mxu0 %v2319
  %8009 = vmatpush.msra.mxu0 %v2269
  %8010 = vmatpush.msra.mxu0 %v2219
  %8011 = vmatpush.msra.mxu0 %v2169
  %8012 = vmatpush.msra.mxu0 %v2119
  %8013 = vmatpush.msra.mxu0 %v2069
  %8014 = vmatpush.msra.mxu0 %v2019
  %8015 = vmatpush.msra.mxu0 %v1969
  %8016 = vmatpush.msra.mxu0 %v1919
  %8017 = vmatpush.msra.mxu0 %v1869
  %8018 = vmatmul.f32.gmra.mxu0 %v1019
  %v8019 = vpop.f32.mrf.mxu0
  %v8020 = vadd.f32 %v8000, %v8019
  %8021 = vdwg.mxu0
  %8022 = vmatpush.msra.mxu0 %v3419
  %8023 = vmatpush.msra.mxu0 %v3369
  %8024 = vmatpush.msra.mxu0 %v3319
  %8025 = vmatpush.msra.mxu0 %v3269
  %8026 = vmatpush.msra.mxu0 %v3219
  %8027 = vmatpush.msra.mxu0 %v3169
  %8028 = vmatpush.msra.mxu0 %v3119
  %8029 = vmatpush.msra.mxu0 %v3069
  %8030 = vmatpush.msra.mxu0 %v3019
  %8031 = vmatpush.msra.mxu0 %v2969
  %8032 = vmatpush.msra.mxu0 %v2919
  %8033 = vmatpush.msra.mxu0 %v2869
  %8034 = vmatpush.msra.mxu0 %v2819
  %8035 = vmatpush.msra.mxu0 %v2769
  %8036 = vmatpush.msra.mxu0 %v2719
  %8037 = vmatpush.msra.mxu0 %v2669
  %8038 = vmatmul.f32.gmra.mxu0 %v1020
  %v8039 = vpop.f32.mrf.mxu0
  %v8040 = vadd.f32 %v8020, %v8039
  %8041 = vdwg.mxu0
  %8042 = vmatpush.msra.mxu0 %v4219
  %8043 = vmatpush.msra.mxu0 %v4169
  %8044 = vmatpush.msra.mxu0 %v4119
  %8045 = vmatpush.msra.mxu0 %v4069
  %8046 = vmatpush.msra.mxu0 %v4019
  %8047 = vmatpush.msra.mxu0 %v3969
  %8048 = vmatpush.msra.mxu0 %v3919
  %8049 = vmatpush.msra.mxu0 %v3869
  %8050 = vmatpush.msra.mxu0 %v3819
  %8051 = vmatpush.msra.mxu0 %v3769
  %8052 = vmatpush.msra.mxu0 %v3719
  %8053 = vmatpush.msra.mxu0 %v3669
  %8054 = vmatpush.msra.mxu0 %v3619
  %8055 = vmatpush.msra.mxu0 %v3569
  %8056 = vmatpush.msra.mxu0 %v3519
  %8057 = vmatpush.msra.mxu0 %v3469
  %8058 = vmatmul.f32.gmra.mxu0 %v1021
  %v8059 = vpop.f32.mrf.mxu0
  %v8060 = vadd.f32 %v8040, %v8059
  %8061 = vdwg.mxu0
  %8062 = vmatpush.msra.mxu0 %v1820
  %8063 = vmatpush.msra.mxu0 %v1770
  %8064 = vmatpush.msra.mxu0 %v1720
  %8065 = vmatpush.msra.mxu0 %v1670
  %8066 = vmatpush.msra.mxu0 %v1620
  %8067 = vmatpush.msra.mxu0 %v1570
  %8068 = vmatpush.msra.mxu0 %v1520
  %8069 = vmatpush.msra.mxu0 %v1470
  %8070 = vmatpush.msra.mxu0 %v1420
  %8071 = vmatpush.msra.mxu0 %v1370
  %8072 = vmatpush.msra.mxu0 %v1320
  %8073 = vmatpush.msra.mxu0 %v1270
  %8074 = vmatpush.msra.mxu0 %v1220
  %8075 = vmatpush.msra.mxu0 %v1170
  %8076 = vmatpush.msra.mxu0 %v1120
  %8077 = vmatpush.msra.mxu0 %v1070
  %8078 = vmatmul.f32.gmra.mxu0 %v1018
  %v8079 = vpop.f32.mrf.mxu0
  %v8080 = vadd.f32 0.0, %v8079
  %8081 = vdwg.mxu0
  %8082 = vmatpush.msra.mxu0 %v2620
  %8083 = vmatpush.msra.mxu0 %v2570
  %8084 = vmatpush.msra.mxu0 %v2520
  %8085 = vmatpush.msra.mxu0 %v2470
  %8086 = vmatpush.msra.mxu0 %v2420
  %8087 = vmatpush.msra.mxu0 %v2370
  %8088 = vmatpush.msra.mxu0 %v2320
  %8089 = vmatpush.msra.mxu0 %v2270
  %8090 = vmatpush.msra.mxu0 %v2220
  %8091 = vmatpush.msra.mxu0 %v2170
  %8092 = vmatpush.msra.mxu0 %v2120
  %8093 = vmatpush.msra.mxu0 %v2070
  %8094 = vmatpush.msra.mxu0 %v2020
  %8095 = vmatpush.msra.mxu0 %v1970
  %8096 = vmatpush.msra.mxu0 %v1920
  %8097 = vmatpush.msra.mxu0 %v1870
  %8098 = vmatmul.f32.gmra.mxu0 %v1019
  %v8099 = vpop.f32.mrf.mxu0
  %v8100 = vadd.f32 %v8080, %v8099
  %8101 = vdwg.mxu0
  %8102 = vmatpush.msra.mxu0 %v3420
  %8103 = vmatpush.msra.mxu0 %v3370
  %8104 = vmatpush.msra.mxu0 %v3320
  %8105 = vmatpush.msra.mxu0 %v3270
  %8106 = vmatpush.msra.mxu0 %v3220
  %8107 = vmatpush.msra.mxu0 %v3170
  %8108 = vmatpush.msra.mxu0 %v3120
  %8109 = vmatpush.msra.mxu0 %v3070
  %8110 = vmatpush.msra.mxu0 %v3020
  %8111 = vmatpush.msra.mxu0 %v2970
  %8112 = vmatpush.msra.mxu0 %v2920
  %8113 = vmatpush.msra.mxu0 %v2870
  %8114 = vmatpush.msra.mxu0 %v2820
  %8115 = vmatpush.msra.mxu0 %v2770
  %8116 = vmatpush.msra.mxu0 %v2720
  %8117 = vmatpush.msra.mxu0 %v2670
  %8118 = vmatmul.f32.gmra.mxu0 %v1020
  %v8119 = vpop.f32.mrf.mxu0
  %v8120 = vadd.f32 %v8100, %v8119
  %8121 = vdwg.mxu0
  %8122 = vmatpush.msra.mxu0 %v4220
  %8123 = vmatpush.msra.mxu0 %v4170
  %8124 = vmatpush.msra.mxu0 %v4120
  %8125 = vmatpush.msra.mxu0 %v4070
  %8126 = vmatpush.msra.mxu0 %v4020
  %8127 = vmatpush.msra.mxu0 %v3970
  %8128 = vmatpush.msra.mxu0 %v3920
  %8129 = vmatpush.msra.mxu0 %v3870
  %8130 = vmatpush.msra.mxu0 %v3820
  %8131 = vmatpush.msra.mxu0 %v3770
  %8132 = vmatpush.msra.mxu0 %v3720
  %8133 = vmatpush.msra.mxu0 %v3670
  %8134 = vmatpush.msra.mxu0 %v3620
  %8135 = vmatpush.msra.mxu0 %v3570
  %8136 = vmatpush.msra.mxu0 %v3520
  %8137 = vmatpush.msra.mxu0 %v3470
  %8138 = vmatmul.f32.gmra.mxu0 %v1021
  %v8139 = vpop.f32.mrf.mxu0
  %v8140 = vadd.f32 %v8120, %v8139
  %8141 = vdwg.mxu0
  %8142 = vmatpush.msra.mxu0 %v1821
  %8143 = vmatpush.msra.mxu0 %v1771
  %8144 = vmatpush.msra.mxu0 %v1721
  %8145 = vmatpush.msra.mxu0 %v1671
  %8146 = vmatpush.msra.mxu0 %v1621
  %8147 = vmatpush.msra.mxu0 %v1571
  %8148 = vmatpush.msra.mxu0 %v1521
  %8149 = vmatpush.msra.mxu0 %v1471
  %8150 = vmatpush.msra.mxu0 %v1421
  %8151 = vmatpush.msra.mxu0 %v1371
  %8152 = vmatpush.msra.mxu0 %v1321
  %8153 = vmatpush.msra.mxu0 %v1271
  %8154 = vmatpush.msra.mxu0 %v1221
  %8155 = vmatpush.msra.mxu0 %v1171
  %8156 = vmatpush.msra.mxu0 %v1121
  %8157 = vmatpush.msra.mxu0 %v1071
  %8158 = vmatmul.f32.gmra.mxu0 %v1018
  %v8159 = vpop.f32.mrf.mxu0
  %v8160 = vadd.f32 0.0, %v8159
  %8161 = vdwg.mxu0
  %8162 = vmatpush.msra.mxu0 %v2621
  %8163 = vmatpush.msra.mxu0 %v2571
  %8164 = vmatpush.msra.mxu0 %v2521
  %8165 = vmatpush.msra.mxu0 %v2471
  %8166 = vmatpush.msra.mxu0 %v2421
  %8167 = vmatpush.msra.mxu0 %v2371
  %8168 = vmatpush.msra.mxu0 %v2321
  %8169 = vmatpush.msra.mxu0 %v2271
  %8170 = vmatpush.msra.mxu0 %v2221
  %8171 = vmatpush.msra.mxu0 %v2171
  %8172 = vmatpush.msra.mxu0 %v2121
  %8173 = vmatpush.msra.mxu0 %v2071
  %8174 = vmatpush.msra.mxu0 %v2021
  %8175 = vmatpush.msra.mxu0 %v1971
  %8176 = vmatpush.msra.mxu0 %v1921
  %8177 = vmatpush.msra.mxu0 %v1871
  %8178 = vmatmul.f32.gmra.mxu0 %v1019
  %v8179 = vpop.f32.mrf.mxu0
  %v8180 = vadd.f32 %v8160, %v8179
  %8181 = vdwg.mxu0
  %8182 = vmatpush.msra.mxu0 %v3421
  %8183 = vmatpush.msra.mxu0 %v3371
  %8184 = vmatpush.msra.mxu0 %v3321
  %8185 = vmatpush.msra.mxu0 %v3271
  %8186 = vmatpush.msra.mxu0 %v3221
  %8187 = vmatpush.msra.mxu0 %v3171
  %8188 = vmatpush.msra.mxu0 %v3121
  %8189 = vmatpush.msra.mxu0 %v3071
  %8190 = vmatpush.msra.mxu0 %v3021
  %8191 = vmatpush.msra.mxu0 %v2971
  %8192 = vmatpush.msra.mxu0 %v2921
  %8193 = vmatpush.msra.mxu0 %v2871
  %8194 = vmatpush.msra.mxu0 %v2821
  %8195 = vmatpush.msra.mxu0 %v2771
  %8196 = vmatpush.msra.mxu0 %v2721
  %8197 = vmatpush.msra.mxu0 %v2671
  %8198 = vmatmul.f32.gmra.mxu0 %v1020
  %v8199 = vpop.f32.mrf.mxu0
  %v8200 = vadd.f32 %v8180, %v8199
  %8201 = vdwg.mxu0
  %8202 = vmatpush.msra.mxu0 %v4221
  %8203 = vmatpush.msra.mxu0 %v4171
  %8204 = vmatpush.msra.mxu0 %v4121
  %8205 = vmatpush.msra.mxu0 %v4071
  %8206 = vmatpush.msra.mxu0 %v4021
  %8207 = vmatpush.msra.mxu0 %v3971
  %8208 = vmatpush.msra.mxu0 %v3921
  %8209 = vmatpush.msra.mxu0 %v3871
  %8210 = vmatpush.msra.mxu0 %v3821
  %8211 = vmatpush.msra.mxu0 %v3771
  %8212 = vmatpush.msra.mxu0 %v3721
  %8213 = vmatpush.msra.mxu0 %v3671
  %8214 = vmatpush.msra.mxu0 %v3621
  %8215 = vmatpush.msra.mxu0 %v3571
  %8216 = vmatpush.msra.mxu0 %v3521
  %8217 = vmatpush.msra.mxu0 %v3471
  %8218 = vmatmul.f32.gmra.mxu0 %v1021
  %v8219 = vpop.f32.mrf.mxu0
  %v8220 = vadd.f32 %v8200, %v8219
  %8221 = vdwg.mxu0
  %8222 = vst [vmem:[#allocation2] sm:$0xff] %v4300
  %8223 = vst [vmem:[#allocation2 + $0x8] sm:$0xff] %v4380
  %8224 = vst [vmem:[#allocation2 + $0x10] sm:$0xff] %v4460
  %8225 = vst [vmem:[#allocation2 + $0x18] sm:$0xff] %v4540
  %8226 = vst [vmem:[#allocation2 + $0x20] sm:$0xff] %v4620
  %8227 = vst [vmem:[#allocation2 + $0x28] sm:$0xff] %v4700
  %8228 = vst [vmem:[#allocation2 + $0x30] sm:$0xff] %v4780
  %8229 = vst [vmem:[#allocation2 + $0x38] sm:$0xff] %v4860
  %8230 = vst [vmem:[#allocation2 + $0x40] sm:$0xff] %v4940
  %8231 = vst [vmem:[#allocation2 + $0x48] sm:$0xff] %v5020
  %8232 = vst [vmem:[#allocation2 + $0x50] sm:$0xff] %v5100
  %8233 = vst [vmem:[#allocation2 + $0x58] sm:$0xff] %v5180
  %8234 = vst [vmem:[#allocation2 + $0x60] sm:$0xff] %v5260
  %8235 = vst [vmem:[#allocation2 + $0x68] sm:$0xff] %v5340
  %8236 = vst [vmem:[#allocation2 + $0x70] sm:$0xff] %v5420
  %8237 = vst [vmem:[#allocation2 + $0x78] sm:$0xff] %v5500
  %8238 = vst [vmem:[#allocation2 + $0x80] sm:$0xff] %v5580
  %8239 = vst [vmem:[#allocation2 + $0x88] sm:$0xff] %v5660
  %8240 = vst [vmem:[#allocation2 + $0x90] sm:$0xff] %v5740
  %8241 = vst [vmem:[#allocation2 + $0x98] sm:$0xff] %v5820
  %8242 = vst [vmem:[#allocation2 + $0xa0] sm:$0xff] %v5900
  %8243 = vst [vmem:[#allocation2 + $0xa8] sm:$0xff] %v5980
  %8244 = vst [vmem:[#allocation2 + $0xb0] sm:$0xff] %v6060
  %8245 = vst [vmem:[#allocation2 + $0xb8] sm:$0xff] %v6140
  %8246 = vst [vmem:[#allocation2 + $0xc0] sm:$0xff] %v6220
  %8247 = vst [vmem:[#allocation2 + $0xc8] sm:$0xff] %v6300
  %8248 = vst [vmem:[#allocation2 + $0xd0] sm:$0xff] %v6380
  %8249 = vst [vmem:[#allocation2 + $0xd8] sm:$0xff] %v6460
  %8250 = vst [vmem:[#allocation2 + $0xe0] sm:$0xff] %v6540
  %8251 = vst [vmem:[#allocation2 + $0xe8] sm:$0xff] %v6620
  %8252 = vst [vmem:[#allocation2 + $0xf0] sm:$0xff] %v6700
  %8253 = vst [vmem:[#allocation2 + $0xf8] sm:$0xff] %v6780
  %8254 = vst [vmem:[#allocation2 + $0x100] sm:$0xff] %v6860
  %8255 = vst [vmem:[#allocation2 + $0x108] sm:$0xff] %v6940
  %8256 = vst [vmem:[#allocation2 + $0x110] sm:$0xff] %v7020
  %8257 = vst [vmem:[#allocation2 + $0x118] sm:$0xff] %v7100
  %8258 = vst [vmem:[#allocation2 + $0x120] sm:$0xff] %v7180
  %8259 = vst [vmem:[#allocation2 + $0x128] sm:$0xff] %v7260
  %8260 = vst [vmem:[#allocation2 + $0x130] sm:$0xff] %v7340
  %8261 = vst [vmem:[#allocation2 + $0x138] sm:$0xff] %v7420
  %8262 = vst [vmem:[#allocation2 + $0x140] sm:$0xff] %v7500
  %8263 = vst [vmem:[#allocation2 + $0x148] sm:$0xff] %v7580
  %8264 = vst [vmem:[#allocation2 + $0x150] sm:$0xff] %v7660
  %8265 = vst [vmem:[#allocation2 + $0x158] sm:$0xff] %v7740
  %8266 = vst [vmem:[#allocation2 + $0x160] sm:$0xff] %v7820
  %8267 = vst [vmem:[#allocation2 + $0x168] sm:$0xff] %v7900
  %8268 = vst [vmem:[#allocation2 + $0x170] sm:$0xff] %v7980
  %8269 = vst [vmem:[#allocation2 + $0x178] sm:$0xff] %v8060
  %8270 = vst [vmem:[#allocation2 + $0x180] sm:$0xff] %v8140
  %8271 = vst [vmem:[#allocation2 + $0x188] sm:$0xff] %v8220
  %v8272 = vld [vmem:[%s5] sm:$0xff]
  %v8273 = vld [vmem:[%s5 + $0x8] sm:$0xff]
  %v8274 = vld [vmem:[%s4] sm:$0xff]
  %v8275 = vld [vmem:[%s4 + $0x8] sm:$0xff]
  %v8276 = vld [vmem:[%s4 + $0x10] sm:$0xff]
  %v8277 = vld [vmem:[%s4 + $0x18] sm:$0xff]
  %v8278 = vld [vmem:[#allocation2] sm:$0xff]
  %v8279 = vld [vmem:[#allocation2 + $0x8] sm:$0xff]
  %v8280 = vld [vmem:[#allocation2 + $0x10] sm:$0xff]
  %v8281 = vld [vmem:[#allocation2 + $0x18] sm:$0xff]
  %v8282 = vld [vmem:[#allocation2 + $0x20] sm:$0xff]
  %v8283 = vld [vmem:[#allocation2 + $0x28] sm:$0xff]
  %v8284 = vld [vmem:[#allocation2 + $0x30] sm:$0xff]
  %v8285 = vld [vmem:[#allocation2 + $0x38] sm:$0xff]
  %v8286 = vld [vmem:[#allocation2 + $0x40] sm:$0xff]
  %v8287 = vld [vmem:[#allocation2 + $0x48] sm:$0xff]
  %v8288 = vld [vmem:[#allocation2 + $0x50] sm:$0xff]
  %v8289 = vld [vmem:[#allocation2 + $0x58] sm:$0xff]
  %v8290 = vld [vmem:[#allocation2 + $0x60] sm:$0xff]
  %v8291 = vld [vmem:[#allocation2 + $0x68] sm:$0xff]
  %v8292 = vld [vmem:[#allocation2 + $0x70] sm:$0xff]
  %v8293 = vld [vmem:[#allocation2 + $0x78] sm:$0xff]
  %v8294 = vld [vmem:[#allocation2 + $0x80] sm:$0xff]
  %v8295 = vld [vmem:[#allocation2 + $0x88] sm:$0xff]
  %v8296 = vld [vmem:[#allocation2 + $0x90] sm:$0xff]
  %v8297 = vld [vmem:[#allocation2 + $0x98] sm:$0xff]
  %v8298 = vld [vmem:[#allocation2 + $0xa0] sm:$0xff]
  %v8299 = vld [vmem:[#allocation2 + $0xa8] sm:$0xff]
  %v8300 = vld [vmem:[#allocation2 + $0xb0] sm:$0xff]
  %v8301 = vld [vmem:[#allocation2 + $0xb8] sm:$0xff]
  %v8302 = vld [vmem:[#allocation2 + $0xc0] sm:$0xff]
  %v8303 = vld [vmem:[#allocation2 + $0xc8] sm:$0xff]
  %v8304 = vld [vmem:[#allocation2 + $0xd0] sm:$0xff]
  %v8305 = vld [vmem:[#allocation2 + $0xd8] sm:$0xff]
  %v8306 = vld [vmem:[#allocation2 + $0xe0] sm:$0xff]
  %v8307 = vld [vmem:[#allocation2 + $0xe8] sm:$0xff]
  %v8308 = vld [vmem:[#allocation2 + $0xf0] sm:$0xff]
  %v8309 = vld [vmem:[#allocation2 + $0xf8] sm:$0xff]
  %v8310 = vld [vmem:[#allocation2 + $0x100] sm:$0xff]
  %v8311 = vld [vmem:[#allocation2 + $0x108] sm:$0xff]
  %v8312 = vld [vmem:[#allocation2 + $0x110] sm:$0xff]
  %v8313 = vld [vmem:[#allocation2 + $0x118] sm:$0xff]
  %v8314 = vld [vmem:[#allocation2 + $0x120] sm:$0xff]
  %v8315 = vld [vmem:[#allocation2 + $0x128] sm:$0xff]
  %v8316 = vld [vmem:[#allocation2 + $0x130] sm:$0xff]
  %v8317 = vld [vmem:[#allocation2 + $0x138] sm:$0xff]
  %v8318 = vld [vmem:[#allocation2 + $0x140] sm:$0xff]
  %v8319 = vld [vmem:[#allocation2 + $0x148] sm:$0xff]
  %v8320 = vld [vmem:[#allocation2 + $0x150] sm:$0xff]
  %v8321 = vld [vmem:[#allocation2 + $0x158] sm:$0xff]
  %v8322 = vld [vmem:[#allocation2 + $0x160] sm:$0xff]
  %v8323 = vld [vmem:[#allocation2 + $0x168] sm:$0xff]
  %v8324 = vld [vmem:[#allocation2 + $0x170] sm:$0xff]
  %v8325 = vld [vmem:[#allocation2 + $0x178] sm:$0xff]
  %v8326 = vld [vmem:[#allocation2 + $0x180] sm:$0xff]
  %v8327 = vld [vmem:[#allocation2 + $0x188] sm:$0xff]
  %8329 = vset.pattern.permute.xlu0 0
  %8330 = vperm.xlu0 %8329, %v8272
  %v8331 = vpop.permute.xlu0 %8330
  %8334 = vset.pattern.permute.xlu0 0
  %8335 = vperm.xlu0 %8334, %v8273
  %v8336 = vpop.permute.xlu0 %8335
  %vm8338 = vcmask 588800
  %v8340 = vsel %vm8338, %v8275, 0
  %v8343 = vsel %vm8338, %v8277, 0
  %8345 = vmatpush.msra.mxu0 %v8308
  %8346 = vmatpush.msra.mxu0 %v8306
  %8347 = vmatpush.msra.mxu0 %v8304
  %8348 = vmatpush.msra.mxu0 %v8302
  %8349 = vmatpush.msra.mxu0 %v8300
  %8350 = vmatpush.msra.mxu0 %v8298
  %8351 = vmatpush.msra.mxu0 %v8296
  %8352 = vmatpush.msra.mxu0 %v8294
  %8353 = vmatpush.msra.mxu0 %v8292
  %8354 = vmatpush.msra.mxu0 %v8290
  %8355 = vmatpush.msra.mxu0 %v8288
  %8356 = vmatpush.msra.mxu0 %v8286
  %8357 = vmatpush.msra.mxu0 %v8284
  %8358 = vmatpush.msra.mxu0 %v8282
  %8359 = vmatpush.msra.mxu0 %v8280
  %8360 = vmatpush.msra.mxu0 %v8278
  %8361 = vmatmul.f32.gmra.mxu0 %v8274
  %v8362 = vpop.f32.mrf.mxu0
  %v8363 = vadd.f32 %v8331, %v8362
  %8364 = vmatmul.f32.gmra.mxu0 %v8276
  %v8365 = vpop.f32.mrf.mxu0
  %v8366 = vadd.f32 %v8336, %v8365
  %8367 = vdwg.mxu0
  %8368 = vmatpush.msra.mxu0 0.0
  %8369 = vmatpush.msra.mxu0 0.0
  %8370 = vmatpush.msra.mxu0 0.0
  %8371 = vmatpush.msra.mxu0 0.0
  %8372 = vmatpush.msra.mxu0 0.0
  %8373 = vmatpush.msra.mxu0 0.0
  %8374 = vmatpush.msra.mxu0 0.0
  %8375 = vmatpush.msra.mxu0 %v8326
  %8376 = vmatpush.msra.mxu0 %v8324
  %8377 = vmatpush.msra.mxu0 %v8322
  %8378 = vmatpush.msra.mxu0 %v8320
  %8379 = vmatpush.msra.mxu0 %v8318
  %8380 = vmatpush.msra.mxu0 %v8316
  %8381 = vmatpush.msra.mxu0 %v8314
  %8382 = vmatpush.msra.mxu0 %v8312
  %8383 = vmatpush.msra.mxu0 %v8310
  %8384 = vmatmul.f32.gmra.mxu0 %v8340
  %v8385 = vpop.f32.mrf.mxu0
  %v8386 = vadd.f32 %v8363, %v8385
  %8387 = vmatmul.f32.gmra.mxu0 %v8343
  %v8388 = vpop.f32.mrf.mxu0
  %v8389 = vadd.f32 %v8366, %v8388
  %8390 = vdwg.mxu0
  %8391 = vmatpush.msra.mxu0 %v8309
  %8392 = vmatpush.msra.mxu0 %v8307
  %8393 = vmatpush.msra.mxu0 %v8305
  %8394 = vmatpush.msra.mxu0 %v8303
  %8395 = vmatpush.msra.mxu0 %v8301
  %8396 = vmatpush.msra.mxu0 %v8299
  %8397 = vmatpush.msra.mxu0 %v8297
  %8398 = vmatpush.msra.mxu0 %v8295
  %8399 = vmatpush.msra.mxu0 %v8293
  %8400 = vmatpush.msra.mxu0 %v8291
  %8401 = vmatpush.msra.mxu0 %v8289
  %8402 = vmatpush.msra.mxu0 %v8287
  %8403 = vmatpush.msra.mxu0 %v8285
  %8404 = vmatpush.msra.mxu0 %v8283
  %8405 = vmatpush.msra.mxu0 %v8281
  %8406 = vmatpush.msra.mxu0 %v8279
  %8407 = vmatmul.f32.gmra.mxu0 %v8274
  %v8408 = vpop.f32.mrf.mxu0
  %v8409 = vadd.f32 %v8331, %v8408
  %8410 = vmatmul.f32.gmra.mxu0 %v8276
  %v8411 = vpop.f32.mrf.mxu0
  %v8412 = vadd.f32 %v8336, %v8411
  %8413 = vdwg.mxu0
  %8414 = vmatpush.msra.mxu0 0.0
  %8415 = vmatpush.msra.mxu0 0.0
  %8416 = vmatpush.msra.mxu0 0.0
  %8417 = vmatpush.msra.mxu0 0.0
  %8418 = vmatpush.msra.mxu0 0.0
  %8419 = vmatpush.msra.mxu0 0.0
  %8420 = vmatpush.msra.mxu0 0.0
  %8421 = vmatpush.msra.mxu0 %v8327
  %8422 = vmatpush.msra.mxu0 %v8325
  %8423 = vmatpush.msra.mxu0 %v8323
  %8424 = vmatpush.msra.mxu0 %v8321
  %8425 = vmatpush.msra.mxu0 %v8319
  %8426 = vmatpush.msra.mxu0 %v8317
  %8427 = vmatpush.msra.mxu0 %v8315
  %8428 = vmatpush.msra.mxu0 %v8313
  %8429 = vmatpush.msra.mxu0 %v8311
  %8430 = vmatmul.f32.gmra.mxu0 %v8340
  %v8431 = vpop.f32.mrf.mxu0
  %v8432 = vadd.f32 %v8409, %v8431
  %8433 = vmatmul.f32.gmra.mxu0 %v8343
  %v8434 = vpop.f32.mrf.mxu0
  %v8435 = vadd.f32 %v8412, %v8434
  %8436 = vdwg.mxu0
  %vm8437 = vcmp.lt.s32.totalorder %v585, 0
  %v8438 = vsub.s32 0, %v585
  %v8439 = vsel %vm8437, %v8438, %v585
  %v8440 = vshrl.u32 %v8439, 6
  %v8441 = vand.u32 %v8439, 63
  %v8442 = vsub.s32 0, %v8441
  %v8443 = vsel %vm8437, %v8442, %v8441
  %vm8444 = vcmp.lt.s32.totalorder %v586, 0
  %v8445 = vsub.s32 0, %v586
  %v8446 = vsel %vm8444, %v8445, %v586
  %v8447 = vshrl.u32 %v8446, 6
  %v8448 = vand.u32 %v8446, 63
  %v8449 = vsub.s32 0, %v8448
  %v8450 = vsel %vm8444, %v8449, %v8448
  %vm8451 = vcmp.ne.s32.totalorder %v8443, 0
  %vm8452 = vcmp.ne.s32.totalorder %v8450, 0
  %vm8453 = vcmp.lt.s32.totalorder %v8443, 0
  %vm8454 = vcmp.lt.s32.totalorder %v8450, 0
  %vm8455 = vmand %vm8453, %vm8451
  %vm8456 = vmand %vm8454, %vm8452
  %v8457 = vadd.s32 %v8443, 64
  %v8458 = vadd.s32 %v8450, 64
  %v8459 = vsel %vm8455, %v8457, %v8443
  %v8460 = vsel %vm8456, %v8458, %v8450
  %vm8461 = vcmp.lt.s32.totalorder %v8459, 50
  %vm8462 = vcmp.lt.s32.totalorder %v8460, 50
  %v8463 = vsel %vm8461, 1, 0
  %v8464 = vsel %vm8462, 1, 0
  %v8465 = vcvt.s32.f32 %v8463
  %v8466 = vcvt.s32.f32 %v8464
  %v8467 = vmul.f32 %v8386, %v8465
  %v8468 = vmul.f32 %v8432, %v8466
  %v8469 = vmul.f32 %v8389, %v8465
  %v8470 = vmul.f32 %v8435, %v8466
  %v8471 = vadd.f32 %v8467, %v8468
  %8472 = vadd.xlane.f32.xlu0 %v8471
  %v8473 = vpop.xlane.xlu0 %8472
  %v8474 = vadd.f32 %v8469, %v8470
  %8475 = vadd.xlane.f32.xlu0 %v8474
  %v8476 = vpop.xlane.xlu0 %8475
  %v8477 = vmul.f32 %v8473, 0.005
  %v8478 = vmul.f32 %v8476, 0.005
  %v8479 = vmul.f32 %v8467, %v8467
  %v8480 = vmul.f32 %v8468, %v8468
  %v8481 = vmul.f32 %v8469, %v8469
  %v8482 = vmul.f32 %v8470, %v8470
  %v8483 = vadd.f32 %v8479, %v8480
  %8484 = vadd.xlane.f32.xlu0 %v8483
  %v8485 = vpop.xlane.xlu0 %8484
  %v8486 = vadd.f32 %v8481, %v8482
  %8487 = vadd.xlane.f32.xlu0 %v8486
  %v8488 = vpop.xlane.xlu0 %8487
  %v8489 = vmul.f32 %v8485, 0.005
  %v8490 = vmul.f32 %v8488, 0.005
  %v8491 = vsub.f32 %v8467, %v8477
  %v8492 = vsub.f32 %v8468, %v8477
  %v8493 = vsub.f32 %v8469, %v8478
  %v8494 = vsub.f32 %v8470, %v8478
  %v8495 = vmul.f32 %v8477, %v8477
  %v8496 = vmul.f32 %v8478, %v8478
  %v8497 = vsub.f32 %v8489, %v8495
  %v8498 = vsub.f32 %v8490, %v8496
  %v8499 = vadd.f32 %v8497, 1e-05
  %v8500 = vadd.f32 %v8498, 1e-05
  %v8501 = vrsqrt.pop %v8499
  %v8502 = vmul.f32 %v8501, %v8499
  %v8503 = vmul.f32 %v8502, %v8501
  %v8504 = vmul.f32 0.5, %v8503
  %v8505 = vsub.f32 1.5, %v8504
  %v8506 = vmul.f32 %v8501, %v8505
  %vm8507 = vweird.f32 %v8499
  %vm8508 = vweird.f32 %v8501
  %vm8509 = vmor %vm8507, %vm8508
  %v8510 = vsel %vm8509, %v8501, %v8506
  %v8511 = vrsqrt.pop %v8500
  %v8512 = vmul.f32 %v8511, %v8500
  %v8513 = vmul.f32 %v8512, %v8511
  %v8514 = vmul.f32 0.5, %v8513
  %v8515 = vsub.f32 1.5, %v8514
  %v8516 = vmul.f32 %v8511, %v8515
  %vm8517 = vweird.f32 %v8500
  %vm8518 = vweird.f32 %v8511
  %vm8519 = vmor %vm8517, %vm8518
  %v8520 = vsel %vm8519, %v8511, %v8516
  %v8521 = vmul.f32 %v8491, %v8510
  %v8522 = vmul.f32 %v8492, %v8510
  %v8523 = vmul.f32 %v8493, %v8520
  %v8524 = vmul.f32 %v8494, %v8520
  %8525 = vset.pattern.permute.xlu0 1
  %8526 = vperm.xlu0 %8525, %v8272
  %v8527 = vpop.permute.xlu0 %8526
  %8529 = vset.pattern.permute.xlu0 1
  %8530 = vperm.xlu0 %8529, %v8273
  %v8531 = vpop.permute.xlu0 %8530
  %v8533 = vmul.f32 %v8521, %v8527
  %v8534 = vmul.f32 %v8522, %v8527
  %v8535 = vmul.f32 %v8523, %v8531
  %v8536 = vmul.f32 %v8524, %v8531
  %8537 = vset.pattern.permute.xlu0 2
  %8538 = vperm.xlu0 %8537, %v8272
  %v8539 = vpop.permute.xlu0 %8538
  %8541 = vset.pattern.permute.xlu0 2
  %8542 = vperm.xlu0 %8541, %v8273
  %v8543 = vpop.permute.xlu0 %8542
  %v8545 = vadd.f32 %v8533, %v8539
  %v8546 = vadd.f32 %v8534, %v8539
  %v8547 = vadd.f32 %v8535, %v8543
  %v8548 = vadd.f32 %v8536, %v8543
  %v8549 = vmax.f32 %v8545, 0.0
  %v8550 = vmax.f32 %v8546, 0.0
  %v8551 = vmax.f32 %v8547, 0.0
  %v8552 = vmax.f32 %v8548, 0.0
  %8555 = vrot.lane.b32.xlu0 %v8549, 64
  %v8556 = vpop.permute.xlu0 %8555
  %8557 = vrot.lane.b32.xlu0 %v8551, 64
  %v8558 = vpop.permute.xlu0 %8557
  %v8561 = vmax.f32 %v8549, %v8556
  %v8562 = vmax.f32 %v8551, %v8558
  %8565 = vrot.lane.b32.xlu0 %v8550, 64
  %v8566 = vpop.permute.xlu0 %8565
  %8567 = vrot.lane.b32.xlu0 %v8552, 64
  %v8568 = vpop.permute.xlu0 %8567
  %v8571 = vmax.f32 %v8550, %v8566
  %v8572 = vmax.f32 %v8552, %v8568
  %v8573 = vmax.f32 %v8561, %v8571
  %v8574 = vmax.f32 %v8562, %v8572
  %v8575 = vld [vmem:[%s6] sm:$0xff]
  %v8576 = vld [vmem:[%s6 + $0x8] sm:$0xff]
  %v8577 = vld [vmem:[%s6 + $0x10] sm:$0xff]
  %v8578 = vld [vmem:[%s6 + $0x18] sm:$0xff]
  %v8579 = vld [vmem:[%s6 + $0x20] sm:$0xff]
  %v8580 = vld [vmem:[%s6 + $0x28] sm:$0xff]
  %v8581 = vld [vmem:[%s6 + $0x30] sm:$0xff]
  %v8582 = vld [vmem:[%s6 + $0x38] sm:$0xff]
  %v8583 = vld [vmem:[%s6 + $0x40] sm:$0xff]
  %v8584 = vld [vmem:[%s6 + $0x48] sm:$0xff]
  %v8585 = vld [vmem:[%s6 + $0x50] sm:$0xff]
  %v8586 = vld [vmem:[%s6 + $0x58] sm:$0xff]
  %v8587 = vld [vmem:[%s6 + $0x60] sm:$0xff]
  %v8588 = vld [vmem:[%s6 + $0x68] sm:$0xff]
  %v8589 = vld [vmem:[%s6 + $0x70] sm:$0xff]
  %v8590 = vld [vmem:[%s6 + $0x78] sm:$0xff]
  %v8591 = vld [vmem:[%s6 + $0x80] sm:$0xff]
  %v8592 = vld [vmem:[%s6 + $0x88] sm:$0xff]
  %v8593 = vld [vmem:[%s6 + $0x90] sm:$0xff]
  %v8594 = vld [vmem:[%s6 + $0x98] sm:$0xff]
  %v8595 = vld [vmem:[%s6 + $0xa0] sm:$0xff]
  %v8596 = vld [vmem:[%s6 + $0xa8] sm:$0xff]
  %v8597 = vld [vmem:[%s6 + $0xb0] sm:$0xff]
  %v8598 = vld [vmem:[%s6 + $0xb8] sm:$0xff]
  %v8599 = vld [vmem:[%s6 + $0xc0] sm:$0xff]
  %v8600 = vld [vmem:[%s6 + $0xc8] sm:$0xff]
  %v8601 = vld [vmem:[%s6 + $0xd0] sm:$0xff]
  %v8602 = vld [vmem:[%s6 + $0xd8] sm:$0xff]
  %v8603 = vld [vmem:[%s6 + $0xe0] sm:$0xff]
  %v8604 = vld [vmem:[%s6 + $0xe8] sm:$0xff]
  %v8605 = vld [vmem:[%s6 + $0xf0] sm:$0xff]
  %v8606 = vld [vmem:[%s6 + $0xf8] sm:$0xff]
  %v8607 = vld [vmem:[%s6 + $0x100] sm:$0xff]
  %v8608 = vld [vmem:[%s6 + $0x108] sm:$0xff]
  %v8609 = vld [vmem:[%s6 + $0x110] sm:$0xff]
  %v8610 = vld [vmem:[%s6 + $0x118] sm:$0xff]
  %v8611 = vld [vmem:[%s6 + $0x120] sm:$0xff]
  %v8612 = vld [vmem:[%s6 + $0x128] sm:$0xff]
  %v8613 = vld [vmem:[%s6 + $0x130] sm:$0xff]
  %v8614 = vld [vmem:[%s6 + $0x138] sm:$0xff]
  %v8615 = vld [vmem:[%s6 + $0x140] sm:$0xff]
  %v8616 = vld [vmem:[%s6 + $0x148] sm:$0xff]
  %v8617 = vld [vmem:[%s6 + $0x150] sm:$0xff]
  %v8618 = vld [vmem:[%s6 + $0x158] sm:$0xff]
  %v8619 = vld [vmem:[%s6 + $0x160] sm:$0xff]
  %v8620 = vld [vmem:[%s6 + $0x168] sm:$0xff]
  %v8621 = vld [vmem:[%s6 + $0x170] sm:$0xff]
  %v8622 = vld [vmem:[%s6 + $0x178] sm:$0xff]
  %v8623 = vld [vmem:[%s6 + $0x180] sm:$0xff]
  %v8624 = vld [vmem:[%s6 + $0x188] sm:$0xff]
  %vm8625 = vcmask 130048
  %v8627 = vsel %vm8625, %v8575, 0
  %v8630 = vsel %vm8625, %v8576, 0
  %v8633 = vsel %vm8625, %v8577, 0
  %v8636 = vsel %vm8625, %v8578, 0
  %v8639 = vsel %vm8625, %v8579, 0
  %v8642 = vsel %vm8625, %v8580, 0
  %v8645 = vsel %vm8625, %v8581, 0
  %v8648 = vsel %vm8625, %v8582, 0
  %v8651 = vsel %vm8625, %v8583, 0
  %v8654 = vsel %vm8625, %v8584, 0
  %v8657 = vsel %vm8625, %v8585, 0
  %v8660 = vsel %vm8625, %v8586, 0
  %v8663 = vsel %vm8625, %v8587, 0
  %v8666 = vsel %vm8625, %v8588, 0
  %v8669 = vsel %vm8625, %v8589, 0
  %v8672 = vsel %vm8625, %v8590, 0
  %v8675 = vsel %vm8625, %v8591, 0
  %v8678 = vsel %vm8625, %v8592, 0
  %v8681 = vsel %vm8625, %v8593, 0
  %v8684 = vsel %vm8625, %v8594, 0
  %v8687 = vsel %vm8625, %v8595, 0
  %v8690 = vsel %vm8625, %v8596, 0
  %v8693 = vsel %vm8625, %v8597, 0
  %v8696 = vsel %vm8625, %v8598, 0
  %v8699 = vsel %vm8625, %v8599, 0
  %v8702 = vsel %vm8625, %v8600, 0
  %v8705 = vsel %vm8625, %v8601, 0
  %v8708 = vsel %vm8625, %v8602, 0
  %v8711 = vsel %vm8625, %v8603, 0
  %v8714 = vsel %vm8625, %v8604, 0
  %v8717 = vsel %vm8625, %v8605, 0
  %v8720 = vsel %vm8625, %v8606, 0
  %v8723 = vsel %vm8625, %v8607, 0
  %v8726 = vsel %vm8625, %v8608, 0
  %v8729 = vsel %vm8625, %v8609, 0
  %v8732 = vsel %vm8625, %v8610, 0
  %v8735 = vsel %vm8625, %v8611, 0
  %v8738 = vsel %vm8625, %v8612, 0
  %v8741 = vsel %vm8625, %v8613, 0
  %v8744 = vsel %vm8625, %v8614, 0
  %v8747 = vsel %vm8625, %v8615, 0
  %v8750 = vsel %vm8625, %v8616, 0
  %v8753 = vsel %vm8625, %v8617, 0
  %v8756 = vsel %vm8625, %v8618, 0
  %v8759 = vsel %vm8625, %v8619, 0
  %v8762 = vsel %vm8625, %v8620, 0
  %v8765 = vsel %vm8625, %v8621, 0
  %v8768 = vsel %vm8625, %v8622, 0
  %v8771 = vsel %vm8625, %v8623, 0
  %v8774 = vsel %vm8625, %v8624, 0
  %8776 = vmatpush.msra.mxu0 0.0
  %8777 = vmatpush.msra.mxu0 0.0
  %8778 = vmatpush.msra.mxu0 0.0
  %8779 = vmatpush.msra.mxu0 0.0
  %8780 = vmatpush.msra.mxu0 0.0
  %8781 = vmatpush.msra.mxu0 0.0
  %8782 = vmatpush.msra.mxu0 0.0
  %8783 = vmatpush.msra.mxu0 0.0
  %8784 = vmatpush.msra.mxu0 0.0
  %8785 = vmatpush.msra.mxu0 0.0
  %8786 = vmatpush.msra.mxu0 0.0
  %8787 = vmatpush.msra.mxu0 0.0
  %8788 = vmatpush.msra.mxu0 0.0
  %8789 = vmatpush.msra.mxu0 0.0
  %8790 = vmatpush.msra.mxu0 %v8574
  %8791 = vmatpush.msra.mxu0 %v8573
  %8792 = vmatmul.f32.gmra.mxu0 %v8627
  %v8793 = vpop.f32.mrf.mxu0
  %v8794 = vadd.f32 0.0, %v8793
  %8795 = vmatmul.f32.gmra.mxu0 %v8630
  %v8796 = vpop.f32.mrf.mxu0
  %v8797 = vadd.f32 0.0, %v8796
  %8798 = vmatmul.f32.gmra.mxu0 %v8633
  %v8799 = vpop.f32.mrf.mxu0
  %v8800 = vadd.f32 0.0, %v8799
  %8801 = vmatmul.f32.gmra.mxu0 %v8636
  %v8802 = vpop.f32.mrf.mxu0
  %v8803 = vadd.f32 0.0, %v8802
  %8804 = vmatmul.f32.gmra.mxu0 %v8639
  %v8805 = vpop.f32.mrf.mxu0
  %v8806 = vadd.f32 0.0, %v8805
  %8807 = vmatmul.f32.gmra.mxu0 %v8642
  %v8808 = vpop.f32.mrf.mxu0
  %v8809 = vadd.f32 0.0, %v8808
  %8810 = vmatmul.f32.gmra.mxu0 %v8645
  %v8811 = vpop.f32.mrf.mxu0
  %v8812 = vadd.f32 0.0, %v8811
  %8813 = vmatmul.f32.gmra.mxu0 %v8648
  %v8814 = vpop.f32.mrf.mxu0
  %v8815 = vadd.f32 0.0, %v8814
  %8816 = vmatmul.f32.gmra.mxu0 %v8651
  %v8817 = vpop.f32.mrf.mxu0
  %v8818 = vadd.f32 0.0, %v8817
  %8819 = vmatmul.f32.gmra.mxu0 %v8654
  %v8820 = vpop.f32.mrf.mxu0
  %v8821 = vadd.f32 0.0, %v8820
  %8822 = vmatmul.f32.gmra.mxu0 %v8657
  %v8823 = vpop.f32.mrf.mxu0
  %v8824 = vadd.f32 0.0, %v8823
  %8825 = vmatmul.f32.gmra.mxu0 %v8660
  %v8826 = vpop.f32.mrf.mxu0
  %v8827 = vadd.f32 0.0, %v8826
  %8828 = vmatmul.f32.gmra.mxu0 %v8663
  %v8829 = vpop.f32.mrf.mxu0
  %v8830 = vadd.f32 0.0, %v8829
  %8831 = vmatmul.f32.gmra.mxu0 %v8666
  %v8832 = vpop.f32.mrf.mxu0
  %v8833 = vadd.f32 0.0, %v8832
  %8834 = vmatmul.f32.gmra.mxu0 %v8669
  %v8835 = vpop.f32.mrf.mxu0
  %v8836 = vadd.f32 0.0, %v8835
  %8837 = vmatmul.f32.gmra.mxu0 %v8672
  %v8838 = vpop.f32.mrf.mxu0
  %v8839 = vadd.f32 0.0, %v8838
  %8840 = vmatmul.f32.gmra.mxu0 %v8675
  %v8841 = vpop.f32.mrf.mxu0
  %v8842 = vadd.f32 0.0, %v8841
  %8843 = vmatmul.f32.gmra.mxu0 %v8678
  %v8844 = vpop.f32.mrf.mxu0
  %v8845 = vadd.f32 0.0, %v8844
  %8846 = vmatmul.f32.gmra.mxu0 %v8681
  %v8847 = vpop.f32.mrf.mxu0
  %v8848 = vadd.f32 0.0, %v8847
  %8849 = vmatmul.f32.gmra.mxu0 %v8684
  %v8850 = vpop.f32.mrf.mxu0
  %v8851 = vadd.f32 0.0, %v8850
  %8852 = vmatmul.f32.gmra.mxu0 %v8687
  %v8853 = vpop.f32.mrf.mxu0
  %v8854 = vadd.f32 0.0, %v8853
  %8855 = vmatmul.f32.gmra.mxu0 %v8690
  %v8856 = vpop.f32.mrf.mxu0
  %v8857 = vadd.f32 0.0, %v8856
  %8858 = vmatmul.f32.gmra.mxu0 %v8693
  %v8859 = vpop.f32.mrf.mxu0
  %v8860 = vadd.f32 0.0, %v8859
  %8861 = vmatmul.f32.gmra.mxu0 %v8696
  %v8862 = vpop.f32.mrf.mxu0
  %v8863 = vadd.f32 0.0, %v8862
  %8864 = vmatmul.f32.gmra.mxu0 %v8699
  %v8865 = vpop.f32.mrf.mxu0
  %v8866 = vadd.f32 0.0, %v8865
  %8867 = vmatmul.f32.gmra.mxu0 %v8702
  %v8868 = vpop.f32.mrf.mxu0
  %v8869 = vadd.f32 0.0, %v8868
  %8870 = vmatmul.f32.gmra.mxu0 %v8705
  %v8871 = vpop.f32.mrf.mxu0
  %v8872 = vadd.f32 0.0, %v8871
  %8873 = vmatmul.f32.gmra.mxu0 %v8708
  %v8874 = vpop.f32.mrf.mxu0
  %v8875 = vadd.f32 0.0, %v8874
  %8876 = vmatmul.f32.gmra.mxu0 %v8711
  %v8877 = vpop.f32.mrf.mxu0
  %v8878 = vadd.f32 0.0, %v8877
  %8879 = vmatmul.f32.gmra.mxu0 %v8714
  %v8880 = vpop.f32.mrf.mxu0
  %v8881 = vadd.f32 0.0, %v8880
  %8882 = vmatmul.f32.gmra.mxu0 %v8717
  %v8883 = vpop.f32.mrf.mxu0
  %v8884 = vadd.f32 0.0, %v8883
  %8885 = vmatmul.f32.gmra.mxu0 %v8720
  %v8886 = vpop.f32.mrf.mxu0
  %v8887 = vadd.f32 0.0, %v8886
  %8888 = vmatmul.f32.gmra.mxu0 %v8723
  %v8889 = vpop.f32.mrf.mxu0
  %v8890 = vadd.f32 0.0, %v8889
  %8891 = vmatmul.f32.gmra.mxu0 %v8726
  %v8892 = vpop.f32.mrf.mxu0
  %v8893 = vadd.f32 0.0, %v8892
  %8894 = vmatmul.f32.gmra.mxu0 %v8729
  %v8895 = vpop.f32.mrf.mxu0
  %v8896 = vadd.f32 0.0, %v8895
  %8897 = vmatmul.f32.gmra.mxu0 %v8732
  %v8898 = vpop.f32.mrf.mxu0
  %v8899 = vadd.f32 0.0, %v8898
  %8900 = vmatmul.f32.gmra.mxu0 %v8735
  %v8901 = vpop.f32.mrf.mxu0
  %v8902 = vadd.f32 0.0, %v8901
  %8903 = vmatmul.f32.gmra.mxu0 %v8738
  %v8904 = vpop.f32.mrf.mxu0
  %v8905 = vadd.f32 0.0, %v8904
  %8906 = vmatmul.f32.gmra.mxu0 %v8741
  %v8907 = vpop.f32.mrf.mxu0
  %v8908 = vadd.f32 0.0, %v8907
  %8909 = vmatmul.f32.gmra.mxu0 %v8744
  %v8910 = vpop.f32.mrf.mxu0
  %v8911 = vadd.f32 0.0, %v8910
  %8912 = vmatmul.f32.gmra.mxu0 %v8747
  %v8913 = vpop.f32.mrf.mxu0
  %v8914 = vadd.f32 0.0, %v8913
  %8915 = vmatmul.f32.gmra.mxu0 %v8750
  %v8916 = vpop.f32.mrf.mxu0
  %v8917 = vadd.f32 0.0, %v8916
  %8918 = vmatmul.f32.gmra.mxu0 %v8753
  %v8919 = vpop.f32.mrf.mxu0
  %v8920 = vadd.f32 0.0, %v8919
  %8921 = vmatmul.f32.gmra.mxu0 %v8756
  %v8922 = vpop.f32.mrf.mxu0
  %v8923 = vadd.f32 0.0, %v8922
  %8924 = vmatmul.f32.gmra.mxu0 %v8759
  %v8925 = vpop.f32.mrf.mxu0
  %v8926 = vadd.f32 0.0, %v8925
  %8927 = vmatmul.f32.gmra.mxu0 %v8762
  %v8928 = vpop.f32.mrf.mxu0
  %v8929 = vadd.f32 0.0, %v8928
  %8930 = vmatmul.f32.gmra.mxu0 %v8765
  %v8931 = vpop.f32.mrf.mxu0
  %v8932 = vadd.f32 0.0, %v8931
  %8933 = vmatmul.f32.gmra.mxu0 %v8768
  %v8934 = vpop.f32.mrf.mxu0
  %v8935 = vadd.f32 0.0, %v8934
  %8936 = vmatmul.f32.gmra.mxu0 %v8771
  %v8937 = vpop.f32.mrf.mxu0
  %v8938 = vadd.f32 0.0, %v8937
  %8939 = vmatmul.f32.gmra.mxu0 %v8774
  %v8940 = vpop.f32.mrf.mxu0
  %v8941 = vadd.f32 0.0, %v8940
  %8942 = vdwg.mxu0
  %v8943 = vld [vmem:[%s7] sm:$0xff]
  %v8944 = vld [vmem:[%s7 + $0x8] sm:$0xff]
  %v8945 = vld [vmem:[%s7 + $0x10] sm:$0xff]
  %v8946 = vld [vmem:[%s7 + $0x18] sm:$0xff]
  %v8947 = vld [vmem:[%s7 + $0x20] sm:$0xff]
  %v8948 = vld [vmem:[%s7 + $0x28] sm:$0xff]
  %v8949 = vld [vmem:[%s7 + $0x30] sm:$0xff]
  %v8950 = vld [vmem:[%s7 + $0x38] sm:$0xff]
  %v8951 = vld [vmem:[%s7 + $0x40] sm:$0xff]
  %v8952 = vld [vmem:[%s7 + $0x48] sm:$0xff]
  %v8953 = vld [vmem:[%s7 + $0x50] sm:$0xff]
  %v8954 = vld [vmem:[%s7 + $0x58] sm:$0xff]
  %v8955 = vld [vmem:[%s7 + $0x60] sm:$0xff]
  %v8956 = vld [vmem:[%s7 + $0x68] sm:$0xff]
  %v8957 = vld [vmem:[%s7 + $0x70] sm:$0xff]
  %v8958 = vld [vmem:[%s7 + $0x78] sm:$0xff]
  %v8959 = vld [vmem:[%s7 + $0x80] sm:$0xff]
  %v8960 = vld [vmem:[%s7 + $0x88] sm:$0xff]
  %v8961 = vld [vmem:[%s7 + $0x90] sm:$0xff]
  %v8962 = vld [vmem:[%s7 + $0x98] sm:$0xff]
  %v8963 = vld [vmem:[%s7 + $0xa0] sm:$0xff]
  %v8964 = vld [vmem:[%s7 + $0xa8] sm:$0xff]
  %v8965 = vld [vmem:[%s7 + $0xb0] sm:$0xff]
  %v8966 = vld [vmem:[%s7 + $0xb8] sm:$0xff]
  %v8967 = vld [vmem:[%s7 + $0xc0] sm:$0xff]
  %v8968 = vld [vmem:[%s7 + $0xc8] sm:$0xff]
  %v8969 = vld [vmem:[%s7 + $0xd0] sm:$0xff]
  %v8970 = vld [vmem:[%s7 + $0xd8] sm:$0xff]
  %v8971 = vld [vmem:[%s7 + $0xe0] sm:$0xff]
  %v8972 = vld [vmem:[%s7 + $0xe8] sm:$0xff]
  %v8973 = vld [vmem:[%s7 + $0xf0] sm:$0xff]
  %v8974 = vld [vmem:[%s7 + $0xf8] sm:$0xff]
  %v8975 = vld [vmem:[%s7 + $0x100] sm:$0xff]
  %v8976 = vld [vmem:[%s7 + $0x108] sm:$0xff]
  %v8977 = vld [vmem:[%s7 + $0x110] sm:$0xff]
  %v8978 = vld [vmem:[%s7 + $0x118] sm:$0xff]
  %v8979 = vld [vmem:[%s7 + $0x120] sm:$0xff]
  %v8980 = vld [vmem:[%s7 + $0x128] sm:$0xff]
  %v8981 = vld [vmem:[%s7 + $0x130] sm:$0xff]
  %v8982 = vld [vmem:[%s7 + $0x138] sm:$0xff]
  %v8983 = vld [vmem:[%s7 + $0x140] sm:$0xff]
  %v8984 = vld [vmem:[%s7 + $0x148] sm:$0xff]
  %v8985 = vld [vmem:[%s7 + $0x150] sm:$0xff]
  %v8986 = vld [vmem:[%s7 + $0x158] sm:$0xff]
  %v8987 = vld [vmem:[%s7 + $0x160] sm:$0xff]
  %v8988 = vld [vmem:[%s7 + $0x168] sm:$0xff]
  %v8989 = vld [vmem:[%s7 + $0x170] sm:$0xff]
  %v8990 = vld [vmem:[%s7 + $0x178] sm:$0xff]
  %v8991 = vld [vmem:[%s7 + $0x180] sm:$0xff]
  %v8992 = vld [vmem:[%s7 + $0x188] sm:$0xff]
  %v8993 = vmul.f32 %v8794, %v8943
  %v8994 = vmul.f32 %v8797, %v8944
  %v8995 = vmul.f32 %v8800, %v8945
  %v8996 = vmul.f32 %v8803, %v8946
  %v8997 = vmul.f32 %v8806, %v8947
  %v8998 = vmul.f32 %v8809, %v8948
  %v8999 = vmul.f32 %v8812, %v8949
  %v9000 = vmul.f32 %v8815, %v8950
  %v9001 = vmul.f32 %v8818, %v8951
  %v9002 = vmul.f32 %v8821, %v8952
  %v9003 = vmul.f32 %v8824, %v8953
  %v9004 = vmul.f32 %v8827, %v8954
  %v9005 = vmul.f32 %v8830, %v8955
  %v9006 = vmul.f32 %v8833, %v8956
  %v9007 = vmul.f32 %v8836, %v8957
  %v9008 = vmul.f32 %v8839, %v8958
  %v9009 = vmul.f32 %v8842, %v8959
  %v9010 = vmul.f32 %v8845, %v8960
  %v9011 = vmul.f32 %v8848, %v8961
  %v9012 = vmul.f32 %v8851, %v8962
  %v9013 = vmul.f32 %v8854, %v8963
  %v9014 = vmul.f32 %v8857, %v8964
  %v9015 = vmul.f32 %v8860, %v8965
  %v9016 = vmul.f32 %v8863, %v8966
  %v9017 = vmul.f32 %v8866, %v8967
  %v9018 = vmul.f32 %v8869, %v8968
  %v9019 = vmul.f32 %v8872, %v8969
  %v9020 = vmul.f32 %v8875, %v8970
  %v9021 = vmul.f32 %v8878, %v8971
  %v9022 = vmul.f32 %v8881, %v8972
  %v9023 = vmul.f32 %v8884, %v8973
  %v9024 = vmul.f32 %v8887, %v8974
  %v9025 = vmul.f32 %v8890, %v8975
  %v9026 = vmul.f32 %v8893, %v8976
  %v9027 = vmul.f32 %v8896, %v8977
  %v9028 = vmul.f32 %v8899, %v8978
  %v9029 = vmul.f32 %v8902, %v8979
  %v9030 = vmul.f32 %v8905, %v8980
  %v9031 = vmul.f32 %v8908, %v8981
  %v9032 = vmul.f32 %v8911, %v8982
  %v9033 = vmul.f32 %v8914, %v8983
  %v9034 = vmul.f32 %v8917, %v8984
  %v9035 = vmul.f32 %v8920, %v8985
  %v9036 = vmul.f32 %v8923, %v8986
  %v9037 = vmul.f32 %v8926, %v8987
  %v9038 = vmul.f32 %v8929, %v8988
  %v9039 = vmul.f32 %v8932, %v8989
  %v9040 = vmul.f32 %v8935, %v8990
  %v9041 = vmul.f32 %v8938, %v8991
  %v9042 = vmul.f32 %v8941, %v8992
  %v9043 = vld [vmem:[%s8] sm:$0xff]
  %v9044 = vld [vmem:[%s8 + $0x8] sm:$0xff]
  %v9045 = vld [vmem:[%s8 + $0x10] sm:$0xff]
  %v9046 = vld [vmem:[%s8 + $0x18] sm:$0xff]
  %v9047 = vld [vmem:[%s8 + $0x20] sm:$0xff]
  %v9048 = vld [vmem:[%s8 + $0x28] sm:$0xff]
  %v9049 = vld [vmem:[%s8 + $0x30] sm:$0xff]
  %v9050 = vld [vmem:[%s8 + $0x38] sm:$0xff]
  %vm9051 = vcmask 523264
  %v9053 = vsel %vm9051, %v8993, 0
  %v9056 = vsel %vm9051, %v8994, 0
  %v9059 = vsel %vm9051, %v8995, 0
  %v9062 = vsel %vm9051, %v8996, 0
  %v9065 = vsel %vm9051, %v8997, 0
  %v9068 = vsel %vm9051, %v8998, 0
  %v9071 = vsel %vm9051, %v8999, 0
  %v9074 = vsel %vm9051, %v9000, 0
  %v9077 = vsel %vm9051, %v9001, 0
  %v9080 = vsel %vm9051, %v9002, 0
  %v9083 = vsel %vm9051, %v9003, 0
  %v9086 = vsel %vm9051, %v9004, 0
  %v9089 = vsel %vm9051, %v9005, 0
  %v9092 = vsel %vm9051, %v9006, 0
  %v9095 = vsel %vm9051, %v9007, 0
  %v9098 = vsel %vm9051, %v9008, 0
  %v9101 = vsel %vm9051, %v9009, 0
  %v9104 = vsel %vm9051, %v9010, 0
  %v9107 = vsel %vm9051, %v9011, 0
  %v9110 = vsel %vm9051, %v9012, 0
  %v9113 = vsel %vm9051, %v9013, 0
  %v9116 = vsel %vm9051, %v9014, 0
  %v9119 = vsel %vm9051, %v9015, 0
  %v9122 = vsel %vm9051, %v9016, 0
  %v9125 = vsel %vm9051, %v9017, 0
  %v9128 = vsel %vm9051, %v9018, 0
  %v9131 = vsel %vm9051, %v9019, 0
  %v9134 = vsel %vm9051, %v9020, 0
  %v9137 = vsel %vm9051, %v9021, 0
  %v9140 = vsel %vm9051, %v9022, 0
  %v9143 = vsel %vm9051, %v9023, 0
  %v9146 = vsel %vm9051, %v9024, 0
  %v9149 = vsel %vm9051, %v9025, 0
  %v9152 = vsel %vm9051, %v9026, 0
  %v9155 = vsel %vm9051, %v9027, 0
  %v9158 = vsel %vm9051, %v9028, 0
  %v9161 = vsel %vm9051, %v9029, 0
  %v9164 = vsel %vm9051, %v9030, 0
  %v9167 = vsel %vm9051, %v9031, 0
  %v9170 = vsel %vm9051, %v9032, 0
  %v9173 = vsel %vm9051, %v9033, 0
  %v9176 = vsel %vm9051, %v9034, 0
  %v9179 = vsel %vm9051, %v9035, 0
  %v9182 = vsel %vm9051, %v9036, 0
  %v9185 = vsel %vm9051, %v9037, 0
  %v9188 = vsel %vm9051, %v9038, 0
  %v9191 = vsel %vm9051, %v9039, 0
  %v9194 = vsel %vm9051, %v9040, 0
  %v9197 = vsel %vm9051, %v9041, 0
  %v9200 = vsel %vm9051, %v9042, 0
  %9202 = vmatpush.msra.mxu0 0.0
  %9203 = vmatpush.msra.mxu0 0.0
  %9204 = vmatpush.msra.mxu0 0.0
  %9205 = vmatpush.msra.mxu0 0.0
  %9206 = vmatpush.msra.mxu0 0.0
  %9207 = vmatpush.msra.mxu0 0.0
  %9208 = vmatpush.msra.mxu0 0.0
  %9209 = vmatpush.msra.mxu0 0.0
  %9210 = vmatpush.msra.mxu0 %v9050
  %9211 = vmatpush.msra.mxu0 %v9049
  %9212 = vmatpush.msra.mxu0 %v9048
  %9213 = vmatpush.msra.mxu0 %v9047
  %9214 = vmatpush.msra.mxu0 %v9046
  %9215 = vmatpush.msra.mxu0 %v9045
  %9216 = vmatpush.msra.mxu0 %v9044
  %9217 = vmatpush.msra.mxu0 %v9043
  %9218 = vmatmul.f32.gmra.mxu0 %v9053
  %v9219 = vpop.f32.mrf.mxu0
  %v9220 = vadd.f32 0.0, %v9219
  %9221 = vmatmul.f32.gmra.mxu0 %v9056
  %v9222 = vpop.f32.mrf.mxu0
  %v9223 = vadd.f32 0.0, %v9222
  %9224 = vmatmul.f32.gmra.mxu0 %v9059
  %v9225 = vpop.f32.mrf.mxu0
  %v9226 = vadd.f32 0.0, %v9225
  %9227 = vmatmul.f32.gmra.mxu0 %v9062
  %v9228 = vpop.f32.mrf.mxu0
  %v9229 = vadd.f32 0.0, %v9228
  %9230 = vmatmul.f32.gmra.mxu0 %v9065
  %v9231 = vpop.f32.mrf.mxu0
  %v9232 = vadd.f32 0.0, %v9231
  %9233 = vmatmul.f32.gmra.mxu0 %v9068
  %v9234 = vpop.f32.mrf.mxu0
  %v9235 = vadd.f32 0.0, %v9234
  %9236 = vmatmul.f32.gmra.mxu0 %v9071
  %v9237 = vpop.f32.mrf.mxu0
  %v9238 = vadd.f32 0.0, %v9237
  %9239 = vmatmul.f32.gmra.mxu0 %v9074
  %v9240 = vpop.f32.mrf.mxu0
  %v9241 = vadd.f32 0.0, %v9240
  %9242 = vmatmul.f32.gmra.mxu0 %v9077
  %v9243 = vpop.f32.mrf.mxu0
  %v9244 = vadd.f32 0.0, %v9243
  %9245 = vmatmul.f32.gmra.mxu0 %v9080
  %v9246 = vpop.f32.mrf.mxu0
  %v9247 = vadd.f32 0.0, %v9246
  %9248 = vmatmul.f32.gmra.mxu0 %v9083
  %v9249 = vpop.f32.mrf.mxu0
  %v9250 = vadd.f32 0.0, %v9249
  %9251 = vmatmul.f32.gmra.mxu0 %v9086
  %v9252 = vpop.f32.mrf.mxu0
  %v9253 = vadd.f32 0.0, %v9252
  %9254 = vmatmul.f32.gmra.mxu0 %v9089
  %v9255 = vpop.f32.mrf.mxu0
  %v9256 = vadd.f32 0.0, %v9255
  %9257 = vmatmul.f32.gmra.mxu0 %v9092
  %v9258 = vpop.f32.mrf.mxu0
  %v9259 = vadd.f32 0.0, %v9258
  %9260 = vmatmul.f32.gmra.mxu0 %v9095
  %v9261 = vpop.f32.mrf.mxu0
  %v9262 = vadd.f32 0.0, %v9261
  %9263 = vmatmul.f32.gmra.mxu0 %v9098
  %v9264 = vpop.f32.mrf.mxu0
  %v9265 = vadd.f32 0.0, %v9264
  %9266 = vmatmul.f32.gmra.mxu0 %v9101
  %v9267 = vpop.f32.mrf.mxu0
  %v9268 = vadd.f32 0.0, %v9267
  %9269 = vmatmul.f32.gmra.mxu0 %v9104
  %v9270 = vpop.f32.mrf.mxu0
  %v9271 = vadd.f32 0.0, %v9270
  %9272 = vmatmul.f32.gmra.mxu0 %v9107
  %v9273 = vpop.f32.mrf.mxu0
  %v9274 = vadd.f32 0.0, %v9273
  %9275 = vmatmul.f32.gmra.mxu0 %v9110
  %v9276 = vpop.f32.mrf.mxu0
  %v9277 = vadd.f32 0.0, %v9276
  %9278 = vmatmul.f32.gmra.mxu0 %v9113
  %v9279 = vpop.f32.mrf.mxu0
  %v9280 = vadd.f32 0.0, %v9279
  %9281 = vmatmul.f32.gmra.mxu0 %v9116
  %v9282 = vpop.f32.mrf.mxu0
  %v9283 = vadd.f32 0.0, %v9282
  %9284 = vmatmul.f32.gmra.mxu0 %v9119
  %v9285 = vpop.f32.mrf.mxu0
  %v9286 = vadd.f32 0.0, %v9285
  %9287 = vmatmul.f32.gmra.mxu0 %v9122
  %v9288 = vpop.f32.mrf.mxu0
  %v9289 = vadd.f32 0.0, %v9288
  %9290 = vmatmul.f32.gmra.mxu0 %v9125
  %v9291 = vpop.f32.mrf.mxu0
  %v9292 = vadd.f32 0.0, %v9291
  %9293 = vmatmul.f32.gmra.mxu0 %v9128
  %v9294 = vpop.f32.mrf.mxu0
  %v9295 = vadd.f32 0.0, %v9294
  %9296 = vmatmul.f32.gmra.mxu0 %v9131
  %v9297 = vpop.f32.mrf.mxu0
  %v9298 = vadd.f32 0.0, %v9297
  %9299 = vmatmul.f32.gmra.mxu0 %v9134
  %v9300 = vpop.f32.mrf.mxu0
  %v9301 = vadd.f32 0.0, %v9300
  %9302 = vmatmul.f32.gmra.mxu0 %v9137
  %v9303 = vpop.f32.mrf.mxu0
  %v9304 = vadd.f32 0.0, %v9303
  %9305 = vmatmul.f32.gmra.mxu0 %v9140
  %v9306 = vpop.f32.mrf.mxu0
  %v9307 = vadd.f32 0.0, %v9306
  %9308 = vmatmul.f32.gmra.mxu0 %v9143
  %v9309 = vpop.f32.mrf.mxu0
  %v9310 = vadd.f32 0.0, %v9309
  %9311 = vmatmul.f32.gmra.mxu0 %v9146
  %v9312 = vpop.f32.mrf.mxu0
  %v9313 = vadd.f32 0.0, %v9312
  %9314 = vmatmul.f32.gmra.mxu0 %v9149
  %v9315 = vpop.f32.mrf.mxu0
  %v9316 = vadd.f32 0.0, %v9315
  %9317 = vmatmul.f32.gmra.mxu0 %v9152
  %v9318 = vpop.f32.mrf.mxu0
  %v9319 = vadd.f32 0.0, %v9318
  %9320 = vmatmul.f32.gmra.mxu0 %v9155
  %v9321 = vpop.f32.mrf.mxu0
  %v9322 = vadd.f32 0.0, %v9321
  %9323 = vmatmul.f32.gmra.mxu0 %v9158
  %v9324 = vpop.f32.mrf.mxu0
  %v9325 = vadd.f32 0.0, %v9324
  %9326 = vmatmul.f32.gmra.mxu0 %v9161
  %v9327 = vpop.f32.mrf.mxu0
  %v9328 = vadd.f32 0.0, %v9327
  %9329 = vmatmul.f32.gmra.mxu0 %v9164
  %v9330 = vpop.f32.mrf.mxu0
  %v9331 = vadd.f32 0.0, %v9330
  %9332 = vmatmul.f32.gmra.mxu0 %v9167
  %v9333 = vpop.f32.mrf.mxu0
  %v9334 = vadd.f32 0.0, %v9333
  %9335 = vmatmul.f32.gmra.mxu0 %v9170
  %v9336 = vpop.f32.mrf.mxu0
  %v9337 = vadd.f32 0.0, %v9336
  %9338 = vmatmul.f32.gmra.mxu0 %v9173
  %v9339 = vpop.f32.mrf.mxu0
  %v9340 = vadd.f32 0.0, %v9339
  %9341 = vmatmul.f32.gmra.mxu0 %v9176
  %v9342 = vpop.f32.mrf.mxu0
  %v9343 = vadd.f32 0.0, %v9342
  %9344 = vmatmul.f32.gmra.mxu0 %v9179
  %v9345 = vpop.f32.mrf.mxu0
  %v9346 = vadd.f32 0.0, %v9345
  %9347 = vmatmul.f32.gmra.mxu0 %v9182
  %v9348 = vpop.f32.mrf.mxu0
  %v9349 = vadd.f32 0.0, %v9348
  %9350 = vmatmul.f32.gmra.mxu0 %v9185
  %v9351 = vpop.f32.mrf.mxu0
  %v9352 = vadd.f32 0.0, %v9351
  %9353 = vmatmul.f32.gmra.mxu0 %v9188
  %v9354 = vpop.f32.mrf.mxu0
  %v9355 = vadd.f32 0.0, %v9354
  %9356 = vmatmul.f32.gmra.mxu0 %v9191
  %v9357 = vpop.f32.mrf.mxu0
  %v9358 = vadd.f32 0.0, %v9357
  %9359 = vmatmul.f32.gmra.mxu0 %v9194
  %v9360 = vpop.f32.mrf.mxu0
  %v9361 = vadd.f32 0.0, %v9360
  %9362 = vmatmul.f32.gmra.mxu0 %v9197
  %v9363 = vpop.f32.mrf.mxu0
  %v9364 = vadd.f32 0.0, %v9363
  %9365 = vmatmul.f32.gmra.mxu0 %v9200
  %v9366 = vpop.f32.mrf.mxu0
  %v9367 = vadd.f32 0.0, %v9366
  %9368 = vdwg.mxu0
  %v9369 = vld [vmem:[%s12] sm:$0xff]
  %v9370 = vld [vmem:[%s12 + $0x8] sm:$0xff]
  %v9371 = vld [vmem:[%s12 + $0x10] sm:$0xff]
  %v9372 = vld [vmem:[%s12 + $0x18] sm:$0xff]
  %v9373 = vld [vmem:[%s12 + $0x20] sm:$0xff]
  %v9374 = vld [vmem:[%s12 + $0x28] sm:$0xff]
  %v9375 = vld [vmem:[%s12 + $0x30] sm:$0xff]
  %v9376 = vld [vmem:[%s12 + $0x38] sm:$0xff]
  %v9377 = vld [vmem:[%s12 + $0x40] sm:$0xff]
  %v9378 = vld [vmem:[%s12 + $0x48] sm:$0xff]
  %v9379 = vld [vmem:[%s12 + $0x50] sm:$0xff]
  %v9380 = vld [vmem:[%s12 + $0x58] sm:$0xff]
  %v9381 = vld [vmem:[%s12 + $0x60] sm:$0xff]
  %v9382 = vld [vmem:[%s12 + $0x68] sm:$0xff]
  %v9383 = vld [vmem:[%s12 + $0x70] sm:$0xff]
  %v9384 = vld [vmem:[%s12 + $0x50] sm:$0xf]
  %v9385 = vld [vmem:[%s12 + $0x8] sm:$0x3]
  %v9386 = vld [vmem:[%s9] sm:$0xff]
  %v9387 = vld [vmem:[%s9 + $0x8] sm:$0xff]
  %v9388 = vld [vmem:[%s9 + $0x10] sm:$0xff]
  %v9389 = vld [vmem:[%s9 + $0x18] sm:$0xff]
  %v9390 = vld [vmem:[%s9 + $0x20] sm:$0xff]
  %v9391 = vld [vmem:[%s9 + $0x28] sm:$0xff]
  %v9392 = vld [vmem:[%s9 + $0x30] sm:$0xff]
  %v9393 = vld [vmem:[%s9 + $0x38] sm:$0xff]
  %v9394 = vld [vmem:[%s9 + $0x40] sm:$0xff]
  %v9395 = vld [vmem:[%s9 + $0x48] sm:$0xff]
  %v9396 = vld [vmem:[%s9 + $0x50] sm:$0xff]
  %v9397 = vld [vmem:[%s9 + $0x58] sm:$0xff]
  %v9398 = vld [vmem:[%s9 + $0x60] sm:$0xff]
  %v9399 = vld [vmem:[%s9 + $0x68] sm:$0xff]
  %v9400 = vld [vmem:[%s9 + $0x70] sm:$0xff]
  %v9401 = vld [vmem:[%s9 + $0x78] sm:$0xff]
  %v9402 = vld [vmem:[%s9 + $0x80] sm:$0xff]
  %v9403 = vld [vmem:[%s9 + $0x88] sm:$0xff]
  %v9404 = vld [vmem:[%s9 + $0x90] sm:$0xff]
  %v9405 = vld [vmem:[%s9 + $0x98] sm:$0xff]
  %v9406 = vld [vmem:[%s9 + $0xa0] sm:$0xff]
  %v9407 = vld [vmem:[%s9 + $0xa8] sm:$0xff]
  %v9408 = vld [vmem:[%s9 + $0xb0] sm:$0xff]
  %v9409 = vld [vmem:[%s9 + $0xb8] sm:$0xff]
  %v9410 = vld [vmem:[%s9 + $0xc0] sm:$0xff]
  %v9411 = vld [vmem:[%s9 + $0xc8] sm:$0xff]
  %v9412 = vld [vmem:[%s9 + $0xd0] sm:$0xff]
  %v9413 = vld [vmem:[%s9 + $0xd8] sm:$0xff]
  %v9414 = vld [vmem:[%s9 + $0xe0] sm:$0xff]
  %v9415 = vld [vmem:[%s9 + $0xe8] sm:$0xff]
  %v9416 = vld [vmem:[%s9 + $0xf0] sm:$0xff]
  %v9417 = vld [vmem:[%s9 + $0xf8] sm:$0xff]
  %v9418 = vld [vmem:[%s9 + $0x100] sm:$0xff]
  %v9419 = vld [vmem:[%s9 + $0x108] sm:$0xff]
  %v9420 = vld [vmem:[%s9 + $0x110] sm:$0xff]
  %v9421 = vld [vmem:[%s9 + $0x118] sm:$0xff]
  %v9422 = vld [vmem:[%s9 + $0x120] sm:$0xff]
  %v9423 = vld [vmem:[%s9 + $0x128] sm:$0xff]
  %v9424 = vld [vmem:[%s9 + $0x130] sm:$0xff]
  %v9425 = vld [vmem:[%s9 + $0x138] sm:$0xff]
  %v9426 = vld [vmem:[%s9 + $0x140] sm:$0xff]
  %v9427 = vld [vmem:[%s9 + $0x148] sm:$0xff]
  %v9428 = vld [vmem:[%s9 + $0x150] sm:$0xff]
  %v9429 = vld [vmem:[%s9 + $0x158] sm:$0xff]
  %v9430 = vld [vmem:[%s9 + $0x160] sm:$0xff]
  %v9431 = vld [vmem:[%s9 + $0x168] sm:$0xff]
  %v9432 = vld [vmem:[%s9 + $0x170] sm:$0xff]
  %v9433 = vld [vmem:[%s9 + $0x178] sm:$0xff]
  %v9434 = vld [vmem:[%s9 + $0x180] sm:$0xff]
  %v9435 = vld [vmem:[%s9 + $0x188] sm:$0xff]
  %v9436 = vld [vmem:[%s9 + $0x190] sm:$0xff]
  %v9437 = vld [vmem:[%s9 + $0x198] sm:$0xff]
  %v9438 = vld [vmem:[%s9 + $0x1a0] sm:$0xff]
  %v9439 = vld [vmem:[%s9 + $0x1a8] sm:$0xff]
  %v9440 = vld [vmem:[%s9 + $0x1b0] sm:$0xff]
  %v9441 = vld [vmem:[%s9 + $0x1b8] sm:$0xff]
  %v9442 = vld [vmem:[%s9 + $0x1c0] sm:$0xff]
  %v9443 = vld [vmem:[%s9 + $0x1c8] sm:$0xff]
  %v9444 = vld [vmem:[%s9 + $0x1d0] sm:$0xff]
  %v9445 = vld [vmem:[%s9 + $0x1d8] sm:$0xff]
  %9447 = vset.pattern.permute.xlu0 0
  %9448 = vperm.xlu0 %9447, %v9369
  %v9449 = vpop.permute.xlu0 %9448
  %9452 = vset.pattern.permute.xlu0 0
  %9453 = vperm.xlu0 %9452, %v9370
  %v9454 = vpop.permute.xlu0 %9453
  %9457 = vset.pattern.permute.xlu0 0
  %9458 = vperm.xlu0 %9457, %v9371
  %v9459 = vpop.permute.xlu0 %9458
  %9462 = vset.pattern.permute.xlu0 0
  %9463 = vperm.xlu0 %9462, %v9372
  %v9464 = vpop.permute.xlu0 %9463
  %9467 = vset.pattern.permute.xlu0 0
  %9468 = vperm.xlu0 %9467, %v9373
  %v9469 = vpop.permute.xlu0 %9468
  %9472 = vset.pattern.permute.xlu0 0
  %9473 = vperm.xlu0 %9472, %v9374
  %v9474 = vpop.permute.xlu0 %9473
  %9477 = vset.pattern.permute.xlu0 0
  %9478 = vperm.xlu0 %9477, %v9375
  %v9479 = vpop.permute.xlu0 %9478
  %9482 = vset.pattern.permute.xlu0 0
  %9483 = vperm.xlu0 %9482, %v9376
  %v9484 = vpop.permute.xlu0 %9483
  %9487 = vset.pattern.permute.xlu0 0
  %9488 = vperm.xlu0 %9487, %v9377
  %v9489 = vpop.permute.xlu0 %9488
  %9492 = vset.pattern.permute.xlu0 0
  %9493 = vperm.xlu0 %9492, %v9378
  %v9494 = vpop.permute.xlu0 %9493
  %9497 = vset.pattern.permute.xlu0 0
  %9498 = vperm.xlu0 %9497, %v9379
  %v9499 = vpop.permute.xlu0 %9498
  %9502 = vset.pattern.permute.xlu0 0
  %9503 = vperm.xlu0 %9502, %v9380
  %v9504 = vpop.permute.xlu0 %9503
  %9507 = vset.pattern.permute.xlu0 0
  %9508 = vperm.xlu0 %9507, %v9381
  %v9509 = vpop.permute.xlu0 %9508
  %9512 = vset.pattern.permute.xlu0 0
  %9513 = vperm.xlu0 %9512, %v9382
  %v9514 = vpop.permute.xlu0 %9513
  %9517 = vset.pattern.permute.xlu0 0
  %9518 = vperm.xlu0 %9517, %v9383
  %v9519 = vpop.permute.xlu0 %9518
  %v9522 = vsel %vm8625, %v9389, 0
  %v9525 = vsel %vm8625, %v9393, 0
  %v9528 = vsel %vm8625, %v9397, 0
  %v9531 = vsel %vm8625, %v9401, 0
  %v9534 = vsel %vm8625, %v9405, 0
  %v9537 = vsel %vm8625, %v9409, 0
  %v9540 = vsel %vm8625, %v9413, 0
  %v9543 = vsel %vm8625, %v9417, 0
  %v9546 = vsel %vm8625, %v9421, 0
  %v9549 = vsel %vm8625, %v9425, 0
  %v9552 = vsel %vm8625, %v9429, 0
  %v9555 = vsel %vm8625, %v9433, 0
  %v9558 = vsel %vm8625, %v9437, 0
  %v9561 = vsel %vm8625, %v9441, 0
  %v9564 = vsel %vm8625, %v9445, 0
  %9566 = vmatpush.msra.mxu0 %v9265
  %9567 = vmatpush.msra.mxu0 %v9262
  %9568 = vmatpush.msra.mxu0 %v9259
  %9569 = vmatpush.msra.mxu0 %v9256
  %9570 = vmatpush.msra.mxu0 %v9253
  %9571 = vmatpush.msra.mxu0 %v9250
  %9572 = vmatpush.msra.mxu0 %v9247
  %9573 = vmatpush.msra.mxu0 %v9244
  %9574 = vmatpush.msra.mxu0 %v9241
  %9575 = vmatpush.msra.mxu0 %v9238
  %9576 = vmatpush.msra.mxu0 %v9235
  %9577 = vmatpush.msra.mxu0 %v9232
  %9578 = vmatpush.msra.mxu0 %v9229
  %9579 = vmatpush.msra.mxu0 %v9226
  %9580 = vmatpush.msra.mxu0 %v9223
  %9581 = vmatpush.msra.mxu0 %v9220
  %9582 = vmatmul.f32.gmra.mxu0 %v9386
  %v9583 = vpop.f32.mrf.mxu0
  %v9584 = vadd.f32 %v9449, %v9583
  %9585 = vmatmul.f32.gmra.mxu0 %v9390
  %v9586 = vpop.f32.mrf.mxu0
  %v9587 = vadd.f32 %v9454, %v9586
  %9588 = vmatmul.f32.gmra.mxu0 %v9394
  %v9589 = vpop.f32.mrf.mxu0
  %v9590 = vadd.f32 %v9459, %v9589
  %9591 = vmatmul.f32.gmra.mxu0 %v9398
  %v9592 = vpop.f32.mrf.mxu0
  %v9593 = vadd.f32 %v9464, %v9592
  %9594 = vmatmul.f32.gmra.mxu0 %v9402
  %v9595 = vpop.f32.mrf.mxu0
  %v9596 = vadd.f32 %v9469, %v9595
  %9597 = vmatmul.f32.gmra.mxu0 %v9406
  %v9598 = vpop.f32.mrf.mxu0
  %v9599 = vadd.f32 %v9474, %v9598
  %9600 = vmatmul.f32.gmra.mxu0 %v9410
  %v9601 = vpop.f32.mrf.mxu0
  %v9602 = vadd.f32 %v9479, %v9601
  %9603 = vmatmul.f32.gmra.mxu0 %v9414
  %v9604 = vpop.f32.mrf.mxu0
  %v9605 = vadd.f32 %v9484, %v9604
  %9606 = vmatmul.f32.gmra.mxu0 %v9418
  %v9607 = vpop.f32.mrf.mxu0
  %v9608 = vadd.f32 %v9489, %v9607
  %9609 = vmatmul.f32.gmra.mxu0 %v9422
  %v9610 = vpop.f32.mrf.mxu0
  %v9611 = vadd.f32 %v9494, %v9610
  %9612 = vmatmul.f32.gmra.mxu0 %v9426
  %v9613 = vpop.f32.mrf.mxu0
  %v9614 = vadd.f32 %v9499, %v9613
  %9615 = vmatmul.f32.gmra.mxu0 %v9430
  %v9616 = vpop.f32.mrf.mxu0
  %v9617 = vadd.f32 %v9504, %v9616
  %9618 = vmatmul.f32.gmra.mxu0 %v9434
  %v9619 = vpop.f32.mrf.mxu0
  %v9620 = vadd.f32 %v9509, %v9619
  %9621 = vmatmul.f32.gmra.mxu0 %v9438
  %v9622 = vpop.f32.mrf.mxu0
  %v9623 = vadd.f32 %v9514, %v9622
  %9624 = vmatmul.f32.gmra.mxu0 %v9442
  %v9625 = vpop.f32.mrf.mxu0
  %v9626 = vadd.f32 %v9519, %v9625
  %9627 = vdwg.mxu0
  %9628 = vmatpush.msra.mxu0 %v9313
  %9629 = vmatpush.msra.mxu0 %v9310
  %9630 = vmatpush.msra.mxu0 %v9307
  %9631 = vmatpush.msra.mxu0 %v9304
  %9632 = vmatpush.msra.mxu0 %v9301
  %9633 = vmatpush.msra.mxu0 %v9298
  %9634 = vmatpush.msra.mxu0 %v9295
  %9635 = vmatpush.msra.mxu0 %v9292
  %9636 = vmatpush.msra.mxu0 %v9289
  %9637 = vmatpush.msra.mxu0 %v9286
  %9638 = vmatpush.msra.mxu0 %v9283
  %9639 = vmatpush.msra.mxu0 %v9280
  %9640 = vmatpush.msra.mxu0 %v9277
  %9641 = vmatpush.msra.mxu0 %v9274
  %9642 = vmatpush.msra.mxu0 %v9271
  %9643 = vmatpush.msra.mxu0 %v9268
  %9644 = vmatmul.f32.gmra.mxu0 %v9387
  %v9645 = vpop.f32.mrf.mxu0
  %v9646 = vadd.f32 %v9584, %v9645
  %9647 = vmatmul.f32.gmra.mxu0 %v9391
  %v9648 = vpop.f32.mrf.mxu0
  %v9649 = vadd.f32 %v9587, %v9648
  %9650 = vmatmul.f32.gmra.mxu0 %v9395
  %v9651 = vpop.f32.mrf.mxu0
  %v9652 = vadd.f32 %v9590, %v9651
  %9653 = vmatmul.f32.gmra.mxu0 %v9399
  %v9654 = vpop.f32.mrf.mxu0
  %v9655 = vadd.f32 %v9593, %v9654
  %9656 = vmatmul.f32.gmra.mxu0 %v9403
  %v9657 = vpop.f32.mrf.mxu0
  %v9658 = vadd.f32 %v9596, %v9657
  %9659 = vmatmul.f32.gmra.mxu0 %v9407
  %v9660 = vpop.f32.mrf.mxu0
  %v9661 = vadd.f32 %v9599, %v9660
  %9662 = vmatmul.f32.gmra.mxu0 %v9411
  %v9663 = vpop.f32.mrf.mxu0
  %v9664 = vadd.f32 %v9602, %v9663
  %9665 = vmatmul.f32.gmra.mxu0 %v9415
  %v9666 = vpop.f32.mrf.mxu0
  %v9667 = vadd.f32 %v9605, %v9666
  %9668 = vmatmul.f32.gmra.mxu0 %v9419
  %v9669 = vpop.f32.mrf.mxu0
  %v9670 = vadd.f32 %v9608, %v9669
  %9671 = vmatmul.f32.gmra.mxu0 %v9423
  %v9672 = vpop.f32.mrf.mxu0
  %v9673 = vadd.f32 %v9611, %v9672
  %9674 = vmatmul.f32.gmra.mxu0 %v9427
  %v9675 = vpop.f32.mrf.mxu0
  %v9676 = vadd.f32 %v9614, %v9675
  %9677 = vmatmul.f32.gmra.mxu0 %v9431
  %v9678 = vpop.f32.mrf.mxu0
  %v9679 = vadd.f32 %v9617, %v9678
  %9680 = vmatmul.f32.gmra.mxu0 %v9435
  %v9681 = vpop.f32.mrf.mxu0
  %v9682 = vadd.f32 %v9620, %v9681
  %9683 = vmatmul.f32.gmra.mxu0 %v9439
  %v9684 = vpop.f32.mrf.mxu0
  %v9685 = vadd.f32 %v9623, %v9684
  %9686 = vmatmul.f32.gmra.mxu0 %v9443
  %v9687 = vpop.f32.mrf.mxu0
  %v9688 = vadd.f32 %v9626, %v9687
  %9689 = vdwg.mxu0
  %9690 = vmatpush.msra.mxu0 %v9361
  %9691 = vmatpush.msra.mxu0 %v9358
  %9692 = vmatpush.msra.mxu0 %v9355
  %9693 = vmatpush.msra.mxu0 %v9352
  %9694 = vmatpush.msra.mxu0 %v9349
  %9695 = vmatpush.msra.mxu0 %v9346
  %9696 = vmatpush.msra.mxu0 %v9343
  %9697 = vmatpush.msra.mxu0 %v9340
  %9698 = vmatpush.msra.mxu0 %v9337
  %9699 = vmatpush.msra.mxu0 %v9334
  %9700 = vmatpush.msra.mxu0 %v9331
  %9701 = vmatpush.msra.mxu0 %v9328
  %9702 = vmatpush.msra.mxu0 %v9325
  %9703 = vmatpush.msra.mxu0 %v9322
  %9704 = vmatpush.msra.mxu0 %v9319
  %9705 = vmatpush.msra.mxu0 %v9316
  %9706 = vmatmul.f32.gmra.mxu0 %v9388
  %v9707 = vpop.f32.mrf.mxu0
  %v9708 = vadd.f32 %v9646, %v9707
  %9709 = vmatmul.f32.gmra.mxu0 %v9392
  %v9710 = vpop.f32.mrf.mxu0
  %v9711 = vadd.f32 %v9649, %v9710
  %9712 = vmatmul.f32.gmra.mxu0 %v9396
  %v9713 = vpop.f32.mrf.mxu0
  %v9714 = vadd.f32 %v9652, %v9713
  %9715 = vmatmul.f32.gmra.mxu0 %v9400
  %v9716 = vpop.f32.mrf.mxu0
  %v9717 = vadd.f32 %v9655, %v9716
  %9718 = vmatmul.f32.gmra.mxu0 %v9404
  %v9719 = vpop.f32.mrf.mxu0
  %v9720 = vadd.f32 %v9658, %v9719
  %9721 = vmatmul.f32.gmra.mxu0 %v9408
  %v9722 = vpop.f32.mrf.mxu0
  %v9723 = vadd.f32 %v9661, %v9722
  %9724 = vmatmul.f32.gmra.mxu0 %v9412
  %v9725 = vpop.f32.mrf.mxu0
  %v9726 = vadd.f32 %v9664, %v9725
  %9727 = vmatmul.f32.gmra.mxu0 %v9416
  %v9728 = vpop.f32.mrf.mxu0
  %v9729 = vadd.f32 %v9667, %v9728
  %9730 = vmatmul.f32.gmra.mxu0 %v9420
  %v9731 = vpop.f32.mrf.mxu0
  %v9732 = vadd.f32 %v9670, %v9731
  %9733 = vmatmul.f32.gmra.mxu0 %v9424
  %v9734 = vpop.f32.mrf.mxu0
  %v9735 = vadd.f32 %v9673, %v9734
  %9736 = vmatmul.f32.gmra.mxu0 %v9428
  %v9737 = vpop.f32.mrf.mxu0
  %v9738 = vadd.f32 %v9676, %v9737
  %9739 = vmatmul.f32.gmra.mxu0 %v9432
  %v9740 = vpop.f32.mrf.mxu0
  %v9741 = vadd.f32 %v9679, %v9740
  %9742 = vmatmul.f32.gmra.mxu0 %v9436
  %v9743 = vpop.f32.mrf.mxu0
  %v9744 = vadd.f32 %v9682, %v9743
  %9745 = vmatmul.f32.gmra.mxu0 %v9440
  %v9746 = vpop.f32.mrf.mxu0
  %v9747 = vadd.f32 %v9685, %v9746
  %9748 = vmatmul.f32.gmra.mxu0 %v9444
  %v9749 = vpop.f32.mrf.mxu0
  %v9750 = vadd.f32 %v9688, %v9749
  %9751 = vdwg.mxu0
  %9752 = vmatpush.msra.mxu0 0.0
  %9753 = vmatpush.msra.mxu0 0.0
  %9754 = vmatpush.msra.mxu0 0.0
  %9755 = vmatpush.msra.mxu0 0.0
  %9756 = vmatpush.msra.mxu0 0.0
  %9757 = vmatpush.msra.mxu0 0.0
  %9758 = vmatpush.msra.mxu0 0.0
  %9759 = vmatpush.msra.mxu0 0.0
  %9760 = vmatpush.msra.mxu0 0.0
  %9761 = vmatpush.msra.mxu0 0.0
  %9762 = vmatpush.msra.mxu0 0.0
  %9763 = vmatpush.msra.mxu0 0.0
  %9764 = vmatpush.msra.mxu0 0.0
  %9765 = vmatpush.msra.mxu0 0.0
  %9766 = vmatpush.msra.mxu0 %v9367
  %9767 = vmatpush.msra.mxu0 %v9364
  %9768 = vmatmul.f32.gmra.mxu0 %v9522
  %v9769 = vpop.f32.mrf.mxu0
  %v9770 = vadd.f32 %v9708, %v9769
  %9771 = vmatmul.f32.gmra.mxu0 %v9525
  %v9772 = vpop.f32.mrf.mxu0
  %v9773 = vadd.f32 %v9711, %v9772
  %9774 = vmatmul.f32.gmra.mxu0 %v9528
  %v9775 = vpop.f32.mrf.mxu0
  %v9776 = vadd.f32 %v9714, %v9775
  %9777 = vmatmul.f32.gmra.mxu0 %v9531
  %v9778 = vpop.f32.mrf.mxu0
  %v9779 = vadd.f32 %v9717, %v9778
  %9780 = vmatmul.f32.gmra.mxu0 %v9534
  %v9781 = vpop.f32.mrf.mxu0
  %v9782 = vadd.f32 %v9720, %v9781
  %9783 = vmatmul.f32.gmra.mxu0 %v9537
  %v9784 = vpop.f32.mrf.mxu0
  %v9785 = vadd.f32 %v9723, %v9784
  %9786 = vmatmul.f32.gmra.mxu0 %v9540
  %v9787 = vpop.f32.mrf.mxu0
  %v9788 = vadd.f32 %v9726, %v9787
  %9789 = vmatmul.f32.gmra.mxu0 %v9543
  %v9790 = vpop.f32.mrf.mxu0
  %v9791 = vadd.f32 %v9729, %v9790
  %9792 = vmatmul.f32.gmra.mxu0 %v9546
  %v9793 = vpop.f32.mrf.mxu0
  %v9794 = vadd.f32 %v9732, %v9793
  %9795 = vmatmul.f32.gmra.mxu0 %v9549
  %v9796 = vpop.f32.mrf.mxu0
  %v9797 = vadd.f32 %v9735, %v9796
  %9798 = vmatmul.f32.gmra.mxu0 %v9552
  %v9799 = vpop.f32.mrf.mxu0
  %v9800 = vadd.f32 %v9738, %v9799
  %9801 = vmatmul.f32.gmra.mxu0 %v9555
  %v9802 = vpop.f32.mrf.mxu0
  %v9803 = vadd.f32 %v9741, %v9802
  %9804 = vmatmul.f32.gmra.mxu0 %v9558
  %v9805 = vpop.f32.mrf.mxu0
  %v9806 = vadd.f32 %v9744, %v9805
  %9807 = vmatmul.f32.gmra.mxu0 %v9561
  %v9808 = vpop.f32.mrf.mxu0
  %v9809 = vadd.f32 %v9747, %v9808
  %9810 = vmatmul.f32.gmra.mxu0 %v9564
  %v9811 = vpop.f32.mrf.mxu0
  %v9812 = vadd.f32 %v9750, %v9811
  %9813 = vdwg.mxu0
  %v9814 = vmax.f32 %v9770, 0.0
  %v9815 = vmax.f32 %v9773, 0.0
  %v9816 = vmax.f32 %v9776, 0.0
  %v9817 = vmax.f32 %v9779, 0.0
  %v9818 = vmax.f32 %v9782, 0.0
  %v9819 = vmax.f32 %v9785, 0.0
  %v9820 = vmax.f32 %v9788, 0.0
  %v9821 = vmax.f32 %v9791, 0.0
  %v9822 = vmax.f32 %v9794, 0.0
  %v9823 = vmax.f32 %v9797, 0.0
  %v9824 = vmax.f32 %v9800, 0.0
  %v9825 = vmax.f32 %v9803, 0.0
  %v9826 = vmax.f32 %v9806, 0.0
  %v9827 = vmax.f32 %v9809, 0.0
  %v9828 = vmax.f32 %v9812, 0.0
  %v9829 = vld [vmem:[%s10] sm:$0xff]
  %v9830 = vld [vmem:[%s10 + $0x8] sm:$0xff]
  %v9831 = vld [vmem:[%s10 + $0x10] sm:$0xff]
  %v9832 = vld [vmem:[%s10 + $0x18] sm:$0xff]
  %v9833 = vld [vmem:[%s10 + $0x20] sm:$0xff]
  %v9834 = vld [vmem:[%s10 + $0x28] sm:$0xff]
  %v9835 = vld [vmem:[%s10 + $0x30] sm:$0xff]
  %v9836 = vld [vmem:[%s10 + $0x38] sm:$0xff]
  %v9837 = vld [vmem:[%s10 + $0x40] sm:$0xff]
  %v9838 = vld [vmem:[%s10 + $0x48] sm:$0xff]
  %v9839 = vld [vmem:[%s10 + $0x50] sm:$0xf]
  %9840 = vset.pattern.permute.xlu0 1
  %9841 = vperm.xlu0 %9840, %v9369
  %v9842 = vpop.permute.xlu0 %9841
  %9844 = vset.pattern.permute.xlu0 1
  %9845 = vperm.xlu0 %9844, %v9370
  %v9846 = vpop.permute.xlu0 %9845
  %9848 = vset.pattern.permute.xlu0 1
  %9849 = vperm.xlu0 %9848, %v9371
  %v9850 = vpop.permute.xlu0 %9849
  %9852 = vset.pattern.permute.xlu0 1
  %9853 = vperm.xlu0 %9852, %v9372
  %v9854 = vpop.permute.xlu0 %9853
  %9856 = vset.pattern.permute.xlu0 1
  %9857 = vperm.xlu0 %9856, %v9373
  %v9858 = vpop.permute.xlu0 %9857
  %9860 = vset.pattern.permute.xlu0 1
  %9861 = vperm.xlu0 %9860, %v9374
  %v9862 = vpop.permute.xlu0 %9861
  %9864 = vset.pattern.permute.xlu0 1
  %9865 = vperm.xlu0 %9864, %v9375
  %v9866 = vpop.permute.xlu0 %9865
  %9868 = vset.pattern.permute.xlu0 1
  %9869 = vperm.xlu0 %9868, %v9376
  %v9870 = vpop.permute.xlu0 %9869
  %9872 = vset.pattern.permute.xlu0 1
  %9873 = vperm.xlu0 %9872, %v9377
  %v9874 = vpop.permute.xlu0 %9873
  %9876 = vset.pattern.permute.xlu0 1
  %9877 = vperm.xlu0 %9876, %v9378
  %v9878 = vpop.permute.xlu0 %9877
  %9881 = vset.pattern.permute.xlu0 1
  %9882 = vperm.xlu0 %9881, %v9384
  %v9883 = vpop.permute.xlu0 %9882
  %vm9885 = vcmask 982016
  %v9887 = vsel %vm9885, %v9829, 0
  %v9890 = vsel %vm9885, %v9830, 0
  %v9893 = vsel %vm9885, %v9831, 0
  %v9896 = vsel %vm9885, %v9832, 0
  %v9899 = vsel %vm9885, %v9833, 0
  %v9902 = vsel %vm9885, %v9834, 0
  %v9905 = vsel %vm9885, %v9835, 0
  %v9908 = vsel %vm9885, %v9836, 0
  %v9911 = vsel %vm9885, %v9837, 0
  %v9914 = vsel %vm9885, %v9838, 0
  %v9917 = vsel %vm9885, %v9839, 0
  %9919 = vmatpush.msra.mxu0 0.0
  %9920 = vmatpush.msra.mxu0 %v9828
  %9921 = vmatpush.msra.mxu0 %v9827
  %9922 = vmatpush.msra.mxu0 %v9826
  %9923 = vmatpush.msra.mxu0 %v9825
  %9924 = vmatpush.msra.mxu0 %v9824
  %9925 = vmatpush.msra.mxu0 %v9823
  %9926 = vmatpush.msra.mxu0 %v9822
  %9927 = vmatpush.msra.mxu0 %v9821
  %9928 = vmatpush.msra.mxu0 %v9820
  %9929 = vmatpush.msra.mxu0 %v9819
  %9930 = vmatpush.msra.mxu0 %v9818
  %9931 = vmatpush.msra.mxu0 %v9817
  %9932 = vmatpush.msra.mxu0 %v9816
  %9933 = vmatpush.msra.mxu0 %v9815
  %9934 = vmatpush.msra.mxu0 %v9814
  %9935 = vmatmul.f32.gmra.mxu0 %v9887
  %v9936 = vpop.f32.mrf.mxu0
  %v9937 = vadd.f32 %v9842, %v9936
  %9938 = vmatmul.f32.gmra.mxu0 %v9890
  %v9939 = vpop.f32.mrf.mxu0
  %v9940 = vadd.f32 %v9846, %v9939
  %9941 = vmatmul.f32.gmra.mxu0 %v9893
  %v9942 = vpop.f32.mrf.mxu0
  %v9943 = vadd.f32 %v9850, %v9942
  %9944 = vmatmul.f32.gmra.mxu0 %v9896
  %v9945 = vpop.f32.mrf.mxu0
  %v9946 = vadd.f32 %v9854, %v9945
  %9947 = vmatmul.f32.gmra.mxu0 %v9899
  %v9948 = vpop.f32.mrf.mxu0
  %v9949 = vadd.f32 %v9858, %v9948
  %9950 = vmatmul.f32.gmra.mxu0 %v9902
  %v9951 = vpop.f32.mrf.mxu0
  %v9952 = vadd.f32 %v9862, %v9951
  %9953 = vmatmul.f32.gmra.mxu0 %v9905
  %v9954 = vpop.f32.mrf.mxu0
  %v9955 = vadd.f32 %v9866, %v9954
  %9956 = vmatmul.f32.gmra.mxu0 %v9908
  %v9957 = vpop.f32.mrf.mxu0
  %v9958 = vadd.f32 %v9870, %v9957
  %9959 = vmatmul.f32.gmra.mxu0 %v9911
  %v9960 = vpop.f32.mrf.mxu0
  %v9961 = vadd.f32 %v9874, %v9960
  %9962 = vmatmul.f32.gmra.mxu0 %v9914
  %v9963 = vpop.f32.mrf.mxu0
  %v9964 = vadd.f32 %v9878, %v9963
  %9965 = vmatmul.f32.gmra.mxu0 %v9917
  %v9966 = vpop.f32.mrf.mxu0
  %v9967 = vadd.f32 %v9883, %v9966
  %9968 = vdwg.mxu0
  %v9969 = vmax.f32 %v9937, 0.0
  %v9970 = vmax.f32 %v9940, 0.0
  %v9971 = vmax.f32 %v9943, 0.0
  %v9972 = vmax.f32 %v9946, 0.0
  %v9973 = vmax.f32 %v9949, 0.0
  %v9974 = vmax.f32 %v9952, 0.0
  %v9975 = vmax.f32 %v9955, 0.0
  %v9976 = vmax.f32 %v9958, 0.0
  %v9977 = vmax.f32 %v9961, 0.0
  %v9978 = vmax.f32 %v9964, 0.0
  %v9979 = vmax.f32 %v9967, 0.0
  %v9980 = vld [vmem:[%s11] sm:$0xff]
  %v9981 = vld [vmem:[%s11 + $0x8] sm:$0x3]
  %9982 = vset.pattern.permute.xlu0 2
  %9983 = vperm.xlu0 %9982, %v9369
  %v9984 = vpop.permute.xlu0 %9983
  %9987 = vset.pattern.permute.xlu0 2
  %9988 = vperm.xlu0 %9987, %v9385
  %v9989 = vpop.permute.xlu0 %9988
  %vm9991 = vcmask 687104
  %v9993 = vsel %vm9991, %v9980, 0
  %v9996 = vsel %vm9991, %v9981, 0
  %vm9998 = vcmask 1043456
  %v10000 = vsel %vm9998, %v9979, 0
  %10002 = vmatpush.msra.mxu0 0.0
  %10003 = vmatpush.msra.mxu0 0.0
  %10004 = vmatpush.msra.mxu0 0.0
  %10005 = vmatpush.msra.mxu0 0.0
  %10006 = vmatpush.msra.mxu0 0.0
  %10007 = vmatpush.msra.mxu0 %v10000
  %10008 = vmatpush.msra.mxu0 %v9978
  %10009 = vmatpush.msra.mxu0 %v9977
  %10010 = vmatpush.msra.mxu0 %v9976
  %10011 = vmatpush.msra.mxu0 %v9975
  %10012 = vmatpush.msra.mxu0 %v9974
  %10013 = vmatpush.msra.mxu0 %v9973
  %10014 = vmatpush.msra.mxu0 %v9972
  %10015 = vmatpush.msra.mxu0 %v9971
  %10016 = vmatpush.msra.mxu0 %v9970
  %10017 = vmatpush.msra.mxu0 %v9969
  %10018 = vmatmul.f32.gmra.mxu0 %v9993
  %v10019 = vpop.f32.mrf.mxu0
  %v10020 = vadd.f32 %v9984, %v10019
  %10021 = vmatmul.f32.gmra.mxu0 %v9996
  %v10022 = vpop.f32.mrf.mxu0
  %v10023 = vadd.f32 %v9989, %v10022
  %10024 = vdwg.mxu0
  %vm10025 = vcmask 15360
  %10026 = vst.msk [vmem:[%s13] sm:$0xff] %vm10025, %v10020
  %vm10027 = vcmask 9216
  %10028 = vst.msk [vmem:[%s13 + $0x8] sm:$0x3] %vm10027, %v10023
  // Predicated region
  $region54: #{lenet5_forward.1} parent=0 // pred_check
    _
  $region55: #{lenet5_forward.1} parent=0 // pred_check_branch
    %10030 = sbr.rel (0) target = $region57
  $region56: #{lenet5_forward.1} parent=0 // pred_region
    _
  $region57: #{lenet5_forward.1} parent=0 // pred_fallthru
    _
  // Predicated region
  $region58: #{lenet5_forward.1} parent=0 // pred_check
    _
  $region59: #{lenet5_forward.1} parent=0 // pred_check_branch
    %10032 = sbr.rel (0) target = $region61
  $region60: #{lenet5_forward.1} parent=0 // pred_region
    _
  $region61: #{lenet5_forward.1} parent=0 // pred_fallthru
    _

</llo_original>
